<compile_context>
chip_gen: v6e
topology: v6e:2x2x1
jax: 0.10.0
libtpu: 0.0.40
codegen_flags: <defaults>
</compile_context>

<pallas_src>
import functools
import math

import jax
import jax.numpy as jnp
from jax.experimental import pallas as pl
from jax.experimental.pallas import tpu as pltpu


# ----------------------------------------------------------------------------
# Fused forward kernel
# ----------------------------------------------------------------------------
def _recommender_kernel(
    x_ref,        # (B*S, E)   f32  enzyme token embeddings, batch-major rows
    cpd_ref,      # (B, FP)    f32  compound fingerprints
    mask_ref,     # (B*S, B*S) f32  additive attn mask (cross-batch + key pad)
    cos_ref,      # (B*S, E)   f32  rotary cos, tiled over heads & batch
    sina_ref,     # (B*S, E)   f32  sin gated to upper half-lanes of each head
    sinb_ref,     # (B*S, E)   f32  -sin gated to lower half-lanes of each head
    ln1_g_ref, ln1_b_ref,
    wqkv_ref, bqkv_ref,
    wo_ref, bo_ref,
    ln2_g_ref, ln2_b_ref,
    wf1_ref, bf1_ref,
    wf2_ref, bf2_ref,
    lnf_g_ref, lnf_b_ref,
    ffw_ref, ffb_ref,
    cpdw_ref, cpdb_ref,
    fc1we_ref, fc1wc_ref, fc1b_ref,
    cewh_ref, cewm_ref, ceb_ref,
    o_ref,        # (B, 1) f32    predicted interaction probability
    *, B, S, E, NH, hd, bn_scale,
):
    f32 = jnp.float32
    bf16 = jnp.bfloat16
    half = hd // 2

    def ln(x, g, b, eps=1e-5):
        mu = jnp.mean(x, axis=-1, keepdims=True)
        c = x - mu
        var = jnp.mean(c * c, axis=-1, keepdims=True)
        return c * jax.lax.rsqrt(var + eps) * g + b

    def mm(a, w_ref):   # bf16 MXU operands, f32 accumulation
        return jnp.dot(a.astype(bf16), w_ref[...], preferred_element_type=f32)

    x = x_ref[...]                                       # (B*S, E) residual stream

    # ---------------- self-attention sublayer (pre-LN, ESM style) -----------
    h = ln(x, ln1_g_ref[...], ln1_b_ref[...])
    qkv = mm(h, wqkv_ref) + bqkv_ref[...]                # fused Q/K/V, (B*S, 3E)
    q = qkv[:, :E]                                       # hd**-0.5 pre-folded into wqkv/bqkv
    k = qkv[:, E:2 * E]
    v = qkv[:, 2 * E:]

    # Full-width rotary: rotate_half for every head via two whole-row rolls;
    # cross-head lanes are zeroed by the head-gated sin tables.
    cos = cos_ref[...]
    sina = sina_ref[...]
    sinb = sinb_ref[...]

    def rope(t):
        return (t * cos
                + pltpu.roll(t, shift=half, axis=1) * sina
                + pltpu.roll(t, shift=E - half, axis=1) * sinb)

    q = rope(q)
    k = rope(k)

    mask = mask_ref[...]                                 # (B*S, B*S) additive
    heads = []
    for hx in range(NH):
        c0 = hx * hd
        qh = q[:, c0:c0 + hd].astype(bf16)
        kh = k[:, c0:c0 + hd].astype(bf16)
        vh = v[:, c0:c0 + hd].astype(bf16)
        # one score matmul / softmax / PV matmul per head, batched over B;
        # the additive mask blocks cross-batch attention and padded keys.
        s = jax.lax.dot_general(qh, kh, (((1,), (1,)), ((), ())),
                                preferred_element_type=f32)   # (B*S, B*S)
        s = s + mask
        m = jnp.max(s, axis=-1, keepdims=True)
        p = jnp.exp(s - m)
        p = p * pl.reciprocal(jnp.sum(p, axis=-1, keepdims=True), approx=True)
        heads.append(jnp.dot(p.astype(bf16), vh, preferred_element_type=f32))
    attn = jnp.concatenate(heads, axis=1)                # (B*S, E), lane-dense

    x = x + mm(attn, wo_ref) + bo_ref[...]               # out proj + residual

    # ---------------- feed-forward sublayer (pre-LN) ------------------------
    h = ln(x, ln2_g_ref[...], ln2_b_ref[...])
    h = mm(h, wf1_ref) + bf1_ref[...]
    # TODO(synk): ESM uses exact erf-GELU; tanh-approx GELU used in-kernel
    # (erf has no guaranteed Mosaic lowering).
    h = 0.5 * h * (1.0 + jnp.tanh(0.7978845608028654
                                  * (h + 0.044715 * h * h * h)))
    x = x + mm(h, wf2_ref) + bf2_ref[...]                # residual

    # ------- emb_layer_norm_after + token-1 extraction + feed_forward -------
    x = ln(x, lnf_g_ref[...], lnf_b_ref[...])
    tok = jnp.concatenate([x[b * S + 1: b * S + 2, :] for b in range(B)],
                          axis=0)                        # (B, E), register concat
    emb_enz = mm(tok, ffw_ref) + ffb_ref[...]            # (B, H)

    # ---------------- compound embedding (Linear FP -> H) -------------------
    emb_cpd = mm(cpd_ref[...], cpdw_ref) + cpdb_ref[...]  # (B, H)

    # ---------- MF * / MLP fc1+BN+ReLU / ce_predictor (fused head) ----------
    mf = emb_enz * emb_cpd                               # coembed_MF
    hm = (mm(emb_enz, fc1we_ref) + mm(emb_cpd, fc1wc_ref)
          + fc1b_ref[...]) * bn_scale                    # BatchNorm1d eval, affine=False
    hm = jnp.maximum(hm, 0.0)                            # ReLU -> coembed_MLP
    # ce_predictor (Linear(2H, 1) + Sigmoid) as VPU multiply + lane reduction
    logit = jnp.sum(hm * cewh_ref[...] + mf * cewm_ref[...],
                    axis=-1, keepdims=True) + ceb_ref[...]
    o_ref[...] = 1.0 / (1.0 + jnp.exp(-logit))           # exact sigmoid on output


# ----------------------------------------------------------------------------
# Glue (parameter setup, rotary / mask tables, pallas_call wrapper)
# ----------------------------------------------------------------------------
def rotary_tables(seq_len, embed_dim, num_heads, head_dim):
    """Full-width rotary tables: cos everywhere; sin gated per half-head so
    two whole-row rolls implement rotate_half for every head at once."""
    half = head_dim // 2
    inv_freq = 1.0 / (10000.0 ** (jnp.arange(0, head_dim, 2, dtype=jnp.float32)
                                  / head_dim))
    t = jnp.arange(seq_len, dtype=jnp.float32)
    freqs = t[:, None] * inv_freq[None, :]                     # (S, hd//2)
    cos_h = jnp.concatenate([jnp.cos(freqs), jnp.cos(freqs)], axis=-1)  # (S, hd)
    sin_h = jnp.concatenate([jnp.sin(freqs), jnp.sin(freqs)], axis=-1)  # (S, hd)
    upper = (jnp.arange(head_dim) >= half).astype(jnp.float32)[None, :]
    sina_h = sin_h * upper                    # multiplies roll(+hd/2) lanes
    sinb_h = -sin_h * (1.0 - upper)           # multiplies roll(-hd/2) lanes
    cos = jnp.tile(cos_h, (1, num_heads))     # (S, E)
    sina = jnp.tile(sina_h, (1, num_heads))
    sinb = jnp.tile(sinb_h, (1, num_heads))
    return cos, sina, sinb


def init_params(key, fp_dim, hidden_dim, embed_dim, num_heads):
    keys = iter(jax.random.split(key, 32))

    def w(shape, scale=0.02):
        return jax.random.normal(next(keys), shape, jnp.float32) * scale

    E, H = embed_dim, hidden_dim
    hd = E // num_heads
    q_scale = hd ** -0.5

    # Attention scale folded into the Q block of the fused QKV projection
    # (host-side, once) -> no in-kernel q multiply. Checkpoint converters
    # must apply the same fold.
    wq, wk, wv = w((E, E)) * q_scale, w((E, E)), w((E, E))
    bq, bk, bv = w((1, E), 0.01) * q_scale, w((1, E), 0.01), w((1, E), 0.01)

    bf16 = jnp.bfloat16
    p = {
        # matmul weights pre-cast to bf16 (halves HBM->VMEM weight traffic);
        # biases / LN params / ce (VPU) weights kept in f32.
        "wqkv": jnp.concatenate([wq, wk, wv], axis=1).astype(bf16),
        "bqkv": jnp.concatenate([bq, bk, bv], axis=1),
        "wo": w((E, E)).astype(bf16),    "bo": w((1, E), 0.01),
        "wf1": w((E, E)).astype(bf16),   "bf1": w((1, E), 0.01),
        "wf2": w((E, E)).astype(bf16),   "bf2": w((1, E), 0.01),
        "ff_w": w((E, H)).astype(bf16),  "ff_b": w((1, H), 0.01),
        "cpd_w": w((fp_dim, H)).astype(bf16), "cpd_b": w((1, H), 0.01),
        "fc1_we": w((H, H)).astype(bf16), "fc1_wc": w((H, H)).astype(bf16),
        "fc1_b": w((1, H), 0.01),
        "ce_wh": w((1, H)), "ce_wm": w((1, H)), "ce_b": w((1, 1), 0.01),
    }
    for lname in ("ln1", "ln2", "lnf"):
        p[lname + "_g"] = jnp.ones((1, E), jnp.float32)
        p[lname + "_b"] = jnp.zeros((1, E), jnp.float32)
    return p


def recommender_forward(params, input_embeds_cpd, input_embeds_enz, enz_padding,
                        *, num_heads):
    B, S, E = input_embeds_enz.shape
    hd = E // num_heads

    # (B, S, E) -> (B*S, E) batch-major token slab (free reshape, no transposes).
    x = input_embeds_enz.astype(jnp.float32).reshape(B * S, E)
    cpd = input_embeds_cpd.astype(jnp.float32)

    cos, sina, sinb = rotary_tables(S, E, num_heads, hd)        # (S, E) each
    cos = jnp.tile(cos, (B, 1))                                 # (B*S, E)
    sina = jnp.tile(sina, (B, 1))
    sinb = jnp.tile(sinb, (B, 1))

    # Additive (B*S, B*S) mask: blocks cross-batch attention and padded keys
    # with a finite -1e30 (no NaN even for fully-padded key rows).
    ids = jnp.arange(B * S, dtype=jnp.int32) // S
    same_batch = ids[:, None] == ids[None, :]
    keypad = enz_padding.reshape(B * S).astype(jnp.float32)
    attn_mask = jnp.where(same_batch & (keypad[None, :] < 0.5),
                          0.0, -1e30).astype(jnp.float32)

    kernel = functools.partial(
        _recommender_kernel, B=B, S=S, E=E, NH=num_heads, hd=hd,
        bn_scale=1.0 / math.sqrt(1.0 + 1e-5))

    # Whole model in one grid-less pallas_call: activations (B*S=16 rows) and
    # bf16 weights (~3 MiB) are fully VMEM-resident at these shapes.
    # TODO(synk): at production B/S, tile rows with a "parallel" grid axis
    # (activation/output BlockSpecs indexed by the grid, weight BlockSpecs with
    # constant index_map so they stay VMEM-resident), re-derive block sizes
    # against v7x's 64 MiB VMEM / 2 TensorCores, and keep weights resident
    # across calls if this layer is invoked repeatedly at small B.
    return pl.pallas_call(
        kernel,
        out_shape=jax.ShapeDtypeStruct((B, 1), jnp.float32),
        compiler_params=pltpu.CompilerParams(
            vmem_limit_bytes=16 * 1024 * 1024),
    )(x, cpd, attn_mask, cos, sina, sinb,
      params["ln1_g"], params["ln1_b"],
      params["wqkv"], params["bqkv"],
      params["wo"], params["bo"],
      params["ln2_g"], params["ln2_b"],
      params["wf1"], params["bf1"],
      params["wf2"], params["bf2"],
      params["lnf_g"], params["lnf_b"],
      params["ff_w"], params["ff_b"],
      params["cpd_w"], params["cpd_b"],
      params["fc1_we"], params["fc1_wc"], params["fc1_b"],
      params["ce_wh"], params["ce_wm"], params["ce_b"])


# ----------------------------------------------------------------------------
if __name__ == "__main__":
    B, S, E, H, FP, NH = 2, 8, 512, 32, 64, 8

    key = jax.random.PRNGKey(0)
    k_params, k_cpd, k_enz = jax.random.split(key, 3)

    params = init_params(k_params, FP, H, E, NH)
    input_embeds_cpd = jax.random.normal(k_cpd, (B, FP), jnp.float32)
    input_embeds_enz = jax.random.normal(k_enz, (B, S, E), jnp.float32)
    enz_padding = jnp.zeros((B, S), jnp.bool_).at[1, 6:].set(True)

    fwd = jax.jit(functools.partial(recommender_forward, num_heads=NH))
    pred = fwd(params, input_embeds_cpd, input_embeds_enz, enz_padding)
    pred = jax.block_until_ready(pred)

    assert pred.shape == (B, 1)
    assert bool(jnp.all(jnp.isfinite(pred)))
    assert bool(jnp.all((pred >= 0.0) & (pred <= 1.0)))
    print("KERNEL_OK")
</pallas_src>

<mosaic_0001>
module attributes {stable_mosaic.version = 11 : i64} {
  func.func @_recommender_kernel(%arg0: memref<16x512xf32, #tpu.memory_space<vmem>>, %arg1: memref<2x64xf32, #tpu.memory_space<vmem>>, %arg2: memref<16x16xf32, #tpu.memory_space<vmem>>, %arg3: memref<16x512xf32, #tpu.memory_space<vmem>>, %arg4: memref<16x512xf32, #tpu.memory_space<vmem>>, %arg5: memref<16x512xf32, #tpu.memory_space<vmem>>, %arg6: memref<1x512xf32, #tpu.memory_space<vmem>>, %arg7: memref<1x512xf32, #tpu.memory_space<vmem>>, %arg8: memref<512x1536xbf16, #tpu.memory_space<vmem>>, %arg9: memref<1x1536xf32, #tpu.memory_space<vmem>>, %arg10: memref<512x512xbf16, #tpu.memory_space<vmem>>, %arg11: memref<1x512xf32, #tpu.memory_space<vmem>>, %arg12: memref<1x512xf32, #tpu.memory_space<vmem>>, %arg13: memref<1x512xf32, #tpu.memory_space<vmem>>, %arg14: memref<512x512xbf16, #tpu.memory_space<vmem>>, %arg15: memref<1x512xf32, #tpu.memory_space<vmem>>, %arg16: memref<512x512xbf16, #tpu.memory_space<vmem>>, %arg17: memref<1x512xf32, #tpu.memory_space<vmem>>, %arg18: memref<1x512xf32, #tpu.memory_space<vmem>>, %arg19: memref<1x512xf32, #tpu.memory_space<vmem>>, %arg20: memref<512x32xbf16, #tpu.memory_space<vmem>>, %arg21: memref<1x32xf32, #tpu.memory_space<vmem>>, %arg22: memref<64x32xbf16, #tpu.memory_space<vmem>>, %arg23: memref<1x32xf32, #tpu.memory_space<vmem>>, %arg24: memref<32x32xbf16, #tpu.memory_space<vmem>>, %arg25: memref<32x32xbf16, #tpu.memory_space<vmem>>, %arg26: memref<1x32xf32, #tpu.memory_space<vmem>>, %arg27: memref<1x32xf32, #tpu.memory_space<vmem>>, %arg28: memref<1x32xf32, #tpu.memory_space<vmem>>, %arg29: memref<1x1xf32, #tpu.memory_space<vmem>>, %arg30: memref<2x1xf32, #tpu.memory_space<vmem>>) attributes {dimension_semantics = [], scalar_prefetch = 0 : i64, scratch_operands = 0 : i64, tpu.core_type = #tpu.core_type<tc>} {
    %c0 = arith.constant 0 : index
    %c0_0 = arith.constant 0 : index
    %0 = vector.load %arg0[%c0, %c0_0] : memref<16x512xf32, #tpu.memory_space<vmem>>, vector<16x512xf32>
    %c0_1 = arith.constant 0 : index
    %c0_2 = arith.constant 0 : index
    %1 = vector.load %arg6[%c0_1, %c0_2] : memref<1x512xf32, #tpu.memory_space<vmem>>, vector<1x512xf32>
    %c0_3 = arith.constant 0 : index
    %c0_4 = arith.constant 0 : index
    %2 = vector.load %arg7[%c0_3, %c0_4] : memref<1x512xf32, #tpu.memory_space<vmem>>, vector<1x512xf32>
    %cst = arith.constant dense<0.000000e+00> : vector<16xf32>
    %3 = vector.multi_reduction <add>, %0, %cst [1] : vector<16x512xf32> to vector<16xf32>
    %4 = vector.shape_cast %3 : vector<16xf32> to vector<16x1xf32>
    %cst_5 = arith.constant 5.120000e+02 : f32
    %5 = vector.broadcast %cst_5 : f32 to vector<16x1xf32>
    %6 = arith.divf %4, %5 : vector<16x1xf32>
    %7 = vector.broadcast %6 : vector<16x1xf32> to vector<16x512xf32>
    %8 = arith.subf %0, %7 : vector<16x512xf32>
    %9 = arith.mulf %8, %8 : vector<16x512xf32>
    %cst_6 = arith.constant dense<0.000000e+00> : vector<16xf32>
    %10 = vector.multi_reduction <add>, %9, %cst_6 [1] : vector<16x512xf32> to vector<16xf32>
    %11 = vector.shape_cast %10 : vector<16xf32> to vector<16x1xf32>
    %cst_7 = arith.constant 5.120000e+02 : f32
    %12 = vector.broadcast %cst_7 : f32 to vector<16x1xf32>
    %13 = arith.divf %11, %12 : vector<16x1xf32>
    %cst_8 = arith.constant 9.99999974E-6 : f32
    %14 = vector.broadcast %cst_8 : f32 to vector<16x1xf32>
    %15 = arith.addf %13, %14 : vector<16x1xf32>
    %16 = math.rsqrt %15 : vector<16x1xf32>
    %17 = vector.broadcast %16 : vector<16x1xf32> to vector<16x512xf32>
    %18 = arith.mulf %8, %17 : vector<16x512xf32>
    %19 = vector.broadcast %1 : vector<1x512xf32> to vector<16x512xf32>
    %20 = arith.mulf %18, %19 : vector<16x512xf32>
    %21 = vector.broadcast %2 : vector<1x512xf32> to vector<16x512xf32>
    %22 = arith.addf %20, %21 : vector<16x512xf32>
    %23 = arith.truncf %22 : vector<16x512xf32> to vector<16x512xbf16>
    %c0_9 = arith.constant 0 : index
    %c0_10 = arith.constant 0 : index
    %24 = vector.load %arg8[%c0_9, %c0_10] : memref<512x1536xbf16, #tpu.memory_space<vmem>>, vector<512x1536xbf16>
    %cst_11 = arith.constant dense<0.000000e+00> : vector<16x1536xf32>
    %25 = tpu.matmul %23, %24, %cst_11 {dimension_numbers = #tpu.dot_dimension_numbers<[1], [0], [0], [1], [0, 0, 1, 1], [], []>} : vector<16x512xbf16>, vector<512x1536xbf16>, vector<16x1536xf32> -> vector<16x1536xf32>
    %c0_12 = arith.constant 0 : index
    %c0_13 = arith.constant 0 : index
    %26 = vector.load %arg9[%c0_12, %c0_13] : memref<1x1536xf32, #tpu.memory_space<vmem>>, vector<1x1536xf32>
    %27 = vector.broadcast %26 : vector<1x1536xf32> to vector<16x1536xf32>
    %28 = arith.addf %25, %27 : vector<16x1536xf32>
    %29 = vector.extract_strided_slice %28 {offsets = [0, 0], sizes = [16, 512], strides = [1, 1]} : vector<16x1536xf32> to vector<16x512xf32>
    %30 = vector.extract_strided_slice %28 {offsets = [0, 512], sizes = [16, 512], strides = [1, 1]} : vector<16x1536xf32> to vector<16x512xf32>
    %31 = vector.extract_strided_slice %28 {offsets = [0, 1024], sizes = [16, 512], strides = [1, 1]} : vector<16x1536xf32> to vector<16x512xf32>
    %c0_14 = arith.constant 0 : index
    %c0_15 = arith.constant 0 : index
    %32 = vector.load %arg3[%c0_14, %c0_15] : memref<16x512xf32, #tpu.memory_space<vmem>>, vector<16x512xf32>
    %c0_16 = arith.constant 0 : index
    %c0_17 = arith.constant 0 : index
    %33 = vector.load %arg4[%c0_16, %c0_17] : memref<16x512xf32, #tpu.memory_space<vmem>>, vector<16x512xf32>
    %c0_18 = arith.constant 0 : index
    %c0_19 = arith.constant 0 : index
    %34 = vector.load %arg5[%c0_18, %c0_19] : memref<16x512xf32, #tpu.memory_space<vmem>>, vector<16x512xf32>
    %35 = arith.mulf %29, %32 : vector<16x512xf32>
    %c32_i32 = arith.constant 32 : i32
    %36 = tpu.dynamic_rotate %29 by %c32_i32 dim 1 : vector<16x512xf32>, i32 -> vector<16x512xf32>
    %37 = arith.mulf %36, %33 : vector<16x512xf32>
    %38 = arith.addf %35, %37 : vector<16x512xf32>
    %c480_i32 = arith.constant 480 : i32
    %39 = tpu.dynamic_rotate %29 by %c480_i32 dim 1 : vector<16x512xf32>, i32 -> vector<16x512xf32>
    %40 = arith.mulf %39, %34 : vector<16x512xf32>
    %41 = arith.addf %38, %40 : vector<16x512xf32>
    %42 = arith.mulf %30, %32 : vector<16x512xf32>
    %c32_i32_20 = arith.constant 32 : i32
    %43 = tpu.dynamic_rotate %30 by %c32_i32_20 dim 1 : vector<16x512xf32>, i32 -> vector<16x512xf32>
    %44 = arith.mulf %43, %33 : vector<16x512xf32>
    %45 = arith.addf %42, %44 : vector<16x512xf32>
    %c480_i32_21 = arith.constant 480 : i32
    %46 = tpu.dynamic_rotate %30 by %c480_i32_21 dim 1 : vector<16x512xf32>, i32 -> vector<16x512xf32>
    %47 = arith.mulf %46, %34 : vector<16x512xf32>
    %48 = arith.addf %45, %47 : vector<16x512xf32>
    %c0_22 = arith.constant 0 : index
    %c0_23 = arith.constant 0 : index
    %49 = vector.load %arg2[%c0_22, %c0_23] : memref<16x16xf32, #tpu.memory_space<vmem>>, vector<16x16xf32>
    %50 = vector.extract_strided_slice %41 {offsets = [0, 0], sizes = [16, 64], strides = [1, 1]} : vector<16x512xf32> to vector<16x64xf32>
    %51 = arith.truncf %50 : vector<16x64xf32> to vector<16x64xbf16>
    %52 = vector.extract_strided_slice %48 {offsets = [0, 0], sizes = [16, 64], strides = [1, 1]} : vector<16x512xf32> to vector<16x64xf32>
    %53 = arith.truncf %52 : vector<16x64xf32> to vector<16x64xbf16>
    %54 = vector.extract_strided_slice %31 {offsets = [0, 0], sizes = [16, 64], strides = [1, 1]} : vector<16x512xf32> to vector<16x64xf32>
    %55 = arith.truncf %54 : vector<16x64xf32> to vector<16x64xbf16>
    %cst_24 = arith.constant dense<0.000000e+00> : vector<16x16xf32>
    %56 = tpu.matmul %51, %53, %cst_24 {dimension_numbers = #tpu.dot_dimension_numbers<[1], [1], [0], [0], [0, 0, 1, 0], [], []>} : vector<16x64xbf16>, vector<16x64xbf16>, vector<16x16xf32> -> vector<16x16xf32>
    %57 = arith.addf %56, %49 : vector<16x16xf32>
    %cst_25 = arith.constant dense<0xFF800000> : vector<16xf32>
    %58 = vector.multi_reduction <maximumf>, %57, %cst_25 [1] : vector<16x16xf32> to vector<16xf32>
    %59 = vector.shape_cast %58 : vector<16xf32> to vector<16x1xf32>
    %60 = vector.broadcast %59 : vector<16x1xf32> to vector<16x16xf32>
    %61 = arith.subf %57, %60 : vector<16x16xf32>
    %62 = math.exp %61 : vector<16x16xf32>
    %cst_26 = arith.constant dense<0.000000e+00> : vector<16xf32>
    %63 = vector.multi_reduction <add>, %62, %cst_26 [1] : vector<16x16xf32> to vector<16xf32>
    %64 = vector.shape_cast %63 : vector<16xf32> to vector<16x1xf32>
    %65 = tpu.reciprocal %64 {approx = true} : vector<16x1xf32> -> vector<16x1xf32>
    %66 = vector.broadcast %65 : vector<16x1xf32> to vector<16x16xf32>
    %67 = arith.mulf %62, %66 : vector<16x16xf32>
    %68 = arith.truncf %67 : vector<16x16xf32> to vector<16x16xbf16>
    %cst_27 = arith.constant dense<0.000000e+00> : vector<16x64xf32>
    %69 = tpu.matmul %68, %55, %cst_27 {dimension_numbers = #tpu.dot_dimension_numbers<[1], [0], [0], [1], [0, 0, 1, 1], [], []>} : vector<16x16xbf16>, vector<16x64xbf16>, vector<16x64xf32> -> vector<16x64xf32>
    %70 = vector.extract_strided_slice %41 {offsets = [0, 64], sizes = [16, 64], strides = [1, 1]} : vector<16x512xf32> to vector<16x64xf32>
    %71 = arith.truncf %70 : vector<16x64xf32> to vector<16x64xbf16>
    %72 = vector.extract_strided_slice %48 {offsets = [0, 64], sizes = [16, 64], strides = [1, 1]} : vector<16x512xf32> to vector<16x64xf32>
    %73 = arith.truncf %72 : vector<16x64xf32> to vector<16x64xbf16>
    %74 = vector.extract_strided_slice %31 {offsets = [0, 64], sizes = [16, 64], strides = [1, 1]} : vector<16x512xf32> to vector<16x64xf32>
    %75 = arith.truncf %74 : vector<16x64xf32> to vector<16x64xbf16>
    %cst_28 = arith.constant dense<0.000000e+00> : vector<16x16xf32>
    %76 = tpu.matmul %71, %73, %cst_28 {dimension_numbers = #tpu.dot_dimension_numbers<[1], [1], [0], [0], [0, 0, 1, 0], [], []>} : vector<16x64xbf16>, vector<16x64xbf16>, vector<16x16xf32> -> vector<16x16xf32>
    %77 = arith.addf %76, %49 : vector<16x16xf32>
    %cst_29 = arith.constant dense<0xFF800000> : vector<16xf32>
    %78 = vector.multi_reduction <maximumf>, %77, %cst_29 [1] : vector<16x16xf32> to vector<16xf32>
    %79 = vector.shape_cast %78 : vector<16xf32> to vector<16x1xf32>
    %80 = vector.broadcast %79 : vector<16x1xf32> to vector<16x16xf32>
    %81 = arith.subf %77, %80 : vector<16x16xf32>
    %82 = math.exp %81 : vector<16x16xf32>
    %cst_30 = arith.constant dense<0.000000e+00> : vector<16xf32>
    %83 = vector.multi_reduction <add>, %82, %cst_30 [1] : vector<16x16xf32> to vector<16xf32>
    %84 = vector.shape_cast %83 : vector<16xf32> to vector<16x1xf32>
    %85 = tpu.reciprocal %84 {approx = true} : vector<16x1xf32> -> vector<16x1xf32>
    %86 = vector.broadcast %85 : vector<16x1xf32> to vector<16x16xf32>
    %87 = arith.mulf %82, %86 : vector<16x16xf32>
    %88 = arith.truncf %87 : vector<16x16xf32> to vector<16x16xbf16>
    %cst_31 = arith.constant dense<0.000000e+00> : vector<16x64xf32>
    %89 = tpu.matmul %88, %75, %cst_31 {dimension_numbers = #tpu.dot_dimension_numbers<[1], [0], [0], [1], [0, 0, 1, 1], [], []>} : vector<16x16xbf16>, vector<16x64xbf16>, vector<16x64xf32> -> vector<16x64xf32>
    %90 = vector.extract_strided_slice %41 {offsets = [0, 128], sizes = [16, 64], strides = [1, 1]} : vector<16x512xf32> to vector<16x64xf32>
    %91 = arith.truncf %90 : vector<16x64xf32> to vector<16x64xbf16>
    %92 = vector.extract_strided_slice %48 {offsets = [0, 128], sizes = [16, 64], strides = [1, 1]} : vector<16x512xf32> to vector<16x64xf32>
    %93 = arith.truncf %92 : vector<16x64xf32> to vector<16x64xbf16>
    %94 = vector.extract_strided_slice %31 {offsets = [0, 128], sizes = [16, 64], strides = [1, 1]} : vector<16x512xf32> to vector<16x64xf32>
    %95 = arith.truncf %94 : vector<16x64xf32> to vector<16x64xbf16>
    %cst_32 = arith.constant dense<0.000000e+00> : vector<16x16xf32>
    %96 = tpu.matmul %91, %93, %cst_32 {dimension_numbers = #tpu.dot_dimension_numbers<[1], [1], [0], [0], [0, 0, 1, 0], [], []>} : vector<16x64xbf16>, vector<16x64xbf16>, vector<16x16xf32> -> vector<16x16xf32>
    %97 = arith.addf %96, %49 : vector<16x16xf32>
    %cst_33 = arith.constant dense<0xFF800000> : vector<16xf32>
    %98 = vector.multi_reduction <maximumf>, %97, %cst_33 [1] : vector<16x16xf32> to vector<16xf32>
    %99 = vector.shape_cast %98 : vector<16xf32> to vector<16x1xf32>
    %100 = vector.broadcast %99 : vector<16x1xf32> to vector<16x16xf32>
    %101 = arith.subf %97, %100 : vector<16x16xf32>
    %102 = math.exp %101 : vector<16x16xf32>
    %cst_34 = arith.constant dense<0.000000e+00> : vector<16xf32>
    %103 = vector.multi_reduction <add>, %102, %cst_34 [1] : vector<16x16xf32> to vector<16xf32>
    %104 = vector.shape_cast %103 : vector<16xf32> to vector<16x1xf32>
    %105 = tpu.reciprocal %104 {approx = true} : vector<16x1xf32> -> vector<16x1xf32>
    %106 = vector.broadcast %105 : vector<16x1xf32> to vector<16x16xf32>
    %107 = arith.mulf %102, %106 : vector<16x16xf32>
    %108 = arith.truncf %107 : vector<16x16xf32> to vector<16x16xbf16>
    %cst_35 = arith.constant dense<0.000000e+00> : vector<16x64xf32>
    %109 = tpu.matmul %108, %95, %cst_35 {dimension_numbers = #tpu.dot_dimension_numbers<[1], [0], [0], [1], [0, 0, 1, 1], [], []>} : vector<16x16xbf16>, vector<16x64xbf16>, vector<16x64xf32> -> vector<16x64xf32>
    %110 = vector.extract_strided_slice %41 {offsets = [0, 192], sizes = [16, 64], strides = [1, 1]} : vector<16x512xf32> to vector<16x64xf32>
    %111 = arith.truncf %110 : vector<16x64xf32> to vector<16x64xbf16>
    %112 = vector.extract_strided_slice %48 {offsets = [0, 192], sizes = [16, 64], strides = [1, 1]} : vector<16x512xf32> to vector<16x64xf32>
    %113 = arith.truncf %112 : vector<16x64xf32> to vector<16x64xbf16>
    %114 = vector.extract_strided_slice %31 {offsets = [0, 192], sizes = [16, 64], strides = [1, 1]} : vector<16x512xf32> to vector<16x64xf32>
    %115 = arith.truncf %114 : vector<16x64xf32> to vector<16x64xbf16>
    %cst_36 = arith.constant dense<0.000000e+00> : vector<16x16xf32>
    %116 = tpu.matmul %111, %113, %cst_36 {dimension_numbers = #tpu.dot_dimension_numbers<[1], [1], [0], [0], [0, 0, 1, 0], [], []>} : vector<16x64xbf16>, vector<16x64xbf16>, vector<16x16xf32> -> vector<16x16xf32>
    %117 = arith.addf %116, %49 : vector<16x16xf32>
    %cst_37 = arith.constant dense<0xFF800000> : vector<16xf32>
    %118 = vector.multi_reduction <maximumf>, %117, %cst_37 [1] : vector<16x16xf32> to vector<16xf32>
    %119 = vector.shape_cast %118 : vector<16xf32> to vector<16x1xf32>
    %120 = vector.broadcast %119 : vector<16x1xf32> to vector<16x16xf32>
    %121 = arith.subf %117, %120 : vector<16x16xf32>
    %122 = math.exp %121 : vector<16x16xf32>
    %cst_38 = arith.constant dense<0.000000e+00> : vector<16xf32>
    %123 = vector.multi_reduction <add>, %122, %cst_38 [1] : vector<16x16xf32> to vector<16xf32>
    %124 = vector.shape_cast %123 : vector<16xf32> to vector<16x1xf32>
    %125 = tpu.reciprocal %124 {approx = true} : vector<16x1xf32> -> vector<16x1xf32>
    %126 = vector.broadcast %125 : vector<16x1xf32> to vector<16x16xf32>
    %127 = arith.mulf %122, %126 : vector<16x16xf32>
    %128 = arith.truncf %127 : vector<16x16xf32> to vector<16x16xbf16>
    %cst_39 = arith.constant dense<0.000000e+00> : vector<16x64xf32>
    %129 = tpu.matmul %128, %115, %cst_39 {dimension_numbers = #tpu.dot_dimension_numbers<[1], [0], [0], [1], [0, 0, 1, 1], [], []>} : vector<16x16xbf16>, vector<16x64xbf16>, vector<16x64xf32> -> vector<16x64xf32>
    %130 = vector.extract_strided_slice %41 {offsets = [0, 256], sizes = [16, 64], strides = [1, 1]} : vector<16x512xf32> to vector<16x64xf32>
    %131 = arith.truncf %130 : vector<16x64xf32> to vector<16x64xbf16>
    %132 = vector.extract_strided_slice %48 {offsets = [0, 256], sizes = [16, 64], strides = [1, 1]} : vector<16x512xf32> to vector<16x64xf32>
    %133 = arith.truncf %132 : vector<16x64xf32> to vector<16x64xbf16>
    %134 = vector.extract_strided_slice %31 {offsets = [0, 256], sizes = [16, 64], strides = [1, 1]} : vector<16x512xf32> to vector<16x64xf32>
    %135 = arith.truncf %134 : vector<16x64xf32> to vector<16x64xbf16>
    %cst_40 = arith.constant dense<0.000000e+00> : vector<16x16xf32>
    %136 = tpu.matmul %131, %133, %cst_40 {dimension_numbers = #tpu.dot_dimension_numbers<[1], [1], [0], [0], [0, 0, 1, 0], [], []>} : vector<16x64xbf16>, vector<16x64xbf16>, vector<16x16xf32> -> vector<16x16xf32>
    %137 = arith.addf %136, %49 : vector<16x16xf32>
    %cst_41 = arith.constant dense<0xFF800000> : vector<16xf32>
    %138 = vector.multi_reduction <maximumf>, %137, %cst_41 [1] : vector<16x16xf32> to vector<16xf32>
    %139 = vector.shape_cast %138 : vector<16xf32> to vector<16x1xf32>
    %140 = vector.broadcast %139 : vector<16x1xf32> to vector<16x16xf32>
    %141 = arith.subf %137, %140 : vector<16x16xf32>
    %142 = math.exp %141 : vector<16x16xf32>
    %cst_42 = arith.constant dense<0.000000e+00> : vector<16xf32>
    %143 = vector.multi_reduction <add>, %142, %cst_42 [1] : vector<16x16xf32> to vector<16xf32>
    %144 = vector.shape_cast %143 : vector<16xf32> to vector<16x1xf32>
    %145 = tpu.reciprocal %144 {approx = true} : vector<16x1xf32> -> vector<16x1xf32>
    %146 = vector.broadcast %145 : vector<16x1xf32> to vector<16x16xf32>
    %147 = arith.mulf %142, %146 : vector<16x16xf32>
    %148 = arith.truncf %147 : vector<16x16xf32> to vector<16x16xbf16>
    %cst_43 = arith.constant dense<0.000000e+00> : vector<16x64xf32>
    %149 = tpu.matmul %148, %135, %cst_43 {dimension_numbers = #tpu.dot_dimension_numbers<[1], [0], [0], [1], [0, 0, 1, 1], [], []>} : vector<16x16xbf16>, vector<16x64xbf16>, vector<16x64xf32> -> vector<16x64xf32>
    %150 = vector.extract_strided_slice %41 {offsets = [0, 320], sizes = [16, 64], strides = [1, 1]} : vector<16x512xf32> to vector<16x64xf32>
    %151 = arith.truncf %150 : vector<16x64xf32> to vector<16x64xbf16>
    %152 = vector.extract_strided_slice %48 {offsets = [0, 320], sizes = [16, 64], strides = [1, 1]} : vector<16x512xf32> to vector<16x64xf32>
    %153 = arith.truncf %152 : vector<16x64xf32> to vector<16x64xbf16>
    %154 = vector.extract_strided_slice %31 {offsets = [0, 320], sizes = [16, 64], strides = [1, 1]} : vector<16x512xf32> to vector<16x64xf32>
    %155 = arith.truncf %154 : vector<16x64xf32> to vector<16x64xbf16>
    %cst_44 = arith.constant dense<0.000000e+00> : vector<16x16xf32>
    %156 = tpu.matmul %151, %153, %cst_44 {dimension_numbers = #tpu.dot_dimension_numbers<[1], [1], [0], [0], [0, 0, 1, 0], [], []>} : vector<16x64xbf16>, vector<16x64xbf16>, vector<16x16xf32> -> vector<16x16xf32>
    %157 = arith.addf %156, %49 : vector<16x16xf32>
    %cst_45 = arith.constant dense<0xFF800000> : vector<16xf32>
    %158 = vector.multi_reduction <maximumf>, %157, %cst_45 [1] : vector<16x16xf32> to vector<16xf32>
    %159 = vector.shape_cast %158 : vector<16xf32> to vector<16x1xf32>
    %160 = vector.broadcast %159 : vector<16x1xf32> to vector<16x16xf32>
    %161 = arith.subf %157, %160 : vector<16x16xf32>
    %162 = math.exp %161 : vector<16x16xf32>
    %cst_46 = arith.constant dense<0.000000e+00> : vector<16xf32>
    %163 = vector.multi_reduction <add>, %162, %cst_46 [1] : vector<16x16xf32> to vector<16xf32>
    %164 = vector.shape_cast %163 : vector<16xf32> to vector<16x1xf32>
    %165 = tpu.reciprocal %164 {approx = true} : vector<16x1xf32> -> vector<16x1xf32>
    %166 = vector.broadcast %165 : vector<16x1xf32> to vector<16x16xf32>
    %167 = arith.mulf %162, %166 : vector<16x16xf32>
    %168 = arith.truncf %167 : vector<16x16xf32> to vector<16x16xbf16>
    %cst_47 = arith.constant dense<0.000000e+00> : vector<16x64xf32>
    %169 = tpu.matmul %168, %155, %cst_47 {dimension_numbers = #tpu.dot_dimension_numbers<[1], [0], [0], [1], [0, 0, 1, 1], [], []>} : vector<16x16xbf16>, vector<16x64xbf16>, vector<16x64xf32> -> vector<16x64xf32>
    %170 = vector.extract_strided_slice %41 {offsets = [0, 384], sizes = [16, 64], strides = [1, 1]} : vector<16x512xf32> to vector<16x64xf32>
    %171 = arith.truncf %170 : vector<16x64xf32> to vector<16x64xbf16>
    %172 = vector.extract_strided_slice %48 {offsets = [0, 384], sizes = [16, 64], strides = [1, 1]} : vector<16x512xf32> to vector<16x64xf32>
    %173 = arith.truncf %172 : vector<16x64xf32> to vector<16x64xbf16>
    %174 = vector.extract_strided_slice %31 {offsets = [0, 384], sizes = [16, 64], strides = [1, 1]} : vector<16x512xf32> to vector<16x64xf32>
    %175 = arith.truncf %174 : vector<16x64xf32> to vector<16x64xbf16>
    %cst_48 = arith.constant dense<0.000000e+00> : vector<16x16xf32>
    %176 = tpu.matmul %171, %173, %cst_48 {dimension_numbers = #tpu.dot_dimension_numbers<[1], [1], [0], [0], [0, 0, 1, 0], [], []>} : vector<16x64xbf16>, vector<16x64xbf16>, vector<16x16xf32> -> vector<16x16xf32>
    %177 = arith.addf %176, %49 : vector<16x16xf32>
    %cst_49 = arith.constant dense<0xFF800000> : vector<16xf32>
    %178 = vector.multi_reduction <maximumf>, %177, %cst_49 [1] : vector<16x16xf32> to vector<16xf32>
    %179 = vector.shape_cast %178 : vector<16xf32> to vector<16x1xf32>
    %180 = vector.broadcast %179 : vector<16x1xf32> to vector<16x16xf32>
    %181 = arith.subf %177, %180 : vector<16x16xf32>
    %182 = math.exp %181 : vector<16x16xf32>
    %cst_50 = arith.constant dense<0.000000e+00> : vector<16xf32>
    %183 = vector.multi_reduction <add>, %182, %cst_50 [1] : vector<16x16xf32> to vector<16xf32>
    %184 = vector.shape_cast %183 : vector<16xf32> to vector<16x1xf32>
    %185 = tpu.reciprocal %184 {approx = true} : vector<16x1xf32> -> vector<16x1xf32>
    %186 = vector.broadcast %185 : vector<16x1xf32> to vector<16x16xf32>
    %187 = arith.mulf %182, %186 : vector<16x16xf32>
    %188 = arith.truncf %187 : vector<16x16xf32> to vector<16x16xbf16>
    %cst_51 = arith.constant dense<0.000000e+00> : vector<16x64xf32>
    %189 = tpu.matmul %188, %175, %cst_51 {dimension_numbers = #tpu.dot_dimension_numbers<[1], [0], [0], [1], [0, 0, 1, 1], [], []>} : vector<16x16xbf16>, vector<16x64xbf16>, vector<16x64xf32> -> vector<16x64xf32>
    %190 = vector.extract_strided_slice %41 {offsets = [0, 448], sizes = [16, 64], strides = [1, 1]} : vector<16x512xf32> to vector<16x64xf32>
    %191 = arith.truncf %190 : vector<16x64xf32> to vector<16x64xbf16>
    %192 = vector.extract_strided_slice %48 {offsets = [0, 448], sizes = [16, 64], strides = [1, 1]} : vector<16x512xf32> to vector<16x64xf32>
    %193 = arith.truncf %192 : vector<16x64xf32> to vector<16x64xbf16>
    %194 = vector.extract_strided_slice %31 {offsets = [0, 448], sizes = [16, 64], strides = [1, 1]} : vector<16x512xf32> to vector<16x64xf32>
    %195 = arith.truncf %194 : vector<16x64xf32> to vector<16x64xbf16>
    %cst_52 = arith.constant dense<0.000000e+00> : vector<16x16xf32>
    %196 = tpu.matmul %191, %193, %cst_52 {dimension_numbers = #tpu.dot_dimension_numbers<[1], [1], [0], [0], [0, 0, 1, 0], [], []>} : vector<16x64xbf16>, vector<16x64xbf16>, vector<16x16xf32> -> vector<16x16xf32>
    %197 = arith.addf %196, %49 : vector<16x16xf32>
    %cst_53 = arith.constant dense<0xFF800000> : vector<16xf32>
    %198 = vector.multi_reduction <maximumf>, %197, %cst_53 [1] : vector<16x16xf32> to vector<16xf32>
    %199 = vector.shape_cast %198 : vector<16xf32> to vector<16x1xf32>
    %200 = vector.broadcast %199 : vector<16x1xf32> to vector<16x16xf32>
    %201 = arith.subf %197, %200 : vector<16x16xf32>
    %202 = math.exp %201 : vector<16x16xf32>
    %cst_54 = arith.constant dense<0.000000e+00> : vector<16xf32>
    %203 = vector.multi_reduction <add>, %202, %cst_54 [1] : vector<16x16xf32> to vector<16xf32>
    %204 = vector.shape_cast %203 : vector<16xf32> to vector<16x1xf32>
    %205 = tpu.reciprocal %204 {approx = true} : vector<16x1xf32> -> vector<16x1xf32>
    %206 = vector.broadcast %205 : vector<16x1xf32> to vector<16x16xf32>
    %207 = arith.mulf %202, %206 : vector<16x16xf32>
    %208 = arith.truncf %207 : vector<16x16xf32> to vector<16x16xbf16>
    %cst_55 = arith.constant dense<0.000000e+00> : vector<16x64xf32>
    %209 = tpu.matmul %208, %195, %cst_55 {dimension_numbers = #tpu.dot_dimension_numbers<[1], [0], [0], [1], [0, 0, 1, 1], [], []>} : vector<16x16xbf16>, vector<16x64xbf16>, vector<16x64xf32> -> vector<16x64xf32>
    %210 = tpu.concatenate %69, %89, %109, %129, %149, %169, %189, %209 in 1 : vector<16x64xf32>, vector<16x64xf32>, vector<16x64xf32>, vector<16x64xf32>, vector<16x64xf32>, vector<16x64xf32>, vector<16x64xf32>, vector<16x64xf32> -> vector<16x512xf32>
    %211 = arith.truncf %210 : vector<16x512xf32> to vector<16x512xbf16>
    %c0_56 = arith.constant 0 : index
    %c0_57 = arith.constant 0 : index
    %212 = vector.load %arg10[%c0_56, %c0_57] : memref<512x512xbf16, #tpu.memory_space<vmem>>, vector<512x512xbf16>
    %cst_58 = arith.constant dense<0.000000e+00> : vector<16x512xf32>
    %213 = tpu.matmul %211, %212, %cst_58 {dimension_numbers = #tpu.dot_dimension_numbers<[1], [0], [0], [1], [0, 0, 1, 1], [], []>} : vector<16x512xbf16>, vector<512x512xbf16>, vector<16x512xf32> -> vector<16x512xf32>
    %214 = arith.addf %0, %213 : vector<16x512xf32>
    %c0_59 = arith.constant 0 : index
    %c0_60 = arith.constant 0 : index
    %215 = vector.load %arg11[%c0_59, %c0_60] : memref<1x512xf32, #tpu.memory_space<vmem>>, vector<1x512xf32>
    %216 = vector.broadcast %215 : vector<1x512xf32> to vector<16x512xf32>
    %217 = arith.addf %214, %216 : vector<16x512xf32>
    %c0_61 = arith.constant 0 : index
    %c0_62 = arith.constant 0 : index
    %218 = vector.load %arg12[%c0_61, %c0_62] : memref<1x512xf32, #tpu.memory_space<vmem>>, vector<1x512xf32>
    %c0_63 = arith.constant 0 : index
    %c0_64 = arith.constant 0 : index
    %219 = vector.load %arg13[%c0_63, %c0_64] : memref<1x512xf32, #tpu.memory_space<vmem>>, vector<1x512xf32>
    %cst_65 = arith.constant dense<0.000000e+00> : vector<16xf32>
    %220 = vector.multi_reduction <add>, %217, %cst_65 [1] : vector<16x512xf32> to vector<16xf32>
    %221 = vector.shape_cast %220 : vector<16xf32> to vector<16x1xf32>
    %cst_66 = arith.constant 5.120000e+02 : f32
    %222 = vector.broadcast %cst_66 : f32 to vector<16x1xf32>
    %223 = arith.divf %221, %222 : vector<16x1xf32>
    %224 = vector.broadcast %223 : vector<16x1xf32> to vector<16x512xf32>
    %225 = arith.subf %217, %224 : vector<16x512xf32>
    %226 = arith.mulf %225, %225 : vector<16x512xf32>
    %cst_67 = arith.constant dense<0.000000e+00> : vector<16xf32>
    %227 = vector.multi_reduction <add>, %226, %cst_67 [1] : vector<16x512xf32> to vector<16xf32>
    %228 = vector.shape_cast %227 : vector<16xf32> to vector<16x1xf32>
    %cst_68 = arith.constant 5.120000e+02 : f32
    %229 = vector.broadcast %cst_68 : f32 to vector<16x1xf32>
    %230 = arith.divf %228, %229 : vector<16x1xf32>
    %cst_69 = arith.constant 9.99999974E-6 : f32
    %231 = vector.broadcast %cst_69 : f32 to vector<16x1xf32>
    %232 = arith.addf %230, %231 : vector<16x1xf32>
    %233 = math.rsqrt %232 : vector<16x1xf32>
    %234 = vector.broadcast %233 : vector<16x1xf32> to vector<16x512xf32>
    %235 = arith.mulf %225, %234 : vector<16x512xf32>
    %236 = vector.broadcast %218 : vector<1x512xf32> to vector<16x512xf32>
    %237 = arith.mulf %235, %236 : vector<16x512xf32>
    %238 = vector.broadcast %219 : vector<1x512xf32> to vector<16x512xf32>
    %239 = arith.addf %237, %238 : vector<16x512xf32>
    %240 = arith.truncf %239 : vector<16x512xf32> to vector<16x512xbf16>
    %c0_70 = arith.constant 0 : index
    %c0_71 = arith.constant 0 : index
    %241 = vector.load %arg14[%c0_70, %c0_71] : memref<512x512xbf16, #tpu.memory_space<vmem>>, vector<512x512xbf16>
    %cst_72 = arith.constant dense<0.000000e+00> : vector<16x512xf32>
    %242 = tpu.matmul %240, %241, %cst_72 {dimension_numbers = #tpu.dot_dimension_numbers<[1], [0], [0], [1], [0, 0, 1, 1], [], []>} : vector<16x512xbf16>, vector<512x512xbf16>, vector<16x512xf32> -> vector<16x512xf32>
    %c0_73 = arith.constant 0 : index
    %c0_74 = arith.constant 0 : index
    %243 = vector.load %arg15[%c0_73, %c0_74] : memref<1x512xf32, #tpu.memory_space<vmem>>, vector<1x512xf32>
    %244 = vector.broadcast %243 : vector<1x512xf32> to vector<16x512xf32>
    %245 = arith.addf %242, %244 : vector<16x512xf32>
    %cst_75 = arith.constant 5.000000e-01 : f32
    %246 = vector.broadcast %cst_75 : f32 to vector<16x512xf32>
    %247 = arith.mulf %246, %245 : vector<16x512xf32>
    %cst_76 = arith.constant 4.471500e-02 : f32
    %248 = vector.broadcast %cst_76 : f32 to vector<16x512xf32>
    %249 = arith.mulf %248, %245 : vector<16x512xf32>
    %250 = arith.mulf %249, %245 : vector<16x512xf32>
    %251 = arith.mulf %250, %245 : vector<16x512xf32>
    %252 = arith.addf %245, %251 : vector<16x512xf32>
    %cst_77 = arith.constant 0.797884583 : f32
    %253 = vector.broadcast %cst_77 : f32 to vector<16x512xf32>
    %254 = arith.mulf %253, %252 : vector<16x512xf32>
    %255 = math.tanh %254 : vector<16x512xf32>
    %cst_78 = arith.constant 1.000000e+00 : f32
    %256 = vector.broadcast %cst_78 : f32 to vector<16x512xf32>
    %257 = arith.addf %256, %255 : vector<16x512xf32>
    %258 = arith.mulf %247, %257 : vector<16x512xf32>
    %259 = arith.truncf %258 : vector<16x512xf32> to vector<16x512xbf16>
    %c0_79 = arith.constant 0 : index
    %c0_80 = arith.constant 0 : index
    %260 = vector.load %arg16[%c0_79, %c0_80] : memref<512x512xbf16, #tpu.memory_space<vmem>>, vector<512x512xbf16>
    %cst_81 = arith.constant dense<0.000000e+00> : vector<16x512xf32>
    %261 = tpu.matmul %259, %260, %cst_81 {dimension_numbers = #tpu.dot_dimension_numbers<[1], [0], [0], [1], [0, 0, 1, 1], [], []>} : vector<16x512xbf16>, vector<512x512xbf16>, vector<16x512xf32> -> vector<16x512xf32>
    %262 = arith.addf %217, %261 : vector<16x512xf32>
    %c0_82 = arith.constant 0 : index
    %c0_83 = arith.constant 0 : index
    %263 = vector.load %arg17[%c0_82, %c0_83] : memref<1x512xf32, #tpu.memory_space<vmem>>, vector<1x512xf32>
    %264 = vector.broadcast %263 : vector<1x512xf32> to vector<16x512xf32>
    %265 = arith.addf %262, %264 : vector<16x512xf32>
    %c0_84 = arith.constant 0 : index
    %c0_85 = arith.constant 0 : index
    %266 = vector.load %arg18[%c0_84, %c0_85] : memref<1x512xf32, #tpu.memory_space<vmem>>, vector<1x512xf32>
    %c0_86 = arith.constant 0 : index
    %c0_87 = arith.constant 0 : index
    %267 = vector.load %arg19[%c0_86, %c0_87] : memref<1x512xf32, #tpu.memory_space<vmem>>, vector<1x512xf32>
    %cst_88 = arith.constant dense<0.000000e+00> : vector<16xf32>
    %268 = vector.multi_reduction <add>, %265, %cst_88 [1] : vector<16x512xf32> to vector<16xf32>
    %269 = vector.shape_cast %268 : vector<16xf32> to vector<16x1xf32>
    %cst_89 = arith.constant 5.120000e+02 : f32
    %270 = vector.broadcast %cst_89 : f32 to vector<16x1xf32>
    %271 = arith.divf %269, %270 : vector<16x1xf32>
    %272 = vector.broadcast %271 : vector<16x1xf32> to vector<16x512xf32>
    %273 = arith.subf %265, %272 : vector<16x512xf32>
    %274 = arith.mulf %273, %273 : vector<16x512xf32>
    %cst_90 = arith.constant dense<0.000000e+00> : vector<16xf32>
    %275 = vector.multi_reduction <add>, %274, %cst_90 [1] : vector<16x512xf32> to vector<16xf32>
    %276 = vector.shape_cast %275 : vector<16xf32> to vector<16x1xf32>
    %cst_91 = arith.constant 5.120000e+02 : f32
    %277 = vector.broadcast %cst_91 : f32 to vector<16x1xf32>
    %278 = arith.divf %276, %277 : vector<16x1xf32>
    %cst_92 = arith.constant 9.99999974E-6 : f32
    %279 = vector.broadcast %cst_92 : f32 to vector<16x1xf32>
    %280 = arith.addf %278, %279 : vector<16x1xf32>
    %281 = math.rsqrt %280 : vector<16x1xf32>
    %282 = vector.broadcast %281 : vector<16x1xf32> to vector<16x512xf32>
    %283 = arith.mulf %273, %282 : vector<16x512xf32>
    %284 = vector.broadcast %266 : vector<1x512xf32> to vector<16x512xf32>
    %285 = arith.mulf %283, %284 : vector<16x512xf32>
    %286 = vector.broadcast %267 : vector<1x512xf32> to vector<16x512xf32>
    %287 = arith.addf %285, %286 : vector<16x512xf32>
    %288 = vector.extract_strided_slice %287 {offsets = [1, 0], sizes = [1, 512], strides = [1, 1]} : vector<16x512xf32> to vector<1x512xf32>
    %289 = vector.extract_strided_slice %287 {offsets = [9, 0], sizes = [1, 512], strides = [1, 1]} : vector<16x512xf32> to vector<1x512xf32>
    %290 = tpu.concatenate %288, %289 in 0 : vector<1x512xf32>, vector<1x512xf32> -> vector<2x512xf32>
    %291 = arith.truncf %290 : vector<2x512xf32> to vector<2x512xbf16>
    %c0_93 = arith.constant 0 : index
    %c0_94 = arith.constant 0 : index
    %292 = vector.load %arg20[%c0_93, %c0_94] : memref<512x32xbf16, #tpu.memory_space<vmem>>, vector<512x32xbf16>
    %cst_95 = arith.constant dense<0.000000e+00> : vector<2x32xf32>
    %293 = tpu.matmul %291, %292, %cst_95 {dimension_numbers = #tpu.dot_dimension_numbers<[1], [0], [0], [1], [0, 0, 1, 1], [], []>} : vector<2x512xbf16>, vector<512x32xbf16>, vector<2x32xf32> -> vector<2x32xf32>
    %c0_96 = arith.constant 0 : index
    %c0_97 = arith.constant 0 : index
    %294 = vector.load %arg21[%c0_96, %c0_97] : memref<1x32xf32, #tpu.memory_space<vmem>>, vector<1x32xf32>
    %295 = vector.broadcast %294 : vector<1x32xf32> to vector<2x32xf32>
    %296 = arith.addf %293, %295 : vector<2x32xf32>
    %c0_98 = arith.constant 0 : index
    %c0_99 = arith.constant 0 : index
    %297 = vector.load %arg1[%c0_98, %c0_99] : memref<2x64xf32, #tpu.memory_space<vmem>>, vector<2x64xf32>
    %298 = arith.truncf %297 : vector<2x64xf32> to vector<2x64xbf16>
    %c0_100 = arith.constant 0 : index
    %c0_101 = arith.constant 0 : index
    %299 = vector.load %arg22[%c0_100, %c0_101] : memref<64x32xbf16, #tpu.memory_space<vmem>>, vector<64x32xbf16>
    %cst_102 = arith.constant dense<0.000000e+00> : vector<2x32xf32>
    %300 = tpu.matmul %298, %299, %cst_102 {dimension_numbers = #tpu.dot_dimension_numbers<[1], [0], [0], [1], [0, 0, 1, 1], [], []>} : vector<2x64xbf16>, vector<64x32xbf16>, vector<2x32xf32> -> vector<2x32xf32>
    %c0_103 = arith.constant 0 : index
    %c0_104 = arith.constant 0 : index
    %301 = vector.load %arg23[%c0_103, %c0_104] : memref<1x32xf32, #tpu.memory_space<vmem>>, vector<1x32xf32>
    %302 = vector.broadcast %301 : vector<1x32xf32> to vector<2x32xf32>
    %303 = arith.addf %300, %302 : vector<2x32xf32>
    %304 = arith.mulf %296, %303 : vector<2x32xf32>
    %305 = arith.truncf %296 : vector<2x32xf32> to vector<2x32xbf16>
    %c0_105 = arith.constant 0 : index
    %c0_106 = arith.constant 0 : index
    %306 = vector.load %arg24[%c0_105, %c0_106] : memref<32x32xbf16, #tpu.memory_space<vmem>>, vector<32x32xbf16>
    %cst_107 = arith.constant dense<0.000000e+00> : vector<2x32xf32>
    %307 = tpu.matmul %305, %306, %cst_107 {dimension_numbers = #tpu.dot_dimension_numbers<[1], [0], [0], [1], [0, 0, 1, 1], [], []>} : vector<2x32xbf16>, vector<32x32xbf16>, vector<2x32xf32> -> vector<2x32xf32>
    %308 = arith.truncf %303 : vector<2x32xf32> to vector<2x32xbf16>
    %c0_108 = arith.constant 0 : index
    %c0_109 = arith.constant 0 : index
    %309 = vector.load %arg25[%c0_108, %c0_109] : memref<32x32xbf16, #tpu.memory_space<vmem>>, vector<32x32xbf16>
    %cst_110 = arith.constant dense<0.000000e+00> : vector<2x32xf32>
    %310 = tpu.matmul %308, %309, %cst_110 {dimension_numbers = #tpu.dot_dimension_numbers<[1], [0], [0], [1], [0, 0, 1, 1], [], []>} : vector<2x32xbf16>, vector<32x32xbf16>, vector<2x32xf32> -> vector<2x32xf32>
    %311 = arith.addf %307, %310 : vector<2x32xf32>
    %c0_111 = arith.constant 0 : index
    %c0_112 = arith.constant 0 : index
    %312 = vector.load %arg26[%c0_111, %c0_112] : memref<1x32xf32, #tpu.memory_space<vmem>>, vector<1x32xf32>
    %313 = vector.broadcast %312 : vector<1x32xf32> to vector<2x32xf32>
    %314 = arith.addf %311, %313 : vector<2x32xf32>
    %cst_113 = arith.constant 0.999994993 : f32
    %315 = vector.broadcast %cst_113 : f32 to vector<2x32xf32>
    %316 = arith.mulf %314, %315 : vector<2x32xf32>
    %cst_114 = arith.constant 0.000000e+00 : f32
    %317 = vector.broadcast %cst_114 : f32 to vector<2x32xf32>
    %318 = arith.maximumf %316, %317 : vector<2x32xf32>
    %c0_115 = arith.constant 0 : index
    %c0_116 = arith.constant 0 : index
    %319 = vector.load %arg27[%c0_115, %c0_116] : memref<1x32xf32, #tpu.memory_space<vmem>>, vector<1x32xf32>
    %320 = vector.broadcast %319 : vector<1x32xf32> to vector<2x32xf32>
    %321 = arith.mulf %318, %320 : vector<2x32xf32>
    %c0_117 = arith.constant 0 : index
    %c0_118 = arith.constant 0 : index
    %322 = vector.load %arg28[%c0_117, %c0_118] : memref<1x32xf32, #tpu.memory_space<vmem>>, vector<1x32xf32>
    %323 = vector.broadcast %322 : vector<1x32xf32> to vector<2x32xf32>
    %324 = arith.mulf %304, %323 : vector<2x32xf32>
    %325 = arith.addf %321, %324 : vector<2x32xf32>
    %cst_119 = arith.constant dense<0.000000e+00> : vector<2xf32>
    %326 = vector.multi_reduction <add>, %325, %cst_119 [1] : vector<2x32xf32> to vector<2xf32>
    %327 = vector.shape_cast %326 : vector<2xf32> to vector<2x1xf32>
    %c0_120 = arith.constant 0 : index
    %c0_121 = arith.constant 0 : index
    %328 = vector.load %arg29[%c0_120, %c0_121] : memref<1x1xf32, #tpu.memory_space<vmem>>, vector<1x1xf32>
    %329 = vector.broadcast %328 : vector<1x1xf32> to vector<2x1xf32>
    %330 = arith.addf %327, %329 : vector<2x1xf32>
    %cst_122 = arith.constant 0.000000e+00 : f32
    %331 = vector.broadcast %cst_122 : f32 to vector<2x1xf32>
    %332 = arith.subf %331, %330 : vector<2x1xf32>
    %333 = math.exp %332 : vector<2x1xf32>
    %cst_123 = arith.constant 1.000000e+00 : f32
    %334 = vector.broadcast %cst_123 : f32 to vector<2x1xf32>
    %335 = arith.addf %334, %333 : vector<2x1xf32>
    %cst_124 = arith.constant 1.000000e+00 : f32
    %336 = vector.broadcast %cst_124 : f32 to vector<2x1xf32>
    %337 = arith.divf %336, %335 : vector<2x1xf32>
    %c0_125 = arith.constant 0 : index
    %c0_126 = arith.constant 0 : index
    %338 = vector.load %arg30[%c0_125, %c0_126] : memref<2x1xf32, #tpu.memory_space<vmem>>, vector<2x1xf32>
    tpu.vector_store %arg30[%c0_125, %c0_126], %337 {strides = array<i32>} : memref<2x1xf32, #tpu.memory_space<vmem>>, vector<2x1xf32>,
    return
  }
}

</mosaic_0001>

<llo_original>
// kernel: recommender_forward.1
$region0: #{recommender_forward.1}
  #allocation0 [shape = 'u32[]', space=smem, size = 0x4, offset = 0x4, fixed_abs, tag = 'smem constant byte address 0x4 - core index']
  #allocation1 [shape = 'u32[144,128]{1,0:T(1,128)}', space=vmem, size = 0x12000, scoped, tag = 'internal scratch']
  #allocation2 [shape = 'f32[1,1]{1,0:T(1,128)S(1)}', space=vmem, size = 0x200, scoped, tag = 'scoped memory for recommender_forward.1']
  %s0 = inlined_call_operand.smem [shape: u32[31], index: -1, kind: input, shape index: {}]
  %s1 = sld [smem:[%s0]]
  %s2 = scalar_lea.smem %s0, 1
  %s3 = sld [smem:[%s2]]
  %s4 = scalar_lea.smem %s0, 2
  %s5 = sld [smem:[%s4]]
  %s6 = scalar_lea.smem %s0, 3
  %s7 = sld [smem:[%s6]]
  %s8 = scalar_lea.smem %s0, 4
  %s9 = sld [smem:[%s8]]
  %s10 = scalar_lea.smem %s0, 5
  %s11 = sld [smem:[%s10]]
  %s12 = scalar_lea.smem %s0, 6
  %s13 = sld [smem:[%s12]]
  %s14 = scalar_lea.smem %s0, 7
  %s15 = sld [smem:[%s14]]
  %s16 = scalar_lea.smem %s0, 8
  %s17 = sld [smem:[%s16]]
  %s18 = scalar_lea.smem %s0, 9
  %s19 = sld [smem:[%s18]]
  %s20 = scalar_lea.smem %s0, 10
  %s21 = sld [smem:[%s20]]
  %s22 = scalar_lea.smem %s0, 11
  %s23 = sld [smem:[%s22]]
  %s24 = scalar_lea.smem %s0, 12
  %s25 = sld [smem:[%s24]]
  %s26 = scalar_lea.smem %s0, 13
  %s27 = sld [smem:[%s26]]
  %s28 = scalar_lea.smem %s0, 14
  %s29 = sld [smem:[%s28]]
  %s30 = scalar_lea.smem %s0, 15
  %s31 = sld [smem:[%s30]]
  %s32 = scalar_lea.smem %s0, 16
  %s33 = sld [smem:[%s32]]
  %s34 = scalar_lea.smem %s0, 17
  %s35 = sld [smem:[%s34]]
  %s36 = scalar_lea.smem %s0, 18
  %s37 = sld [smem:[%s36]]
  %s38 = scalar_lea.smem %s0, 19
  %s39 = sld [smem:[%s38]]
  %s40 = scalar_lea.smem %s0, 20
  %s41 = sld [smem:[%s40]]
  %s42 = scalar_lea.smem %s0, 21
  %s43 = sld [smem:[%s42]]
  %s44 = scalar_lea.smem %s0, 22
  %s45 = sld [smem:[%s44]]
  %s46 = scalar_lea.smem %s0, 23
  %s47 = sld [smem:[%s46]]
  %s48 = scalar_lea.smem %s0, 24
  %s49 = sld [smem:[%s48]]
  %s50 = scalar_lea.smem %s0, 25
  %s51 = sld [smem:[%s50]]
  %s52 = scalar_lea.smem %s0, 26
  %s53 = sld [smem:[%s52]]
  %s54 = scalar_lea.smem %s0, 27
  %s55 = sld [smem:[%s54]]
  %s56 = scalar_lea.smem %s0, 28
  %s57 = sld [smem:[%s56]]
  %s58 = scalar_lea.smem %s0, 29
  %s59 = sld [smem:[%s58]]
  %s60 = scalar_lea.smem %s0, 30
  %s61 = sld [smem:[%s60]]
  %s62 = sld [smem:[#allocation0]]
  $region222: #{recommender_forward.1} parent=0
    _
  %s64 = ssub.s32 1, %s62
  %s65 = scalar_select 0, %s64, %s62
  %v66 = vstv %s59
  %67 = vst [vmem:[#allocation2] sm:$0x1] %v66
  $region1: #{recommender_forward.1} parent=0
    #allocation3 [shape = 'u8[32768]{0}', space=vmem, size = 0x8000, scoped, tag = 'input window, operand 0, single buffered']
    #allocation4 [shape = 's32[1]{0}', space=sflag, size = 0x4, scoped, tag = 'scoped memory for recommender_forward.1']
    #allocation5 [shape = 'u8[1024]{0}', space=vmem, size = 0x400, scoped, tag = 'input window, operand 1, single buffered']
    #allocation6 [shape = 's32[1]{0}', space=sflag, size = 0x4, scoped, tag = 'scoped memory for recommender_forward.1']
    #allocation7 [shape = 'u8[2048]{0}', space=vmem, size = 0x800, scoped, tag = 'input window, operand 6, single buffered']
    #allocation8 [shape = 'u8[2048]{0}', space=vmem, size = 0x800, scoped, tag = 'input window, operand 7, single buffered']
    #allocation9 [shape = 's32[1]{0}', space=sflag, size = 0x4, scoped, tag = 'scoped memory for recommender_forward.1']
    #allocation10 [shape = 'u8[1572864]{0}', space=vmem, size = 0x180000, scoped, tag = 'input window, operand 8, single buffered']
    #allocation11 [shape = 'u8[6144]{0}', space=vmem, size = 0x1800, scoped, tag = 'input window, operand 9, single buffered']
    #allocation12 [shape = 's32[1]{0}', space=sflag, size = 0x4, scoped, tag = 'scoped memory for recommender_forward.1']
    #allocation13 [shape = 'u8[524288]{0}', space=vmem, size = 0x80000, scoped, tag = 'input window, operand 10, single buffered']
    #allocation14 [shape = 'u8[2048]{0}', space=vmem, size = 0x800, scoped, tag = 'input window, operand 11, single buffered']
    #allocation15 [shape = 's32[1]{0}', space=sflag, size = 0x4, scoped, tag = 'scoped memory for recommender_forward.1']
    #allocation16 [shape = 'u8[2048]{0}', space=vmem, size = 0x800, scoped, tag = 'input window, operand 12, single buffered']
    #allocation17 [shape = 'u8[2048]{0}', space=vmem, size = 0x800, scoped, tag = 'input window, operand 13, single buffered']
    #allocation18 [shape = 's32[1]{0}', space=sflag, size = 0x4, scoped, tag = 'scoped memory for recommender_forward.1']
    #allocation19 [shape = 'u8[524288]{0}', space=vmem, size = 0x80000, scoped, tag = 'input window, operand 14, single buffered']
    #allocation20 [shape = 'u8[2048]{0}', space=vmem, size = 0x800, scoped, tag = 'input window, operand 15, single buffered']
    #allocation21 [shape = 's32[1]{0}', space=sflag, size = 0x4, scoped, tag = 'scoped memory for recommender_forward.1']
    #allocation22 [shape = 'u8[524288]{0}', space=vmem, size = 0x80000, scoped, tag = 'input window, operand 16, single buffered']
    #allocation23 [shape = 'u8[2048]{0}', space=vmem, size = 0x800, scoped, tag = 'input window, operand 17, single buffered']
    #allocation24 [shape = 's32[1]{0}', space=sflag, size = 0x4, scoped, tag = 'scoped memory for recommender_forward.1']
    #allocation25 [shape = 'u8[2048]{0}', space=vmem, size = 0x800, scoped, tag = 'input window, operand 18, single buffered']
    #allocation26 [shape = 'u8[2048]{0}', space=vmem, size = 0x800, scoped, tag = 'input window, operand 19, single buffered']
    #allocation27 [shape = 's32[1]{0}', space=sflag, size = 0x4, scoped, tag = 'scoped memory for recommender_forward.1']
    #allocation28 [shape = 'u8[512]{0}', space=vmem, size = 0x400, scoped, tag = 'input window, operand 21, single buffered']
    #allocation29 [shape = 'u8[512]{0}', space=vmem, size = 0x400, scoped, tag = 'input window, operand 23, single buffered']
    #allocation30 [shape = 's32[1]{0}', space=sflag, size = 0x4, scoped, tag = 'scoped memory for recommender_forward.1']
    #allocation31 [shape = 'u8[8192]{0}', space=vmem, size = 0x2000, scoped, tag = 'input window, operand 24, single buffered']
    #allocation32 [shape = 'u8[8192]{0}', space=vmem, size = 0x2000, scoped, tag = 'input window, operand 25, single buffered']
    #allocation33 [shape = 's32[1]{0}', space=sflag, size = 0x4, scoped, tag = 'scoped memory for recommender_forward.1']
    #allocation34 [shape = 'u8[512]{0}', space=vmem, size = 0x400, scoped, tag = 'input window, operand 26, single buffered']
    #allocation35 [shape = 'u8[512]{0}', space=vmem, size = 0x400, scoped, tag = 'input window, operand 27, single buffered']
    #allocation36 [shape = 's32[1]{0}', space=sflag, size = 0x4, scoped, tag = 'scoped memory for recommender_forward.1']
    #allocation37 [shape = 'u8[512]{0}', space=vmem, size = 0x400, scoped, tag = 'input window, operand 28, single buffered']
    %68 = vsyncpa [#allocation4], 0
    %69 = vsyncpa [#allocation6], 0
    %70 = vsyncpa [#allocation9], 0
    %71 = vsyncpa [#allocation12], 0
    %72 = vsyncpa [#allocation15], 0
    %73 = vsyncpa [#allocation18], 0
    %74 = vsyncpa [#allocation21], 0
    %75 = vsyncpa [#allocation24], 0
    %76 = vsyncpa [#allocation27], 0
    %77 = vsyncpa [#allocation30], 0
    %78 = vsyncpa [#allocation33], 0
    %79 = vsyncpa [#allocation36], 0
    // Predicated region
    $region2: #{recommender_forward.1} parent=1 // pred_check
      _
    $region3: #{recommender_forward.1} parent=1 // pred_check_branch
      %81 = sbr.rel (0) target = $region5
    $region4: #{recommender_forward.1} parent=1 // pred_region
      %s83 = ssub.s32 1024, 1024
      %84 = vsyncadd [#allocation4], %s83
      %s85 = sshll.u32 [#allocation3], 4
      %s86 = int_to_ptr.vmem [resolvable:$true] %s85
      %91 = dma.hbm_to_vmem [thread:$0]  %s1, 1024, %s86, [#allocation4], 512, 512, 32
    $region5: #{recommender_forward.1} parent=1 // pred_fallthru
      _
    // Predicated region
    $region6: #{recommender_forward.1} parent=1 // pred_check
      _
    $region7: #{recommender_forward.1} parent=1 // pred_check_branch
      %93 = sbr.rel (0) target = $region9
    $region8: #{recommender_forward.1} parent=1 // pred_region
      %s95 = ssub.s32 32, 32
      %96 = vsyncadd [#allocation6], %s95
      %s98 = sshll.u32 [#allocation5], 4
      %s99 = int_to_ptr.vmem [resolvable:$true] %s98
      %101 = dma.hbm_to_vmem [thread:$0]  %s3, 32, %s99, [#allocation6]
    $region9: #{recommender_forward.1} parent=1 // pred_fallthru
      _
    // Predicated region
    $region10: #{recommender_forward.1} parent=1 // pred_check
      _
    $region11: #{recommender_forward.1} parent=1 // pred_check_branch
      %103 = sbr.rel (0) target = $region13
    $region12: #{recommender_forward.1} parent=1 // pred_region
      _
    $region13: #{recommender_forward.1} parent=1 // pred_fallthru
      _
    // Predicated region
    $region14: #{recommender_forward.1} parent=1 // pred_check
      _
    $region15: #{recommender_forward.1} parent=1 // pred_check_branch
      %105 = sbr.rel (0) target = $region17
    $region16: #{recommender_forward.1} parent=1 // pred_region
      _
    $region17: #{recommender_forward.1} parent=1 // pred_fallthru
      _
    // Predicated region
    $region18: #{recommender_forward.1} parent=1 // pred_check
      _
    $region19: #{recommender_forward.1} parent=1 // pred_check_branch
      %107 = sbr.rel (0) target = $region21
    $region20: #{recommender_forward.1} parent=1 // pred_region
      _
    $region21: #{recommender_forward.1} parent=1 // pred_fallthru
      _
    // Predicated region
    $region22: #{recommender_forward.1} parent=1 // pred_check
      _
    $region23: #{recommender_forward.1} parent=1 // pred_check_branch
      %109 = sbr.rel (0) target = $region25
    $region24: #{recommender_forward.1} parent=1 // pred_region
      _
    $region25: #{recommender_forward.1} parent=1 // pred_fallthru
      _
    // Predicated region
    $region26: #{recommender_forward.1} parent=1 // pred_check
      _
    $region27: #{recommender_forward.1} parent=1 // pred_check_branch
      %111 = sbr.rel (0) target = $region29
    $region28: #{recommender_forward.1} parent=1 // pred_region
      %s113 = ssub.s32 64, 64
      %114 = vsyncadd [#allocation6], %s113
      %s116 = sshll.u32 [#allocation7], 4
      %s117 = int_to_ptr.vmem [resolvable:$true] %s116
      %119 = dma.hbm_to_vmem [thread:$0]  %s13, 64, %s117, [#allocation6]
    $region29: #{recommender_forward.1} parent=1 // pred_fallthru
      _
    // Predicated region
    $region30: #{recommender_forward.1} parent=1 // pred_check
      _
    $region31: #{recommender_forward.1} parent=1 // pred_check_branch
      %121 = sbr.rel (0) target = $region33
    $region32: #{recommender_forward.1} parent=1 // pred_region
      %s123 = ssub.s32 64, 64
      %124 = vsyncadd [#allocation9], %s123
      %s126 = sshll.u32 [#allocation8], 4
      %s127 = int_to_ptr.vmem [resolvable:$true] %s126
      %129 = dma.hbm_to_vmem [thread:$0]  %s15, 64, %s127, [#allocation9]
    $region33: #{recommender_forward.1} parent=1 // pred_fallthru
      _
    // Predicated region
    $region34: #{recommender_forward.1} parent=1 // pred_check
      _
    $region35: #{recommender_forward.1} parent=1 // pred_check_branch
      %131 = sbr.rel (0) target = $region37
    $region36: #{recommender_forward.1} parent=1 // pred_region
      %s133 = ssub.s32 49152, 49152
      %134 = vsyncadd [#allocation9], %s133
      %s135 = sshll.u32 [#allocation10], 4
      %s136 = int_to_ptr.vmem [resolvable:$true] %s135
      %141 = dma.hbm_to_vmem [thread:$0]  %s17, 49152, %s136, [#allocation9], 768, 768, 48
    $region37: #{recommender_forward.1} parent=1 // pred_fallthru
      _
    // Predicated region
    $region38: #{recommender_forward.1} parent=1 // pred_check
      _
    $region39: #{recommender_forward.1} parent=1 // pred_check_branch
      %143 = sbr.rel (0) target = $region41
    $region40: #{recommender_forward.1} parent=1 // pred_region
      %s145 = ssub.s32 192, 192
      %146 = vsyncadd [#allocation12], %s145
      %s148 = sshll.u32 [#allocation11], 4
      %s149 = int_to_ptr.vmem [resolvable:$true] %s148
      %151 = dma.hbm_to_vmem [thread:$0]  %s19, 192, %s149, [#allocation12]
    $region41: #{recommender_forward.1} parent=1 // pred_fallthru
      _
    // Predicated region
    $region42: #{recommender_forward.1} parent=1 // pred_check
      _
    $region43: #{recommender_forward.1} parent=1 // pred_check_branch
      %153 = sbr.rel (0) target = $region45
    $region44: #{recommender_forward.1} parent=1 // pred_region
      %s155 = ssub.s32 16384, 16384
      %156 = vsyncadd [#allocation12], %s155
      %s157 = sshll.u32 [#allocation13], 4
      %s158 = int_to_ptr.vmem [resolvable:$true] %s157
      %163 = dma.hbm_to_vmem [thread:$0]  %s21, 16384, %s158, [#allocation12], 256, 256, 16
    $region45: #{recommender_forward.1} parent=1 // pred_fallthru
      _
    // Predicated region
    $region46: #{recommender_forward.1} parent=1 // pred_check
      _
    $region47: #{recommender_forward.1} parent=1 // pred_check_branch
      %165 = sbr.rel (0) target = $region49
    $region48: #{recommender_forward.1} parent=1 // pred_region
      %s167 = ssub.s32 64, 64
      %168 = vsyncadd [#allocation15], %s167
      %s170 = sshll.u32 [#allocation14], 4
      %s171 = int_to_ptr.vmem [resolvable:$true] %s170
      %173 = dma.hbm_to_vmem [thread:$0]  %s23, 64, %s171, [#allocation15]
    $region49: #{recommender_forward.1} parent=1 // pred_fallthru
      _
    // Predicated region
    $region50: #{recommender_forward.1} parent=1 // pred_check
      _
    $region51: #{recommender_forward.1} parent=1 // pred_check_branch
      %175 = sbr.rel (0) target = $region53
    $region52: #{recommender_forward.1} parent=1 // pred_region
      %s177 = ssub.s32 64, 64
      %178 = vsyncadd [#allocation15], %s177
      %s180 = sshll.u32 [#allocation16], 4
      %s181 = int_to_ptr.vmem [resolvable:$true] %s180
      %183 = dma.hbm_to_vmem [thread:$0]  %s25, 64, %s181, [#allocation15]
    $region53: #{recommender_forward.1} parent=1 // pred_fallthru
      _
    // Predicated region
    $region54: #{recommender_forward.1} parent=1 // pred_check
      _
    $region55: #{recommender_forward.1} parent=1 // pred_check_branch
      %185 = sbr.rel (0) target = $region57
    $region56: #{recommender_forward.1} parent=1 // pred_region
      %s187 = ssub.s32 64, 64
      %188 = vsyncadd [#allocation18], %s187
      %s190 = sshll.u32 [#allocation17], 4
      %s191 = int_to_ptr.vmem [resolvable:$true] %s190
      %193 = dma.hbm_to_vmem [thread:$0]  %s27, 64, %s191, [#allocation18]
    $region57: #{recommender_forward.1} parent=1 // pred_fallthru
      _
    // Predicated region
    $region58: #{recommender_forward.1} parent=1 // pred_check
      _
    $region59: #{recommender_forward.1} parent=1 // pred_check_branch
      %195 = sbr.rel (0) target = $region61
    $region60: #{recommender_forward.1} parent=1 // pred_region
      %s197 = ssub.s32 16384, 16384
      %198 = vsyncadd [#allocation18], %s197
      %s199 = sshll.u32 [#allocation19], 4
      %s200 = int_to_ptr.vmem [resolvable:$true] %s199
      %205 = dma.hbm_to_vmem [thread:$0]  %s29, 16384, %s200, [#allocation18], 256, 256, 16
    $region61: #{recommender_forward.1} parent=1 // pred_fallthru
      _
    // Predicated region
    $region62: #{recommender_forward.1} parent=1 // pred_check
      _
    $region63: #{recommender_forward.1} parent=1 // pred_check_branch
      %207 = sbr.rel (0) target = $region65
    $region64: #{recommender_forward.1} parent=1 // pred_region
      %s209 = ssub.s32 64, 64
      %210 = vsyncadd [#allocation21], %s209
      %s212 = sshll.u32 [#allocation20], 4
      %s213 = int_to_ptr.vmem [resolvable:$true] %s212
      %215 = dma.hbm_to_vmem [thread:$0]  %s31, 64, %s213, [#allocation21]
    $region65: #{recommender_forward.1} parent=1 // pred_fallthru
      _
    // Predicated region
    $region66: #{recommender_forward.1} parent=1 // pred_check
      _
    $region67: #{recommender_forward.1} parent=1 // pred_check_branch
      %217 = sbr.rel (0) target = $region69
    $region68: #{recommender_forward.1} parent=1 // pred_region
      %s219 = ssub.s32 16384, 16384
      %220 = vsyncadd [#allocation21], %s219
      %s221 = sshll.u32 [#allocation22], 4
      %s222 = int_to_ptr.vmem [resolvable:$true] %s221
      %227 = dma.hbm_to_vmem [thread:$0]  %s33, 16384, %s222, [#allocation21], 256, 256, 16
    $region69: #{recommender_forward.1} parent=1 // pred_fallthru
      _
    // Predicated region
    $region70: #{recommender_forward.1} parent=1 // pred_check
      _
    $region71: #{recommender_forward.1} parent=1 // pred_check_branch
      %229 = sbr.rel (0) target = $region73
    $region72: #{recommender_forward.1} parent=1 // pred_region
      %s231 = ssub.s32 64, 64
      %232 = vsyncadd [#allocation24], %s231
      %s234 = sshll.u32 [#allocation23], 4
      %s235 = int_to_ptr.vmem [resolvable:$true] %s234
      %237 = dma.hbm_to_vmem [thread:$0]  %s35, 64, %s235, [#allocation24]
    $region73: #{recommender_forward.1} parent=1 // pred_fallthru
      _
    // Predicated region
    $region74: #{recommender_forward.1} parent=1 // pred_check
      _
    $region75: #{recommender_forward.1} parent=1 // pred_check_branch
      %239 = sbr.rel (0) target = $region77
    $region76: #{recommender_forward.1} parent=1 // pred_region
      %s241 = ssub.s32 64, 64
      %242 = vsyncadd [#allocation24], %s241
      %s244 = sshll.u32 [#allocation25], 4
      %s245 = int_to_ptr.vmem [resolvable:$true] %s244
      %247 = dma.hbm_to_vmem [thread:$0]  %s37, 64, %s245, [#allocation24]
    $region77: #{recommender_forward.1} parent=1 // pred_fallthru
      _
    // Predicated region
    $region78: #{recommender_forward.1} parent=1 // pred_check
      _
    $region79: #{recommender_forward.1} parent=1 // pred_check_branch
      %249 = sbr.rel (0) target = $region81
    $region80: #{recommender_forward.1} parent=1 // pred_region
      %s251 = ssub.s32 64, 64
      %252 = vsyncadd [#allocation27], %s251
      %s254 = sshll.u32 [#allocation26], 4
      %s255 = int_to_ptr.vmem [resolvable:$true] %s254
      %257 = dma.hbm_to_vmem [thread:$0]  %s39, 64, %s255, [#allocation27]
    $region81: #{recommender_forward.1} parent=1 // pred_fallthru
      _
    // Predicated region
    $region82: #{recommender_forward.1} parent=1 // pred_check
      _
    $region83: #{recommender_forward.1} parent=1 // pred_check_branch
      %259 = sbr.rel (0) target = $region85
    $region84: #{recommender_forward.1} parent=1 // pred_region
      _
    $region85: #{recommender_forward.1} parent=1 // pred_fallthru
      _
    // Predicated region
    $region86: #{recommender_forward.1} parent=1 // pred_check
      _
    $region87: #{recommender_forward.1} parent=1 // pred_check_branch
      %261 = sbr.rel (0) target = $region89
    $region88: #{recommender_forward.1} parent=1 // pred_region
      %s263 = ssub.s32 16, 16
      %264 = vsyncadd [#allocation27], %s263
      %s266 = sshll.u32 [#allocation28], 4
      %s267 = int_to_ptr.vmem [resolvable:$true] %s266
      %269 = dma.hbm_to_vmem [thread:$0]  %s43, 16, %s267, [#allocation27]
    $region89: #{recommender_forward.1} parent=1 // pred_fallthru
      _
    // Predicated region
    $region90: #{recommender_forward.1} parent=1 // pred_check
      _
    $region91: #{recommender_forward.1} parent=1 // pred_check_branch
      %271 = sbr.rel (0) target = $region93
    $region92: #{recommender_forward.1} parent=1 // pred_region
      _
    $region93: #{recommender_forward.1} parent=1 // pred_fallthru
      _
    // Predicated region
    $region94: #{recommender_forward.1} parent=1 // pred_check
      _
    $region95: #{recommender_forward.1} parent=1 // pred_check_branch
      %273 = sbr.rel (0) target = $region97
    $region96: #{recommender_forward.1} parent=1 // pred_region
      %s275 = ssub.s32 16, 16
      %276 = vsyncadd [#allocation30], %s275
      %s278 = sshll.u32 [#allocation29], 4
      %s279 = int_to_ptr.vmem [resolvable:$true] %s278
      %281 = dma.hbm_to_vmem [thread:$0]  %s47, 16, %s279, [#allocation30]
    $region97: #{recommender_forward.1} parent=1 // pred_fallthru
      _
    // Predicated region
    $region98: #{recommender_forward.1} parent=1 // pred_check
      _
    $region99: #{recommender_forward.1} parent=1 // pred_check_branch
      %283 = sbr.rel (0) target = $region101
    $region100: #{recommender_forward.1} parent=1 // pred_region
      %s285 = ssub.s32 256, 256
      %286 = vsyncadd [#allocation30], %s285
      %s287 = sshll.u32 [#allocation31], 4
      %s288 = int_to_ptr.vmem [resolvable:$true] %s287
      %293 = dma.hbm_to_vmem [thread:$0]  %s49, 256, %s288, [#allocation30], 64, 64, 4
    $region101: #{recommender_forward.1} parent=1 // pred_fallthru
      _
    // Predicated region
    $region102: #{recommender_forward.1} parent=1 // pred_check
      _
    $region103: #{recommender_forward.1} parent=1 // pred_check_branch
      %295 = sbr.rel (0) target = $region105
    $region104: #{recommender_forward.1} parent=1 // pred_region
      %s297 = ssub.s32 256, 256
      %298 = vsyncadd [#allocation33], %s297
      %s299 = sshll.u32 [#allocation32], 4
      %s300 = int_to_ptr.vmem [resolvable:$true] %s299
      %305 = dma.hbm_to_vmem [thread:$0]  %s51, 256, %s300, [#allocation33], 64, 64, 4
    $region105: #{recommender_forward.1} parent=1 // pred_fallthru
      _
    // Predicated region
    $region106: #{recommender_forward.1} parent=1 // pred_check
      _
    $region107: #{recommender_forward.1} parent=1 // pred_check_branch
      %307 = sbr.rel (0) target = $region109
    $region108: #{recommender_forward.1} parent=1 // pred_region
      %s309 = ssub.s32 16, 16
      %310 = vsyncadd [#allocation33], %s309
      %s312 = sshll.u32 [#allocation34], 4
      %s313 = int_to_ptr.vmem [resolvable:$true] %s312
      %315 = dma.hbm_to_vmem [thread:$0]  %s53, 16, %s313, [#allocation33]
    $region109: #{recommender_forward.1} parent=1 // pred_fallthru
      _
    // Predicated region
    $region110: #{recommender_forward.1} parent=1 // pred_check
      _
    $region111: #{recommender_forward.1} parent=1 // pred_check_branch
      %317 = sbr.rel (0) target = $region113
    $region112: #{recommender_forward.1} parent=1 // pred_region
      %s319 = ssub.s32 16, 16
      %320 = vsyncadd [#allocation36], %s319
      %s322 = sshll.u32 [#allocation35], 4
      %s323 = int_to_ptr.vmem [resolvable:$true] %s322
      %325 = dma.hbm_to_vmem [thread:$0]  %s55, 16, %s323, [#allocation36]
    $region113: #{recommender_forward.1} parent=1 // pred_fallthru
      _
    // Predicated region
    $region114: #{recommender_forward.1} parent=1 // pred_check
      _
    $region115: #{recommender_forward.1} parent=1 // pred_check_branch
      %327 = sbr.rel (0) target = $region117
    $region116: #{recommender_forward.1} parent=1 // pred_region
      %s329 = ssub.s32 16, 16
      %330 = vsyncadd [#allocation36], %s329
      %s332 = sshll.u32 [#allocation37], 4
      %s333 = int_to_ptr.vmem [resolvable:$true] %s332
      %335 = dma.hbm_to_vmem [thread:$0]  %s57, 16, %s333, [#allocation36]
    $region117: #{recommender_forward.1} parent=1 // pred_fallthru
      _
    // Predicated region
    $region118: #{recommender_forward.1} parent=1 // pred_check
      _
    $region119: #{recommender_forward.1} parent=1 // pred_check_branch
      %337 = sbr.rel (0) target = $region121
    $region120: #{recommender_forward.1} parent=1 // pred_region
      _
    $region121: #{recommender_forward.1} parent=1 // pred_fallthru
      _
    // Predicated region
    $region122: #{recommender_forward.1} parent=1 // pred_check
      _
    $region123: #{recommender_forward.1} parent=1 // pred_check_branch
      %339 = sbr.rel (0) target = $region125
    $region124: #{recommender_forward.1} parent=1 // pred_region
      %340 = dma.done [#allocation4], 1024
    $region125: #{recommender_forward.1} parent=1 // pred_fallthru
      _
    // Predicated region
    $region126: #{recommender_forward.1} parent=1 // pred_check
      _
    $region127: #{recommender_forward.1} parent=1 // pred_check_branch
      %342 = sbr.rel (0) target = $region129
    $region128: #{recommender_forward.1} parent=1 // pred_region
      %343 = dma.done [#allocation6], 32
    $region129: #{recommender_forward.1} parent=1 // pred_fallthru
      _
    // Predicated region
    $region130: #{recommender_forward.1} parent=1 // pred_check
      _
    $region131: #{recommender_forward.1} parent=1 // pred_check_branch
      %345 = sbr.rel (0) target = $region133
    $region132: #{recommender_forward.1} parent=1 // pred_region
      %346 = dma.done [#allocation6], 64
    $region133: #{recommender_forward.1} parent=1 // pred_fallthru
      _
    // Predicated region
    $region134: #{recommender_forward.1} parent=1 // pred_check
      _
    $region135: #{recommender_forward.1} parent=1 // pred_check_branch
      %348 = sbr.rel (0) target = $region137
    $region136: #{recommender_forward.1} parent=1 // pred_region
      %349 = dma.done [#allocation9], 64
    $region137: #{recommender_forward.1} parent=1 // pred_fallthru
      _
    // Predicated region
    $region138: #{recommender_forward.1} parent=1 // pred_check
      _
    $region139: #{recommender_forward.1} parent=1 // pred_check_branch
      %351 = sbr.rel (0) target = $region141
    $region140: #{recommender_forward.1} parent=1 // pred_region
      %352 = dma.done [#allocation9], 49152
    $region141: #{recommender_forward.1} parent=1 // pred_fallthru
      _
    // Predicated region
    $region142: #{recommender_forward.1} parent=1 // pred_check
      _
    $region143: #{recommender_forward.1} parent=1 // pred_check_branch
      %354 = sbr.rel (0) target = $region145
    $region144: #{recommender_forward.1} parent=1 // pred_region
      %355 = dma.done [#allocation12], 192
    $region145: #{recommender_forward.1} parent=1 // pred_fallthru
      _
    // Predicated region
    $region146: #{recommender_forward.1} parent=1 // pred_check
      _
    $region147: #{recommender_forward.1} parent=1 // pred_check_branch
      %357 = sbr.rel (0) target = $region149
    $region148: #{recommender_forward.1} parent=1 // pred_region
      %358 = dma.done [#allocation12], 16384
    $region149: #{recommender_forward.1} parent=1 // pred_fallthru
      _
    // Predicated region
    $region150: #{recommender_forward.1} parent=1 // pred_check
      _
    $region151: #{recommender_forward.1} parent=1 // pred_check_branch
      %360 = sbr.rel (0) target = $region153
    $region152: #{recommender_forward.1} parent=1 // pred_region
      %361 = dma.done [#allocation15], 64
    $region153: #{recommender_forward.1} parent=1 // pred_fallthru
      _
    // Predicated region
    $region154: #{recommender_forward.1} parent=1 // pred_check
      _
    $region155: #{recommender_forward.1} parent=1 // pred_check_branch
      %363 = sbr.rel (0) target = $region157
    $region156: #{recommender_forward.1} parent=1 // pred_region
      %364 = dma.done [#allocation15], 64
    $region157: #{recommender_forward.1} parent=1 // pred_fallthru
      _
    // Predicated region
    $region158: #{recommender_forward.1} parent=1 // pred_check
      _
    $region159: #{recommender_forward.1} parent=1 // pred_check_branch
      %366 = sbr.rel (0) target = $region161
    $region160: #{recommender_forward.1} parent=1 // pred_region
      %367 = dma.done [#allocation18], 64
    $region161: #{recommender_forward.1} parent=1 // pred_fallthru
      _
    // Predicated region
    $region162: #{recommender_forward.1} parent=1 // pred_check
      _
    $region163: #{recommender_forward.1} parent=1 // pred_check_branch
      %369 = sbr.rel (0) target = $region165
    $region164: #{recommender_forward.1} parent=1 // pred_region
      %370 = dma.done [#allocation18], 16384
    $region165: #{recommender_forward.1} parent=1 // pred_fallthru
      _
    // Predicated region
    $region166: #{recommender_forward.1} parent=1 // pred_check
      _
    $region167: #{recommender_forward.1} parent=1 // pred_check_branch
      %372 = sbr.rel (0) target = $region169
    $region168: #{recommender_forward.1} parent=1 // pred_region
      %373 = dma.done [#allocation21], 64
    $region169: #{recommender_forward.1} parent=1 // pred_fallthru
      _
    // Predicated region
    $region170: #{recommender_forward.1} parent=1 // pred_check
      _
    $region171: #{recommender_forward.1} parent=1 // pred_check_branch
      %375 = sbr.rel (0) target = $region173
    $region172: #{recommender_forward.1} parent=1 // pred_region
      %376 = dma.done [#allocation21], 16384
    $region173: #{recommender_forward.1} parent=1 // pred_fallthru
      _
    // Predicated region
    $region174: #{recommender_forward.1} parent=1 // pred_check
      _
    $region175: #{recommender_forward.1} parent=1 // pred_check_branch
      %378 = sbr.rel (0) target = $region177
    $region176: #{recommender_forward.1} parent=1 // pred_region
      %379 = dma.done [#allocation24], 64
    $region177: #{recommender_forward.1} parent=1 // pred_fallthru
      _
    // Predicated region
    $region178: #{recommender_forward.1} parent=1 // pred_check
      _
    $region179: #{recommender_forward.1} parent=1 // pred_check_branch
      %381 = sbr.rel (0) target = $region181
    $region180: #{recommender_forward.1} parent=1 // pred_region
      %382 = dma.done [#allocation24], 64
    $region181: #{recommender_forward.1} parent=1 // pred_fallthru
      _
    // Predicated region
    $region182: #{recommender_forward.1} parent=1 // pred_check
      _
    $region183: #{recommender_forward.1} parent=1 // pred_check_branch
      %384 = sbr.rel (0) target = $region185
    $region184: #{recommender_forward.1} parent=1 // pred_region
      %385 = dma.done [#allocation27], 64
    $region185: #{recommender_forward.1} parent=1 // pred_fallthru
      _
    // Predicated region
    $region186: #{recommender_forward.1} parent=1 // pred_check
      _
    $region187: #{recommender_forward.1} parent=1 // pred_check_branch
      %387 = sbr.rel (0) target = $region189
    $region188: #{recommender_forward.1} parent=1 // pred_region
      %388 = dma.done [#allocation27], 16
    $region189: #{recommender_forward.1} parent=1 // pred_fallthru
      _
    // Predicated region
    $region190: #{recommender_forward.1} parent=1 // pred_check
      _
    $region191: #{recommender_forward.1} parent=1 // pred_check_branch
      %390 = sbr.rel (0) target = $region193
    $region192: #{recommender_forward.1} parent=1 // pred_region
      %391 = dma.done [#allocation30], 16
    $region193: #{recommender_forward.1} parent=1 // pred_fallthru
      _
    // Predicated region
    $region194: #{recommender_forward.1} parent=1 // pred_check
      _
    $region195: #{recommender_forward.1} parent=1 // pred_check_branch
      %393 = sbr.rel (0) target = $region197
    $region196: #{recommender_forward.1} parent=1 // pred_region
      %394 = dma.done [#allocation30], 256
    $region197: #{recommender_forward.1} parent=1 // pred_fallthru
      _
    // Predicated region
    $region198: #{recommender_forward.1} parent=1 // pred_check
      _
    $region199: #{recommender_forward.1} parent=1 // pred_check_branch
      %396 = sbr.rel (0) target = $region201
    $region200: #{recommender_forward.1} parent=1 // pred_region
      %397 = dma.done [#allocation33], 256
    $region201: #{recommender_forward.1} parent=1 // pred_fallthru
      _
    // Predicated region
    $region202: #{recommender_forward.1} parent=1 // pred_check
      _
    $region203: #{recommender_forward.1} parent=1 // pred_check_branch
      %399 = sbr.rel (0) target = $region205
    $region204: #{recommender_forward.1} parent=1 // pred_region
      %400 = dma.done [#allocation33], 16
    $region205: #{recommender_forward.1} parent=1 // pred_fallthru
      _
    // Predicated region
    $region206: #{recommender_forward.1} parent=1 // pred_check
      _
    $region207: #{recommender_forward.1} parent=1 // pred_check_branch
      %402 = sbr.rel (0) target = $region209
    $region208: #{recommender_forward.1} parent=1 // pred_region
      %403 = dma.done [#allocation36], 16
    $region209: #{recommender_forward.1} parent=1 // pred_fallthru
      _
    // Predicated region
    $region210: #{recommender_forward.1} parent=1 // pred_check
      _
    $region211: #{recommender_forward.1} parent=1 // pred_check_branch
      %405 = sbr.rel (0) target = $region213
    $region212: #{recommender_forward.1} parent=1 // pred_region
      %406 = dma.done [#allocation36], 16
    $region213: #{recommender_forward.1} parent=1 // pred_fallthru
      _
    %v408 = vld [vmem:[#allocation3] sm:$0xff]
    %v409 = vld [vmem:[#allocation3 + $0x8] sm:$0xff]
    %v410 = vld [vmem:[#allocation3 + $0x10] sm:$0xff]
    %v411 = vld [vmem:[#allocation3 + $0x18] sm:$0xff]
    %v412 = vld [vmem:[#allocation3 + $0x20] sm:$0xff]
    %v413 = vld [vmem:[#allocation3 + $0x28] sm:$0xff]
    %v414 = vld [vmem:[#allocation3 + $0x30] sm:$0xff]
    %v415 = vld [vmem:[#allocation3 + $0x38] sm:$0xff]
    %v416 = vld [vmem:[#allocation7] sm:$0xf]
    %v417 = vld [vmem:[#allocation8] sm:$0xf]
    %v418 = vadd.f32 %v408, %v409
    %v419 = vadd.f32 %v418, %v410
    %v420 = vadd.f32 %v419, %v411
    %421 = vadd.xlane.f32.xlu0 %v420
    %v422 = vpop.xlane.xlu0 %421
    %v423 = vadd.f32 %v412, %v413
    %v424 = vadd.f32 %v423, %v414
    %v425 = vadd.f32 %v424, %v415
    %426 = vadd.xlane.f32.xlu0 %v425
    %v427 = vpop.xlane.xlu0 %426
    %v428 = vrcp.pop 512.0
    %v429 = vmul.f32 %v422, %v428
    %v430 = vmul.f32 %v427, %v428
    %v431 = vsub.f32 %v408, %v429
    %v432 = vsub.f32 %v409, %v429
    %v433 = vsub.f32 %v410, %v429
    %v434 = vsub.f32 %v411, %v429
    %v435 = vsub.f32 %v412, %v430
    %v436 = vsub.f32 %v413, %v430
    %v437 = vsub.f32 %v414, %v430
    %v438 = vsub.f32 %v415, %v430
    %v439 = vmul.f32 %v431, %v431
    %v440 = vmul.f32 %v432, %v432
    %v441 = vmul.f32 %v433, %v433
    %v442 = vmul.f32 %v434, %v434
    %v443 = vmul.f32 %v435, %v435
    %v444 = vmul.f32 %v436, %v436
    %v445 = vmul.f32 %v437, %v437
    %v446 = vmul.f32 %v438, %v438
    %v447 = vadd.f32 %v439, %v440
    %v448 = vadd.f32 %v447, %v441
    %v449 = vadd.f32 %v448, %v442
    %450 = vadd.xlane.f32.xlu0 %v449
    %v451 = vpop.xlane.xlu0 %450
    %v452 = vadd.f32 %v443, %v444
    %v453 = vadd.f32 %v452, %v445
    %v454 = vadd.f32 %v453, %v446
    %455 = vadd.xlane.f32.xlu0 %v454
    %v456 = vpop.xlane.xlu0 %455
    %v457 = vmul.f32 %v451, %v428
    %v458 = vmul.f32 %v456, %v428
    %v459 = vadd.f32 %v457, 1e-05
    %v460 = vadd.f32 %v458, 1e-05
    %v461 = vrsqrt.pop %v459
    %v462 = vrsqrt.pop %v460
    %v463 = vmul.f32 %v431, %v461
    %v464 = vmul.f32 %v432, %v461
    %v465 = vmul.f32 %v433, %v461
    %v466 = vmul.f32 %v434, %v461
    %v467 = vmul.f32 %v435, %v462
    %v468 = vmul.f32 %v436, %v462
    %v469 = vmul.f32 %v437, %v462
    %v470 = vmul.f32 %v438, %v462
    %v472 = vlaneseq
    %v473 = vshrl.u32 %v472, 7
    %v474 = vsub.s32 0, %v473
    %v475 = vrot.slane %v416, %v474
    %v476 = vlaneseq
    %v477 = vshrl.u32 %v476, 7
    %v478 = vsub.s32 1, %v477
    %v479 = vrot.slane %v416, %v478
    %v480 = vlaneseq
    %v481 = vshrl.u32 %v480, 7
    %v482 = vsub.s32 2, %v481
    %v483 = vrot.slane %v416, %v482
    %v484 = vlaneseq
    %v485 = vshrl.u32 %v484, 7
    %v486 = vsub.s32 3, %v485
    %v487 = vrot.slane %v416, %v486
    %v492 = vmul.f32 %v463, %v475
    %v493 = vmul.f32 %v464, %v479
    %v494 = vmul.f32 %v465, %v483
    %v495 = vmul.f32 %v466, %v487
    %v496 = vmul.f32 %v467, %v475
    %v497 = vmul.f32 %v468, %v479
    %v498 = vmul.f32 %v469, %v483
    %v499 = vmul.f32 %v470, %v487
    %v501 = vlaneseq
    %v502 = vshrl.u32 %v501, 7
    %v503 = vsub.s32 0, %v502
    %v504 = vrot.slane %v417, %v503
    %v505 = vlaneseq
    %v506 = vshrl.u32 %v505, 7
    %v507 = vsub.s32 1, %v506
    %v508 = vrot.slane %v417, %v507
    %v509 = vlaneseq
    %v510 = vshrl.u32 %v509, 7
    %v511 = vsub.s32 2, %v510
    %v512 = vrot.slane %v417, %v511
    %v513 = vlaneseq
    %v514 = vshrl.u32 %v513, 7
    %v515 = vsub.s32 3, %v514
    %v516 = vrot.slane %v417, %v515
    %v521 = vadd.f32 %v492, %v504
    %v522 = vadd.f32 %v493, %v508
    %v523 = vadd.f32 %v494, %v512
    %v524 = vadd.f32 %v495, %v516
    %v525 = vadd.f32 %v496, %v504
    %v526 = vadd.f32 %v497, %v508
    %v527 = vadd.f32 %v498, %v512
    %v528 = vadd.f32 %v499, %v516
    %v529 = vpack.c.bf16 %v525, %v521
    %v530 = vpack.c.bf16 %v526, %v522
    %v531 = vpack.c.bf16 %v527, %v523
    %v532 = vpack.c.bf16 %v528, %v524
    %v533 = vld [vmem:[#allocation10] sm:$0xff]
    %v534 = vld [vmem:[#allocation10 + $0x8] sm:$0xff]
    %v535 = vld [vmem:[#allocation10 + $0x10] sm:$0xff]
    %v536 = vld [vmem:[#allocation10 + $0x18] sm:$0xff]
    %v537 = vld [vmem:[#allocation10 + $0x20] sm:$0xff]
    %v538 = vld [vmem:[#allocation10 + $0x28] sm:$0xff]
    %v539 = vld [vmem:[#allocation10 + $0x30] sm:$0xff]
    %v540 = vld [vmem:[#allocation10 + $0x38] sm:$0xff]
    %v541 = vld [vmem:[#allocation10 + $0x40] sm:$0xff]
    %v542 = vld [vmem:[#allocation10 + $0x48] sm:$0xff]
    %v543 = vld [vmem:[#allocation10 + $0x50] sm:$0xff]
    %v544 = vld [vmem:[#allocation10 + $0x58] sm:$0xff]
    %v545 = vld [vmem:[#allocation10 + $0x60] sm:$0xff]
    %v546 = vld [vmem:[#allocation10 + $0x68] sm:$0xff]
    %v547 = vld [vmem:[#allocation10 + $0x70] sm:$0xff]
    %v548 = vld [vmem:[#allocation10 + $0x78] sm:$0xff]
    %v549 = vld [vmem:[#allocation10 + $0x80] sm:$0xff]
    %v550 = vld [vmem:[#allocation10 + $0x88] sm:$0xff]
    %v551 = vld [vmem:[#allocation10 + $0x90] sm:$0xff]
    %v552 = vld [vmem:[#allocation10 + $0x98] sm:$0xff]
    %v553 = vld [vmem:[#allocation10 + $0xa0] sm:$0xff]
    %v554 = vld [vmem:[#allocation10 + $0xa8] sm:$0xff]
    %v555 = vld [vmem:[#allocation10 + $0xb0] sm:$0xff]
    %v556 = vld [vmem:[#allocation10 + $0xb8] sm:$0xff]
    %v557 = vld [vmem:[#allocation10 + $0xc0] sm:$0xff]
    %v558 = vld [vmem:[#allocation10 + $0xc8] sm:$0xff]
    %v559 = vld [vmem:[#allocation10 + $0xd0] sm:$0xff]
    %v560 = vld [vmem:[#allocation10 + $0xd8] sm:$0xff]
    %v561 = vld [vmem:[#allocation10 + $0xe0] sm:$0xff]
    %v562 = vld [vmem:[#allocation10 + $0xe8] sm:$0xff]
    %v563 = vld [vmem:[#allocation10 + $0xf0] sm:$0xff]
    %v564 = vld [vmem:[#allocation10 + $0xf8] sm:$0xff]
    %v565 = vld [vmem:[#allocation10 + $0x100] sm:$0xff]
    %v566 = vld [vmem:[#allocation10 + $0x108] sm:$0xff]
    %v567 = vld [vmem:[#allocation10 + $0x110] sm:$0xff]
    %v568 = vld [vmem:[#allocation10 + $0x118] sm:$0xff]
    %v569 = vld [vmem:[#allocation10 + $0x120] sm:$0xff]
    %v570 = vld [vmem:[#allocation10 + $0x128] sm:$0xff]
    %v571 = vld [vmem:[#allocation10 + $0x130] sm:$0xff]
    %v572 = vld [vmem:[#allocation10 + $0x138] sm:$0xff]
    %v573 = vld [vmem:[#allocation10 + $0x140] sm:$0xff]
    %v574 = vld [vmem:[#allocation10 + $0x148] sm:$0xff]
    %v575 = vld [vmem:[#allocation10 + $0x150] sm:$0xff]
    %v576 = vld [vmem:[#allocation10 + $0x158] sm:$0xff]
    %v577 = vld [vmem:[#allocation10 + $0x160] sm:$0xff]
    %v578 = vld [vmem:[#allocation10 + $0x168] sm:$0xff]
    %v579 = vld [vmem:[#allocation10 + $0x170] sm:$0xff]
    %v580 = vld [vmem:[#allocation10 + $0x178] sm:$0xff]
    %v581 = vld [vmem:[#allocation10 + $0x180] sm:$0xff]
    %v582 = vld [vmem:[#allocation10 + $0x188] sm:$0xff]
    %v583 = vld [vmem:[#allocation10 + $0x190] sm:$0xff]
    %v584 = vld [vmem:[#allocation10 + $0x198] sm:$0xff]
    %v585 = vld [vmem:[#allocation10 + $0x1a0] sm:$0xff]
    %v586 = vld [vmem:[#allocation10 + $0x1a8] sm:$0xff]
    %v587 = vld [vmem:[#allocation10 + $0x1b0] sm:$0xff]
    %v588 = vld [vmem:[#allocation10 + $0x1b8] sm:$0xff]
    %v589 = vld [vmem:[#allocation10 + $0x1c0] sm:$0xff]
    %v590 = vld [vmem:[#allocation10 + $0x1c8] sm:$0xff]
    %v591 = vld [vmem:[#allocation10 + $0x1d0] sm:$0xff]
    %v592 = vld [vmem:[#allocation10 + $0x1d8] sm:$0xff]
    %v593 = vld [vmem:[#allocation10 + $0x1e0] sm:$0xff]
    %v594 = vld [vmem:[#allocation10 + $0x1e8] sm:$0xff]
    %v595 = vld [vmem:[#allocation10 + $0x1f0] sm:$0xff]
    %v596 = vld [vmem:[#allocation10 + $0x1f8] sm:$0xff]
    %v597 = vld [vmem:[#allocation10 + $0x200] sm:$0xff]
    %v598 = vld [vmem:[#allocation10 + $0x208] sm:$0xff]
    %v599 = vld [vmem:[#allocation10 + $0x210] sm:$0xff]
    %v600 = vld [vmem:[#allocation10 + $0x218] sm:$0xff]
    %v601 = vld [vmem:[#allocation10 + $0x220] sm:$0xff]
    %v602 = vld [vmem:[#allocation10 + $0x228] sm:$0xff]
    %v603 = vld [vmem:[#allocation10 + $0x230] sm:$0xff]
    %v604 = vld [vmem:[#allocation10 + $0x238] sm:$0xff]
    %v605 = vld [vmem:[#allocation10 + $0x240] sm:$0xff]
    %v606 = vld [vmem:[#allocation10 + $0x248] sm:$0xff]
    %v607 = vld [vmem:[#allocation10 + $0x250] sm:$0xff]
    %v608 = vld [vmem:[#allocation10 + $0x258] sm:$0xff]
    %v609 = vld [vmem:[#allocation10 + $0x260] sm:$0xff]
    %v610 = vld [vmem:[#allocation10 + $0x268] sm:$0xff]
    %v611 = vld [vmem:[#allocation10 + $0x270] sm:$0xff]
    %v612 = vld [vmem:[#allocation10 + $0x278] sm:$0xff]
    %v613 = vld [vmem:[#allocation10 + $0x280] sm:$0xff]
    %v614 = vld [vmem:[#allocation10 + $0x288] sm:$0xff]
    %v615 = vld [vmem:[#allocation10 + $0x290] sm:$0xff]
    %v616 = vld [vmem:[#allocation10 + $0x298] sm:$0xff]
    %v617 = vld [vmem:[#allocation10 + $0x2a0] sm:$0xff]
    %v618 = vld [vmem:[#allocation10 + $0x2a8] sm:$0xff]
    %v619 = vld [vmem:[#allocation10 + $0x2b0] sm:$0xff]
    %v620 = vld [vmem:[#allocation10 + $0x2b8] sm:$0xff]
    %v621 = vld [vmem:[#allocation10 + $0x2c0] sm:$0xff]
    %v622 = vld [vmem:[#allocation10 + $0x2c8] sm:$0xff]
    %v623 = vld [vmem:[#allocation10 + $0x2d0] sm:$0xff]
    %v624 = vld [vmem:[#allocation10 + $0x2d8] sm:$0xff]
    %v625 = vld [vmem:[#allocation10 + $0x2e0] sm:$0xff]
    %v626 = vld [vmem:[#allocation10 + $0x2e8] sm:$0xff]
    %v627 = vld [vmem:[#allocation10 + $0x2f0] sm:$0xff]
    %v628 = vld [vmem:[#allocation10 + $0x2f8] sm:$0xff]
    %v629 = vld [vmem:[#allocation10 + $0x300] sm:$0xff]
    %v630 = vld [vmem:[#allocation10 + $0x308] sm:$0xff]
    %v631 = vld [vmem:[#allocation10 + $0x310] sm:$0xff]
    %v632 = vld [vmem:[#allocation10 + $0x318] sm:$0xff]
    %v633 = vld [vmem:[#allocation10 + $0x320] sm:$0xff]
    %v634 = vld [vmem:[#allocation10 + $0x328] sm:$0xff]
    %v635 = vld [vmem:[#allocation10 + $0x330] sm:$0xff]
    %v636 = vld [vmem:[#allocation10 + $0x338] sm:$0xff]
    %v637 = vld [vmem:[#allocation10 + $0x340] sm:$0xff]
    %v638 = vld [vmem:[#allocation10 + $0x348] sm:$0xff]
    %v639 = vld [vmem:[#allocation10 + $0x350] sm:$0xff]
    %v640 = vld [vmem:[#allocation10 + $0x358] sm:$0xff]
    %v641 = vld [vmem:[#allocation10 + $0x360] sm:$0xff]
    %v642 = vld [vmem:[#allocation10 + $0x368] sm:$0xff]
    %v643 = vld [vmem:[#allocation10 + $0x370] sm:$0xff]
    %v644 = vld [vmem:[#allocation10 + $0x378] sm:$0xff]
    %v645 = vld [vmem:[#allocation10 + $0x380] sm:$0xff]
    %v646 = vld [vmem:[#allocation10 + $0x388] sm:$0xff]
    %v647 = vld [vmem:[#allocation10 + $0x390] sm:$0xff]
    %v648 = vld [vmem:[#allocation10 + $0x398] sm:$0xff]
    %v649 = vld [vmem:[#allocation10 + $0x3a0] sm:$0xff]
    %v650 = vld [vmem:[#allocation10 + $0x3a8] sm:$0xff]
    %v651 = vld [vmem:[#allocation10 + $0x3b0] sm:$0xff]
    %v652 = vld [vmem:[#allocation10 + $0x3b8] sm:$0xff]
    %v653 = vld [vmem:[#allocation10 + $0x3c0] sm:$0xff]
    %v654 = vld [vmem:[#allocation10 + $0x3c8] sm:$0xff]
    %v655 = vld [vmem:[#allocation10 + $0x3d0] sm:$0xff]
    %v656 = vld [vmem:[#allocation10 + $0x3d8] sm:$0xff]
    %v657 = vld [vmem:[#allocation10 + $0x3e0] sm:$0xff]
    %v658 = vld [vmem:[#allocation10 + $0x3e8] sm:$0xff]
    %v659 = vld [vmem:[#allocation10 + $0x3f0] sm:$0xff]
    %v660 = vld [vmem:[#allocation10 + $0x3f8] sm:$0xff]
    %v661 = vld [vmem:[#allocation10 + $0x400] sm:$0xff]
    %v662 = vld [vmem:[#allocation10 + $0x408] sm:$0xff]
    %v663 = vld [vmem:[#allocation10 + $0x410] sm:$0xff]
    %v664 = vld [vmem:[#allocation10 + $0x418] sm:$0xff]
    %v665 = vld [vmem:[#allocation10 + $0x420] sm:$0xff]
    %v666 = vld [vmem:[#allocation10 + $0x428] sm:$0xff]
    %v667 = vld [vmem:[#allocation10 + $0x430] sm:$0xff]
    %v668 = vld [vmem:[#allocation10 + $0x438] sm:$0xff]
    %v669 = vld [vmem:[#allocation10 + $0x440] sm:$0xff]
    %v670 = vld [vmem:[#allocation10 + $0x448] sm:$0xff]
    %v671 = vld [vmem:[#allocation10 + $0x450] sm:$0xff]
    %v672 = vld [vmem:[#allocation10 + $0x458] sm:$0xff]
    %v673 = vld [vmem:[#allocation10 + $0x460] sm:$0xff]
    %v674 = vld [vmem:[#allocation10 + $0x468] sm:$0xff]
    %v675 = vld [vmem:[#allocation10 + $0x470] sm:$0xff]
    %v676 = vld [vmem:[#allocation10 + $0x478] sm:$0xff]
    %v677 = vld [vmem:[#allocation10 + $0x480] sm:$0xff]
    %v678 = vld [vmem:[#allocation10 + $0x488] sm:$0xff]
    %v679 = vld [vmem:[#allocation10 + $0x490] sm:$0xff]
    %v680 = vld [vmem:[#allocation10 + $0x498] sm:$0xff]
    %v681 = vld [vmem:[#allocation10 + $0x4a0] sm:$0xff]
    %v682 = vld [vmem:[#allocation10 + $0x4a8] sm:$0xff]
    %v683 = vld [vmem:[#allocation10 + $0x4b0] sm:$0xff]
    %v684 = vld [vmem:[#allocation10 + $0x4b8] sm:$0xff]
    %v685 = vld [vmem:[#allocation10 + $0x4c0] sm:$0xff]
    %v686 = vld [vmem:[#allocation10 + $0x4c8] sm:$0xff]
    %v687 = vld [vmem:[#allocation10 + $0x4d0] sm:$0xff]
    %v688 = vld [vmem:[#allocation10 + $0x4d8] sm:$0xff]
    %v689 = vld [vmem:[#allocation10 + $0x4e0] sm:$0xff]
    %v690 = vld [vmem:[#allocation10 + $0x4e8] sm:$0xff]
    %v691 = vld [vmem:[#allocation10 + $0x4f0] sm:$0xff]
    %v692 = vld [vmem:[#allocation10 + $0x4f8] sm:$0xff]
    %v693 = vld [vmem:[#allocation10 + $0x500] sm:$0xff]
    %v694 = vld [vmem:[#allocation10 + $0x508] sm:$0xff]
    %v695 = vld [vmem:[#allocation10 + $0x510] sm:$0xff]
    %v696 = vld [vmem:[#allocation10 + $0x518] sm:$0xff]
    %v697 = vld [vmem:[#allocation10 + $0x520] sm:$0xff]
    %v698 = vld [vmem:[#allocation10 + $0x528] sm:$0xff]
    %v699 = vld [vmem:[#allocation10 + $0x530] sm:$0xff]
    %v700 = vld [vmem:[#allocation10 + $0x538] sm:$0xff]
    %v701 = vld [vmem:[#allocation10 + $0x540] sm:$0xff]
    %v702 = vld [vmem:[#allocation10 + $0x548] sm:$0xff]
    %v703 = vld [vmem:[#allocation10 + $0x550] sm:$0xff]
    %v704 = vld [vmem:[#allocation10 + $0x558] sm:$0xff]
    %v705 = vld [vmem:[#allocation10 + $0x560] sm:$0xff]
    %v706 = vld [vmem:[#allocation10 + $0x568] sm:$0xff]
    %v707 = vld [vmem:[#allocation10 + $0x570] sm:$0xff]
    %v708 = vld [vmem:[#allocation10 + $0x578] sm:$0xff]
    %v709 = vld [vmem:[#allocation10 + $0x580] sm:$0xff]
    %v710 = vld [vmem:[#allocation10 + $0x588] sm:$0xff]
    %v711 = vld [vmem:[#allocation10 + $0x590] sm:$0xff]
    %v712 = vld [vmem:[#allocation10 + $0x598] sm:$0xff]
    %v713 = vld [vmem:[#allocation10 + $0x5a0] sm:$0xff]
    %v714 = vld [vmem:[#allocation10 + $0x5a8] sm:$0xff]
    %v715 = vld [vmem:[#allocation10 + $0x5b0] sm:$0xff]
    %v716 = vld [vmem:[#allocation10 + $0x5b8] sm:$0xff]
    %v717 = vld [vmem:[#allocation10 + $0x5c0] sm:$0xff]
    %v718 = vld [vmem:[#allocation10 + $0x5c8] sm:$0xff]
    %v719 = vld [vmem:[#allocation10 + $0x5d0] sm:$0xff]
    %v720 = vld [vmem:[#allocation10 + $0x5d8] sm:$0xff]
    %v721 = vld [vmem:[#allocation10 + $0x5e0] sm:$0xff]
    %v722 = vld [vmem:[#allocation10 + $0x5e8] sm:$0xff]
    %v723 = vld [vmem:[#allocation10 + $0x5f0] sm:$0xff]
    %v724 = vld [vmem:[#allocation10 + $0x5f8] sm:$0xff]
    %v725 = vld [vmem:[#allocation10 + $0x600] sm:$0xff]
    %v726 = vld [vmem:[#allocation10 + $0x608] sm:$0xff]
    %v727 = vld [vmem:[#allocation10 + $0x610] sm:$0xff]
    %v728 = vld [vmem:[#allocation10 + $0x618] sm:$0xff]
    %v729 = vld [vmem:[#allocation10 + $0x620] sm:$0xff]
    %v730 = vld [vmem:[#allocation10 + $0x628] sm:$0xff]
    %v731 = vld [vmem:[#allocation10 + $0x630] sm:$0xff]
    %v732 = vld [vmem:[#allocation10 + $0x638] sm:$0xff]
    %v733 = vld [vmem:[#allocation10 + $0x640] sm:$0xff]
    %v734 = vld [vmem:[#allocation10 + $0x648] sm:$0xff]
    %v735 = vld [vmem:[#allocation10 + $0x650] sm:$0xff]
    %v736 = vld [vmem:[#allocation10 + $0x658] sm:$0xff]
    %v737 = vld [vmem:[#allocation10 + $0x660] sm:$0xff]
    %v738 = vld [vmem:[#allocation10 + $0x668] sm:$0xff]
    %v739 = vld [vmem:[#allocation10 + $0x670] sm:$0xff]
    %v740 = vld [vmem:[#allocation10 + $0x678] sm:$0xff]
    %v741 = vld [vmem:[#allocation10 + $0x680] sm:$0xff]
    %v742 = vld [vmem:[#allocation10 + $0x688] sm:$0xff]
    %v743 = vld [vmem:[#allocation10 + $0x690] sm:$0xff]
    %v744 = vld [vmem:[#allocation10 + $0x698] sm:$0xff]
    %v745 = vld [vmem:[#allocation10 + $0x6a0] sm:$0xff]
    %v746 = vld [vmem:[#allocation10 + $0x6a8] sm:$0xff]
    %v747 = vld [vmem:[#allocation10 + $0x6b0] sm:$0xff]
    %v748 = vld [vmem:[#allocation10 + $0x6b8] sm:$0xff]
    %v749 = vld [vmem:[#allocation10 + $0x6c0] sm:$0xff]
    %v750 = vld [vmem:[#allocation10 + $0x6c8] sm:$0xff]
    %v751 = vld [vmem:[#allocation10 + $0x6d0] sm:$0xff]
    %v752 = vld [vmem:[#allocation10 + $0x6d8] sm:$0xff]
    %v753 = vld [vmem:[#allocation10 + $0x6e0] sm:$0xff]
    %v754 = vld [vmem:[#allocation10 + $0x6e8] sm:$0xff]
    %v755 = vld [vmem:[#allocation10 + $0x6f0] sm:$0xff]
    %v756 = vld [vmem:[#allocation10 + $0x6f8] sm:$0xff]
    %v757 = vld [vmem:[#allocation10 + $0x700] sm:$0xff]
    %v758 = vld [vmem:[#allocation10 + $0x708] sm:$0xff]
    %v759 = vld [vmem:[#allocation10 + $0x710] sm:$0xff]
    %v760 = vld [vmem:[#allocation10 + $0x718] sm:$0xff]
    %v761 = vld [vmem:[#allocation10 + $0x720] sm:$0xff]
    %v762 = vld [vmem:[#allocation10 + $0x728] sm:$0xff]
    %v763 = vld [vmem:[#allocation10 + $0x730] sm:$0xff]
    %v764 = vld [vmem:[#allocation10 + $0x738] sm:$0xff]
    %v765 = vld [vmem:[#allocation10 + $0x740] sm:$0xff]
    %v766 = vld [vmem:[#allocation10 + $0x748] sm:$0xff]
    %v767 = vld [vmem:[#allocation10 + $0x750] sm:$0xff]
    %v768 = vld [vmem:[#allocation10 + $0x758] sm:$0xff]
    %v769 = vld [vmem:[#allocation10 + $0x760] sm:$0xff]
    %v770 = vld [vmem:[#allocation10 + $0x768] sm:$0xff]
    %v771 = vld [vmem:[#allocation10 + $0x770] sm:$0xff]
    %v772 = vld [vmem:[#allocation10 + $0x778] sm:$0xff]
    %v773 = vld [vmem:[#allocation10 + $0x780] sm:$0xff]
    %v774 = vld [vmem:[#allocation10 + $0x788] sm:$0xff]
    %v775 = vld [vmem:[#allocation10 + $0x790] sm:$0xff]
    %v776 = vld [vmem:[#allocation10 + $0x798] sm:$0xff]
    %v777 = vld [vmem:[#allocation10 + $0x7a0] sm:$0xff]
    %v778 = vld [vmem:[#allocation10 + $0x7a8] sm:$0xff]
    %v779 = vld [vmem:[#allocation10 + $0x7b0] sm:$0xff]
    %v780 = vld [vmem:[#allocation10 + $0x7b8] sm:$0xff]
    %v781 = vld [vmem:[#allocation10 + $0x7c0] sm:$0xff]
    %v782 = vld [vmem:[#allocation10 + $0x7c8] sm:$0xff]
    %v783 = vld [vmem:[#allocation10 + $0x7d0] sm:$0xff]
    %v784 = vld [vmem:[#allocation10 + $0x7d8] sm:$0xff]
    %v785 = vld [vmem:[#allocation10 + $0x7e0] sm:$0xff]
    %v786 = vld [vmem:[#allocation10 + $0x7e8] sm:$0xff]
    %v787 = vld [vmem:[#allocation10 + $0x7f0] sm:$0xff]
    %v788 = vld [vmem:[#allocation10 + $0x7f8] sm:$0xff]
    %v789 = vld [vmem:[#allocation10 + $0x800] sm:$0xff]
    %v790 = vld [vmem:[#allocation10 + $0x808] sm:$0xff]
    %v791 = vld [vmem:[#allocation10 + $0x810] sm:$0xff]
    %v792 = vld [vmem:[#allocation10 + $0x818] sm:$0xff]
    %v793 = vld [vmem:[#allocation10 + $0x820] sm:$0xff]
    %v794 = vld [vmem:[#allocation10 + $0x828] sm:$0xff]
    %v795 = vld [vmem:[#allocation10 + $0x830] sm:$0xff]
    %v796 = vld [vmem:[#allocation10 + $0x838] sm:$0xff]
    %v797 = vld [vmem:[#allocation10 + $0x840] sm:$0xff]
    %v798 = vld [vmem:[#allocation10 + $0x848] sm:$0xff]
    %v799 = vld [vmem:[#allocation10 + $0x850] sm:$0xff]
    %v800 = vld [vmem:[#allocation10 + $0x858] sm:$0xff]
    %v801 = vld [vmem:[#allocation10 + $0x860] sm:$0xff]
    %v802 = vld [vmem:[#allocation10 + $0x868] sm:$0xff]
    %v803 = vld [vmem:[#allocation10 + $0x870] sm:$0xff]
    %v804 = vld [vmem:[#allocation10 + $0x878] sm:$0xff]
    %v805 = vld [vmem:[#allocation10 + $0x880] sm:$0xff]
    %v806 = vld [vmem:[#allocation10 + $0x888] sm:$0xff]
    %v807 = vld [vmem:[#allocation10 + $0x890] sm:$0xff]
    %v808 = vld [vmem:[#allocation10 + $0x898] sm:$0xff]
    %v809 = vld [vmem:[#allocation10 + $0x8a0] sm:$0xff]
    %v810 = vld [vmem:[#allocation10 + $0x8a8] sm:$0xff]
    %v811 = vld [vmem:[#allocation10 + $0x8b0] sm:$0xff]
    %v812 = vld [vmem:[#allocation10 + $0x8b8] sm:$0xff]
    %v813 = vld [vmem:[#allocation10 + $0x8c0] sm:$0xff]
    %v814 = vld [vmem:[#allocation10 + $0x8c8] sm:$0xff]
    %v815 = vld [vmem:[#allocation10 + $0x8d0] sm:$0xff]
    %v816 = vld [vmem:[#allocation10 + $0x8d8] sm:$0xff]
    %v817 = vld [vmem:[#allocation10 + $0x8e0] sm:$0xff]
    %v818 = vld [vmem:[#allocation10 + $0x8e8] sm:$0xff]
    %v819 = vld [vmem:[#allocation10 + $0x8f0] sm:$0xff]
    %v820 = vld [vmem:[#allocation10 + $0x8f8] sm:$0xff]
    %v821 = vld [vmem:[#allocation10 + $0x900] sm:$0xff]
    %v822 = vld [vmem:[#allocation10 + $0x908] sm:$0xff]
    %v823 = vld [vmem:[#allocation10 + $0x910] sm:$0xff]
    %v824 = vld [vmem:[#allocation10 + $0x918] sm:$0xff]
    %v825 = vld [vmem:[#allocation10 + $0x920] sm:$0xff]
    %v826 = vld [vmem:[#allocation10 + $0x928] sm:$0xff]
    %v827 = vld [vmem:[#allocation10 + $0x930] sm:$0xff]
    %v828 = vld [vmem:[#allocation10 + $0x938] sm:$0xff]
    %v829 = vld [vmem:[#allocation10 + $0x940] sm:$0xff]
    %v830 = vld [vmem:[#allocation10 + $0x948] sm:$0xff]
    %v831 = vld [vmem:[#allocation10 + $0x950] sm:$0xff]
    %v832 = vld [vmem:[#allocation10 + $0x958] sm:$0xff]
    %v833 = vld [vmem:[#allocation10 + $0x960] sm:$0xff]
    %v834 = vld [vmem:[#allocation10 + $0x968] sm:$0xff]
    %v835 = vld [vmem:[#allocation10 + $0x970] sm:$0xff]
    %v836 = vld [vmem:[#allocation10 + $0x978] sm:$0xff]
    %v837 = vld [vmem:[#allocation10 + $0x980] sm:$0xff]
    %v838 = vld [vmem:[#allocation10 + $0x988] sm:$0xff]
    %v839 = vld [vmem:[#allocation10 + $0x990] sm:$0xff]
    %v840 = vld [vmem:[#allocation10 + $0x998] sm:$0xff]
    %v841 = vld [vmem:[#allocation10 + $0x9a0] sm:$0xff]
    %v842 = vld [vmem:[#allocation10 + $0x9a8] sm:$0xff]
    %v843 = vld [vmem:[#allocation10 + $0x9b0] sm:$0xff]
    %v844 = vld [vmem:[#allocation10 + $0x9b8] sm:$0xff]
    %v845 = vld [vmem:[#allocation10 + $0x9c0] sm:$0xff]
    %v846 = vld [vmem:[#allocation10 + $0x9c8] sm:$0xff]
    %v847 = vld [vmem:[#allocation10 + $0x9d0] sm:$0xff]
    %v848 = vld [vmem:[#allocation10 + $0x9d8] sm:$0xff]
    %v849 = vld [vmem:[#allocation10 + $0x9e0] sm:$0xff]
    %v850 = vld [vmem:[#allocation10 + $0x9e8] sm:$0xff]
    %v851 = vld [vmem:[#allocation10 + $0x9f0] sm:$0xff]
    %v852 = vld [vmem:[#allocation10 + $0x9f8] sm:$0xff]
    %v853 = vld [vmem:[#allocation10 + $0xa00] sm:$0xff]
    %v854 = vld [vmem:[#allocation10 + $0xa08] sm:$0xff]
    %v855 = vld [vmem:[#allocation10 + $0xa10] sm:$0xff]
    %v856 = vld [vmem:[#allocation10 + $0xa18] sm:$0xff]
    %v857 = vld [vmem:[#allocation10 + $0xa20] sm:$0xff]
    %v858 = vld [vmem:[#allocation10 + $0xa28] sm:$0xff]
    %v859 = vld [vmem:[#allocation10 + $0xa30] sm:$0xff]
    %v860 = vld [vmem:[#allocation10 + $0xa38] sm:$0xff]
    %v861 = vld [vmem:[#allocation10 + $0xa40] sm:$0xff]
    %v862 = vld [vmem:[#allocation10 + $0xa48] sm:$0xff]
    %v863 = vld [vmem:[#allocation10 + $0xa50] sm:$0xff]
    %v864 = vld [vmem:[#allocation10 + $0xa58] sm:$0xff]
    %v865 = vld [vmem:[#allocation10 + $0xa60] sm:$0xff]
    %v866 = vld [vmem:[#allocation10 + $0xa68] sm:$0xff]
    %v867 = vld [vmem:[#allocation10 + $0xa70] sm:$0xff]
    %v868 = vld [vmem:[#allocation10 + $0xa78] sm:$0xff]
    %v869 = vld [vmem:[#allocation10 + $0xa80] sm:$0xff]
    %v870 = vld [vmem:[#allocation10 + $0xa88] sm:$0xff]
    %v871 = vld [vmem:[#allocation10 + $0xa90] sm:$0xff]
    %v872 = vld [vmem:[#allocation10 + $0xa98] sm:$0xff]
    %v873 = vld [vmem:[#allocation10 + $0xaa0] sm:$0xff]
    %v874 = vld [vmem:[#allocation10 + $0xaa8] sm:$0xff]
    %v875 = vld [vmem:[#allocation10 + $0xab0] sm:$0xff]
    %v876 = vld [vmem:[#allocation10 + $0xab8] sm:$0xff]
    %v877 = vld [vmem:[#allocation10 + $0xac0] sm:$0xff]
    %v878 = vld [vmem:[#allocation10 + $0xac8] sm:$0xff]
    %v879 = vld [vmem:[#allocation10 + $0xad0] sm:$0xff]
    %v880 = vld [vmem:[#allocation10 + $0xad8] sm:$0xff]
    %v881 = vld [vmem:[#allocation10 + $0xae0] sm:$0xff]
    %v882 = vld [vmem:[#allocation10 + $0xae8] sm:$0xff]
    %v883 = vld [vmem:[#allocation10 + $0xaf0] sm:$0xff]
    %v884 = vld [vmem:[#allocation10 + $0xaf8] sm:$0xff]
    %v885 = vld [vmem:[#allocation10 + $0xb00] sm:$0xff]
    %v886 = vld [vmem:[#allocation10 + $0xb08] sm:$0xff]
    %v887 = vld [vmem:[#allocation10 + $0xb10] sm:$0xff]
    %v888 = vld [vmem:[#allocation10 + $0xb18] sm:$0xff]
    %v889 = vld [vmem:[#allocation10 + $0xb20] sm:$0xff]
    %v890 = vld [vmem:[#allocation10 + $0xb28] sm:$0xff]
    %v891 = vld [vmem:[#allocation10 + $0xb30] sm:$0xff]
    %v892 = vld [vmem:[#allocation10 + $0xb38] sm:$0xff]
    %v893 = vld [vmem:[#allocation10 + $0xb40] sm:$0xff]
    %v894 = vld [vmem:[#allocation10 + $0xb48] sm:$0xff]
    %v895 = vld [vmem:[#allocation10 + $0xb50] sm:$0xff]
    %v896 = vld [vmem:[#allocation10 + $0xb58] sm:$0xff]
    %v897 = vld [vmem:[#allocation10 + $0xb60] sm:$0xff]
    %v898 = vld [vmem:[#allocation10 + $0xb68] sm:$0xff]
    %v899 = vld [vmem:[#allocation10 + $0xb70] sm:$0xff]
    %v900 = vld [vmem:[#allocation10 + $0xb78] sm:$0xff]
    %v901 = vld [vmem:[#allocation10 + $0xb80] sm:$0xff]
    %v902 = vld [vmem:[#allocation10 + $0xb88] sm:$0xff]
    %v903 = vld [vmem:[#allocation10 + $0xb90] sm:$0xff]
    %v904 = vld [vmem:[#allocation10 + $0xb98] sm:$0xff]
    %v905 = vld [vmem:[#allocation10 + $0xba0] sm:$0xff]
    %v906 = vld [vmem:[#allocation10 + $0xba8] sm:$0xff]
    %v907 = vld [vmem:[#allocation10 + $0xbb0] sm:$0xff]
    %v908 = vld [vmem:[#allocation10 + $0xbb8] sm:$0xff]
    %v909 = vld [vmem:[#allocation10 + $0xbc0] sm:$0xff]
    %v910 = vld [vmem:[#allocation10 + $0xbc8] sm:$0xff]
    %v911 = vld [vmem:[#allocation10 + $0xbd0] sm:$0xff]
    %v912 = vld [vmem:[#allocation10 + $0xbd8] sm:$0xff]
    %v913 = vld [vmem:[#allocation10 + $0xbe0] sm:$0xff]
    %v914 = vld [vmem:[#allocation10 + $0xbe8] sm:$0xff]
    %v915 = vld [vmem:[#allocation10 + $0xbf0] sm:$0xff]
    %v916 = vld [vmem:[#allocation10 + $0xbf8] sm:$0xff]
    %v917 = vld [vmem:[#allocation11] sm:$0xff]
    %v918 = vld [vmem:[#allocation11 + $0x8] sm:$0xf]
    %v921 = vlaneseq
    %v922 = vshrl.u32 %v921, 7
    %v923 = vsub.s32 0, %v922
    %v924 = vrot.slane %v917, %v923
    %v925 = vlaneseq
    %v926 = vshrl.u32 %v925, 7
    %v927 = vsub.s32 1, %v926
    %v928 = vrot.slane %v917, %v927
    %v929 = vlaneseq
    %v930 = vshrl.u32 %v929, 7
    %v931 = vsub.s32 2, %v930
    %v932 = vrot.slane %v917, %v931
    %v933 = vlaneseq
    %v934 = vshrl.u32 %v933, 7
    %v935 = vsub.s32 3, %v934
    %v936 = vrot.slane %v917, %v935
    %v937 = vlaneseq
    %v938 = vshrl.u32 %v937, 7
    %v939 = vsub.s32 4, %v938
    %v940 = vrot.slane %v917, %v939
    %v941 = vlaneseq
    %v942 = vshrl.u32 %v941, 7
    %v943 = vsub.s32 5, %v942
    %v944 = vrot.slane %v917, %v943
    %v945 = vlaneseq
    %v946 = vshrl.u32 %v945, 7
    %v947 = vsub.s32 6, %v946
    %v948 = vrot.slane %v917, %v947
    %v949 = vlaneseq
    %v950 = vshrl.u32 %v949, 7
    %v951 = vsub.s32 7, %v950
    %v952 = vrot.slane %v917, %v951
    %v953 = vlaneseq
    %v954 = vshrl.u32 %v953, 7
    %v955 = vsub.s32 0, %v954
    %v956 = vrot.slane %v918, %v955
    %v957 = vlaneseq
    %v958 = vshrl.u32 %v957, 7
    %v959 = vsub.s32 1, %v958
    %v960 = vrot.slane %v918, %v959
    %v961 = vlaneseq
    %v962 = vshrl.u32 %v961, 7
    %v963 = vsub.s32 2, %v962
    %v964 = vrot.slane %v918, %v963
    %v965 = vlaneseq
    %v966 = vshrl.u32 %v965, 7
    %v967 = vsub.s32 3, %v966
    %v968 = vrot.slane %v918, %v967
    %v1365 = vunpack.c.l.b16 %v533
    %v1366 = vunpack.c.h.b16 %v533
    %v1367 = vunpack.c.l.b16 %v534
    %v1368 = vunpack.c.h.b16 %v534
    %v1369 = vunpack.c.l.b16 %v535
    %v1370 = vunpack.c.h.b16 %v535
    %v1371 = vunpack.c.l.b16 %v536
    %v1372 = vunpack.c.h.b16 %v536
    %v1373 = vunpack.c.l.b16 %v537
    %v1374 = vunpack.c.h.b16 %v537
    %v1375 = vunpack.c.l.b16 %v538
    %v1376 = vunpack.c.h.b16 %v538
    %v1377 = vunpack.c.l.b16 %v539
    %v1378 = vunpack.c.h.b16 %v539
    %v1379 = vunpack.c.l.b16 %v540
    %v1380 = vunpack.c.h.b16 %v540
    %v1381 = vunpack.c.l.b16 %v541
    %v1382 = vunpack.c.h.b16 %v541
    %v1383 = vunpack.c.l.b16 %v542
    %v1384 = vunpack.c.h.b16 %v542
    %v1385 = vunpack.c.l.b16 %v543
    %v1386 = vunpack.c.h.b16 %v543
    %v1387 = vunpack.c.l.b16 %v544
    %v1388 = vunpack.c.h.b16 %v544
    %v1389 = vunpack.c.l.b16 %v545
    %v1390 = vunpack.c.h.b16 %v545
    %v1391 = vunpack.c.l.b16 %v546
    %v1392 = vunpack.c.h.b16 %v546
    %v1393 = vunpack.c.l.b16 %v547
    %v1394 = vunpack.c.h.b16 %v547
    %v1395 = vunpack.c.l.b16 %v548
    %v1396 = vunpack.c.h.b16 %v548
    %v1397 = vunpack.c.l.b16 %v549
    %v1398 = vunpack.c.h.b16 %v549
    %v1399 = vunpack.c.l.b16 %v550
    %v1400 = vunpack.c.h.b16 %v550
    %v1401 = vunpack.c.l.b16 %v551
    %v1402 = vunpack.c.h.b16 %v551
    %v1403 = vunpack.c.l.b16 %v552
    %v1404 = vunpack.c.h.b16 %v552
    %v1405 = vunpack.c.l.b16 %v553
    %v1406 = vunpack.c.h.b16 %v553
    %v1407 = vunpack.c.l.b16 %v554
    %v1408 = vunpack.c.h.b16 %v554
    %v1409 = vunpack.c.l.b16 %v555
    %v1410 = vunpack.c.h.b16 %v555
    %v1411 = vunpack.c.l.b16 %v556
    %v1412 = vunpack.c.h.b16 %v556
    %v1413 = vunpack.c.l.b16 %v557
    %v1414 = vunpack.c.h.b16 %v557
    %v1415 = vunpack.c.l.b16 %v558
    %v1416 = vunpack.c.h.b16 %v558
    %v1417 = vunpack.c.l.b16 %v559
    %v1418 = vunpack.c.h.b16 %v559
    %v1419 = vunpack.c.l.b16 %v560
    %v1420 = vunpack.c.h.b16 %v560
    %v1421 = vunpack.c.l.b16 %v561
    %v1422 = vunpack.c.h.b16 %v561
    %v1423 = vunpack.c.l.b16 %v562
    %v1424 = vunpack.c.h.b16 %v562
    %v1425 = vunpack.c.l.b16 %v563
    %v1426 = vunpack.c.h.b16 %v563
    %v1427 = vunpack.c.l.b16 %v564
    %v1428 = vunpack.c.h.b16 %v564
    %v1429 = vunpack.c.l.b16 %v565
    %v1430 = vunpack.c.h.b16 %v565
    %v1431 = vunpack.c.l.b16 %v566
    %v1432 = vunpack.c.h.b16 %v566
    %v1433 = vunpack.c.l.b16 %v567
    %v1434 = vunpack.c.h.b16 %v567
    %v1435 = vunpack.c.l.b16 %v568
    %v1436 = vunpack.c.h.b16 %v568
    %v1437 = vunpack.c.l.b16 %v569
    %v1438 = vunpack.c.h.b16 %v569
    %v1439 = vunpack.c.l.b16 %v570
    %v1440 = vunpack.c.h.b16 %v570
    %v1441 = vunpack.c.l.b16 %v571
    %v1442 = vunpack.c.h.b16 %v571
    %v1443 = vunpack.c.l.b16 %v572
    %v1444 = vunpack.c.h.b16 %v572
    %v1445 = vunpack.c.l.b16 %v573
    %v1446 = vunpack.c.h.b16 %v573
    %v1447 = vunpack.c.l.b16 %v574
    %v1448 = vunpack.c.h.b16 %v574
    %v1449 = vunpack.c.l.b16 %v575
    %v1450 = vunpack.c.h.b16 %v575
    %v1451 = vunpack.c.l.b16 %v576
    %v1452 = vunpack.c.h.b16 %v576
    %v1453 = vunpack.c.l.b16 %v577
    %v1454 = vunpack.c.h.b16 %v577
    %v1455 = vunpack.c.l.b16 %v578
    %v1456 = vunpack.c.h.b16 %v578
    %v1457 = vunpack.c.l.b16 %v579
    %v1458 = vunpack.c.h.b16 %v579
    %v1459 = vunpack.c.l.b16 %v580
    %v1460 = vunpack.c.h.b16 %v580
    %v1461 = vunpack.c.l.b16 %v581
    %v1462 = vunpack.c.h.b16 %v581
    %v1463 = vunpack.c.l.b16 %v582
    %v1464 = vunpack.c.h.b16 %v582
    %v1465 = vunpack.c.l.b16 %v583
    %v1466 = vunpack.c.h.b16 %v583
    %v1467 = vunpack.c.l.b16 %v584
    %v1468 = vunpack.c.h.b16 %v584
    %v1469 = vunpack.c.l.b16 %v585
    %v1470 = vunpack.c.h.b16 %v585
    %v1471 = vunpack.c.l.b16 %v586
    %v1472 = vunpack.c.h.b16 %v586
    %v1473 = vunpack.c.l.b16 %v587
    %v1474 = vunpack.c.h.b16 %v587
    %v1475 = vunpack.c.l.b16 %v588
    %v1476 = vunpack.c.h.b16 %v588
    %v1477 = vunpack.c.l.b16 %v589
    %v1478 = vunpack.c.h.b16 %v589
    %v1479 = vunpack.c.l.b16 %v590
    %v1480 = vunpack.c.h.b16 %v590
    %v1481 = vunpack.c.l.b16 %v591
    %v1482 = vunpack.c.h.b16 %v591
    %v1483 = vunpack.c.l.b16 %v592
    %v1484 = vunpack.c.h.b16 %v592
    %v1485 = vunpack.c.l.b16 %v593
    %v1486 = vunpack.c.h.b16 %v593
    %v1487 = vunpack.c.l.b16 %v594
    %v1488 = vunpack.c.h.b16 %v594
    %v1489 = vunpack.c.l.b16 %v595
    %v1490 = vunpack.c.h.b16 %v595
    %v1491 = vunpack.c.l.b16 %v596
    %v1492 = vunpack.c.h.b16 %v596
    %v1493 = vunpack.c.l.b16 %v597
    %v1494 = vunpack.c.h.b16 %v597
    %v1495 = vunpack.c.l.b16 %v598
    %v1496 = vunpack.c.h.b16 %v598
    %v1497 = vunpack.c.l.b16 %v599
    %v1498 = vunpack.c.h.b16 %v599
    %v1499 = vunpack.c.l.b16 %v600
    %v1500 = vunpack.c.h.b16 %v600
    %v1501 = vunpack.c.l.b16 %v601
    %v1502 = vunpack.c.h.b16 %v601
    %v1503 = vunpack.c.l.b16 %v602
    %v1504 = vunpack.c.h.b16 %v602
    %v1505 = vunpack.c.l.b16 %v603
    %v1506 = vunpack.c.h.b16 %v603
    %v1507 = vunpack.c.l.b16 %v604
    %v1508 = vunpack.c.h.b16 %v604
    %v1509 = vunpack.c.l.b16 %v605
    %v1510 = vunpack.c.h.b16 %v605
    %v1511 = vunpack.c.l.b16 %v606
    %v1512 = vunpack.c.h.b16 %v606
    %v1513 = vunpack.c.l.b16 %v607
    %v1514 = vunpack.c.h.b16 %v607
    %v1515 = vunpack.c.l.b16 %v608
    %v1516 = vunpack.c.h.b16 %v608
    %v1517 = vunpack.c.l.b16 %v609
    %v1518 = vunpack.c.h.b16 %v609
    %v1519 = vunpack.c.l.b16 %v610
    %v1520 = vunpack.c.h.b16 %v610
    %v1521 = vunpack.c.l.b16 %v611
    %v1522 = vunpack.c.h.b16 %v611
    %v1523 = vunpack.c.l.b16 %v612
    %v1524 = vunpack.c.h.b16 %v612
    %v1525 = vunpack.c.l.b16 %v613
    %v1526 = vunpack.c.h.b16 %v613
    %v1527 = vunpack.c.l.b16 %v614
    %v1528 = vunpack.c.h.b16 %v614
    %v1529 = vunpack.c.l.b16 %v615
    %v1530 = vunpack.c.h.b16 %v615
    %v1531 = vunpack.c.l.b16 %v616
    %v1532 = vunpack.c.h.b16 %v616
    %v1533 = vunpack.c.l.b16 %v617
    %v1534 = vunpack.c.h.b16 %v617
    %v1535 = vunpack.c.l.b16 %v618
    %v1536 = vunpack.c.h.b16 %v618
    %v1537 = vunpack.c.l.b16 %v619
    %v1538 = vunpack.c.h.b16 %v619
    %v1539 = vunpack.c.l.b16 %v620
    %v1540 = vunpack.c.h.b16 %v620
    %v1541 = vunpack.c.l.b16 %v621
    %v1542 = vunpack.c.h.b16 %v621
    %v1543 = vunpack.c.l.b16 %v622
    %v1544 = vunpack.c.h.b16 %v622
    %v1545 = vunpack.c.l.b16 %v623
    %v1546 = vunpack.c.h.b16 %v623
    %v1547 = vunpack.c.l.b16 %v624
    %v1548 = vunpack.c.h.b16 %v624
    %v1549 = vunpack.c.l.b16 %v625
    %v1550 = vunpack.c.h.b16 %v625
    %v1551 = vunpack.c.l.b16 %v626
    %v1552 = vunpack.c.h.b16 %v626
    %v1553 = vunpack.c.l.b16 %v627
    %v1554 = vunpack.c.h.b16 %v627
    %v1555 = vunpack.c.l.b16 %v628
    %v1556 = vunpack.c.h.b16 %v628
    %v1557 = vunpack.c.l.b16 %v629
    %v1558 = vunpack.c.h.b16 %v629
    %v1559 = vunpack.c.l.b16 %v630
    %v1560 = vunpack.c.h.b16 %v630
    %v1561 = vunpack.c.l.b16 %v631
    %v1562 = vunpack.c.h.b16 %v631
    %v1563 = vunpack.c.l.b16 %v632
    %v1564 = vunpack.c.h.b16 %v632
    %v1565 = vunpack.c.l.b16 %v633
    %v1566 = vunpack.c.h.b16 %v633
    %v1567 = vunpack.c.l.b16 %v634
    %v1568 = vunpack.c.h.b16 %v634
    %v1569 = vunpack.c.l.b16 %v635
    %v1570 = vunpack.c.h.b16 %v635
    %v1571 = vunpack.c.l.b16 %v636
    %v1572 = vunpack.c.h.b16 %v636
    %v1573 = vunpack.c.l.b16 %v637
    %v1574 = vunpack.c.h.b16 %v637
    %v1575 = vunpack.c.l.b16 %v638
    %v1576 = vunpack.c.h.b16 %v638
    %v1577 = vunpack.c.l.b16 %v639
    %v1578 = vunpack.c.h.b16 %v639
    %v1579 = vunpack.c.l.b16 %v640
    %v1580 = vunpack.c.h.b16 %v640
    %v1581 = vunpack.c.l.b16 %v641
    %v1582 = vunpack.c.h.b16 %v641
    %v1583 = vunpack.c.l.b16 %v642
    %v1584 = vunpack.c.h.b16 %v642
    %v1585 = vunpack.c.l.b16 %v643
    %v1586 = vunpack.c.h.b16 %v643
    %v1587 = vunpack.c.l.b16 %v644
    %v1588 = vunpack.c.h.b16 %v644
    %v1589 = vunpack.c.l.b16 %v645
    %v1590 = vunpack.c.h.b16 %v645
    %v1591 = vunpack.c.l.b16 %v646
    %v1592 = vunpack.c.h.b16 %v646
    %v1593 = vunpack.c.l.b16 %v647
    %v1594 = vunpack.c.h.b16 %v647
    %v1595 = vunpack.c.l.b16 %v648
    %v1596 = vunpack.c.h.b16 %v648
    %v1597 = vunpack.c.l.b16 %v649
    %v1598 = vunpack.c.h.b16 %v649
    %v1599 = vunpack.c.l.b16 %v650
    %v1600 = vunpack.c.h.b16 %v650
    %v1601 = vunpack.c.l.b16 %v651
    %v1602 = vunpack.c.h.b16 %v651
    %v1603 = vunpack.c.l.b16 %v652
    %v1604 = vunpack.c.h.b16 %v652
    %v1605 = vunpack.c.l.b16 %v653
    %v1606 = vunpack.c.h.b16 %v653
    %v1607 = vunpack.c.l.b16 %v654
    %v1608 = vunpack.c.h.b16 %v654
    %v1609 = vunpack.c.l.b16 %v655
    %v1610 = vunpack.c.h.b16 %v655
    %v1611 = vunpack.c.l.b16 %v656
    %v1612 = vunpack.c.h.b16 %v656
    %v1613 = vunpack.c.l.b16 %v657
    %v1614 = vunpack.c.h.b16 %v657
    %v1615 = vunpack.c.l.b16 %v658
    %v1616 = vunpack.c.h.b16 %v658
    %v1617 = vunpack.c.l.b16 %v659
    %v1618 = vunpack.c.h.b16 %v659
    %v1619 = vunpack.c.l.b16 %v660
    %v1620 = vunpack.c.h.b16 %v660
    %v1621 = vunpack.c.l.b16 %v661
    %v1622 = vunpack.c.h.b16 %v661
    %v1623 = vunpack.c.l.b16 %v662
    %v1624 = vunpack.c.h.b16 %v662
    %v1625 = vunpack.c.l.b16 %v663
    %v1626 = vunpack.c.h.b16 %v663
    %v1627 = vunpack.c.l.b16 %v664
    %v1628 = vunpack.c.h.b16 %v664
    %v1629 = vunpack.c.l.b16 %v665
    %v1630 = vunpack.c.h.b16 %v665
    %v1631 = vunpack.c.l.b16 %v666
    %v1632 = vunpack.c.h.b16 %v666
    %v1633 = vunpack.c.l.b16 %v667
    %v1634 = vunpack.c.h.b16 %v667
    %v1635 = vunpack.c.l.b16 %v668
    %v1636 = vunpack.c.h.b16 %v668
    %v1637 = vunpack.c.l.b16 %v669
    %v1638 = vunpack.c.h.b16 %v669
    %v1639 = vunpack.c.l.b16 %v670
    %v1640 = vunpack.c.h.b16 %v670
    %v1641 = vunpack.c.l.b16 %v671
    %v1642 = vunpack.c.h.b16 %v671
    %v1643 = vunpack.c.l.b16 %v672
    %v1644 = vunpack.c.h.b16 %v672
    %v1645 = vunpack.c.l.b16 %v673
    %v1646 = vunpack.c.h.b16 %v673
    %v1647 = vunpack.c.l.b16 %v674
    %v1648 = vunpack.c.h.b16 %v674
    %v1649 = vunpack.c.l.b16 %v675
    %v1650 = vunpack.c.h.b16 %v675
    %v1651 = vunpack.c.l.b16 %v676
    %v1652 = vunpack.c.h.b16 %v676
    %v1653 = vunpack.c.l.b16 %v677
    %v1654 = vunpack.c.h.b16 %v677
    %v1655 = vunpack.c.l.b16 %v678
    %v1656 = vunpack.c.h.b16 %v678
    %v1657 = vunpack.c.l.b16 %v679
    %v1658 = vunpack.c.h.b16 %v679
    %v1659 = vunpack.c.l.b16 %v680
    %v1660 = vunpack.c.h.b16 %v680
    %v1661 = vunpack.c.l.b16 %v681
    %v1662 = vunpack.c.h.b16 %v681
    %v1663 = vunpack.c.l.b16 %v682
    %v1664 = vunpack.c.h.b16 %v682
    %v1665 = vunpack.c.l.b16 %v683
    %v1666 = vunpack.c.h.b16 %v683
    %v1667 = vunpack.c.l.b16 %v684
    %v1668 = vunpack.c.h.b16 %v684
    %v1669 = vunpack.c.l.b16 %v685
    %v1670 = vunpack.c.h.b16 %v685
    %v1671 = vunpack.c.l.b16 %v686
    %v1672 = vunpack.c.h.b16 %v686
    %v1673 = vunpack.c.l.b16 %v687
    %v1674 = vunpack.c.h.b16 %v687
    %v1675 = vunpack.c.l.b16 %v688
    %v1676 = vunpack.c.h.b16 %v688
    %v1677 = vunpack.c.l.b16 %v689
    %v1678 = vunpack.c.h.b16 %v689
    %v1679 = vunpack.c.l.b16 %v690
    %v1680 = vunpack.c.h.b16 %v690
    %v1681 = vunpack.c.l.b16 %v691
    %v1682 = vunpack.c.h.b16 %v691
    %v1683 = vunpack.c.l.b16 %v692
    %v1684 = vunpack.c.h.b16 %v692
    %v1685 = vunpack.c.l.b16 %v693
    %v1686 = vunpack.c.h.b16 %v693
    %v1687 = vunpack.c.l.b16 %v694
    %v1688 = vunpack.c.h.b16 %v694
    %v1689 = vunpack.c.l.b16 %v695
    %v1690 = vunpack.c.h.b16 %v695
    %v1691 = vunpack.c.l.b16 %v696
    %v1692 = vunpack.c.h.b16 %v696
    %v1693 = vunpack.c.l.b16 %v697
    %v1694 = vunpack.c.h.b16 %v697
    %v1695 = vunpack.c.l.b16 %v698
    %v1696 = vunpack.c.h.b16 %v698
    %v1697 = vunpack.c.l.b16 %v699
    %v1698 = vunpack.c.h.b16 %v699
    %v1699 = vunpack.c.l.b16 %v700
    %v1700 = vunpack.c.h.b16 %v700
    %v1701 = vunpack.c.l.b16 %v701
    %v1702 = vunpack.c.h.b16 %v701
    %v1703 = vunpack.c.l.b16 %v702
    %v1704 = vunpack.c.h.b16 %v702
    %v1705 = vunpack.c.l.b16 %v703
    %v1706 = vunpack.c.h.b16 %v703
    %v1707 = vunpack.c.l.b16 %v704
    %v1708 = vunpack.c.h.b16 %v704
    %v1709 = vunpack.c.l.b16 %v705
    %v1710 = vunpack.c.h.b16 %v705
    %v1711 = vunpack.c.l.b16 %v706
    %v1712 = vunpack.c.h.b16 %v706
    %v1713 = vunpack.c.l.b16 %v707
    %v1714 = vunpack.c.h.b16 %v707
    %v1715 = vunpack.c.l.b16 %v708
    %v1716 = vunpack.c.h.b16 %v708
    %v1717 = vunpack.c.l.b16 %v709
    %v1718 = vunpack.c.h.b16 %v709
    %v1719 = vunpack.c.l.b16 %v710
    %v1720 = vunpack.c.h.b16 %v710
    %v1721 = vunpack.c.l.b16 %v711
    %v1722 = vunpack.c.h.b16 %v711
    %v1723 = vunpack.c.l.b16 %v712
    %v1724 = vunpack.c.h.b16 %v712
    %v1725 = vunpack.c.l.b16 %v713
    %v1726 = vunpack.c.h.b16 %v713
    %v1727 = vunpack.c.l.b16 %v714
    %v1728 = vunpack.c.h.b16 %v714
    %v1729 = vunpack.c.l.b16 %v715
    %v1730 = vunpack.c.h.b16 %v715
    %v1731 = vunpack.c.l.b16 %v716
    %v1732 = vunpack.c.h.b16 %v716
    %v1733 = vunpack.c.l.b16 %v717
    %v1734 = vunpack.c.h.b16 %v717
    %v1735 = vunpack.c.l.b16 %v718
    %v1736 = vunpack.c.h.b16 %v718
    %v1737 = vunpack.c.l.b16 %v719
    %v1738 = vunpack.c.h.b16 %v719
    %v1739 = vunpack.c.l.b16 %v720
    %v1740 = vunpack.c.h.b16 %v720
    %v1741 = vunpack.c.l.b16 %v721
    %v1742 = vunpack.c.h.b16 %v721
    %v1743 = vunpack.c.l.b16 %v722
    %v1744 = vunpack.c.h.b16 %v722
    %v1745 = vunpack.c.l.b16 %v723
    %v1746 = vunpack.c.h.b16 %v723
    %v1747 = vunpack.c.l.b16 %v724
    %v1748 = vunpack.c.h.b16 %v724
    %v1749 = vunpack.c.l.b16 %v725
    %v1750 = vunpack.c.h.b16 %v725
    %v1751 = vunpack.c.l.b16 %v726
    %v1752 = vunpack.c.h.b16 %v726
    %v1753 = vunpack.c.l.b16 %v727
    %v1754 = vunpack.c.h.b16 %v727
    %v1755 = vunpack.c.l.b16 %v728
    %v1756 = vunpack.c.h.b16 %v728
    %v1757 = vunpack.c.l.b16 %v729
    %v1758 = vunpack.c.h.b16 %v729
    %v1759 = vunpack.c.l.b16 %v730
    %v1760 = vunpack.c.h.b16 %v730
    %v1761 = vunpack.c.l.b16 %v731
    %v1762 = vunpack.c.h.b16 %v731
    %v1763 = vunpack.c.l.b16 %v732
    %v1764 = vunpack.c.h.b16 %v732
    %v1765 = vunpack.c.l.b16 %v733
    %v1766 = vunpack.c.h.b16 %v733
    %v1767 = vunpack.c.l.b16 %v734
    %v1768 = vunpack.c.h.b16 %v734
    %v1769 = vunpack.c.l.b16 %v735
    %v1770 = vunpack.c.h.b16 %v735
    %v1771 = vunpack.c.l.b16 %v736
    %v1772 = vunpack.c.h.b16 %v736
    %v1773 = vunpack.c.l.b16 %v737
    %v1774 = vunpack.c.h.b16 %v737
    %v1775 = vunpack.c.l.b16 %v738
    %v1776 = vunpack.c.h.b16 %v738
    %v1777 = vunpack.c.l.b16 %v739
    %v1778 = vunpack.c.h.b16 %v739
    %v1779 = vunpack.c.l.b16 %v740
    %v1780 = vunpack.c.h.b16 %v740
    %v1781 = vunpack.c.l.b16 %v741
    %v1782 = vunpack.c.h.b16 %v741
    %v1783 = vunpack.c.l.b16 %v742
    %v1784 = vunpack.c.h.b16 %v742
    %v1785 = vunpack.c.l.b16 %v743
    %v1786 = vunpack.c.h.b16 %v743
    %v1787 = vunpack.c.l.b16 %v744
    %v1788 = vunpack.c.h.b16 %v744
    %v1789 = vunpack.c.l.b16 %v745
    %v1790 = vunpack.c.h.b16 %v745
    %v1791 = vunpack.c.l.b16 %v746
    %v1792 = vunpack.c.h.b16 %v746
    %v1793 = vunpack.c.l.b16 %v747
    %v1794 = vunpack.c.h.b16 %v747
    %v1795 = vunpack.c.l.b16 %v748
    %v1796 = vunpack.c.h.b16 %v748
    %v1797 = vunpack.c.l.b16 %v749
    %v1798 = vunpack.c.h.b16 %v749
    %v1799 = vunpack.c.l.b16 %v750
    %v1800 = vunpack.c.h.b16 %v750
    %v1801 = vunpack.c.l.b16 %v751
    %v1802 = vunpack.c.h.b16 %v751
    %v1803 = vunpack.c.l.b16 %v752
    %v1804 = vunpack.c.h.b16 %v752
    %v1805 = vunpack.c.l.b16 %v753
    %v1806 = vunpack.c.h.b16 %v753
    %v1807 = vunpack.c.l.b16 %v754
    %v1808 = vunpack.c.h.b16 %v754
    %v1809 = vunpack.c.l.b16 %v755
    %v1810 = vunpack.c.h.b16 %v755
    %v1811 = vunpack.c.l.b16 %v756
    %v1812 = vunpack.c.h.b16 %v756
    %v1813 = vunpack.c.l.b16 %v757
    %v1814 = vunpack.c.h.b16 %v757
    %v1815 = vunpack.c.l.b16 %v758
    %v1816 = vunpack.c.h.b16 %v758
    %v1817 = vunpack.c.l.b16 %v759
    %v1818 = vunpack.c.h.b16 %v759
    %v1819 = vunpack.c.l.b16 %v760
    %v1820 = vunpack.c.h.b16 %v760
    %v1821 = vunpack.c.l.b16 %v761
    %v1822 = vunpack.c.h.b16 %v761
    %v1823 = vunpack.c.l.b16 %v762
    %v1824 = vunpack.c.h.b16 %v762
    %v1825 = vunpack.c.l.b16 %v763
    %v1826 = vunpack.c.h.b16 %v763
    %v1827 = vunpack.c.l.b16 %v764
    %v1828 = vunpack.c.h.b16 %v764
    %v1829 = vunpack.c.l.b16 %v765
    %v1830 = vunpack.c.h.b16 %v765
    %v1831 = vunpack.c.l.b16 %v766
    %v1832 = vunpack.c.h.b16 %v766
    %v1833 = vunpack.c.l.b16 %v767
    %v1834 = vunpack.c.h.b16 %v767
    %v1835 = vunpack.c.l.b16 %v768
    %v1836 = vunpack.c.h.b16 %v768
    %v1837 = vunpack.c.l.b16 %v769
    %v1838 = vunpack.c.h.b16 %v769
    %v1839 = vunpack.c.l.b16 %v770
    %v1840 = vunpack.c.h.b16 %v770
    %v1841 = vunpack.c.l.b16 %v771
    %v1842 = vunpack.c.h.b16 %v771
    %v1843 = vunpack.c.l.b16 %v772
    %v1844 = vunpack.c.h.b16 %v772
    %v1845 = vunpack.c.l.b16 %v773
    %v1846 = vunpack.c.h.b16 %v773
    %v1847 = vunpack.c.l.b16 %v774
    %v1848 = vunpack.c.h.b16 %v774
    %v1849 = vunpack.c.l.b16 %v775
    %v1850 = vunpack.c.h.b16 %v775
    %v1851 = vunpack.c.l.b16 %v776
    %v1852 = vunpack.c.h.b16 %v776
    %v1853 = vunpack.c.l.b16 %v777
    %v1854 = vunpack.c.h.b16 %v777
    %v1855 = vunpack.c.l.b16 %v778
    %v1856 = vunpack.c.h.b16 %v778
    %v1857 = vunpack.c.l.b16 %v779
    %v1858 = vunpack.c.h.b16 %v779
    %v1859 = vunpack.c.l.b16 %v780
    %v1860 = vunpack.c.h.b16 %v780
    %v1861 = vunpack.c.l.b16 %v781
    %v1862 = vunpack.c.h.b16 %v781
    %v1863 = vunpack.c.l.b16 %v782
    %v1864 = vunpack.c.h.b16 %v782
    %v1865 = vunpack.c.l.b16 %v783
    %v1866 = vunpack.c.h.b16 %v783
    %v1867 = vunpack.c.l.b16 %v784
    %v1868 = vunpack.c.h.b16 %v784
    %v1869 = vunpack.c.l.b16 %v785
    %v1870 = vunpack.c.h.b16 %v785
    %v1871 = vunpack.c.l.b16 %v786
    %v1872 = vunpack.c.h.b16 %v786
    %v1873 = vunpack.c.l.b16 %v787
    %v1874 = vunpack.c.h.b16 %v787
    %v1875 = vunpack.c.l.b16 %v788
    %v1876 = vunpack.c.h.b16 %v788
    %v1877 = vunpack.c.l.b16 %v789
    %v1878 = vunpack.c.h.b16 %v789
    %v1879 = vunpack.c.l.b16 %v790
    %v1880 = vunpack.c.h.b16 %v790
    %v1881 = vunpack.c.l.b16 %v791
    %v1882 = vunpack.c.h.b16 %v791
    %v1883 = vunpack.c.l.b16 %v792
    %v1884 = vunpack.c.h.b16 %v792
    %v1885 = vunpack.c.l.b16 %v793
    %v1886 = vunpack.c.h.b16 %v793
    %v1887 = vunpack.c.l.b16 %v794
    %v1888 = vunpack.c.h.b16 %v794
    %v1889 = vunpack.c.l.b16 %v795
    %v1890 = vunpack.c.h.b16 %v795
    %v1891 = vunpack.c.l.b16 %v796
    %v1892 = vunpack.c.h.b16 %v796
    %v1893 = vunpack.c.l.b16 %v797
    %v1894 = vunpack.c.h.b16 %v797
    %v1895 = vunpack.c.l.b16 %v798
    %v1896 = vunpack.c.h.b16 %v798
    %v1897 = vunpack.c.l.b16 %v799
    %v1898 = vunpack.c.h.b16 %v799
    %v1899 = vunpack.c.l.b16 %v800
    %v1900 = vunpack.c.h.b16 %v800
    %v1901 = vunpack.c.l.b16 %v801
    %v1902 = vunpack.c.h.b16 %v801
    %v1903 = vunpack.c.l.b16 %v802
    %v1904 = vunpack.c.h.b16 %v802
    %v1905 = vunpack.c.l.b16 %v803
    %v1906 = vunpack.c.h.b16 %v803
    %v1907 = vunpack.c.l.b16 %v804
    %v1908 = vunpack.c.h.b16 %v804
    %v1909 = vunpack.c.l.b16 %v805
    %v1910 = vunpack.c.h.b16 %v805
    %v1911 = vunpack.c.l.b16 %v806
    %v1912 = vunpack.c.h.b16 %v806
    %v1913 = vunpack.c.l.b16 %v807
    %v1914 = vunpack.c.h.b16 %v807
    %v1915 = vunpack.c.l.b16 %v808
    %v1916 = vunpack.c.h.b16 %v808
    %v1917 = vunpack.c.l.b16 %v809
    %v1918 = vunpack.c.h.b16 %v809
    %v1919 = vunpack.c.l.b16 %v810
    %v1920 = vunpack.c.h.b16 %v810
    %v1921 = vunpack.c.l.b16 %v811
    %v1922 = vunpack.c.h.b16 %v811
    %v1923 = vunpack.c.l.b16 %v812
    %v1924 = vunpack.c.h.b16 %v812
    %v1925 = vunpack.c.l.b16 %v813
    %v1926 = vunpack.c.h.b16 %v813
    %v1927 = vunpack.c.l.b16 %v814
    %v1928 = vunpack.c.h.b16 %v814
    %v1929 = vunpack.c.l.b16 %v815
    %v1930 = vunpack.c.h.b16 %v815
    %v1931 = vunpack.c.l.b16 %v816
    %v1932 = vunpack.c.h.b16 %v816
    %v1933 = vunpack.c.l.b16 %v817
    %v1934 = vunpack.c.h.b16 %v817
    %v1935 = vunpack.c.l.b16 %v818
    %v1936 = vunpack.c.h.b16 %v818
    %v1937 = vunpack.c.l.b16 %v819
    %v1938 = vunpack.c.h.b16 %v819
    %v1939 = vunpack.c.l.b16 %v820
    %v1940 = vunpack.c.h.b16 %v820
    %v1941 = vunpack.c.l.b16 %v821
    %v1942 = vunpack.c.h.b16 %v821
    %v1943 = vunpack.c.l.b16 %v822
    %v1944 = vunpack.c.h.b16 %v822
    %v1945 = vunpack.c.l.b16 %v823
    %v1946 = vunpack.c.h.b16 %v823
    %v1947 = vunpack.c.l.b16 %v824
    %v1948 = vunpack.c.h.b16 %v824
    %v1949 = vunpack.c.l.b16 %v825
    %v1950 = vunpack.c.h.b16 %v825
    %v1951 = vunpack.c.l.b16 %v826
    %v1952 = vunpack.c.h.b16 %v826
    %v1953 = vunpack.c.l.b16 %v827
    %v1954 = vunpack.c.h.b16 %v827
    %v1955 = vunpack.c.l.b16 %v828
    %v1956 = vunpack.c.h.b16 %v828
    %v1957 = vunpack.c.l.b16 %v829
    %v1958 = vunpack.c.h.b16 %v829
    %v1959 = vunpack.c.l.b16 %v830
    %v1960 = vunpack.c.h.b16 %v830
    %v1961 = vunpack.c.l.b16 %v831
    %v1962 = vunpack.c.h.b16 %v831
    %v1963 = vunpack.c.l.b16 %v832
    %v1964 = vunpack.c.h.b16 %v832
    %v1965 = vunpack.c.l.b16 %v833
    %v1966 = vunpack.c.h.b16 %v833
    %v1967 = vunpack.c.l.b16 %v834
    %v1968 = vunpack.c.h.b16 %v834
    %v1969 = vunpack.c.l.b16 %v835
    %v1970 = vunpack.c.h.b16 %v835
    %v1971 = vunpack.c.l.b16 %v836
    %v1972 = vunpack.c.h.b16 %v836
    %v1973 = vunpack.c.l.b16 %v837
    %v1974 = vunpack.c.h.b16 %v837
    %v1975 = vunpack.c.l.b16 %v838
    %v1976 = vunpack.c.h.b16 %v838
    %v1977 = vunpack.c.l.b16 %v839
    %v1978 = vunpack.c.h.b16 %v839
    %v1979 = vunpack.c.l.b16 %v840
    %v1980 = vunpack.c.h.b16 %v840
    %v1981 = vunpack.c.l.b16 %v841
    %v1982 = vunpack.c.h.b16 %v841
    %v1983 = vunpack.c.l.b16 %v842
    %v1984 = vunpack.c.h.b16 %v842
    %v1985 = vunpack.c.l.b16 %v843
    %v1986 = vunpack.c.h.b16 %v843
    %v1987 = vunpack.c.l.b16 %v844
    %v1988 = vunpack.c.h.b16 %v844
    %v1989 = vunpack.c.l.b16 %v845
    %v1990 = vunpack.c.h.b16 %v845
    %v1991 = vunpack.c.l.b16 %v846
    %v1992 = vunpack.c.h.b16 %v846
    %v1993 = vunpack.c.l.b16 %v847
    %v1994 = vunpack.c.h.b16 %v847
    %v1995 = vunpack.c.l.b16 %v848
    %v1996 = vunpack.c.h.b16 %v848
    %v1997 = vunpack.c.l.b16 %v849
    %v1998 = vunpack.c.h.b16 %v849
    %v1999 = vunpack.c.l.b16 %v850
    %v2000 = vunpack.c.h.b16 %v850
    %v2001 = vunpack.c.l.b16 %v851
    %v2002 = vunpack.c.h.b16 %v851
    %v2003 = vunpack.c.l.b16 %v852
    %v2004 = vunpack.c.h.b16 %v852
    %v2005 = vunpack.c.l.b16 %v853
    %v2006 = vunpack.c.h.b16 %v853
    %v2007 = vunpack.c.l.b16 %v854
    %v2008 = vunpack.c.h.b16 %v854
    %v2009 = vunpack.c.l.b16 %v855
    %v2010 = vunpack.c.h.b16 %v855
    %v2011 = vunpack.c.l.b16 %v856
    %v2012 = vunpack.c.h.b16 %v856
    %v2013 = vunpack.c.l.b16 %v857
    %v2014 = vunpack.c.h.b16 %v857
    %v2015 = vunpack.c.l.b16 %v858
    %v2016 = vunpack.c.h.b16 %v858
    %v2017 = vunpack.c.l.b16 %v859
    %v2018 = vunpack.c.h.b16 %v859
    %v2019 = vunpack.c.l.b16 %v860
    %v2020 = vunpack.c.h.b16 %v860
    %v2021 = vunpack.c.l.b16 %v861
    %v2022 = vunpack.c.h.b16 %v861
    %v2023 = vunpack.c.l.b16 %v862
    %v2024 = vunpack.c.h.b16 %v862
    %v2025 = vunpack.c.l.b16 %v863
    %v2026 = vunpack.c.h.b16 %v863
    %v2027 = vunpack.c.l.b16 %v864
    %v2028 = vunpack.c.h.b16 %v864
    %v2029 = vunpack.c.l.b16 %v865
    %v2030 = vunpack.c.h.b16 %v865
    %v2031 = vunpack.c.l.b16 %v866
    %v2032 = vunpack.c.h.b16 %v866
    %v2033 = vunpack.c.l.b16 %v867
    %v2034 = vunpack.c.h.b16 %v867
    %v2035 = vunpack.c.l.b16 %v868
    %v2036 = vunpack.c.h.b16 %v868
    %v2037 = vunpack.c.l.b16 %v869
    %v2038 = vunpack.c.h.b16 %v869
    %v2039 = vunpack.c.l.b16 %v870
    %v2040 = vunpack.c.h.b16 %v870
    %v2041 = vunpack.c.l.b16 %v871
    %v2042 = vunpack.c.h.b16 %v871
    %v2043 = vunpack.c.l.b16 %v872
    %v2044 = vunpack.c.h.b16 %v872
    %v2045 = vunpack.c.l.b16 %v873
    %v2046 = vunpack.c.h.b16 %v873
    %v2047 = vunpack.c.l.b16 %v874
    %v2048 = vunpack.c.h.b16 %v874
    %v2049 = vunpack.c.l.b16 %v875
    %v2050 = vunpack.c.h.b16 %v875
    %v2051 = vunpack.c.l.b16 %v876
    %v2052 = vunpack.c.h.b16 %v876
    %v2053 = vunpack.c.l.b16 %v877
    %v2054 = vunpack.c.h.b16 %v877
    %v2055 = vunpack.c.l.b16 %v878
    %v2056 = vunpack.c.h.b16 %v878
    %v2057 = vunpack.c.l.b16 %v879
    %v2058 = vunpack.c.h.b16 %v879
    %v2059 = vunpack.c.l.b16 %v880
    %v2060 = vunpack.c.h.b16 %v880
    %v2061 = vunpack.c.l.b16 %v881
    %v2062 = vunpack.c.h.b16 %v881
    %v2063 = vunpack.c.l.b16 %v882
    %v2064 = vunpack.c.h.b16 %v882
    %v2065 = vunpack.c.l.b16 %v883
    %v2066 = vunpack.c.h.b16 %v883
    %v2067 = vunpack.c.l.b16 %v884
    %v2068 = vunpack.c.h.b16 %v884
    %v2069 = vunpack.c.l.b16 %v885
    %v2070 = vunpack.c.h.b16 %v885
    %v2071 = vunpack.c.l.b16 %v886
    %v2072 = vunpack.c.h.b16 %v886
    %v2073 = vunpack.c.l.b16 %v887
    %v2074 = vunpack.c.h.b16 %v887
    %v2075 = vunpack.c.l.b16 %v888
    %v2076 = vunpack.c.h.b16 %v888
    %v2077 = vunpack.c.l.b16 %v889
    %v2078 = vunpack.c.h.b16 %v889
    %v2079 = vunpack.c.l.b16 %v890
    %v2080 = vunpack.c.h.b16 %v890
    %v2081 = vunpack.c.l.b16 %v891
    %v2082 = vunpack.c.h.b16 %v891
    %v2083 = vunpack.c.l.b16 %v892
    %v2084 = vunpack.c.h.b16 %v892
    %v2085 = vunpack.c.l.b16 %v893
    %v2086 = vunpack.c.h.b16 %v893
    %v2087 = vunpack.c.l.b16 %v894
    %v2088 = vunpack.c.h.b16 %v894
    %v2089 = vunpack.c.l.b16 %v895
    %v2090 = vunpack.c.h.b16 %v895
    %v2091 = vunpack.c.l.b16 %v896
    %v2092 = vunpack.c.h.b16 %v896
    %v2093 = vunpack.c.l.b16 %v897
    %v2094 = vunpack.c.h.b16 %v897
    %v2095 = vunpack.c.l.b16 %v898
    %v2096 = vunpack.c.h.b16 %v898
    %v2097 = vunpack.c.l.b16 %v899
    %v2098 = vunpack.c.h.b16 %v899
    %v2099 = vunpack.c.l.b16 %v900
    %v2100 = vunpack.c.h.b16 %v900
    %v2101 = vunpack.c.l.b16 %v901
    %v2102 = vunpack.c.h.b16 %v901
    %v2103 = vunpack.c.l.b16 %v902
    %v2104 = vunpack.c.h.b16 %v902
    %v2105 = vunpack.c.l.b16 %v903
    %v2106 = vunpack.c.h.b16 %v903
    %v2107 = vunpack.c.l.b16 %v904
    %v2108 = vunpack.c.h.b16 %v904
    %v2109 = vunpack.c.l.b16 %v905
    %v2110 = vunpack.c.h.b16 %v905
    %v2111 = vunpack.c.l.b16 %v906
    %v2112 = vunpack.c.h.b16 %v906
    %v2113 = vunpack.c.l.b16 %v907
    %v2114 = vunpack.c.h.b16 %v907
    %v2115 = vunpack.c.l.b16 %v908
    %v2116 = vunpack.c.h.b16 %v908
    %v2117 = vunpack.c.l.b16 %v909
    %v2118 = vunpack.c.h.b16 %v909
    %v2119 = vunpack.c.l.b16 %v910
    %v2120 = vunpack.c.h.b16 %v910
    %v2121 = vunpack.c.l.b16 %v911
    %v2122 = vunpack.c.h.b16 %v911
    %v2123 = vunpack.c.l.b16 %v912
    %v2124 = vunpack.c.h.b16 %v912
    %v2125 = vunpack.c.l.b16 %v913
    %v2126 = vunpack.c.h.b16 %v913
    %v2127 = vunpack.c.l.b16 %v914
    %v2128 = vunpack.c.h.b16 %v914
    %v2129 = vunpack.c.l.b16 %v915
    %v2130 = vunpack.c.h.b16 %v915
    %v2131 = vunpack.c.l.b16 %v916
    %v2132 = vunpack.c.h.b16 %v916
    %v2133 = vpack.c.b16 %v1377, %v1365
    %v2134 = vpack.c.b16 %v1378, %v1366
    %v2135 = vpack.c.b16 %v1379, %v1367
    %v2136 = vpack.c.b16 %v1380, %v1368
    %v2137 = vpack.c.b16 %v1381, %v1369
    %v2138 = vpack.c.b16 %v1382, %v1370
    %v2139 = vpack.c.b16 %v1383, %v1371
    %v2140 = vpack.c.b16 %v1384, %v1372
    %v2141 = vpack.c.b16 %v1385, %v1373
    %v2142 = vpack.c.b16 %v1386, %v1374
    %v2143 = vpack.c.b16 %v1387, %v1375
    %v2144 = vpack.c.b16 %v1388, %v1376
    %v2145 = vpack.c.b16 %v1401, %v1389
    %v2146 = vpack.c.b16 %v1402, %v1390
    %v2147 = vpack.c.b16 %v1403, %v1391
    %v2148 = vpack.c.b16 %v1404, %v1392
    %v2149 = vpack.c.b16 %v1405, %v1393
    %v2150 = vpack.c.b16 %v1406, %v1394
    %v2151 = vpack.c.b16 %v1407, %v1395
    %v2152 = vpack.c.b16 %v1408, %v1396
    %v2153 = vpack.c.b16 %v1409, %v1397
    %v2154 = vpack.c.b16 %v1410, %v1398
    %v2155 = vpack.c.b16 %v1411, %v1399
    %v2156 = vpack.c.b16 %v1412, %v1400
    %v2157 = vpack.c.b16 %v1425, %v1413
    %v2158 = vpack.c.b16 %v1426, %v1414
    %v2159 = vpack.c.b16 %v1427, %v1415
    %v2160 = vpack.c.b16 %v1428, %v1416
    %v2161 = vpack.c.b16 %v1429, %v1417
    %v2162 = vpack.c.b16 %v1430, %v1418
    %v2163 = vpack.c.b16 %v1431, %v1419
    %v2164 = vpack.c.b16 %v1432, %v1420
    %v2165 = vpack.c.b16 %v1433, %v1421
    %v2166 = vpack.c.b16 %v1434, %v1422
    %v2167 = vpack.c.b16 %v1435, %v1423
    %v2168 = vpack.c.b16 %v1436, %v1424
    %v2169 = vpack.c.b16 %v1449, %v1437
    %v2170 = vpack.c.b16 %v1450, %v1438
    %v2171 = vpack.c.b16 %v1451, %v1439
    %v2172 = vpack.c.b16 %v1452, %v1440
    %v2173 = vpack.c.b16 %v1453, %v1441
    %v2174 = vpack.c.b16 %v1454, %v1442
    %v2175 = vpack.c.b16 %v1455, %v1443
    %v2176 = vpack.c.b16 %v1456, %v1444
    %v2177 = vpack.c.b16 %v1457, %v1445
    %v2178 = vpack.c.b16 %v1458, %v1446
    %v2179 = vpack.c.b16 %v1459, %v1447
    %v2180 = vpack.c.b16 %v1460, %v1448
    %v2181 = vpack.c.b16 %v1473, %v1461
    %v2182 = vpack.c.b16 %v1474, %v1462
    %v2183 = vpack.c.b16 %v1475, %v1463
    %v2184 = vpack.c.b16 %v1476, %v1464
    %v2185 = vpack.c.b16 %v1477, %v1465
    %v2186 = vpack.c.b16 %v1478, %v1466
    %v2187 = vpack.c.b16 %v1479, %v1467
    %v2188 = vpack.c.b16 %v1480, %v1468
    %v2189 = vpack.c.b16 %v1481, %v1469
    %v2190 = vpack.c.b16 %v1482, %v1470
    %v2191 = vpack.c.b16 %v1483, %v1471
    %v2192 = vpack.c.b16 %v1484, %v1472
    %v2193 = vpack.c.b16 %v1497, %v1485
    %v2194 = vpack.c.b16 %v1498, %v1486
    %v2195 = vpack.c.b16 %v1499, %v1487
    %v2196 = vpack.c.b16 %v1500, %v1488
    %v2197 = vpack.c.b16 %v1501, %v1489
    %v2198 = vpack.c.b16 %v1502, %v1490
    %v2199 = vpack.c.b16 %v1503, %v1491
    %v2200 = vpack.c.b16 %v1504, %v1492
    %v2201 = vpack.c.b16 %v1505, %v1493
    %v2202 = vpack.c.b16 %v1506, %v1494
    %v2203 = vpack.c.b16 %v1507, %v1495
    %v2204 = vpack.c.b16 %v1508, %v1496
    %v2205 = vpack.c.b16 %v1521, %v1509
    %v2206 = vpack.c.b16 %v1522, %v1510
    %v2207 = vpack.c.b16 %v1523, %v1511
    %v2208 = vpack.c.b16 %v1524, %v1512
    %v2209 = vpack.c.b16 %v1525, %v1513
    %v2210 = vpack.c.b16 %v1526, %v1514
    %v2211 = vpack.c.b16 %v1527, %v1515
    %v2212 = vpack.c.b16 %v1528, %v1516
    %v2213 = vpack.c.b16 %v1529, %v1517
    %v2214 = vpack.c.b16 %v1530, %v1518
    %v2215 = vpack.c.b16 %v1531, %v1519
    %v2216 = vpack.c.b16 %v1532, %v1520
    %v2217 = vpack.c.b16 %v1545, %v1533
    %v2218 = vpack.c.b16 %v1546, %v1534
    %v2219 = vpack.c.b16 %v1547, %v1535
    %v2220 = vpack.c.b16 %v1548, %v1536
    %v2221 = vpack.c.b16 %v1549, %v1537
    %v2222 = vpack.c.b16 %v1550, %v1538
    %v2223 = vpack.c.b16 %v1551, %v1539
    %v2224 = vpack.c.b16 %v1552, %v1540
    %v2225 = vpack.c.b16 %v1553, %v1541
    %v2226 = vpack.c.b16 %v1554, %v1542
    %v2227 = vpack.c.b16 %v1555, %v1543
    %v2228 = vpack.c.b16 %v1556, %v1544
    %v2229 = vpack.c.b16 %v1569, %v1557
    %v2230 = vpack.c.b16 %v1570, %v1558
    %v2231 = vpack.c.b16 %v1571, %v1559
    %v2232 = vpack.c.b16 %v1572, %v1560
    %v2233 = vpack.c.b16 %v1573, %v1561
    %v2234 = vpack.c.b16 %v1574, %v1562
    %v2235 = vpack.c.b16 %v1575, %v1563
    %v2236 = vpack.c.b16 %v1576, %v1564
    %v2237 = vpack.c.b16 %v1577, %v1565
    %v2238 = vpack.c.b16 %v1578, %v1566
    %v2239 = vpack.c.b16 %v1579, %v1567
    %v2240 = vpack.c.b16 %v1580, %v1568
    %v2241 = vpack.c.b16 %v1593, %v1581
    %v2242 = vpack.c.b16 %v1594, %v1582
    %v2243 = vpack.c.b16 %v1595, %v1583
    %v2244 = vpack.c.b16 %v1596, %v1584
    %v2245 = vpack.c.b16 %v1597, %v1585
    %v2246 = vpack.c.b16 %v1598, %v1586
    %v2247 = vpack.c.b16 %v1599, %v1587
    %v2248 = vpack.c.b16 %v1600, %v1588
    %v2249 = vpack.c.b16 %v1601, %v1589
    %v2250 = vpack.c.b16 %v1602, %v1590
    %v2251 = vpack.c.b16 %v1603, %v1591
    %v2252 = vpack.c.b16 %v1604, %v1592
    %v2253 = vpack.c.b16 %v1617, %v1605
    %v2254 = vpack.c.b16 %v1618, %v1606
    %v2255 = vpack.c.b16 %v1619, %v1607
    %v2256 = vpack.c.b16 %v1620, %v1608
    %v2257 = vpack.c.b16 %v1621, %v1609
    %v2258 = vpack.c.b16 %v1622, %v1610
    %v2259 = vpack.c.b16 %v1623, %v1611
    %v2260 = vpack.c.b16 %v1624, %v1612
    %v2261 = vpack.c.b16 %v1625, %v1613
    %v2262 = vpack.c.b16 %v1626, %v1614
    %v2263 = vpack.c.b16 %v1627, %v1615
    %v2264 = vpack.c.b16 %v1628, %v1616
    %v2265 = vpack.c.b16 %v1641, %v1629
    %v2266 = vpack.c.b16 %v1642, %v1630
    %v2267 = vpack.c.b16 %v1643, %v1631
    %v2268 = vpack.c.b16 %v1644, %v1632
    %v2269 = vpack.c.b16 %v1645, %v1633
    %v2270 = vpack.c.b16 %v1646, %v1634
    %v2271 = vpack.c.b16 %v1647, %v1635
    %v2272 = vpack.c.b16 %v1648, %v1636
    %v2273 = vpack.c.b16 %v1649, %v1637
    %v2274 = vpack.c.b16 %v1650, %v1638
    %v2275 = vpack.c.b16 %v1651, %v1639
    %v2276 = vpack.c.b16 %v1652, %v1640
    %v2277 = vpack.c.b16 %v1665, %v1653
    %v2278 = vpack.c.b16 %v1666, %v1654
    %v2279 = vpack.c.b16 %v1667, %v1655
    %v2280 = vpack.c.b16 %v1668, %v1656
    %v2281 = vpack.c.b16 %v1669, %v1657
    %v2282 = vpack.c.b16 %v1670, %v1658
    %v2283 = vpack.c.b16 %v1671, %v1659
    %v2284 = vpack.c.b16 %v1672, %v1660
    %v2285 = vpack.c.b16 %v1673, %v1661
    %v2286 = vpack.c.b16 %v1674, %v1662
    %v2287 = vpack.c.b16 %v1675, %v1663
    %v2288 = vpack.c.b16 %v1676, %v1664
    %v2289 = vpack.c.b16 %v1689, %v1677
    %v2290 = vpack.c.b16 %v1690, %v1678
    %v2291 = vpack.c.b16 %v1691, %v1679
    %v2292 = vpack.c.b16 %v1692, %v1680
    %v2293 = vpack.c.b16 %v1693, %v1681
    %v2294 = vpack.c.b16 %v1694, %v1682
    %v2295 = vpack.c.b16 %v1695, %v1683
    %v2296 = vpack.c.b16 %v1696, %v1684
    %v2297 = vpack.c.b16 %v1697, %v1685
    %v2298 = vpack.c.b16 %v1698, %v1686
    %v2299 = vpack.c.b16 %v1699, %v1687
    %v2300 = vpack.c.b16 %v1700, %v1688
    %v2301 = vpack.c.b16 %v1713, %v1701
    %v2302 = vpack.c.b16 %v1714, %v1702
    %v2303 = vpack.c.b16 %v1715, %v1703
    %v2304 = vpack.c.b16 %v1716, %v1704
    %v2305 = vpack.c.b16 %v1717, %v1705
    %v2306 = vpack.c.b16 %v1718, %v1706
    %v2307 = vpack.c.b16 %v1719, %v1707
    %v2308 = vpack.c.b16 %v1720, %v1708
    %v2309 = vpack.c.b16 %v1721, %v1709
    %v2310 = vpack.c.b16 %v1722, %v1710
    %v2311 = vpack.c.b16 %v1723, %v1711
    %v2312 = vpack.c.b16 %v1724, %v1712
    %v2313 = vpack.c.b16 %v1737, %v1725
    %v2314 = vpack.c.b16 %v1738, %v1726
    %v2315 = vpack.c.b16 %v1739, %v1727
    %v2316 = vpack.c.b16 %v1740, %v1728
    %v2317 = vpack.c.b16 %v1741, %v1729
    %v2318 = vpack.c.b16 %v1742, %v1730
    %v2319 = vpack.c.b16 %v1743, %v1731
    %v2320 = vpack.c.b16 %v1744, %v1732
    %v2321 = vpack.c.b16 %v1745, %v1733
    %v2322 = vpack.c.b16 %v1746, %v1734
    %v2323 = vpack.c.b16 %v1747, %v1735
    %v2324 = vpack.c.b16 %v1748, %v1736
    %v2325 = vpack.c.b16 %v1761, %v1749
    %v2326 = vpack.c.b16 %v1762, %v1750
    %v2327 = vpack.c.b16 %v1763, %v1751
    %v2328 = vpack.c.b16 %v1764, %v1752
    %v2329 = vpack.c.b16 %v1765, %v1753
    %v2330 = vpack.c.b16 %v1766, %v1754
    %v2331 = vpack.c.b16 %v1767, %v1755
    %v2332 = vpack.c.b16 %v1768, %v1756
    %v2333 = vpack.c.b16 %v1769, %v1757
    %v2334 = vpack.c.b16 %v1770, %v1758
    %v2335 = vpack.c.b16 %v1771, %v1759
    %v2336 = vpack.c.b16 %v1772, %v1760
    %v2337 = vpack.c.b16 %v1785, %v1773
    %v2338 = vpack.c.b16 %v1786, %v1774
    %v2339 = vpack.c.b16 %v1787, %v1775
    %v2340 = vpack.c.b16 %v1788, %v1776
    %v2341 = vpack.c.b16 %v1789, %v1777
    %v2342 = vpack.c.b16 %v1790, %v1778
    %v2343 = vpack.c.b16 %v1791, %v1779
    %v2344 = vpack.c.b16 %v1792, %v1780
    %v2345 = vpack.c.b16 %v1793, %v1781
    %v2346 = vpack.c.b16 %v1794, %v1782
    %v2347 = vpack.c.b16 %v1795, %v1783
    %v2348 = vpack.c.b16 %v1796, %v1784
    %v2349 = vpack.c.b16 %v1809, %v1797
    %v2350 = vpack.c.b16 %v1810, %v1798
    %v2351 = vpack.c.b16 %v1811, %v1799
    %v2352 = vpack.c.b16 %v1812, %v1800
    %v2353 = vpack.c.b16 %v1813, %v1801
    %v2354 = vpack.c.b16 %v1814, %v1802
    %v2355 = vpack.c.b16 %v1815, %v1803
    %v2356 = vpack.c.b16 %v1816, %v1804
    %v2357 = vpack.c.b16 %v1817, %v1805
    %v2358 = vpack.c.b16 %v1818, %v1806
    %v2359 = vpack.c.b16 %v1819, %v1807
    %v2360 = vpack.c.b16 %v1820, %v1808
    %v2361 = vpack.c.b16 %v1833, %v1821
    %v2362 = vpack.c.b16 %v1834, %v1822
    %v2363 = vpack.c.b16 %v1835, %v1823
    %v2364 = vpack.c.b16 %v1836, %v1824
    %v2365 = vpack.c.b16 %v1837, %v1825
    %v2366 = vpack.c.b16 %v1838, %v1826
    %v2367 = vpack.c.b16 %v1839, %v1827
    %v2368 = vpack.c.b16 %v1840, %v1828
    %v2369 = vpack.c.b16 %v1841, %v1829
    %v2370 = vpack.c.b16 %v1842, %v1830
    %v2371 = vpack.c.b16 %v1843, %v1831
    %v2372 = vpack.c.b16 %v1844, %v1832
    %v2373 = vpack.c.b16 %v1857, %v1845
    %v2374 = vpack.c.b16 %v1858, %v1846
    %v2375 = vpack.c.b16 %v1859, %v1847
    %v2376 = vpack.c.b16 %v1860, %v1848
    %v2377 = vpack.c.b16 %v1861, %v1849
    %v2378 = vpack.c.b16 %v1862, %v1850
    %v2379 = vpack.c.b16 %v1863, %v1851
    %v2380 = vpack.c.b16 %v1864, %v1852
    %v2381 = vpack.c.b16 %v1865, %v1853
    %v2382 = vpack.c.b16 %v1866, %v1854
    %v2383 = vpack.c.b16 %v1867, %v1855
    %v2384 = vpack.c.b16 %v1868, %v1856
    %v2385 = vpack.c.b16 %v1881, %v1869
    %v2386 = vpack.c.b16 %v1882, %v1870
    %v2387 = vpack.c.b16 %v1883, %v1871
    %v2388 = vpack.c.b16 %v1884, %v1872
    %v2389 = vpack.c.b16 %v1885, %v1873
    %v2390 = vpack.c.b16 %v1886, %v1874
    %v2391 = vpack.c.b16 %v1887, %v1875
    %v2392 = vpack.c.b16 %v1888, %v1876
    %v2393 = vpack.c.b16 %v1889, %v1877
    %v2394 = vpack.c.b16 %v1890, %v1878
    %v2395 = vpack.c.b16 %v1891, %v1879
    %v2396 = vpack.c.b16 %v1892, %v1880
    %v2397 = vpack.c.b16 %v1905, %v1893
    %v2398 = vpack.c.b16 %v1906, %v1894
    %v2399 = vpack.c.b16 %v1907, %v1895
    %v2400 = vpack.c.b16 %v1908, %v1896
    %v2401 = vpack.c.b16 %v1909, %v1897
    %v2402 = vpack.c.b16 %v1910, %v1898
    %v2403 = vpack.c.b16 %v1911, %v1899
    %v2404 = vpack.c.b16 %v1912, %v1900
    %v2405 = vpack.c.b16 %v1913, %v1901
    %v2406 = vpack.c.b16 %v1914, %v1902
    %v2407 = vpack.c.b16 %v1915, %v1903
    %v2408 = vpack.c.b16 %v1916, %v1904
    %v2409 = vpack.c.b16 %v1929, %v1917
    %v2410 = vpack.c.b16 %v1930, %v1918
    %v2411 = vpack.c.b16 %v1931, %v1919
    %v2412 = vpack.c.b16 %v1932, %v1920
    %v2413 = vpack.c.b16 %v1933, %v1921
    %v2414 = vpack.c.b16 %v1934, %v1922
    %v2415 = vpack.c.b16 %v1935, %v1923
    %v2416 = vpack.c.b16 %v1936, %v1924
    %v2417 = vpack.c.b16 %v1937, %v1925
    %v2418 = vpack.c.b16 %v1938, %v1926
    %v2419 = vpack.c.b16 %v1939, %v1927
    %v2420 = vpack.c.b16 %v1940, %v1928
    %v2421 = vpack.c.b16 %v1953, %v1941
    %v2422 = vpack.c.b16 %v1954, %v1942
    %v2423 = vpack.c.b16 %v1955, %v1943
    %v2424 = vpack.c.b16 %v1956, %v1944
    %v2425 = vpack.c.b16 %v1957, %v1945
    %v2426 = vpack.c.b16 %v1958, %v1946
    %v2427 = vpack.c.b16 %v1959, %v1947
    %v2428 = vpack.c.b16 %v1960, %v1948
    %v2429 = vpack.c.b16 %v1961, %v1949
    %v2430 = vpack.c.b16 %v1962, %v1950
    %v2431 = vpack.c.b16 %v1963, %v1951
    %v2432 = vpack.c.b16 %v1964, %v1952
    %v2433 = vpack.c.b16 %v1977, %v1965
    %v2434 = vpack.c.b16 %v1978, %v1966
    %v2435 = vpack.c.b16 %v1979, %v1967
    %v2436 = vpack.c.b16 %v1980, %v1968
    %v2437 = vpack.c.b16 %v1981, %v1969
    %v2438 = vpack.c.b16 %v1982, %v1970
    %v2439 = vpack.c.b16 %v1983, %v1971
    %v2440 = vpack.c.b16 %v1984, %v1972
    %v2441 = vpack.c.b16 %v1985, %v1973
    %v2442 = vpack.c.b16 %v1986, %v1974
    %v2443 = vpack.c.b16 %v1987, %v1975
    %v2444 = vpack.c.b16 %v1988, %v1976
    %v2445 = vpack.c.b16 %v2001, %v1989
    %v2446 = vpack.c.b16 %v2002, %v1990
    %v2447 = vpack.c.b16 %v2003, %v1991
    %v2448 = vpack.c.b16 %v2004, %v1992
    %v2449 = vpack.c.b16 %v2005, %v1993
    %v2450 = vpack.c.b16 %v2006, %v1994
    %v2451 = vpack.c.b16 %v2007, %v1995
    %v2452 = vpack.c.b16 %v2008, %v1996
    %v2453 = vpack.c.b16 %v2009, %v1997
    %v2454 = vpack.c.b16 %v2010, %v1998
    %v2455 = vpack.c.b16 %v2011, %v1999
    %v2456 = vpack.c.b16 %v2012, %v2000
    %v2457 = vpack.c.b16 %v2025, %v2013
    %v2458 = vpack.c.b16 %v2026, %v2014
    %v2459 = vpack.c.b16 %v2027, %v2015
    %v2460 = vpack.c.b16 %v2028, %v2016
    %v2461 = vpack.c.b16 %v2029, %v2017
    %v2462 = vpack.c.b16 %v2030, %v2018
    %v2463 = vpack.c.b16 %v2031, %v2019
    %v2464 = vpack.c.b16 %v2032, %v2020
    %v2465 = vpack.c.b16 %v2033, %v2021
    %v2466 = vpack.c.b16 %v2034, %v2022
    %v2467 = vpack.c.b16 %v2035, %v2023
    %v2468 = vpack.c.b16 %v2036, %v2024
    %v2469 = vpack.c.b16 %v2049, %v2037
    %v2470 = vpack.c.b16 %v2050, %v2038
    %v2471 = vpack.c.b16 %v2051, %v2039
    %v2472 = vpack.c.b16 %v2052, %v2040
    %v2473 = vpack.c.b16 %v2053, %v2041
    %v2474 = vpack.c.b16 %v2054, %v2042
    %v2475 = vpack.c.b16 %v2055, %v2043
    %v2476 = vpack.c.b16 %v2056, %v2044
    %v2477 = vpack.c.b16 %v2057, %v2045
    %v2478 = vpack.c.b16 %v2058, %v2046
    %v2479 = vpack.c.b16 %v2059, %v2047
    %v2480 = vpack.c.b16 %v2060, %v2048
    %v2481 = vpack.c.b16 %v2073, %v2061
    %v2482 = vpack.c.b16 %v2074, %v2062
    %v2483 = vpack.c.b16 %v2075, %v2063
    %v2484 = vpack.c.b16 %v2076, %v2064
    %v2485 = vpack.c.b16 %v2077, %v2065
    %v2486 = vpack.c.b16 %v2078, %v2066
    %v2487 = vpack.c.b16 %v2079, %v2067
    %v2488 = vpack.c.b16 %v2080, %v2068
    %v2489 = vpack.c.b16 %v2081, %v2069
    %v2490 = vpack.c.b16 %v2082, %v2070
    %v2491 = vpack.c.b16 %v2083, %v2071
    %v2492 = vpack.c.b16 %v2084, %v2072
    %v2493 = vpack.c.b16 %v2097, %v2085
    %v2494 = vpack.c.b16 %v2098, %v2086
    %v2495 = vpack.c.b16 %v2099, %v2087
    %v2496 = vpack.c.b16 %v2100, %v2088
    %v2497 = vpack.c.b16 %v2101, %v2089
    %v2498 = vpack.c.b16 %v2102, %v2090
    %v2499 = vpack.c.b16 %v2103, %v2091
    %v2500 = vpack.c.b16 %v2104, %v2092
    %v2501 = vpack.c.b16 %v2105, %v2093
    %v2502 = vpack.c.b16 %v2106, %v2094
    %v2503 = vpack.c.b16 %v2107, %v2095
    %v2504 = vpack.c.b16 %v2108, %v2096
    %v2505 = vpack.c.b16 %v2121, %v2109
    %v2506 = vpack.c.b16 %v2122, %v2110
    %v2507 = vpack.c.b16 %v2123, %v2111
    %v2508 = vpack.c.b16 %v2124, %v2112
    %v2509 = vpack.c.b16 %v2125, %v2113
    %v2510 = vpack.c.b16 %v2126, %v2114
    %v2511 = vpack.c.b16 %v2127, %v2115
    %v2512 = vpack.c.b16 %v2128, %v2116
    %v2513 = vpack.c.b16 %v2129, %v2117
    %v2514 = vpack.c.b16 %v2130, %v2118
    %v2515 = vpack.c.b16 %v2131, %v2119
    %v2516 = vpack.c.b16 %v2132, %v2120
    %2901 = vmatprep.subr.bf16.mxu0 %v2218
    %2902 = vmatpush1.bf16.msra.mxu0 %v2217
    %2903 = vmatprep.subr.bf16.mxu0 %v2206
    %2904 = vmatpush1.bf16.msra.mxu0 %v2205
    %2905 = vmatprep.subr.bf16.mxu0 %v2194
    %2906 = vmatpush1.bf16.msra.mxu0 %v2193
    %2907 = vmatprep.subr.bf16.mxu0 %v2182
    %2908 = vmatpush1.bf16.msra.mxu0 %v2181
    %2909 = vmatprep.subr.bf16.mxu0 %v2170
    %2910 = vmatpush1.bf16.msra.mxu0 %v2169
    %2911 = vmatprep.subr.bf16.mxu0 %v2158
    %2912 = vmatpush1.bf16.msra.mxu0 %v2157
    %2913 = vmatprep.subr.bf16.mxu0 %v2146
    %2914 = vmatpush1.bf16.msra.mxu0 %v2145
    %2915 = vmatprep.subr.bf16.mxu0 %v2134
    %2916 = vmatpush1.bf16.msra.mxu0 %v2133
    %2917 = vmatprep.subr.bf16.mxu0 %v2314
    %2918 = vmatpush2.bf16.msra.mxu0 %v2313
    %2919 = vmatprep.subr.bf16.mxu0 %v2302
    %2920 = vmatpush2.bf16.msra.mxu0 %v2301
    %2921 = vmatprep.subr.bf16.mxu0 %v2290
    %2922 = vmatpush2.bf16.msra.mxu0 %v2289
    %2923 = vmatprep.subr.bf16.mxu0 %v2278
    %2924 = vmatpush2.bf16.msra.mxu0 %v2277
    %2925 = vmatprep.subr.bf16.mxu0 %v2266
    %2926 = vmatpush2.bf16.msra.mxu0 %v2265
    %2927 = vmatprep.subr.bf16.mxu0 %v2254
    %2928 = vmatpush2.bf16.msra.mxu0 %v2253
    %2929 = vmatprep.subr.bf16.mxu0 %v2242
    %2930 = vmatpush2.bf16.msra.mxu0 %v2241
    %2931 = vmatprep.subr.bf16.mxu0 %v2230
    %2932 = vmatpush2.bf16.msra.mxu0 %v2229
    %2933 = vmatprep.mubr.bf16.mxu0 %v530
    %2934 = vmatmul.mubr.bf16.gmra.mxu0 %v529
    %v2935 = vpop.f32.mrf.mxu0
    %v2936 = vadd.f32 %v924, %v2935
    %v2937 = vpop.f32.mrf.mxu0
    %v2938 = vadd.f32 %v928, %v2937
    %v2939 = vpop.f32.mrf.mxu0
    %v2940 = vadd.f32 %v924, %v2939
    %v2941 = vpop.f32.mrf.mxu0
    %v2942 = vadd.f32 %v928, %v2941
    %2943 = vdwg.mxu0
    %2944 = vmatprep.subr.bf16.mxu0 %v2410
    %2945 = vmatpush1.bf16.msra.mxu0 %v2409
    %2946 = vmatprep.subr.bf16.mxu0 %v2398
    %2947 = vmatpush1.bf16.msra.mxu0 %v2397
    %2948 = vmatprep.subr.bf16.mxu0 %v2386
    %2949 = vmatpush1.bf16.msra.mxu0 %v2385
    %2950 = vmatprep.subr.bf16.mxu0 %v2374
    %2951 = vmatpush1.bf16.msra.mxu0 %v2373
    %2952 = vmatprep.subr.bf16.mxu0 %v2362
    %2953 = vmatpush1.bf16.msra.mxu0 %v2361
    %2954 = vmatprep.subr.bf16.mxu0 %v2350
    %2955 = vmatpush1.bf16.msra.mxu0 %v2349
    %2956 = vmatprep.subr.bf16.mxu0 %v2338
    %2957 = vmatpush1.bf16.msra.mxu0 %v2337
    %2958 = vmatprep.subr.bf16.mxu0 %v2326
    %2959 = vmatpush1.bf16.msra.mxu0 %v2325
    %2960 = vmatprep.subr.bf16.mxu0 %v2506
    %2961 = vmatpush2.bf16.msra.mxu0 %v2505
    %2962 = vmatprep.subr.bf16.mxu0 %v2494
    %2963 = vmatpush2.bf16.msra.mxu0 %v2493
    %2964 = vmatprep.subr.bf16.mxu0 %v2482
    %2965 = vmatpush2.bf16.msra.mxu0 %v2481
    %2966 = vmatprep.subr.bf16.mxu0 %v2470
    %2967 = vmatpush2.bf16.msra.mxu0 %v2469
    %2968 = vmatprep.subr.bf16.mxu0 %v2458
    %2969 = vmatpush2.bf16.msra.mxu0 %v2457
    %2970 = vmatprep.subr.bf16.mxu0 %v2446
    %2971 = vmatpush2.bf16.msra.mxu0 %v2445
    %2972 = vmatprep.subr.bf16.mxu0 %v2434
    %2973 = vmatpush2.bf16.msra.mxu0 %v2433
    %2974 = vmatprep.subr.bf16.mxu0 %v2422
    %2975 = vmatpush2.bf16.msra.mxu0 %v2421
    %2976 = vmatprep.mubr.bf16.mxu0 %v532
    %2977 = vmatmul.mubr.bf16.gmra.mxu0 %v531
    %v2978 = vpop.f32.mrf.mxu0
    %v2979 = vadd.f32 %v2936, %v2978
    %v2980 = vpop.f32.mrf.mxu0
    %v2981 = vadd.f32 %v2938, %v2980
    %v2982 = vpop.f32.mrf.mxu0
    %v2983 = vadd.f32 %v2940, %v2982
    %v2984 = vpop.f32.mrf.mxu0
    %v2985 = vadd.f32 %v2942, %v2984
    %2986 = vdwg.mxu0
    %2987 = vmatprep.subr.bf16.mxu0 %v2220
    %2988 = vmatpush1.bf16.msra.mxu0 %v2219
    %2989 = vmatprep.subr.bf16.mxu0 %v2208
    %2990 = vmatpush1.bf16.msra.mxu0 %v2207
    %2991 = vmatprep.subr.bf16.mxu0 %v2196
    %2992 = vmatpush1.bf16.msra.mxu0 %v2195
    %2993 = vmatprep.subr.bf16.mxu0 %v2184
    %2994 = vmatpush1.bf16.msra.mxu0 %v2183
    %2995 = vmatprep.subr.bf16.mxu0 %v2172
    %2996 = vmatpush1.bf16.msra.mxu0 %v2171
    %2997 = vmatprep.subr.bf16.mxu0 %v2160
    %2998 = vmatpush1.bf16.msra.mxu0 %v2159
    %2999 = vmatprep.subr.bf16.mxu0 %v2148
    %3000 = vmatpush1.bf16.msra.mxu0 %v2147
    %3001 = vmatprep.subr.bf16.mxu0 %v2136
    %3002 = vmatpush1.bf16.msra.mxu0 %v2135
    %3003 = vmatprep.subr.bf16.mxu0 %v2316
    %3004 = vmatpush2.bf16.msra.mxu0 %v2315
    %3005 = vmatprep.subr.bf16.mxu0 %v2304
    %3006 = vmatpush2.bf16.msra.mxu0 %v2303
    %3007 = vmatprep.subr.bf16.mxu0 %v2292
    %3008 = vmatpush2.bf16.msra.mxu0 %v2291
    %3009 = vmatprep.subr.bf16.mxu0 %v2280
    %3010 = vmatpush2.bf16.msra.mxu0 %v2279
    %3011 = vmatprep.subr.bf16.mxu0 %v2268
    %3012 = vmatpush2.bf16.msra.mxu0 %v2267
    %3013 = vmatprep.subr.bf16.mxu0 %v2256
    %3014 = vmatpush2.bf16.msra.mxu0 %v2255
    %3015 = vmatprep.subr.bf16.mxu0 %v2244
    %3016 = vmatpush2.bf16.msra.mxu0 %v2243
    %3017 = vmatprep.subr.bf16.mxu0 %v2232
    %3018 = vmatpush2.bf16.msra.mxu0 %v2231
    %3019 = vmatprep.mubr.bf16.mxu0 %v530
    %3020 = vmatmul.mubr.bf16.gmra.mxu0 %v529
    %v3021 = vpop.f32.mrf.mxu0
    %v3022 = vadd.f32 %v932, %v3021
    %v3023 = vpop.f32.mrf.mxu0
    %v3024 = vadd.f32 %v936, %v3023
    %v3025 = vpop.f32.mrf.mxu0
    %v3026 = vadd.f32 %v932, %v3025
    %v3027 = vpop.f32.mrf.mxu0
    %v3028 = vadd.f32 %v936, %v3027
    %3029 = vdwg.mxu0
    %3030 = vmatprep.subr.bf16.mxu0 %v2412
    %3031 = vmatpush1.bf16.msra.mxu0 %v2411
    %3032 = vmatprep.subr.bf16.mxu0 %v2400
    %3033 = vmatpush1.bf16.msra.mxu0 %v2399
    %3034 = vmatprep.subr.bf16.mxu0 %v2388
    %3035 = vmatpush1.bf16.msra.mxu0 %v2387
    %3036 = vmatprep.subr.bf16.mxu0 %v2376
    %3037 = vmatpush1.bf16.msra.mxu0 %v2375
    %3038 = vmatprep.subr.bf16.mxu0 %v2364
    %3039 = vmatpush1.bf16.msra.mxu0 %v2363
    %3040 = vmatprep.subr.bf16.mxu0 %v2352
    %3041 = vmatpush1.bf16.msra.mxu0 %v2351
    %3042 = vmatprep.subr.bf16.mxu0 %v2340
    %3043 = vmatpush1.bf16.msra.mxu0 %v2339
    %3044 = vmatprep.subr.bf16.mxu0 %v2328
    %3045 = vmatpush1.bf16.msra.mxu0 %v2327
    %3046 = vmatprep.subr.bf16.mxu0 %v2508
    %3047 = vmatpush2.bf16.msra.mxu0 %v2507
    %3048 = vmatprep.subr.bf16.mxu0 %v2496
    %3049 = vmatpush2.bf16.msra.mxu0 %v2495
    %3050 = vmatprep.subr.bf16.mxu0 %v2484
    %3051 = vmatpush2.bf16.msra.mxu0 %v2483
    %3052 = vmatprep.subr.bf16.mxu0 %v2472
    %3053 = vmatpush2.bf16.msra.mxu0 %v2471
    %3054 = vmatprep.subr.bf16.mxu0 %v2460
    %3055 = vmatpush2.bf16.msra.mxu0 %v2459
    %3056 = vmatprep.subr.bf16.mxu0 %v2448
    %3057 = vmatpush2.bf16.msra.mxu0 %v2447
    %3058 = vmatprep.subr.bf16.mxu0 %v2436
    %3059 = vmatpush2.bf16.msra.mxu0 %v2435
    %3060 = vmatprep.subr.bf16.mxu0 %v2424
    %3061 = vmatpush2.bf16.msra.mxu0 %v2423
    %3062 = vmatprep.mubr.bf16.mxu0 %v532
    %3063 = vmatmul.mubr.bf16.gmra.mxu0 %v531
    %v3064 = vpop.f32.mrf.mxu0
    %v3065 = vadd.f32 %v3022, %v3064
    %v3066 = vpop.f32.mrf.mxu0
    %v3067 = vadd.f32 %v3024, %v3066
    %v3068 = vpop.f32.mrf.mxu0
    %v3069 = vadd.f32 %v3026, %v3068
    %v3070 = vpop.f32.mrf.mxu0
    %v3071 = vadd.f32 %v3028, %v3070
    %3072 = vdwg.mxu0
    %3073 = vmatprep.subr.bf16.mxu0 %v2222
    %3074 = vmatpush1.bf16.msra.mxu0 %v2221
    %3075 = vmatprep.subr.bf16.mxu0 %v2210
    %3076 = vmatpush1.bf16.msra.mxu0 %v2209
    %3077 = vmatprep.subr.bf16.mxu0 %v2198
    %3078 = vmatpush1.bf16.msra.mxu0 %v2197
    %3079 = vmatprep.subr.bf16.mxu0 %v2186
    %3080 = vmatpush1.bf16.msra.mxu0 %v2185
    %3081 = vmatprep.subr.bf16.mxu0 %v2174
    %3082 = vmatpush1.bf16.msra.mxu0 %v2173
    %3083 = vmatprep.subr.bf16.mxu0 %v2162
    %3084 = vmatpush1.bf16.msra.mxu0 %v2161
    %3085 = vmatprep.subr.bf16.mxu0 %v2150
    %3086 = vmatpush1.bf16.msra.mxu0 %v2149
    %3087 = vmatprep.subr.bf16.mxu0 %v2138
    %3088 = vmatpush1.bf16.msra.mxu0 %v2137
    %3089 = vmatprep.subr.bf16.mxu0 %v2318
    %3090 = vmatpush2.bf16.msra.mxu0 %v2317
    %3091 = vmatprep.subr.bf16.mxu0 %v2306
    %3092 = vmatpush2.bf16.msra.mxu0 %v2305
    %3093 = vmatprep.subr.bf16.mxu0 %v2294
    %3094 = vmatpush2.bf16.msra.mxu0 %v2293
    %3095 = vmatprep.subr.bf16.mxu0 %v2282
    %3096 = vmatpush2.bf16.msra.mxu0 %v2281
    %3097 = vmatprep.subr.bf16.mxu0 %v2270
    %3098 = vmatpush2.bf16.msra.mxu0 %v2269
    %3099 = vmatprep.subr.bf16.mxu0 %v2258
    %3100 = vmatpush2.bf16.msra.mxu0 %v2257
    %3101 = vmatprep.subr.bf16.mxu0 %v2246
    %3102 = vmatpush2.bf16.msra.mxu0 %v2245
    %3103 = vmatprep.subr.bf16.mxu0 %v2234
    %3104 = vmatpush2.bf16.msra.mxu0 %v2233
    %3105 = vmatprep.mubr.bf16.mxu0 %v530
    %3106 = vmatmul.mubr.bf16.gmra.mxu0 %v529
    %v3107 = vpop.f32.mrf.mxu0
    %v3108 = vadd.f32 %v940, %v3107
    %v3109 = vpop.f32.mrf.mxu0
    %v3110 = vadd.f32 %v944, %v3109
    %v3111 = vpop.f32.mrf.mxu0
    %v3112 = vadd.f32 %v940, %v3111
    %v3113 = vpop.f32.mrf.mxu0
    %v3114 = vadd.f32 %v944, %v3113
    %3115 = vdwg.mxu0
    %3116 = vmatprep.subr.bf16.mxu0 %v2414
    %3117 = vmatpush1.bf16.msra.mxu0 %v2413
    %3118 = vmatprep.subr.bf16.mxu0 %v2402
    %3119 = vmatpush1.bf16.msra.mxu0 %v2401
    %3120 = vmatprep.subr.bf16.mxu0 %v2390
    %3121 = vmatpush1.bf16.msra.mxu0 %v2389
    %3122 = vmatprep.subr.bf16.mxu0 %v2378
    %3123 = vmatpush1.bf16.msra.mxu0 %v2377
    %3124 = vmatprep.subr.bf16.mxu0 %v2366
    %3125 = vmatpush1.bf16.msra.mxu0 %v2365
    %3126 = vmatprep.subr.bf16.mxu0 %v2354
    %3127 = vmatpush1.bf16.msra.mxu0 %v2353
    %3128 = vmatprep.subr.bf16.mxu0 %v2342
    %3129 = vmatpush1.bf16.msra.mxu0 %v2341
    %3130 = vmatprep.subr.bf16.mxu0 %v2330
    %3131 = vmatpush1.bf16.msra.mxu0 %v2329
    %3132 = vmatprep.subr.bf16.mxu0 %v2510
    %3133 = vmatpush2.bf16.msra.mxu0 %v2509
    %3134 = vmatprep.subr.bf16.mxu0 %v2498
    %3135 = vmatpush2.bf16.msra.mxu0 %v2497
    %3136 = vmatprep.subr.bf16.mxu0 %v2486
    %3137 = vmatpush2.bf16.msra.mxu0 %v2485
    %3138 = vmatprep.subr.bf16.mxu0 %v2474
    %3139 = vmatpush2.bf16.msra.mxu0 %v2473
    %3140 = vmatprep.subr.bf16.mxu0 %v2462
    %3141 = vmatpush2.bf16.msra.mxu0 %v2461
    %3142 = vmatprep.subr.bf16.mxu0 %v2450
    %3143 = vmatpush2.bf16.msra.mxu0 %v2449
    %3144 = vmatprep.subr.bf16.mxu0 %v2438
    %3145 = vmatpush2.bf16.msra.mxu0 %v2437
    %3146 = vmatprep.subr.bf16.mxu0 %v2426
    %3147 = vmatpush2.bf16.msra.mxu0 %v2425
    %3148 = vmatprep.mubr.bf16.mxu0 %v532
    %3149 = vmatmul.mubr.bf16.gmra.mxu0 %v531
    %v3150 = vpop.f32.mrf.mxu0
    %v3151 = vadd.f32 %v3108, %v3150
    %v3152 = vpop.f32.mrf.mxu0
    %v3153 = vadd.f32 %v3110, %v3152
    %v3154 = vpop.f32.mrf.mxu0
    %v3155 = vadd.f32 %v3112, %v3154
    %v3156 = vpop.f32.mrf.mxu0
    %v3157 = vadd.f32 %v3114, %v3156
    %3158 = vdwg.mxu0
    %3159 = vmatprep.subr.bf16.mxu0 %v2224
    %3160 = vmatpush1.bf16.msra.mxu0 %v2223
    %3161 = vmatprep.subr.bf16.mxu0 %v2212
    %3162 = vmatpush1.bf16.msra.mxu0 %v2211
    %3163 = vmatprep.subr.bf16.mxu0 %v2200
    %3164 = vmatpush1.bf16.msra.mxu0 %v2199
    %3165 = vmatprep.subr.bf16.mxu0 %v2188
    %3166 = vmatpush1.bf16.msra.mxu0 %v2187
    %3167 = vmatprep.subr.bf16.mxu0 %v2176
    %3168 = vmatpush1.bf16.msra.mxu0 %v2175
    %3169 = vmatprep.subr.bf16.mxu0 %v2164
    %3170 = vmatpush1.bf16.msra.mxu0 %v2163
    %3171 = vmatprep.subr.bf16.mxu0 %v2152
    %3172 = vmatpush1.bf16.msra.mxu0 %v2151
    %3173 = vmatprep.subr.bf16.mxu0 %v2140
    %3174 = vmatpush1.bf16.msra.mxu0 %v2139
    %3175 = vmatprep.subr.bf16.mxu0 %v2320
    %3176 = vmatpush2.bf16.msra.mxu0 %v2319
    %3177 = vmatprep.subr.bf16.mxu0 %v2308
    %3178 = vmatpush2.bf16.msra.mxu0 %v2307
    %3179 = vmatprep.subr.bf16.mxu0 %v2296
    %3180 = vmatpush2.bf16.msra.mxu0 %v2295
    %3181 = vmatprep.subr.bf16.mxu0 %v2284
    %3182 = vmatpush2.bf16.msra.mxu0 %v2283
    %3183 = vmatprep.subr.bf16.mxu0 %v2272
    %3184 = vmatpush2.bf16.msra.mxu0 %v2271
    %3185 = vmatprep.subr.bf16.mxu0 %v2260
    %3186 = vmatpush2.bf16.msra.mxu0 %v2259
    %3187 = vmatprep.subr.bf16.mxu0 %v2248
    %3188 = vmatpush2.bf16.msra.mxu0 %v2247
    %3189 = vmatprep.subr.bf16.mxu0 %v2236
    %3190 = vmatpush2.bf16.msra.mxu0 %v2235
    %3191 = vmatprep.mubr.bf16.mxu0 %v530
    %3192 = vmatmul.mubr.bf16.gmra.mxu0 %v529
    %v3193 = vpop.f32.mrf.mxu0
    %v3194 = vadd.f32 %v948, %v3193
    %v3195 = vpop.f32.mrf.mxu0
    %v3196 = vadd.f32 %v952, %v3195
    %v3197 = vpop.f32.mrf.mxu0
    %v3198 = vadd.f32 %v948, %v3197
    %v3199 = vpop.f32.mrf.mxu0
    %v3200 = vadd.f32 %v952, %v3199
    %3201 = vdwg.mxu0
    %3202 = vmatprep.subr.bf16.mxu0 %v2416
    %3203 = vmatpush1.bf16.msra.mxu0 %v2415
    %3204 = vmatprep.subr.bf16.mxu0 %v2404
    %3205 = vmatpush1.bf16.msra.mxu0 %v2403
    %3206 = vmatprep.subr.bf16.mxu0 %v2392
    %3207 = vmatpush1.bf16.msra.mxu0 %v2391
    %3208 = vmatprep.subr.bf16.mxu0 %v2380
    %3209 = vmatpush1.bf16.msra.mxu0 %v2379
    %3210 = vmatprep.subr.bf16.mxu0 %v2368
    %3211 = vmatpush1.bf16.msra.mxu0 %v2367
    %3212 = vmatprep.subr.bf16.mxu0 %v2356
    %3213 = vmatpush1.bf16.msra.mxu0 %v2355
    %3214 = vmatprep.subr.bf16.mxu0 %v2344
    %3215 = vmatpush1.bf16.msra.mxu0 %v2343
    %3216 = vmatprep.subr.bf16.mxu0 %v2332
    %3217 = vmatpush1.bf16.msra.mxu0 %v2331
    %3218 = vmatprep.subr.bf16.mxu0 %v2512
    %3219 = vmatpush2.bf16.msra.mxu0 %v2511
    %3220 = vmatprep.subr.bf16.mxu0 %v2500
    %3221 = vmatpush2.bf16.msra.mxu0 %v2499
    %3222 = vmatprep.subr.bf16.mxu0 %v2488
    %3223 = vmatpush2.bf16.msra.mxu0 %v2487
    %3224 = vmatprep.subr.bf16.mxu0 %v2476
    %3225 = vmatpush2.bf16.msra.mxu0 %v2475
    %3226 = vmatprep.subr.bf16.mxu0 %v2464
    %3227 = vmatpush2.bf16.msra.mxu0 %v2463
    %3228 = vmatprep.subr.bf16.mxu0 %v2452
    %3229 = vmatpush2.bf16.msra.mxu0 %v2451
    %3230 = vmatprep.subr.bf16.mxu0 %v2440
    %3231 = vmatpush2.bf16.msra.mxu0 %v2439
    %3232 = vmatprep.subr.bf16.mxu0 %v2428
    %3233 = vmatpush2.bf16.msra.mxu0 %v2427
    %3234 = vmatprep.mubr.bf16.mxu0 %v532
    %3235 = vmatmul.mubr.bf16.gmra.mxu0 %v531
    %v3236 = vpop.f32.mrf.mxu0
    %v3237 = vadd.f32 %v3194, %v3236
    %v3238 = vpop.f32.mrf.mxu0
    %v3239 = vadd.f32 %v3196, %v3238
    %v3240 = vpop.f32.mrf.mxu0
    %v3241 = vadd.f32 %v3198, %v3240
    %v3242 = vpop.f32.mrf.mxu0
    %v3243 = vadd.f32 %v3200, %v3242
    %3244 = vdwg.mxu0
    %3245 = vmatprep.subr.bf16.mxu0 %v2226
    %3246 = vmatpush1.bf16.msra.mxu0 %v2225
    %3247 = vmatprep.subr.bf16.mxu0 %v2214
    %3248 = vmatpush1.bf16.msra.mxu0 %v2213
    %3249 = vmatprep.subr.bf16.mxu0 %v2202
    %3250 = vmatpush1.bf16.msra.mxu0 %v2201
    %3251 = vmatprep.subr.bf16.mxu0 %v2190
    %3252 = vmatpush1.bf16.msra.mxu0 %v2189
    %3253 = vmatprep.subr.bf16.mxu0 %v2178
    %3254 = vmatpush1.bf16.msra.mxu0 %v2177
    %3255 = vmatprep.subr.bf16.mxu0 %v2166
    %3256 = vmatpush1.bf16.msra.mxu0 %v2165
    %3257 = vmatprep.subr.bf16.mxu0 %v2154
    %3258 = vmatpush1.bf16.msra.mxu0 %v2153
    %3259 = vmatprep.subr.bf16.mxu0 %v2142
    %3260 = vmatpush1.bf16.msra.mxu0 %v2141
    %3261 = vmatprep.subr.bf16.mxu0 %v2322
    %3262 = vmatpush2.bf16.msra.mxu0 %v2321
    %3263 = vmatprep.subr.bf16.mxu0 %v2310
    %3264 = vmatpush2.bf16.msra.mxu0 %v2309
    %3265 = vmatprep.subr.bf16.mxu0 %v2298
    %3266 = vmatpush2.bf16.msra.mxu0 %v2297
    %3267 = vmatprep.subr.bf16.mxu0 %v2286
    %3268 = vmatpush2.bf16.msra.mxu0 %v2285
    %3269 = vmatprep.subr.bf16.mxu0 %v2274
    %3270 = vmatpush2.bf16.msra.mxu0 %v2273
    %3271 = vmatprep.subr.bf16.mxu0 %v2262
    %3272 = vmatpush2.bf16.msra.mxu0 %v2261
    %3273 = vmatprep.subr.bf16.mxu0 %v2250
    %3274 = vmatpush2.bf16.msra.mxu0 %v2249
    %3275 = vmatprep.subr.bf16.mxu0 %v2238
    %3276 = vmatpush2.bf16.msra.mxu0 %v2237
    %3277 = vmatprep.mubr.bf16.mxu0 %v530
    %3278 = vmatmul.mubr.bf16.gmra.mxu0 %v529
    %v3279 = vpop.f32.mrf.mxu0
    %v3280 = vadd.f32 %v956, %v3279
    %v3281 = vpop.f32.mrf.mxu0
    %v3282 = vadd.f32 %v960, %v3281
    %v3283 = vpop.f32.mrf.mxu0
    %v3284 = vadd.f32 %v956, %v3283
    %v3285 = vpop.f32.mrf.mxu0
    %v3286 = vadd.f32 %v960, %v3285
    %3287 = vdwg.mxu0
    %3288 = vmatprep.subr.bf16.mxu0 %v2418
    %3289 = vmatpush1.bf16.msra.mxu0 %v2417
    %3290 = vmatprep.subr.bf16.mxu0 %v2406
    %3291 = vmatpush1.bf16.msra.mxu0 %v2405
    %3292 = vmatprep.subr.bf16.mxu0 %v2394
    %3293 = vmatpush1.bf16.msra.mxu0 %v2393
    %3294 = vmatprep.subr.bf16.mxu0 %v2382
    %3295 = vmatpush1.bf16.msra.mxu0 %v2381
    %3296 = vmatprep.subr.bf16.mxu0 %v2370
    %3297 = vmatpush1.bf16.msra.mxu0 %v2369
    %3298 = vmatprep.subr.bf16.mxu0 %v2358
    %3299 = vmatpush1.bf16.msra.mxu0 %v2357
    %3300 = vmatprep.subr.bf16.mxu0 %v2346
    %3301 = vmatpush1.bf16.msra.mxu0 %v2345
    %3302 = vmatprep.subr.bf16.mxu0 %v2334
    %3303 = vmatpush1.bf16.msra.mxu0 %v2333
    %3304 = vmatprep.subr.bf16.mxu0 %v2514
    %3305 = vmatpush2.bf16.msra.mxu0 %v2513
    %3306 = vmatprep.subr.bf16.mxu0 %v2502
    %3307 = vmatpush2.bf16.msra.mxu0 %v2501
    %3308 = vmatprep.subr.bf16.mxu0 %v2490
    %3309 = vmatpush2.bf16.msra.mxu0 %v2489
    %3310 = vmatprep.subr.bf16.mxu0 %v2478
    %3311 = vmatpush2.bf16.msra.mxu0 %v2477
    %3312 = vmatprep.subr.bf16.mxu0 %v2466
    %3313 = vmatpush2.bf16.msra.mxu0 %v2465
    %3314 = vmatprep.subr.bf16.mxu0 %v2454
    %3315 = vmatpush2.bf16.msra.mxu0 %v2453
    %3316 = vmatprep.subr.bf16.mxu0 %v2442
    %3317 = vmatpush2.bf16.msra.mxu0 %v2441
    %3318 = vmatprep.subr.bf16.mxu0 %v2430
    %3319 = vmatpush2.bf16.msra.mxu0 %v2429
    %3320 = vmatprep.mubr.bf16.mxu0 %v532
    %3321 = vmatmul.mubr.bf16.gmra.mxu0 %v531
    %v3322 = vpop.f32.mrf.mxu0
    %v3323 = vadd.f32 %v3280, %v3322
    %v3324 = vpop.f32.mrf.mxu0
    %v3325 = vadd.f32 %v3282, %v3324
    %v3326 = vpop.f32.mrf.mxu0
    %v3327 = vadd.f32 %v3284, %v3326
    %v3328 = vpop.f32.mrf.mxu0
    %v3329 = vadd.f32 %v3286, %v3328
    %3330 = vdwg.mxu0
    %3331 = vmatprep.subr.bf16.mxu0 %v2228
    %3332 = vmatpush1.bf16.msra.mxu0 %v2227
    %3333 = vmatprep.subr.bf16.mxu0 %v2216
    %3334 = vmatpush1.bf16.msra.mxu0 %v2215
    %3335 = vmatprep.subr.bf16.mxu0 %v2204
    %3336 = vmatpush1.bf16.msra.mxu0 %v2203
    %3337 = vmatprep.subr.bf16.mxu0 %v2192
    %3338 = vmatpush1.bf16.msra.mxu0 %v2191
    %3339 = vmatprep.subr.bf16.mxu0 %v2180
    %3340 = vmatpush1.bf16.msra.mxu0 %v2179
    %3341 = vmatprep.subr.bf16.mxu0 %v2168
    %3342 = vmatpush1.bf16.msra.mxu0 %v2167
    %3343 = vmatprep.subr.bf16.mxu0 %v2156
    %3344 = vmatpush1.bf16.msra.mxu0 %v2155
    %3345 = vmatprep.subr.bf16.mxu0 %v2144
    %3346 = vmatpush1.bf16.msra.mxu0 %v2143
    %3347 = vmatprep.subr.bf16.mxu0 %v2324
    %3348 = vmatpush2.bf16.msra.mxu0 %v2323
    %3349 = vmatprep.subr.bf16.mxu0 %v2312
    %3350 = vmatpush2.bf16.msra.mxu0 %v2311
    %3351 = vmatprep.subr.bf16.mxu0 %v2300
    %3352 = vmatpush2.bf16.msra.mxu0 %v2299
    %3353 = vmatprep.subr.bf16.mxu0 %v2288
    %3354 = vmatpush2.bf16.msra.mxu0 %v2287
    %3355 = vmatprep.subr.bf16.mxu0 %v2276
    %3356 = vmatpush2.bf16.msra.mxu0 %v2275
    %3357 = vmatprep.subr.bf16.mxu0 %v2264
    %3358 = vmatpush2.bf16.msra.mxu0 %v2263
    %3359 = vmatprep.subr.bf16.mxu0 %v2252
    %3360 = vmatpush2.bf16.msra.mxu0 %v2251
    %3361 = vmatprep.subr.bf16.mxu0 %v2240
    %3362 = vmatpush2.bf16.msra.mxu0 %v2239
    %3363 = vmatprep.mubr.bf16.mxu0 %v530
    %3364 = vmatmul.mubr.bf16.gmra.mxu0 %v529
    %v3365 = vpop.f32.mrf.mxu0
    %v3366 = vadd.f32 %v964, %v3365
    %v3367 = vpop.f32.mrf.mxu0
    %v3368 = vadd.f32 %v968, %v3367
    %v3369 = vpop.f32.mrf.mxu0
    %v3370 = vadd.f32 %v964, %v3369
    %v3371 = vpop.f32.mrf.mxu0
    %v3372 = vadd.f32 %v968, %v3371
    %3373 = vdwg.mxu0
    %3374 = vmatprep.subr.bf16.mxu0 %v2420
    %3375 = vmatpush1.bf16.msra.mxu0 %v2419
    %3376 = vmatprep.subr.bf16.mxu0 %v2408
    %3377 = vmatpush1.bf16.msra.mxu0 %v2407
    %3378 = vmatprep.subr.bf16.mxu0 %v2396
    %3379 = vmatpush1.bf16.msra.mxu0 %v2395
    %3380 = vmatprep.subr.bf16.mxu0 %v2384
    %3381 = vmatpush1.bf16.msra.mxu0 %v2383
    %3382 = vmatprep.subr.bf16.mxu0 %v2372
    %3383 = vmatpush1.bf16.msra.mxu0 %v2371
    %3384 = vmatprep.subr.bf16.mxu0 %v2360
    %3385 = vmatpush1.bf16.msra.mxu0 %v2359
    %3386 = vmatprep.subr.bf16.mxu0 %v2348
    %3387 = vmatpush1.bf16.msra.mxu0 %v2347
    %3388 = vmatprep.subr.bf16.mxu0 %v2336
    %3389 = vmatpush1.bf16.msra.mxu0 %v2335
    %3390 = vmatprep.subr.bf16.mxu0 %v2516
    %3391 = vmatpush2.bf16.msra.mxu0 %v2515
    %3392 = vmatprep.subr.bf16.mxu0 %v2504
    %3393 = vmatpush2.bf16.msra.mxu0 %v2503
    %3394 = vmatprep.subr.bf16.mxu0 %v2492
    %3395 = vmatpush2.bf16.msra.mxu0 %v2491
    %3396 = vmatprep.subr.bf16.mxu0 %v2480
    %3397 = vmatpush2.bf16.msra.mxu0 %v2479
    %3398 = vmatprep.subr.bf16.mxu0 %v2468
    %3399 = vmatpush2.bf16.msra.mxu0 %v2467
    %3400 = vmatprep.subr.bf16.mxu0 %v2456
    %3401 = vmatpush2.bf16.msra.mxu0 %v2455
    %3402 = vmatprep.subr.bf16.mxu0 %v2444
    %3403 = vmatpush2.bf16.msra.mxu0 %v2443
    %3404 = vmatprep.subr.bf16.mxu0 %v2432
    %3405 = vmatpush2.bf16.msra.mxu0 %v2431
    %3406 = vmatprep.mubr.bf16.mxu0 %v532
    %3407 = vmatmul.mubr.bf16.gmra.mxu0 %v531
    %v3408 = vpop.f32.mrf.mxu0
    %v3409 = vadd.f32 %v3366, %v3408
    %v3410 = vpop.f32.mrf.mxu0
    %v3411 = vadd.f32 %v3368, %v3410
    %v3412 = vpop.f32.mrf.mxu0
    %v3413 = vadd.f32 %v3370, %v3412
    %v3414 = vpop.f32.mrf.mxu0
    %v3415 = vadd.f32 %v3372, %v3414
    %3416 = vdwg.mxu0
    %v3417 = vld [vmem:[%s7] sm:$0xff]
    %v3418 = vld [vmem:[%s7 + $0x8] sm:$0xff]
    %v3419 = vld [vmem:[%s7 + $0x10] sm:$0xff]
    %v3420 = vld [vmem:[%s7 + $0x18] sm:$0xff]
    %v3421 = vld [vmem:[%s7 + $0x20] sm:$0xff]
    %v3422 = vld [vmem:[%s7 + $0x28] sm:$0xff]
    %v3423 = vld [vmem:[%s7 + $0x30] sm:$0xff]
    %v3424 = vld [vmem:[%s7 + $0x38] sm:$0xff]
    %v3425 = vld [vmem:[%s9] sm:$0xff]
    %v3426 = vld [vmem:[%s9 + $0x8] sm:$0xff]
    %v3427 = vld [vmem:[%s9 + $0x10] sm:$0xff]
    %v3428 = vld [vmem:[%s9 + $0x18] sm:$0xff]
    %v3429 = vld [vmem:[%s9 + $0x20] sm:$0xff]
    %v3430 = vld [vmem:[%s9 + $0x28] sm:$0xff]
    %v3431 = vld [vmem:[%s9 + $0x30] sm:$0xff]
    %v3432 = vld [vmem:[%s9 + $0x38] sm:$0xff]
    %v3433 = vld [vmem:[%s11] sm:$0xff]
    %v3434 = vld [vmem:[%s11 + $0x8] sm:$0xff]
    %v3435 = vld [vmem:[%s11 + $0x10] sm:$0xff]
    %v3436 = vld [vmem:[%s11 + $0x18] sm:$0xff]
    %v3437 = vld [vmem:[%s11 + $0x20] sm:$0xff]
    %v3438 = vld [vmem:[%s11 + $0x28] sm:$0xff]
    %v3439 = vld [vmem:[%s11 + $0x30] sm:$0xff]
    %v3440 = vld [vmem:[%s11 + $0x38] sm:$0xff]
    %v3441 = vmul.f32 %v2979, %v3417
    %v3442 = vmul.f32 %v2981, %v3418
    %v3443 = vmul.f32 %v3065, %v3419
    %v3444 = vmul.f32 %v3067, %v3420
    %v3445 = vmul.f32 %v2983, %v3421
    %v3446 = vmul.f32 %v2985, %v3422
    %v3447 = vmul.f32 %v3069, %v3423
    %v3448 = vmul.f32 %v3071, %v3424
    %3449 = vrot.lane.b32.xlu0 %v2979, 32
    %v3450 = vpop.permute.xlu0 %3449
    %3451 = vrot.lane.b32.xlu0 %v2983, 32
    %v3452 = vpop.permute.xlu0 %3451
    %3453 = vrot.lane.b32.xlu0 %v2981, 32
    %v3454 = vpop.permute.xlu0 %3453
    %3455 = vrot.lane.b32.xlu0 %v2985, 32
    %v3456 = vpop.permute.xlu0 %3455
    %3457 = vrot.lane.b32.xlu0 %v3065, 32
    %v3458 = vpop.permute.xlu0 %3457
    %3459 = vrot.lane.b32.xlu0 %v3069, 32
    %v3460 = vpop.permute.xlu0 %3459
    %3461 = vrot.lane.b32.xlu0 %v3067, 32
    %v3462 = vpop.permute.xlu0 %3461
    %3463 = vrot.lane.b32.xlu0 %v3071, 32
    %v3464 = vpop.permute.xlu0 %3463
    %v3465 = vlaneseq
    %v3466 = vand.u32 %v3465, 127
    %vm3467 = vcmp.lt.s32.totalorder %v3466, 32
    %v3468 = vsel %vm3467, %v3458, %v3462
    %v3469 = vsel %vm3467, %v3460, %v3464
    %v3470 = vsel %vm3467, %v3454, %v3458
    %v3471 = vsel %vm3467, %v3456, %v3460
    %v3472 = vsel %vm3467, %v3450, %v3454
    %v3473 = vsel %vm3467, %v3452, %v3456
    %v3474 = vsel %vm3467, %v3462, %v3450
    %v3475 = vsel %vm3467, %v3464, %v3452
    %v3476 = vmul.f32 %v3474, %v3425
    %v3477 = vmul.f32 %v3472, %v3426
    %v3478 = vmul.f32 %v3470, %v3427
    %v3479 = vmul.f32 %v3468, %v3428
    %v3480 = vmul.f32 %v3475, %v3429
    %v3481 = vmul.f32 %v3473, %v3430
    %v3482 = vmul.f32 %v3471, %v3431
    %v3483 = vmul.f32 %v3469, %v3432
    %v3484 = vadd.f32 %v3441, %v3476
    %v3485 = vadd.f32 %v3442, %v3477
    %v3486 = vadd.f32 %v3443, %v3478
    %v3487 = vadd.f32 %v3444, %v3479
    %v3488 = vadd.f32 %v3445, %v3480
    %v3489 = vadd.f32 %v3446, %v3481
    %v3490 = vadd.f32 %v3447, %v3482
    %v3491 = vadd.f32 %v3448, %v3483
    %3492 = vrot.lane.b32.xlu0 %v2979, 96
    %v3493 = vpop.permute.xlu0 %3492
    %3494 = vrot.lane.b32.xlu0 %v2983, 96
    %v3495 = vpop.permute.xlu0 %3494
    %3496 = vrot.lane.b32.xlu0 %v2981, 96
    %v3497 = vpop.permute.xlu0 %3496
    %3498 = vrot.lane.b32.xlu0 %v2985, 96
    %v3499 = vpop.permute.xlu0 %3498
    %3500 = vrot.lane.b32.xlu0 %v3065, 96
    %v3501 = vpop.permute.xlu0 %3500
    %3502 = vrot.lane.b32.xlu0 %v3069, 96
    %v3503 = vpop.permute.xlu0 %3502
    %3504 = vrot.lane.b32.xlu0 %v3067, 96
    %v3505 = vpop.permute.xlu0 %3504
    %3506 = vrot.lane.b32.xlu0 %v3071, 96
    %v3507 = vpop.permute.xlu0 %3506
    %vm3508 = vcmp.lt.s32.totalorder %v3466, 96
    %v3509 = vsel %vm3508, %v3501, %v3505
    %v3510 = vsel %vm3508, %v3503, %v3507
    %v3511 = vsel %vm3508, %v3497, %v3501
    %v3512 = vsel %vm3508, %v3499, %v3503
    %v3513 = vsel %vm3508, %v3493, %v3497
    %v3514 = vsel %vm3508, %v3495, %v3499
    %v3515 = vsel %vm3508, %v3505, %v3493
    %v3516 = vsel %vm3508, %v3507, %v3495
    %v3517 = vmul.f32 %v3513, %v3433
    %v3518 = vmul.f32 %v3511, %v3434
    %v3519 = vmul.f32 %v3509, %v3435
    %v3520 = vmul.f32 %v3515, %v3436
    %v3521 = vmul.f32 %v3514, %v3437
    %v3522 = vmul.f32 %v3512, %v3438
    %v3523 = vmul.f32 %v3510, %v3439
    %v3524 = vmul.f32 %v3516, %v3440
    %v3525 = vadd.f32 %v3484, %v3517
    %v3526 = vadd.f32 %v3485, %v3518
    %v3527 = vadd.f32 %v3486, %v3519
    %v3528 = vadd.f32 %v3487, %v3520
    %v3529 = vadd.f32 %v3488, %v3521
    %v3530 = vadd.f32 %v3489, %v3522
    %v3531 = vadd.f32 %v3490, %v3523
    %v3532 = vadd.f32 %v3491, %v3524
    %v3533 = vmul.f32 %v3151, %v3417
    %v3534 = vmul.f32 %v3153, %v3418
    %v3535 = vmul.f32 %v3237, %v3419
    %v3536 = vmul.f32 %v3239, %v3420
    %v3537 = vmul.f32 %v3155, %v3421
    %v3538 = vmul.f32 %v3157, %v3422
    %v3539 = vmul.f32 %v3241, %v3423
    %v3540 = vmul.f32 %v3243, %v3424
    %3541 = vrot.lane.b32.xlu0 %v3151, 32
    %v3542 = vpop.permute.xlu0 %3541
    %3543 = vrot.lane.b32.xlu0 %v3155, 32
    %v3544 = vpop.permute.xlu0 %3543
    %3545 = vrot.lane.b32.xlu0 %v3153, 32
    %v3546 = vpop.permute.xlu0 %3545
    %3547 = vrot.lane.b32.xlu0 %v3157, 32
    %v3548 = vpop.permute.xlu0 %3547
    %3549 = vrot.lane.b32.xlu0 %v3237, 32
    %v3550 = vpop.permute.xlu0 %3549
    %3551 = vrot.lane.b32.xlu0 %v3241, 32
    %v3552 = vpop.permute.xlu0 %3551
    %3553 = vrot.lane.b32.xlu0 %v3239, 32
    %v3554 = vpop.permute.xlu0 %3553
    %3555 = vrot.lane.b32.xlu0 %v3243, 32
    %v3556 = vpop.permute.xlu0 %3555
    %v3557 = vsel %vm3467, %v3550, %v3554
    %v3558 = vsel %vm3467, %v3552, %v3556
    %v3559 = vsel %vm3467, %v3546, %v3550
    %v3560 = vsel %vm3467, %v3548, %v3552
    %v3561 = vsel %vm3467, %v3542, %v3546
    %v3562 = vsel %vm3467, %v3544, %v3548
    %v3563 = vsel %vm3467, %v3554, %v3542
    %v3564 = vsel %vm3467, %v3556, %v3544
    %v3565 = vmul.f32 %v3563, %v3425
    %v3566 = vmul.f32 %v3561, %v3426
    %v3567 = vmul.f32 %v3559, %v3427
    %v3568 = vmul.f32 %v3557, %v3428
    %v3569 = vmul.f32 %v3564, %v3429
    %v3570 = vmul.f32 %v3562, %v3430
    %v3571 = vmul.f32 %v3560, %v3431
    %v3572 = vmul.f32 %v3558, %v3432
    %v3573 = vadd.f32 %v3533, %v3565
    %v3574 = vadd.f32 %v3534, %v3566
    %v3575 = vadd.f32 %v3535, %v3567
    %v3576 = vadd.f32 %v3536, %v3568
    %v3577 = vadd.f32 %v3537, %v3569
    %v3578 = vadd.f32 %v3538, %v3570
    %v3579 = vadd.f32 %v3539, %v3571
    %v3580 = vadd.f32 %v3540, %v3572
    %3581 = vrot.lane.b32.xlu0 %v3151, 96
    %v3582 = vpop.permute.xlu0 %3581
    %3583 = vrot.lane.b32.xlu0 %v3155, 96
    %v3584 = vpop.permute.xlu0 %3583
    %3585 = vrot.lane.b32.xlu0 %v3153, 96
    %v3586 = vpop.permute.xlu0 %3585
    %3587 = vrot.lane.b32.xlu0 %v3157, 96
    %v3588 = vpop.permute.xlu0 %3587
    %3589 = vrot.lane.b32.xlu0 %v3237, 96
    %v3590 = vpop.permute.xlu0 %3589
    %3591 = vrot.lane.b32.xlu0 %v3241, 96
    %v3592 = vpop.permute.xlu0 %3591
    %3593 = vrot.lane.b32.xlu0 %v3239, 96
    %v3594 = vpop.permute.xlu0 %3593
    %3595 = vrot.lane.b32.xlu0 %v3243, 96
    %v3596 = vpop.permute.xlu0 %3595
    %v3597 = vsel %vm3508, %v3590, %v3594
    %v3598 = vsel %vm3508, %v3592, %v3596
    %v3599 = vsel %vm3508, %v3586, %v3590
    %v3600 = vsel %vm3508, %v3588, %v3592
    %v3601 = vsel %vm3508, %v3582, %v3586
    %v3602 = vsel %vm3508, %v3584, %v3588
    %v3603 = vsel %vm3508, %v3594, %v3582
    %v3604 = vsel %vm3508, %v3596, %v3584
    %v3605 = vmul.f32 %v3601, %v3433
    %v3606 = vmul.f32 %v3599, %v3434
    %v3607 = vmul.f32 %v3597, %v3435
    %v3608 = vmul.f32 %v3603, %v3436
    %v3609 = vmul.f32 %v3602, %v3437
    %v3610 = vmul.f32 %v3600, %v3438
    %v3611 = vmul.f32 %v3598, %v3439
    %v3612 = vmul.f32 %v3604, %v3440
    %v3613 = vadd.f32 %v3573, %v3605
    %v3614 = vadd.f32 %v3574, %v3606
    %v3615 = vadd.f32 %v3575, %v3607
    %v3616 = vadd.f32 %v3576, %v3608
    %v3617 = vadd.f32 %v3577, %v3609
    %v3618 = vadd.f32 %v3578, %v3610
    %v3619 = vadd.f32 %v3579, %v3611
    %v3620 = vadd.f32 %v3580, %v3612
    %v3621 = vld [vmem:[%s5] sm:$0xff]
    %v3622 = vld [vmem:[%s5 + $0x8] sm:$0xff]
    %v3623 = vpack.c.bf16 %v3529, %v3525
    %v3624 = vpack.c.bf16 %v3617, %v3613
    %v3625 = vpack.c.bf16 %v3327, %v3323
    %vm3626 = vcmask 523264
    %v3628 = vsel %vm3626, %v3623, 0
    %v3631 = vsel %vm3626, %v3624, 0
    %3633 = vmatprep.subr.bf16.mxu0 0
    %3634 = vmatpush1.bf16.xpose.msra.mxu0 0
    %3635 = vmatprep.subr.bf16.mxu0 0
    %3636 = vmatpush1.bf16.xpose.msra.mxu0 0
    %3637 = vmatprep.subr.bf16.mxu0 0
    %3638 = vmatpush1.bf16.xpose.msra.mxu0 0
    %3639 = vmatprep.subr.bf16.mxu0 0
    %3640 = vmatpush1.bf16.xpose.msra.mxu0 0
    %3641 = vmatprep.subr.bf16.mxu0 0
    %3642 = vmatpush1.bf16.xpose.msra.mxu0 0
    %3643 = vmatprep.subr.bf16.mxu0 0
    %3644 = vmatpush1.bf16.xpose.msra.mxu0 0
    %3645 = vmatprep.subr.bf16.mxu0 0
    %3646 = vmatpush1.bf16.xpose.msra.mxu0 0
    %3647 = vmatprep.subr.bf16.mxu0 0
    %3648 = vmatpush1.bf16.xpose.msra.mxu0 %v3631
    %3649 = vmatprep.subr.bf16.mxu0 0
    %3650 = vmatpush2.bf16.xpose.msra.mxu0 0
    %3651 = vmatprep.subr.bf16.mxu0 0
    %3652 = vmatpush2.bf16.xpose.msra.mxu0 0
    %3653 = vmatprep.subr.bf16.mxu0 0
    %3654 = vmatpush2.bf16.xpose.msra.mxu0 0
    %3655 = vmatprep.subr.bf16.mxu0 0
    %3656 = vmatpush2.bf16.xpose.msra.mxu0 0
    %3657 = vmatprep.subr.bf16.mxu0 0
    %3658 = vmatpush2.bf16.xpose.msra.mxu0 0
    %3659 = vmatprep.subr.bf16.mxu0 0
    %3660 = vmatpush2.bf16.xpose.msra.mxu0 0
    %3661 = vmatprep.subr.bf16.mxu0 0
    %3662 = vmatpush2.bf16.xpose.msra.mxu0 0
    %3663 = vmatprep.subr.bf16.mxu0 0
    %3664 = vmatpush2.bf16.xpose.msra.mxu0 0
    %3665 = vmatprep.mubr.bf16.mxu0 0
    %3666 = vmatmul.mubr.bf16.gmra.mxu0 %v3628
    %v3667 = vpop.f32.mrf.mxu0
    %v3668 = vadd.f32 %v3621, %v3667
    %v3669 = vpop.f32.mrf.mxu0
    %v3670 = vpop.f32.mrf.mxu0
    %v3671 = vadd.f32 %v3622, %v3670
    %v3672 = vpop.f32.mrf.mxu0
    %3673 = vdwg.mxu0
    %vm3674 = vcmask 130048
    %v3675 = vsel %vm3674, %v3668, -inf
    %3676 = vmax.xlane.f32.xlu0 %v3675
    %v3677 = vpop.xlane.xlu0 %3676
    %v3678 = vsel %vm3674, %v3671, -inf
    %3679 = vmax.xlane.f32.xlu0 %v3678
    %v3680 = vpop.xlane.xlu0 %3679
    %v3681 = vsub.f32 %v3668, %v3677
    %v3682 = vsub.f32 %v3671, %v3680
    %v3683 = vmul.f32 %v3681, 1.442695
    %v3684 = vpow.pop %v3683
    %v3685 = vmul.f32 %v3682, 1.442695
    %v3686 = vpow.pop %v3685
    %v3687 = vsel %vm3674, %v3684, 0.0
    %3688 = vadd.xlane.f32.xlu0 %v3687
    %v3689 = vpop.xlane.xlu0 %3688
    %v3690 = vsel %vm3674, %v3686, 0.0
    %3691 = vadd.xlane.f32.xlu0 %v3690
    %v3692 = vpop.xlane.xlu0 %3691
    %v3693 = vrcp.pop %v3689
    %v3694 = vrcp.pop %v3692
    %v3695 = vmul.f32 %v3684, %v3693
    %v3696 = vmul.f32 %v3686, %v3694
    %v3697 = vpack.c.bf16 %v3696, %v3695
    %v3699 = vsel %vm3674, %v3697, 0
    %3701 = vmatprep.subr.bf16.mxu0 0
    %3702 = vmatpush1.bf16.msra.mxu0 0
    %3703 = vmatprep.subr.bf16.mxu0 0
    %3704 = vmatpush1.bf16.msra.mxu0 0
    %3705 = vmatprep.subr.bf16.mxu0 0
    %3706 = vmatpush1.bf16.msra.mxu0 0
    %3707 = vmatprep.subr.bf16.mxu0 0
    %3708 = vmatpush1.bf16.msra.mxu0 0
    %3709 = vmatprep.subr.bf16.mxu0 0
    %3710 = vmatpush1.bf16.msra.mxu0 0
    %3711 = vmatprep.subr.bf16.mxu0 0
    %3712 = vmatpush1.bf16.msra.mxu0 0
    %3713 = vmatprep.subr.bf16.mxu0 0
    %3714 = vmatpush1.bf16.msra.mxu0 0
    %3715 = vmatprep.subr.bf16.mxu0 0
    %3716 = vmatpush1.bf16.msra.mxu0 %v3625
    %3717 = vmatprep.subr.bf16.mxu0 0
    %3718 = vmatpush2.bf16.msra.mxu0 0
    %3719 = vmatprep.subr.bf16.mxu0 0
    %3720 = vmatpush2.bf16.msra.mxu0 0
    %3721 = vmatprep.subr.bf16.mxu0 0
    %3722 = vmatpush2.bf16.msra.mxu0 0
    %3723 = vmatprep.subr.bf16.mxu0 0
    %3724 = vmatpush2.bf16.msra.mxu0 0
    %3725 = vmatprep.subr.bf16.mxu0 0
    %3726 = vmatpush2.bf16.msra.mxu0 0
    %3727 = vmatprep.subr.bf16.mxu0 0
    %3728 = vmatpush2.bf16.msra.mxu0 0
    %3729 = vmatprep.subr.bf16.mxu0 0
    %3730 = vmatpush2.bf16.msra.mxu0 0
    %3731 = vmatprep.subr.bf16.mxu0 0
    %3732 = vmatpush2.bf16.msra.mxu0 0
    %3733 = vmatprep.mubr.bf16.mxu0 0
    %3734 = vmatmul.mubr.bf16.gmra.mxu0 %v3699
    %v3735 = vpop.f32.mrf.mxu0
    %v3736 = vadd.f32 0.0, %v3735
    %v3737 = vpop.f32.mrf.mxu0
    %v3738 = vpop.f32.mrf.mxu0
    %v3739 = vadd.f32 0.0, %v3738
    %v3740 = vpop.f32.mrf.mxu0
    %3741 = vdwg.mxu0
    %3743 = vrot.lane.b32.xlu0 %v3623, 64
    %v3744 = vpop.permute.xlu0 %3743
    %3746 = vrot.lane.b32.xlu0 %v3624, 64
    %v3747 = vpop.permute.xlu0 %3746
    %v3749 = vsel %vm3626, %v3744, 0
    %v3752 = vsel %vm3626, %v3747, 0
    %3754 = vmatprep.subr.bf16.mxu0 0
    %3755 = vmatpush1.bf16.xpose.msra.mxu0 0
    %3756 = vmatprep.subr.bf16.mxu0 0
    %3757 = vmatpush1.bf16.xpose.msra.mxu0 0
    %3758 = vmatprep.subr.bf16.mxu0 0
    %3759 = vmatpush1.bf16.xpose.msra.mxu0 0
    %3760 = vmatprep.subr.bf16.mxu0 0
    %3761 = vmatpush1.bf16.xpose.msra.mxu0 0
    %3762 = vmatprep.subr.bf16.mxu0 0
    %3763 = vmatpush1.bf16.xpose.msra.mxu0 0
    %3764 = vmatprep.subr.bf16.mxu0 0
    %3765 = vmatpush1.bf16.xpose.msra.mxu0 0
    %3766 = vmatprep.subr.bf16.mxu0 0
    %3767 = vmatpush1.bf16.xpose.msra.mxu0 0
    %3768 = vmatprep.subr.bf16.mxu0 0
    %3769 = vmatpush1.bf16.xpose.msra.mxu0 %v3752
    %3770 = vmatprep.subr.bf16.mxu0 0
    %3771 = vmatpush2.bf16.xpose.msra.mxu0 0
    %3772 = vmatprep.subr.bf16.mxu0 0
    %3773 = vmatpush2.bf16.xpose.msra.mxu0 0
    %3774 = vmatprep.subr.bf16.mxu0 0
    %3775 = vmatpush2.bf16.xpose.msra.mxu0 0
    %3776 = vmatprep.subr.bf16.mxu0 0
    %3777 = vmatpush2.bf16.xpose.msra.mxu0 0
    %3778 = vmatprep.subr.bf16.mxu0 0
    %3779 = vmatpush2.bf16.xpose.msra.mxu0 0
    %3780 = vmatprep.subr.bf16.mxu0 0
    %3781 = vmatpush2.bf16.xpose.msra.mxu0 0
    %3782 = vmatprep.subr.bf16.mxu0 0
    %3783 = vmatpush2.bf16.xpose.msra.mxu0 0
    %3784 = vmatprep.subr.bf16.mxu0 0
    %3785 = vmatpush2.bf16.xpose.msra.mxu0 0
    %3786 = vmatprep.mubr.bf16.mxu0 0
    %3787 = vmatmul.mubr.bf16.gmra.mxu0 %v3749
    %v3788 = vpop.f32.mrf.mxu0
    %v3789 = vadd.f32 %v3621, %v3788
    %v3790 = vpop.f32.mrf.mxu0
    %v3791 = vpop.f32.mrf.mxu0
    %v3792 = vadd.f32 %v3622, %v3791
    %v3793 = vpop.f32.mrf.mxu0
    %3794 = vdwg.mxu0
    %v3795 = vsel %vm3674, %v3789, -inf
    %3796 = vmax.xlane.f32.xlu0 %v3795
    %v3797 = vpop.xlane.xlu0 %3796
    %v3798 = vsel %vm3674, %v3792, -inf
    %3799 = vmax.xlane.f32.xlu0 %v3798
    %v3800 = vpop.xlane.xlu0 %3799
    %v3801 = vsub.f32 %v3789, %v3797
    %v3802 = vsub.f32 %v3792, %v3800
    %v3803 = vmul.f32 %v3801, 1.442695
    %v3804 = vpow.pop %v3803
    %v3805 = vmul.f32 %v3802, 1.442695
    %v3806 = vpow.pop %v3805
    %v3807 = vsel %vm3674, %v3804, 0.0
    %3808 = vadd.xlane.f32.xlu0 %v3807
    %v3809 = vpop.xlane.xlu0 %3808
    %v3810 = vsel %vm3674, %v3806, 0.0
    %3811 = vadd.xlane.f32.xlu0 %v3810
    %v3812 = vpop.xlane.xlu0 %3811
    %v3813 = vrcp.pop %v3809
    %v3814 = vrcp.pop %v3812
    %v3815 = vmul.f32 %v3804, %v3813
    %v3816 = vmul.f32 %v3806, %v3814
    %v3817 = vpack.c.bf16 %v3816, %v3815
    %3819 = vrot.lane.b32.xlu0 %v3625, 64
    %v3820 = vpop.permute.xlu0 %3819
    %v3823 = vsel %vm3674, %v3817, 0
    %3825 = vmatprep.subr.bf16.mxu0 0
    %3826 = vmatpush1.bf16.msra.mxu0 0
    %3827 = vmatprep.subr.bf16.mxu0 0
    %3828 = vmatpush1.bf16.msra.mxu0 0
    %3829 = vmatprep.subr.bf16.mxu0 0
    %3830 = vmatpush1.bf16.msra.mxu0 0
    %3831 = vmatprep.subr.bf16.mxu0 0
    %3832 = vmatpush1.bf16.msra.mxu0 0
    %3833 = vmatprep.subr.bf16.mxu0 0
    %3834 = vmatpush1.bf16.msra.mxu0 0
    %3835 = vmatprep.subr.bf16.mxu0 0
    %3836 = vmatpush1.bf16.msra.mxu0 0
    %3837 = vmatprep.subr.bf16.mxu0 0
    %3838 = vmatpush1.bf16.msra.mxu0 0
    %3839 = vmatprep.subr.bf16.mxu0 0
    %3840 = vmatpush1.bf16.msra.mxu0 %v3820
    %3841 = vmatprep.subr.bf16.mxu0 0
    %3842 = vmatpush2.bf16.msra.mxu0 0
    %3843 = vmatprep.subr.bf16.mxu0 0
    %3844 = vmatpush2.bf16.msra.mxu0 0
    %3845 = vmatprep.subr.bf16.mxu0 0
    %3846 = vmatpush2.bf16.msra.mxu0 0
    %3847 = vmatprep.subr.bf16.mxu0 0
    %3848 = vmatpush2.bf16.msra.mxu0 0
    %3849 = vmatprep.subr.bf16.mxu0 0
    %3850 = vmatpush2.bf16.msra.mxu0 0
    %3851 = vmatprep.subr.bf16.mxu0 0
    %3852 = vmatpush2.bf16.msra.mxu0 0
    %3853 = vmatprep.subr.bf16.mxu0 0
    %3854 = vmatpush2.bf16.msra.mxu0 0
    %3855 = vmatprep.subr.bf16.mxu0 0
    %3856 = vmatpush2.bf16.msra.mxu0 0
    %3857 = vmatprep.mubr.bf16.mxu0 0
    %3858 = vmatmul.mubr.bf16.gmra.mxu0 %v3823
    %v3859 = vpop.f32.mrf.mxu0
    %v3860 = vadd.f32 0.0, %v3859
    %v3861 = vpop.f32.mrf.mxu0
    %v3862 = vpop.f32.mrf.mxu0
    %v3863 = vadd.f32 0.0, %v3862
    %v3864 = vpop.f32.mrf.mxu0
    %3865 = vdwg.mxu0
    %v3866 = vpack.c.bf16 %v3530, %v3526
    %v3867 = vpack.c.bf16 %v3618, %v3614
    %v3868 = vpack.c.bf16 %v3329, %v3325
    %v3870 = vsel %vm3626, %v3866, 0
    %v3873 = vsel %vm3626, %v3867, 0
    %3875 = vmatprep.subr.bf16.mxu0 0
    %3876 = vmatpush1.bf16.xpose.msra.mxu0 0
    %3877 = vmatprep.subr.bf16.mxu0 0
    %3878 = vmatpush1.bf16.xpose.msra.mxu0 0
    %3879 = vmatprep.subr.bf16.mxu0 0
    %3880 = vmatpush1.bf16.xpose.msra.mxu0 0
    %3881 = vmatprep.subr.bf16.mxu0 0
    %3882 = vmatpush1.bf16.xpose.msra.mxu0 0
    %3883 = vmatprep.subr.bf16.mxu0 0
    %3884 = vmatpush1.bf16.xpose.msra.mxu0 0
    %3885 = vmatprep.subr.bf16.mxu0 0
    %3886 = vmatpush1.bf16.xpose.msra.mxu0 0
    %3887 = vmatprep.subr.bf16.mxu0 0
    %3888 = vmatpush1.bf16.xpose.msra.mxu0 0
    %3889 = vmatprep.subr.bf16.mxu0 0
    %3890 = vmatpush1.bf16.xpose.msra.mxu0 %v3873
    %3891 = vmatprep.subr.bf16.mxu0 0
    %3892 = vmatpush2.bf16.xpose.msra.mxu0 0
    %3893 = vmatprep.subr.bf16.mxu0 0
    %3894 = vmatpush2.bf16.xpose.msra.mxu0 0
    %3895 = vmatprep.subr.bf16.mxu0 0
    %3896 = vmatpush2.bf16.xpose.msra.mxu0 0
    %3897 = vmatprep.subr.bf16.mxu0 0
    %3898 = vmatpush2.bf16.xpose.msra.mxu0 0
    %3899 = vmatprep.subr.bf16.mxu0 0
    %3900 = vmatpush2.bf16.xpose.msra.mxu0 0
    %3901 = vmatprep.subr.bf16.mxu0 0
    %3902 = vmatpush2.bf16.xpose.msra.mxu0 0
    %3903 = vmatprep.subr.bf16.mxu0 0
    %3904 = vmatpush2.bf16.xpose.msra.mxu0 0
    %3905 = vmatprep.subr.bf16.mxu0 0
    %3906 = vmatpush2.bf16.xpose.msra.mxu0 0
    %3907 = vmatprep.mubr.bf16.mxu0 0
    %3908 = vmatmul.mubr.bf16.gmra.mxu0 %v3870
    %v3909 = vpop.f32.mrf.mxu0
    %v3910 = vadd.f32 %v3621, %v3909
    %v3911 = vpop.f32.mrf.mxu0
    %v3912 = vpop.f32.mrf.mxu0
    %v3913 = vadd.f32 %v3622, %v3912
    %v3914 = vpop.f32.mrf.mxu0
    %3915 = vdwg.mxu0
    %v3916 = vsel %vm3674, %v3910, -inf
    %3917 = vmax.xlane.f32.xlu0 %v3916
    %v3918 = vpop.xlane.xlu0 %3917
    %v3919 = vsel %vm3674, %v3913, -inf
    %3920 = vmax.xlane.f32.xlu0 %v3919
    %v3921 = vpop.xlane.xlu0 %3920
    %v3922 = vsub.f32 %v3910, %v3918
    %v3923 = vsub.f32 %v3913, %v3921
    %v3924 = vmul.f32 %v3922, 1.442695
    %v3925 = vpow.pop %v3924
    %v3926 = vmul.f32 %v3923, 1.442695
    %v3927 = vpow.pop %v3926
    %v3928 = vsel %vm3674, %v3925, 0.0
    %3929 = vadd.xlane.f32.xlu0 %v3928
    %v3930 = vpop.xlane.xlu0 %3929
    %v3931 = vsel %vm3674, %v3927, 0.0
    %3932 = vadd.xlane.f32.xlu0 %v3931
    %v3933 = vpop.xlane.xlu0 %3932
    %v3934 = vrcp.pop %v3930
    %v3935 = vrcp.pop %v3933
    %v3936 = vmul.f32 %v3925, %v3934
    %v3937 = vmul.f32 %v3927, %v3935
    %v3938 = vpack.c.bf16 %v3937, %v3936
    %v3940 = vsel %vm3674, %v3938, 0
    %3942 = vmatprep.subr.bf16.mxu0 0
    %3943 = vmatpush1.bf16.msra.mxu0 0
    %3944 = vmatprep.subr.bf16.mxu0 0
    %3945 = vmatpush1.bf16.msra.mxu0 0
    %3946 = vmatprep.subr.bf16.mxu0 0
    %3947 = vmatpush1.bf16.msra.mxu0 0
    %3948 = vmatprep.subr.bf16.mxu0 0
    %3949 = vmatpush1.bf16.msra.mxu0 0
    %3950 = vmatprep.subr.bf16.mxu0 0
    %3951 = vmatpush1.bf16.msra.mxu0 0
    %3952 = vmatprep.subr.bf16.mxu0 0
    %3953 = vmatpush1.bf16.msra.mxu0 0
    %3954 = vmatprep.subr.bf16.mxu0 0
    %3955 = vmatpush1.bf16.msra.mxu0 0
    %3956 = vmatprep.subr.bf16.mxu0 0
    %3957 = vmatpush1.bf16.msra.mxu0 %v3868
    %3958 = vmatprep.subr.bf16.mxu0 0
    %3959 = vmatpush2.bf16.msra.mxu0 0
    %3960 = vmatprep.subr.bf16.mxu0 0
    %3961 = vmatpush2.bf16.msra.mxu0 0
    %3962 = vmatprep.subr.bf16.mxu0 0
    %3963 = vmatpush2.bf16.msra.mxu0 0
    %3964 = vmatprep.subr.bf16.mxu0 0
    %3965 = vmatpush2.bf16.msra.mxu0 0
    %3966 = vmatprep.subr.bf16.mxu0 0
    %3967 = vmatpush2.bf16.msra.mxu0 0
    %3968 = vmatprep.subr.bf16.mxu0 0
    %3969 = vmatpush2.bf16.msra.mxu0 0
    %3970 = vmatprep.subr.bf16.mxu0 0
    %3971 = vmatpush2.bf16.msra.mxu0 0
    %3972 = vmatprep.subr.bf16.mxu0 0
    %3973 = vmatpush2.bf16.msra.mxu0 0
    %3974 = vmatprep.mubr.bf16.mxu0 0
    %3975 = vmatmul.mubr.bf16.gmra.mxu0 %v3940
    %v3976 = vpop.f32.mrf.mxu0
    %v3977 = vadd.f32 0.0, %v3976
    %v3978 = vpop.f32.mrf.mxu0
    %v3979 = vpop.f32.mrf.mxu0
    %v3980 = vadd.f32 0.0, %v3979
    %v3981 = vpop.f32.mrf.mxu0
    %3982 = vdwg.mxu0
    %3984 = vrot.lane.b32.xlu0 %v3866, 64
    %v3985 = vpop.permute.xlu0 %3984
    %3987 = vrot.lane.b32.xlu0 %v3867, 64
    %v3988 = vpop.permute.xlu0 %3987
    %v3990 = vsel %vm3626, %v3985, 0
    %v3993 = vsel %vm3626, %v3988, 0
    %3995 = vmatprep.subr.bf16.mxu0 0
    %3996 = vmatpush1.bf16.xpose.msra.mxu0 0
    %3997 = vmatprep.subr.bf16.mxu0 0
    %3998 = vmatpush1.bf16.xpose.msra.mxu0 0
    %3999 = vmatprep.subr.bf16.mxu0 0
    %4000 = vmatpush1.bf16.xpose.msra.mxu0 0
    %4001 = vmatprep.subr.bf16.mxu0 0
    %4002 = vmatpush1.bf16.xpose.msra.mxu0 0
    %4003 = vmatprep.subr.bf16.mxu0 0
    %4004 = vmatpush1.bf16.xpose.msra.mxu0 0
    %4005 = vmatprep.subr.bf16.mxu0 0
    %4006 = vmatpush1.bf16.xpose.msra.mxu0 0
    %4007 = vmatprep.subr.bf16.mxu0 0
    %4008 = vmatpush1.bf16.xpose.msra.mxu0 0
    %4009 = vmatprep.subr.bf16.mxu0 0
    %4010 = vmatpush1.bf16.xpose.msra.mxu0 %v3993
    %4011 = vmatprep.subr.bf16.mxu0 0
    %4012 = vmatpush2.bf16.xpose.msra.mxu0 0
    %4013 = vmatprep.subr.bf16.mxu0 0
    %4014 = vmatpush2.bf16.xpose.msra.mxu0 0
    %4015 = vmatprep.subr.bf16.mxu0 0
    %4016 = vmatpush2.bf16.xpose.msra.mxu0 0
    %4017 = vmatprep.subr.bf16.mxu0 0
    %4018 = vmatpush2.bf16.xpose.msra.mxu0 0
    %4019 = vmatprep.subr.bf16.mxu0 0
    %4020 = vmatpush2.bf16.xpose.msra.mxu0 0
    %4021 = vmatprep.subr.bf16.mxu0 0
    %4022 = vmatpush2.bf16.xpose.msra.mxu0 0
    %4023 = vmatprep.subr.bf16.mxu0 0
    %4024 = vmatpush2.bf16.xpose.msra.mxu0 0
    %4025 = vmatprep.subr.bf16.mxu0 0
    %4026 = vmatpush2.bf16.xpose.msra.mxu0 0
    %4027 = vmatprep.mubr.bf16.mxu0 0
    %4028 = vmatmul.mubr.bf16.gmra.mxu0 %v3990
    %v4029 = vpop.f32.mrf.mxu0
    %v4030 = vadd.f32 %v3621, %v4029
    %v4031 = vpop.f32.mrf.mxu0
    %v4032 = vpop.f32.mrf.mxu0
    %v4033 = vadd.f32 %v3622, %v4032
    %v4034 = vpop.f32.mrf.mxu0
    %4035 = vdwg.mxu0
    %v4036 = vsel %vm3674, %v4030, -inf
    %4037 = vmax.xlane.f32.xlu0 %v4036
    %v4038 = vpop.xlane.xlu0 %4037
    %v4039 = vsel %vm3674, %v4033, -inf
    %4040 = vmax.xlane.f32.xlu0 %v4039
    %v4041 = vpop.xlane.xlu0 %4040
    %v4042 = vsub.f32 %v4030, %v4038
    %v4043 = vsub.f32 %v4033, %v4041
    %v4044 = vmul.f32 %v4042, 1.442695
    %v4045 = vpow.pop %v4044
    %v4046 = vmul.f32 %v4043, 1.442695
    %v4047 = vpow.pop %v4046
    %v4048 = vsel %vm3674, %v4045, 0.0
    %4049 = vadd.xlane.f32.xlu0 %v4048
    %v4050 = vpop.xlane.xlu0 %4049
    %v4051 = vsel %vm3674, %v4047, 0.0
    %4052 = vadd.xlane.f32.xlu0 %v4051
    %v4053 = vpop.xlane.xlu0 %4052
    %v4054 = vrcp.pop %v4050
    %v4055 = vrcp.pop %v4053
    %v4056 = vmul.f32 %v4045, %v4054
    %v4057 = vmul.f32 %v4047, %v4055
    %v4058 = vpack.c.bf16 %v4057, %v4056
    %4060 = vrot.lane.b32.xlu0 %v3868, 64
    %v4061 = vpop.permute.xlu0 %4060
    %v4064 = vsel %vm3674, %v4058, 0
    %4066 = vmatprep.subr.bf16.mxu0 0
    %4067 = vmatpush1.bf16.msra.mxu0 0
    %4068 = vmatprep.subr.bf16.mxu0 0
    %4069 = vmatpush1.bf16.msra.mxu0 0
    %4070 = vmatprep.subr.bf16.mxu0 0
    %4071 = vmatpush1.bf16.msra.mxu0 0
    %4072 = vmatprep.subr.bf16.mxu0 0
    %4073 = vmatpush1.bf16.msra.mxu0 0
    %4074 = vmatprep.subr.bf16.mxu0 0
    %4075 = vmatpush1.bf16.msra.mxu0 0
    %4076 = vmatprep.subr.bf16.mxu0 0
    %4077 = vmatpush1.bf16.msra.mxu0 0
    %4078 = vmatprep.subr.bf16.mxu0 0
    %4079 = vmatpush1.bf16.msra.mxu0 0
    %4080 = vmatprep.subr.bf16.mxu0 0
    %4081 = vmatpush1.bf16.msra.mxu0 %v4061
    %4082 = vmatprep.subr.bf16.mxu0 0
    %4083 = vmatpush2.bf16.msra.mxu0 0
    %4084 = vmatprep.subr.bf16.mxu0 0
    %4085 = vmatpush2.bf16.msra.mxu0 0
    %4086 = vmatprep.subr.bf16.mxu0 0
    %4087 = vmatpush2.bf16.msra.mxu0 0
    %4088 = vmatprep.subr.bf16.mxu0 0
    %4089 = vmatpush2.bf16.msra.mxu0 0
    %4090 = vmatprep.subr.bf16.mxu0 0
    %4091 = vmatpush2.bf16.msra.mxu0 0
    %4092 = vmatprep.subr.bf16.mxu0 0
    %4093 = vmatpush2.bf16.msra.mxu0 0
    %4094 = vmatprep.subr.bf16.mxu0 0
    %4095 = vmatpush2.bf16.msra.mxu0 0
    %4096 = vmatprep.subr.bf16.mxu0 0
    %4097 = vmatpush2.bf16.msra.mxu0 0
    %4098 = vmatprep.mubr.bf16.mxu0 0
    %4099 = vmatmul.mubr.bf16.gmra.mxu0 %v4064
    %v4100 = vpop.f32.mrf.mxu0
    %v4101 = vadd.f32 0.0, %v4100
    %v4102 = vpop.f32.mrf.mxu0
    %v4103 = vpop.f32.mrf.mxu0
    %v4104 = vadd.f32 0.0, %v4103
    %v4105 = vpop.f32.mrf.mxu0
    %4106 = vdwg.mxu0
    %v4107 = vpack.c.bf16 %v3531, %v3527
    %v4108 = vpack.c.bf16 %v3619, %v3615
    %v4109 = vpack.c.bf16 %v3413, %v3409
    %v4111 = vsel %vm3626, %v4107, 0
    %v4114 = vsel %vm3626, %v4108, 0
    %4116 = vmatprep.subr.bf16.mxu0 0
    %4117 = vmatpush1.bf16.xpose.msra.mxu0 0
    %4118 = vmatprep.subr.bf16.mxu0 0
    %4119 = vmatpush1.bf16.xpose.msra.mxu0 0
    %4120 = vmatprep.subr.bf16.mxu0 0
    %4121 = vmatpush1.bf16.xpose.msra.mxu0 0
    %4122 = vmatprep.subr.bf16.mxu0 0
    %4123 = vmatpush1.bf16.xpose.msra.mxu0 0
    %4124 = vmatprep.subr.bf16.mxu0 0
    %4125 = vmatpush1.bf16.xpose.msra.mxu0 0
    %4126 = vmatprep.subr.bf16.mxu0 0
    %4127 = vmatpush1.bf16.xpose.msra.mxu0 0
    %4128 = vmatprep.subr.bf16.mxu0 0
    %4129 = vmatpush1.bf16.xpose.msra.mxu0 0
    %4130 = vmatprep.subr.bf16.mxu0 0
    %4131 = vmatpush1.bf16.xpose.msra.mxu0 %v4114
    %4132 = vmatprep.subr.bf16.mxu0 0
    %4133 = vmatpush2.bf16.xpose.msra.mxu0 0
    %4134 = vmatprep.subr.bf16.mxu0 0
    %4135 = vmatpush2.bf16.xpose.msra.mxu0 0
    %4136 = vmatprep.subr.bf16.mxu0 0
    %4137 = vmatpush2.bf16.xpose.msra.mxu0 0
    %4138 = vmatprep.subr.bf16.mxu0 0
    %4139 = vmatpush2.bf16.xpose.msra.mxu0 0
    %4140 = vmatprep.subr.bf16.mxu0 0
    %4141 = vmatpush2.bf16.xpose.msra.mxu0 0
    %4142 = vmatprep.subr.bf16.mxu0 0
    %4143 = vmatpush2.bf16.xpose.msra.mxu0 0
    %4144 = vmatprep.subr.bf16.mxu0 0
    %4145 = vmatpush2.bf16.xpose.msra.mxu0 0
    %4146 = vmatprep.subr.bf16.mxu0 0
    %4147 = vmatpush2.bf16.xpose.msra.mxu0 0
    %4148 = vmatprep.mubr.bf16.mxu0 0
    %4149 = vmatmul.mubr.bf16.gmra.mxu0 %v4111
    %v4150 = vpop.f32.mrf.mxu0
    %v4151 = vadd.f32 %v3621, %v4150
    %v4152 = vpop.f32.mrf.mxu0
    %v4153 = vpop.f32.mrf.mxu0
    %v4154 = vadd.f32 %v3622, %v4153
    %v4155 = vpop.f32.mrf.mxu0
    %4156 = vdwg.mxu0
    %v4157 = vsel %vm3674, %v4151, -inf
    %4158 = vmax.xlane.f32.xlu0 %v4157
    %v4159 = vpop.xlane.xlu0 %4158
    %v4160 = vsel %vm3674, %v4154, -inf
    %4161 = vmax.xlane.f32.xlu0 %v4160
    %v4162 = vpop.xlane.xlu0 %4161
    %v4163 = vsub.f32 %v4151, %v4159
    %v4164 = vsub.f32 %v4154, %v4162
    %v4165 = vmul.f32 %v4163, 1.442695
    %v4166 = vpow.pop %v4165
    %v4167 = vmul.f32 %v4164, 1.442695
    %v4168 = vpow.pop %v4167
    %v4169 = vsel %vm3674, %v4166, 0.0
    %4170 = vadd.xlane.f32.xlu0 %v4169
    %v4171 = vpop.xlane.xlu0 %4170
    %v4172 = vsel %vm3674, %v4168, 0.0
    %4173 = vadd.xlane.f32.xlu0 %v4172
    %v4174 = vpop.xlane.xlu0 %4173
    %v4175 = vrcp.pop %v4171
    %v4176 = vrcp.pop %v4174
    %v4177 = vmul.f32 %v4166, %v4175
    %v4178 = vmul.f32 %v4168, %v4176
    %v4179 = vpack.c.bf16 %v4178, %v4177
    %v4181 = vsel %vm3674, %v4179, 0
    %4183 = vmatprep.subr.bf16.mxu0 0
    %4184 = vmatpush1.bf16.msra.mxu0 0
    %4185 = vmatprep.subr.bf16.mxu0 0
    %4186 = vmatpush1.bf16.msra.mxu0 0
    %4187 = vmatprep.subr.bf16.mxu0 0
    %4188 = vmatpush1.bf16.msra.mxu0 0
    %4189 = vmatprep.subr.bf16.mxu0 0
    %4190 = vmatpush1.bf16.msra.mxu0 0
    %4191 = vmatprep.subr.bf16.mxu0 0
    %4192 = vmatpush1.bf16.msra.mxu0 0
    %4193 = vmatprep.subr.bf16.mxu0 0
    %4194 = vmatpush1.bf16.msra.mxu0 0
    %4195 = vmatprep.subr.bf16.mxu0 0
    %4196 = vmatpush1.bf16.msra.mxu0 0
    %4197 = vmatprep.subr.bf16.mxu0 0
    %4198 = vmatpush1.bf16.msra.mxu0 %v4109
    %4199 = vmatprep.subr.bf16.mxu0 0
    %4200 = vmatpush2.bf16.msra.mxu0 0
    %4201 = vmatprep.subr.bf16.mxu0 0
    %4202 = vmatpush2.bf16.msra.mxu0 0
    %4203 = vmatprep.subr.bf16.mxu0 0
    %4204 = vmatpush2.bf16.msra.mxu0 0
    %4205 = vmatprep.subr.bf16.mxu0 0
    %4206 = vmatpush2.bf16.msra.mxu0 0
    %4207 = vmatprep.subr.bf16.mxu0 0
    %4208 = vmatpush2.bf16.msra.mxu0 0
    %4209 = vmatprep.subr.bf16.mxu0 0
    %4210 = vmatpush2.bf16.msra.mxu0 0
    %4211 = vmatprep.subr.bf16.mxu0 0
    %4212 = vmatpush2.bf16.msra.mxu0 0
    %4213 = vmatprep.subr.bf16.mxu0 0
    %4214 = vmatpush2.bf16.msra.mxu0 0
    %4215 = vmatprep.mubr.bf16.mxu0 0
    %4216 = vmatmul.mubr.bf16.gmra.mxu0 %v4181
    %v4217 = vpop.f32.mrf.mxu0
    %v4218 = vadd.f32 0.0, %v4217
    %v4219 = vpop.f32.mrf.mxu0
    %v4220 = vpop.f32.mrf.mxu0
    %v4221 = vadd.f32 0.0, %v4220
    %v4222 = vpop.f32.mrf.mxu0
    %4223 = vdwg.mxu0
    %4225 = vrot.lane.b32.xlu0 %v4107, 64
    %v4226 = vpop.permute.xlu0 %4225
    %4228 = vrot.lane.b32.xlu0 %v4108, 64
    %v4229 = vpop.permute.xlu0 %4228
    %v4231 = vsel %vm3626, %v4226, 0
    %v4234 = vsel %vm3626, %v4229, 0
    %4236 = vmatprep.subr.bf16.mxu0 0
    %4237 = vmatpush1.bf16.xpose.msra.mxu0 0
    %4238 = vmatprep.subr.bf16.mxu0 0
    %4239 = vmatpush1.bf16.xpose.msra.mxu0 0
    %4240 = vmatprep.subr.bf16.mxu0 0
    %4241 = vmatpush1.bf16.xpose.msra.mxu0 0
    %4242 = vmatprep.subr.bf16.mxu0 0
    %4243 = vmatpush1.bf16.xpose.msra.mxu0 0
    %4244 = vmatprep.subr.bf16.mxu0 0
    %4245 = vmatpush1.bf16.xpose.msra.mxu0 0
    %4246 = vmatprep.subr.bf16.mxu0 0
    %4247 = vmatpush1.bf16.xpose.msra.mxu0 0
    %4248 = vmatprep.subr.bf16.mxu0 0
    %4249 = vmatpush1.bf16.xpose.msra.mxu0 0
    %4250 = vmatprep.subr.bf16.mxu0 0
    %4251 = vmatpush1.bf16.xpose.msra.mxu0 %v4234
    %4252 = vmatprep.subr.bf16.mxu0 0
    %4253 = vmatpush2.bf16.xpose.msra.mxu0 0
    %4254 = vmatprep.subr.bf16.mxu0 0
    %4255 = vmatpush2.bf16.xpose.msra.mxu0 0
    %4256 = vmatprep.subr.bf16.mxu0 0
    %4257 = vmatpush2.bf16.xpose.msra.mxu0 0
    %4258 = vmatprep.subr.bf16.mxu0 0
    %4259 = vmatpush2.bf16.xpose.msra.mxu0 0
    %4260 = vmatprep.subr.bf16.mxu0 0
    %4261 = vmatpush2.bf16.xpose.msra.mxu0 0
    %4262 = vmatprep.subr.bf16.mxu0 0
    %4263 = vmatpush2.bf16.xpose.msra.mxu0 0
    %4264 = vmatprep.subr.bf16.mxu0 0
    %4265 = vmatpush2.bf16.xpose.msra.mxu0 0
    %4266 = vmatprep.subr.bf16.mxu0 0
    %4267 = vmatpush2.bf16.xpose.msra.mxu0 0
    %4268 = vmatprep.mubr.bf16.mxu0 0
    %4269 = vmatmul.mubr.bf16.gmra.mxu0 %v4231
    %v4270 = vpop.f32.mrf.mxu0
    %v4271 = vadd.f32 %v3621, %v4270
    %v4272 = vpop.f32.mrf.mxu0
    %v4273 = vpop.f32.mrf.mxu0
    %v4274 = vadd.f32 %v3622, %v4273
    %v4275 = vpop.f32.mrf.mxu0
    %4276 = vdwg.mxu0
    %v4277 = vsel %vm3674, %v4271, -inf
    %4278 = vmax.xlane.f32.xlu0 %v4277
    %v4279 = vpop.xlane.xlu0 %4278
    %v4280 = vsel %vm3674, %v4274, -inf
    %4281 = vmax.xlane.f32.xlu0 %v4280
    %v4282 = vpop.xlane.xlu0 %4281
    %v4283 = vsub.f32 %v4271, %v4279
    %v4284 = vsub.f32 %v4274, %v4282
    %v4285 = vmul.f32 %v4283, 1.442695
    %v4286 = vpow.pop %v4285
    %v4287 = vmul.f32 %v4284, 1.442695
    %v4288 = vpow.pop %v4287
    %v4289 = vsel %vm3674, %v4286, 0.0
    %4290 = vadd.xlane.f32.xlu0 %v4289
    %v4291 = vpop.xlane.xlu0 %4290
    %v4292 = vsel %vm3674, %v4288, 0.0
    %4293 = vadd.xlane.f32.xlu0 %v4292
    %v4294 = vpop.xlane.xlu0 %4293
    %v4295 = vrcp.pop %v4291
    %v4296 = vrcp.pop %v4294
    %v4297 = vmul.f32 %v4286, %v4295
    %v4298 = vmul.f32 %v4288, %v4296
    %v4299 = vpack.c.bf16 %v4298, %v4297
    %4301 = vrot.lane.b32.xlu0 %v4109, 64
    %v4302 = vpop.permute.xlu0 %4301
    %v4305 = vsel %vm3674, %v4299, 0
    %4307 = vmatprep.subr.bf16.mxu0 0
    %4308 = vmatpush1.bf16.msra.mxu0 0
    %4309 = vmatprep.subr.bf16.mxu0 0
    %4310 = vmatpush1.bf16.msra.mxu0 0
    %4311 = vmatprep.subr.bf16.mxu0 0
    %4312 = vmatpush1.bf16.msra.mxu0 0
    %4313 = vmatprep.subr.bf16.mxu0 0
    %4314 = vmatpush1.bf16.msra.mxu0 0
    %4315 = vmatprep.subr.bf16.mxu0 0
    %4316 = vmatpush1.bf16.msra.mxu0 0
    %4317 = vmatprep.subr.bf16.mxu0 0
    %4318 = vmatpush1.bf16.msra.mxu0 0
    %4319 = vmatprep.subr.bf16.mxu0 0
    %4320 = vmatpush1.bf16.msra.mxu0 0
    %4321 = vmatprep.subr.bf16.mxu0 0
    %4322 = vmatpush1.bf16.msra.mxu0 %v4302
    %4323 = vmatprep.subr.bf16.mxu0 0
    %4324 = vmatpush2.bf16.msra.mxu0 0
    %4325 = vmatprep.subr.bf16.mxu0 0
    %4326 = vmatpush2.bf16.msra.mxu0 0
    %4327 = vmatprep.subr.bf16.mxu0 0
    %4328 = vmatpush2.bf16.msra.mxu0 0
    %4329 = vmatprep.subr.bf16.mxu0 0
    %4330 = vmatpush2.bf16.msra.mxu0 0
    %4331 = vmatprep.subr.bf16.mxu0 0
    %4332 = vmatpush2.bf16.msra.mxu0 0
    %4333 = vmatprep.subr.bf16.mxu0 0
    %4334 = vmatpush2.bf16.msra.mxu0 0
    %4335 = vmatprep.subr.bf16.mxu0 0
    %4336 = vmatpush2.bf16.msra.mxu0 0
    %4337 = vmatprep.subr.bf16.mxu0 0
    %4338 = vmatpush2.bf16.msra.mxu0 0
    %4339 = vmatprep.mubr.bf16.mxu0 0
    %4340 = vmatmul.mubr.bf16.gmra.mxu0 %v4305
    %v4341 = vpop.f32.mrf.mxu0
    %v4342 = vadd.f32 0.0, %v4341
    %v4343 = vpop.f32.mrf.mxu0
    %v4344 = vpop.f32.mrf.mxu0
    %v4345 = vadd.f32 0.0, %v4344
    %v4346 = vpop.f32.mrf.mxu0
    %4347 = vdwg.mxu0
    %v4348 = vpack.c.bf16 %v3532, %v3528
    %v4349 = vpack.c.bf16 %v3620, %v3616
    %v4350 = vpack.c.bf16 %v3415, %v3411
    %v4352 = vsel %vm3626, %v4348, 0
    %v4355 = vsel %vm3626, %v4349, 0
    %4357 = vmatprep.subr.bf16.mxu0 0
    %4358 = vmatpush1.bf16.xpose.msra.mxu0 0
    %4359 = vmatprep.subr.bf16.mxu0 0
    %4360 = vmatpush1.bf16.xpose.msra.mxu0 0
    %4361 = vmatprep.subr.bf16.mxu0 0
    %4362 = vmatpush1.bf16.xpose.msra.mxu0 0
    %4363 = vmatprep.subr.bf16.mxu0 0
    %4364 = vmatpush1.bf16.xpose.msra.mxu0 0
    %4365 = vmatprep.subr.bf16.mxu0 0
    %4366 = vmatpush1.bf16.xpose.msra.mxu0 0
    %4367 = vmatprep.subr.bf16.mxu0 0
    %4368 = vmatpush1.bf16.xpose.msra.mxu0 0
    %4369 = vmatprep.subr.bf16.mxu0 0
    %4370 = vmatpush1.bf16.xpose.msra.mxu0 0
    %4371 = vmatprep.subr.bf16.mxu0 0
    %4372 = vmatpush1.bf16.xpose.msra.mxu0 %v4355
    %4373 = vmatprep.subr.bf16.mxu0 0
    %4374 = vmatpush2.bf16.xpose.msra.mxu0 0
    %4375 = vmatprep.subr.bf16.mxu0 0
    %4376 = vmatpush2.bf16.xpose.msra.mxu0 0
    %4377 = vmatprep.subr.bf16.mxu0 0
    %4378 = vmatpush2.bf16.xpose.msra.mxu0 0
    %4379 = vmatprep.subr.bf16.mxu0 0
    %4380 = vmatpush2.bf16.xpose.msra.mxu0 0
    %4381 = vmatprep.subr.bf16.mxu0 0
    %4382 = vmatpush2.bf16.xpose.msra.mxu0 0
    %4383 = vmatprep.subr.bf16.mxu0 0
    %4384 = vmatpush2.bf16.xpose.msra.mxu0 0
    %4385 = vmatprep.subr.bf16.mxu0 0
    %4386 = vmatpush2.bf16.xpose.msra.mxu0 0
    %4387 = vmatprep.subr.bf16.mxu0 0
    %4388 = vmatpush2.bf16.xpose.msra.mxu0 0
    %4389 = vmatprep.mubr.bf16.mxu0 0
    %4390 = vmatmul.mubr.bf16.gmra.mxu0 %v4352
    %v4391 = vpop.f32.mrf.mxu0
    %v4392 = vadd.f32 %v3621, %v4391
    %v4393 = vpop.f32.mrf.mxu0
    %v4394 = vpop.f32.mrf.mxu0
    %v4395 = vadd.f32 %v3622, %v4394
    %v4396 = vpop.f32.mrf.mxu0
    %4397 = vdwg.mxu0
    %v4398 = vsel %vm3674, %v4392, -inf
    %4399 = vmax.xlane.f32.xlu0 %v4398
    %v4400 = vpop.xlane.xlu0 %4399
    %v4401 = vsel %vm3674, %v4395, -inf
    %4402 = vmax.xlane.f32.xlu0 %v4401
    %v4403 = vpop.xlane.xlu0 %4402
    %v4404 = vsub.f32 %v4392, %v4400
    %v4405 = vsub.f32 %v4395, %v4403
    %v4406 = vmul.f32 %v4404, 1.442695
    %v4407 = vpow.pop %v4406
    %v4408 = vmul.f32 %v4405, 1.442695
    %v4409 = vpow.pop %v4408
    %v4410 = vsel %vm3674, %v4407, 0.0
    %4411 = vadd.xlane.f32.xlu0 %v4410
    %v4412 = vpop.xlane.xlu0 %4411
    %v4413 = vsel %vm3674, %v4409, 0.0
    %4414 = vadd.xlane.f32.xlu0 %v4413
    %v4415 = vpop.xlane.xlu0 %4414
    %v4416 = vrcp.pop %v4412
    %v4417 = vrcp.pop %v4415
    %v4418 = vmul.f32 %v4407, %v4416
    %v4419 = vmul.f32 %v4409, %v4417
    %v4420 = vpack.c.bf16 %v4419, %v4418
    %v4422 = vsel %vm3674, %v4420, 0
    %4424 = vmatprep.subr.bf16.mxu0 0
    %4425 = vmatpush1.bf16.msra.mxu0 0
    %4426 = vmatprep.subr.bf16.mxu0 0
    %4427 = vmatpush1.bf16.msra.mxu0 0
    %4428 = vmatprep.subr.bf16.mxu0 0
    %4429 = vmatpush1.bf16.msra.mxu0 0
    %4430 = vmatprep.subr.bf16.mxu0 0
    %4431 = vmatpush1.bf16.msra.mxu0 0
    %4432 = vmatprep.subr.bf16.mxu0 0
    %4433 = vmatpush1.bf16.msra.mxu0 0
    %4434 = vmatprep.subr.bf16.mxu0 0
    %4435 = vmatpush1.bf16.msra.mxu0 0
    %4436 = vmatprep.subr.bf16.mxu0 0
    %4437 = vmatpush1.bf16.msra.mxu0 0
    %4438 = vmatprep.subr.bf16.mxu0 0
    %4439 = vmatpush1.bf16.msra.mxu0 %v4350
    %4440 = vmatprep.subr.bf16.mxu0 0
    %4441 = vmatpush2.bf16.msra.mxu0 0
    %4442 = vmatprep.subr.bf16.mxu0 0
    %4443 = vmatpush2.bf16.msra.mxu0 0
    %4444 = vmatprep.subr.bf16.mxu0 0
    %4445 = vmatpush2.bf16.msra.mxu0 0
    %4446 = vmatprep.subr.bf16.mxu0 0
    %4447 = vmatpush2.bf16.msra.mxu0 0
    %4448 = vmatprep.subr.bf16.mxu0 0
    %4449 = vmatpush2.bf16.msra.mxu0 0
    %4450 = vmatprep.subr.bf16.mxu0 0
    %4451 = vmatpush2.bf16.msra.mxu0 0
    %4452 = vmatprep.subr.bf16.mxu0 0
    %4453 = vmatpush2.bf16.msra.mxu0 0
    %4454 = vmatprep.subr.bf16.mxu0 0
    %4455 = vmatpush2.bf16.msra.mxu0 0
    %4456 = vmatprep.mubr.bf16.mxu0 0
    %4457 = vmatmul.mubr.bf16.gmra.mxu0 %v4422
    %v4458 = vpop.f32.mrf.mxu0
    %v4459 = vadd.f32 0.0, %v4458
    %v4460 = vpop.f32.mrf.mxu0
    %v4461 = vpop.f32.mrf.mxu0
    %v4462 = vadd.f32 0.0, %v4461
    %v4463 = vpop.f32.mrf.mxu0
    %4464 = vdwg.mxu0
    %4466 = vrot.lane.b32.xlu0 %v4348, 64
    %v4467 = vpop.permute.xlu0 %4466
    %4469 = vrot.lane.b32.xlu0 %v4349, 64
    %v4470 = vpop.permute.xlu0 %4469
    %v4472 = vsel %vm3626, %v4467, 0
    %v4475 = vsel %vm3626, %v4470, 0
    %4477 = vmatprep.subr.bf16.mxu0 0
    %4478 = vmatpush1.bf16.xpose.msra.mxu0 0
    %4479 = vmatprep.subr.bf16.mxu0 0
    %4480 = vmatpush1.bf16.xpose.msra.mxu0 0
    %4481 = vmatprep.subr.bf16.mxu0 0
    %4482 = vmatpush1.bf16.xpose.msra.mxu0 0
    %4483 = vmatprep.subr.bf16.mxu0 0
    %4484 = vmatpush1.bf16.xpose.msra.mxu0 0
    %4485 = vmatprep.subr.bf16.mxu0 0
    %4486 = vmatpush1.bf16.xpose.msra.mxu0 0
    %4487 = vmatprep.subr.bf16.mxu0 0
    %4488 = vmatpush1.bf16.xpose.msra.mxu0 0
    %4489 = vmatprep.subr.bf16.mxu0 0
    %4490 = vmatpush1.bf16.xpose.msra.mxu0 0
    %4491 = vmatprep.subr.bf16.mxu0 0
    %4492 = vmatpush1.bf16.xpose.msra.mxu0 %v4475
    %4493 = vmatprep.subr.bf16.mxu0 0
    %4494 = vmatpush2.bf16.xpose.msra.mxu0 0
    %4495 = vmatprep.subr.bf16.mxu0 0
    %4496 = vmatpush2.bf16.xpose.msra.mxu0 0
    %4497 = vmatprep.subr.bf16.mxu0 0
    %4498 = vmatpush2.bf16.xpose.msra.mxu0 0
    %4499 = vmatprep.subr.bf16.mxu0 0
    %4500 = vmatpush2.bf16.xpose.msra.mxu0 0
    %4501 = vmatprep.subr.bf16.mxu0 0
    %4502 = vmatpush2.bf16.xpose.msra.mxu0 0
    %4503 = vmatprep.subr.bf16.mxu0 0
    %4504 = vmatpush2.bf16.xpose.msra.mxu0 0
    %4505 = vmatprep.subr.bf16.mxu0 0
    %4506 = vmatpush2.bf16.xpose.msra.mxu0 0
    %4507 = vmatprep.subr.bf16.mxu0 0
    %4508 = vmatpush2.bf16.xpose.msra.mxu0 0
    %4509 = vmatprep.mubr.bf16.mxu0 0
    %4510 = vmatmul.mubr.bf16.gmra.mxu0 %v4472
    %v4511 = vpop.f32.mrf.mxu0
    %v4512 = vadd.f32 %v3621, %v4511
    %v4513 = vpop.f32.mrf.mxu0
    %v4514 = vpop.f32.mrf.mxu0
    %v4515 = vadd.f32 %v3622, %v4514
    %v4516 = vpop.f32.mrf.mxu0
    %4517 = vdwg.mxu0
    %v4518 = vsel %vm3674, %v4512, -inf
    %4519 = vmax.xlane.f32.xlu0 %v4518
    %v4520 = vpop.xlane.xlu0 %4519
    %v4521 = vsel %vm3674, %v4515, -inf
    %4522 = vmax.xlane.f32.xlu0 %v4521
    %v4523 = vpop.xlane.xlu0 %4522
    %v4524 = vsub.f32 %v4512, %v4520
    %v4525 = vsub.f32 %v4515, %v4523
    %v4526 = vmul.f32 %v4524, 1.442695
    %v4527 = vpow.pop %v4526
    %v4528 = vmul.f32 %v4525, 1.442695
    %v4529 = vpow.pop %v4528
    %v4530 = vsel %vm3674, %v4527, 0.0
    %4531 = vadd.xlane.f32.xlu0 %v4530
    %v4532 = vpop.xlane.xlu0 %4531
    %v4533 = vsel %vm3674, %v4529, 0.0
    %4534 = vadd.xlane.f32.xlu0 %v4533
    %v4535 = vpop.xlane.xlu0 %4534
    %v4536 = vrcp.pop %v4532
    %v4537 = vrcp.pop %v4535
    %v4538 = vmul.f32 %v4527, %v4536
    %v4539 = vmul.f32 %v4529, %v4537
    %v4540 = vpack.c.bf16 %v4539, %v4538
    %4542 = vrot.lane.b32.xlu0 %v4350, 64
    %v4543 = vpop.permute.xlu0 %4542
    %v4546 = vsel %vm3674, %v4540, 0
    %4548 = vmatprep.subr.bf16.mxu0 0
    %4549 = vmatpush1.bf16.msra.mxu0 0
    %4550 = vmatprep.subr.bf16.mxu0 0
    %4551 = vmatpush1.bf16.msra.mxu0 0
    %4552 = vmatprep.subr.bf16.mxu0 0
    %4553 = vmatpush1.bf16.msra.mxu0 0
    %4554 = vmatprep.subr.bf16.mxu0 0
    %4555 = vmatpush1.bf16.msra.mxu0 0
    %4556 = vmatprep.subr.bf16.mxu0 0
    %4557 = vmatpush1.bf16.msra.mxu0 0
    %4558 = vmatprep.subr.bf16.mxu0 0
    %4559 = vmatpush1.bf16.msra.mxu0 0
    %4560 = vmatprep.subr.bf16.mxu0 0
    %4561 = vmatpush1.bf16.msra.mxu0 0
    %4562 = vmatprep.subr.bf16.mxu0 0
    %4563 = vmatpush1.bf16.msra.mxu0 %v4543
    %4564 = vmatprep.subr.bf16.mxu0 0
    %4565 = vmatpush2.bf16.msra.mxu0 0
    %4566 = vmatprep.subr.bf16.mxu0 0
    %4567 = vmatpush2.bf16.msra.mxu0 0
    %4568 = vmatprep.subr.bf16.mxu0 0
    %4569 = vmatpush2.bf16.msra.mxu0 0
    %4570 = vmatprep.subr.bf16.mxu0 0
    %4571 = vmatpush2.bf16.msra.mxu0 0
    %4572 = vmatprep.subr.bf16.mxu0 0
    %4573 = vmatpush2.bf16.msra.mxu0 0
    %4574 = vmatprep.subr.bf16.mxu0 0
    %4575 = vmatpush2.bf16.msra.mxu0 0
    %4576 = vmatprep.subr.bf16.mxu0 0
    %4577 = vmatpush2.bf16.msra.mxu0 0
    %4578 = vmatprep.subr.bf16.mxu0 0
    %4579 = vmatpush2.bf16.msra.mxu0 0
    %4580 = vmatprep.mubr.bf16.mxu0 0
    %4581 = vmatmul.mubr.bf16.gmra.mxu0 %v4546
    %v4582 = vpop.f32.mrf.mxu0
    %v4583 = vadd.f32 0.0, %v4582
    %v4584 = vpop.f32.mrf.mxu0
    %v4585 = vpop.f32.mrf.mxu0
    %v4586 = vadd.f32 0.0, %v4585
    %v4587 = vpop.f32.mrf.mxu0
    %4588 = vdwg.mxu0
    %4591 = vrot.lane.b32.xlu0 %v3860, 64
    %v4592 = vpop.permute.xlu0 %4591
    %4593 = vrot.lane.b32.xlu0 %v3863, 64
    %v4594 = vpop.permute.xlu0 %4593
    %4599 = vrot.lane.b32.xlu0 %v4101, 64
    %v4600 = vpop.permute.xlu0 %4599
    %4601 = vrot.lane.b32.xlu0 %v4104, 64
    %v4602 = vpop.permute.xlu0 %4601
    %4607 = vrot.lane.b32.xlu0 %v4342, 64
    %v4608 = vpop.permute.xlu0 %4607
    %4609 = vrot.lane.b32.xlu0 %v4345, 64
    %v4610 = vpop.permute.xlu0 %4609
    %4615 = vrot.lane.b32.xlu0 %v4583, 64
    %v4616 = vpop.permute.xlu0 %4615
    %4617 = vrot.lane.b32.xlu0 %v4586, 64
    %v4618 = vpop.permute.xlu0 %4617
    %v4621 = vsel %vm3626, %v3736, %v4592
    %v4622 = vsel %vm3626, %v3739, %v4594
    %v4623 = vsel %vm3626, %v3977, %v4600
    %v4624 = vsel %vm3626, %v3980, %v4602
    %v4625 = vsel %vm3626, %v4218, %v4608
    %v4626 = vsel %vm3626, %v4221, %v4610
    %v4627 = vsel %vm3626, %v4459, %v4616
    %v4628 = vsel %vm3626, %v4462, %v4618
    %v4629 = vpack.c.bf16 %v4622, %v4621
    %v4630 = vpack.c.bf16 %v4624, %v4623
    %v4631 = vpack.c.bf16 %v4626, %v4625
    %v4632 = vpack.c.bf16 %v4628, %v4627
    %v4633 = vld [vmem:[#allocation13] sm:$0xff]
    %v4634 = vld [vmem:[#allocation13 + $0x8] sm:$0xff]
    %v4635 = vld [vmem:[#allocation13 + $0x10] sm:$0xff]
    %v4636 = vld [vmem:[#allocation13 + $0x18] sm:$0xff]
    %v4637 = vld [vmem:[#allocation13 + $0x20] sm:$0xff]
    %v4638 = vld [vmem:[#allocation13 + $0x28] sm:$0xff]
    %v4639 = vld [vmem:[#allocation13 + $0x30] sm:$0xff]
    %v4640 = vld [vmem:[#allocation13 + $0x38] sm:$0xff]
    %v4641 = vld [vmem:[#allocation13 + $0x40] sm:$0xff]
    %v4642 = vld [vmem:[#allocation13 + $0x48] sm:$0xff]
    %v4643 = vld [vmem:[#allocation13 + $0x50] sm:$0xff]
    %v4644 = vld [vmem:[#allocation13 + $0x58] sm:$0xff]
    %v4645 = vld [vmem:[#allocation13 + $0x60] sm:$0xff]
    %v4646 = vld [vmem:[#allocation13 + $0x68] sm:$0xff]
    %v4647 = vld [vmem:[#allocation13 + $0x70] sm:$0xff]
    %v4648 = vld [vmem:[#allocation13 + $0x78] sm:$0xff]
    %v4649 = vld [vmem:[#allocation13 + $0x80] sm:$0xff]
    %v4650 = vld [vmem:[#allocation13 + $0x88] sm:$0xff]
    %v4651 = vld [vmem:[#allocation13 + $0x90] sm:$0xff]
    %v4652 = vld [vmem:[#allocation13 + $0x98] sm:$0xff]
    %v4653 = vld [vmem:[#allocation13 + $0xa0] sm:$0xff]
    %v4654 = vld [vmem:[#allocation13 + $0xa8] sm:$0xff]
    %v4655 = vld [vmem:[#allocation13 + $0xb0] sm:$0xff]
    %v4656 = vld [vmem:[#allocation13 + $0xb8] sm:$0xff]
    %v4657 = vld [vmem:[#allocation13 + $0xc0] sm:$0xff]
    %v4658 = vld [vmem:[#allocation13 + $0xc8] sm:$0xff]
    %v4659 = vld [vmem:[#allocation13 + $0xd0] sm:$0xff]
    %v4660 = vld [vmem:[#allocation13 + $0xd8] sm:$0xff]
    %v4661 = vld [vmem:[#allocation13 + $0xe0] sm:$0xff]
    %v4662 = vld [vmem:[#allocation13 + $0xe8] sm:$0xff]
    %v4663 = vld [vmem:[#allocation13 + $0xf0] sm:$0xff]
    %v4664 = vld [vmem:[#allocation13 + $0xf8] sm:$0xff]
    %v4665 = vld [vmem:[#allocation13 + $0x100] sm:$0xff]
    %v4666 = vld [vmem:[#allocation13 + $0x108] sm:$0xff]
    %v4667 = vld [vmem:[#allocation13 + $0x110] sm:$0xff]
    %v4668 = vld [vmem:[#allocation13 + $0x118] sm:$0xff]
    %v4669 = vld [vmem:[#allocation13 + $0x120] sm:$0xff]
    %v4670 = vld [vmem:[#allocation13 + $0x128] sm:$0xff]
    %v4671 = vld [vmem:[#allocation13 + $0x130] sm:$0xff]
    %v4672 = vld [vmem:[#allocation13 + $0x138] sm:$0xff]
    %v4673 = vld [vmem:[#allocation13 + $0x140] sm:$0xff]
    %v4674 = vld [vmem:[#allocation13 + $0x148] sm:$0xff]
    %v4675 = vld [vmem:[#allocation13 + $0x150] sm:$0xff]
    %v4676 = vld [vmem:[#allocation13 + $0x158] sm:$0xff]
    %v4677 = vld [vmem:[#allocation13 + $0x160] sm:$0xff]
    %v4678 = vld [vmem:[#allocation13 + $0x168] sm:$0xff]
    %v4679 = vld [vmem:[#allocation13 + $0x170] sm:$0xff]
    %v4680 = vld [vmem:[#allocation13 + $0x178] sm:$0xff]
    %v4681 = vld [vmem:[#allocation13 + $0x180] sm:$0xff]
    %v4682 = vld [vmem:[#allocation13 + $0x188] sm:$0xff]
    %v4683 = vld [vmem:[#allocation13 + $0x190] sm:$0xff]
    %v4684 = vld [vmem:[#allocation13 + $0x198] sm:$0xff]
    %v4685 = vld [vmem:[#allocation13 + $0x1a0] sm:$0xff]
    %v4686 = vld [vmem:[#allocation13 + $0x1a8] sm:$0xff]
    %v4687 = vld [vmem:[#allocation13 + $0x1b0] sm:$0xff]
    %v4688 = vld [vmem:[#allocation13 + $0x1b8] sm:$0xff]
    %v4689 = vld [vmem:[#allocation13 + $0x1c0] sm:$0xff]
    %v4690 = vld [vmem:[#allocation13 + $0x1c8] sm:$0xff]
    %v4691 = vld [vmem:[#allocation13 + $0x1d0] sm:$0xff]
    %v4692 = vld [vmem:[#allocation13 + $0x1d8] sm:$0xff]
    %v4693 = vld [vmem:[#allocation13 + $0x1e0] sm:$0xff]
    %v4694 = vld [vmem:[#allocation13 + $0x1e8] sm:$0xff]
    %v4695 = vld [vmem:[#allocation13 + $0x1f0] sm:$0xff]
    %v4696 = vld [vmem:[#allocation13 + $0x1f8] sm:$0xff]
    %v4697 = vld [vmem:[#allocation13 + $0x200] sm:$0xff]
    %v4698 = vld [vmem:[#allocation13 + $0x208] sm:$0xff]
    %v4699 = vld [vmem:[#allocation13 + $0x210] sm:$0xff]
    %v4700 = vld [vmem:[#allocation13 + $0x218] sm:$0xff]
    %v4701 = vld [vmem:[#allocation13 + $0x220] sm:$0xff]
    %v4702 = vld [vmem:[#allocation13 + $0x228] sm:$0xff]
    %v4703 = vld [vmem:[#allocation13 + $0x230] sm:$0xff]
    %v4704 = vld [vmem:[#allocation13 + $0x238] sm:$0xff]
    %v4705 = vld [vmem:[#allocation13 + $0x240] sm:$0xff]
    %v4706 = vld [vmem:[#allocation13 + $0x248] sm:$0xff]
    %v4707 = vld [vmem:[#allocation13 + $0x250] sm:$0xff]
    %v4708 = vld [vmem:[#allocation13 + $0x258] sm:$0xff]
    %v4709 = vld [vmem:[#allocation13 + $0x260] sm:$0xff]
    %v4710 = vld [vmem:[#allocation13 + $0x268] sm:$0xff]
    %v4711 = vld [vmem:[#allocation13 + $0x270] sm:$0xff]
    %v4712 = vld [vmem:[#allocation13 + $0x278] sm:$0xff]
    %v4713 = vld [vmem:[#allocation13 + $0x280] sm:$0xff]
    %v4714 = vld [vmem:[#allocation13 + $0x288] sm:$0xff]
    %v4715 = vld [vmem:[#allocation13 + $0x290] sm:$0xff]
    %v4716 = vld [vmem:[#allocation13 + $0x298] sm:$0xff]
    %v4717 = vld [vmem:[#allocation13 + $0x2a0] sm:$0xff]
    %v4718 = vld [vmem:[#allocation13 + $0x2a8] sm:$0xff]
    %v4719 = vld [vmem:[#allocation13 + $0x2b0] sm:$0xff]
    %v4720 = vld [vmem:[#allocation13 + $0x2b8] sm:$0xff]
    %v4721 = vld [vmem:[#allocation13 + $0x2c0] sm:$0xff]
    %v4722 = vld [vmem:[#allocation13 + $0x2c8] sm:$0xff]
    %v4723 = vld [vmem:[#allocation13 + $0x2d0] sm:$0xff]
    %v4724 = vld [vmem:[#allocation13 + $0x2d8] sm:$0xff]
    %v4725 = vld [vmem:[#allocation13 + $0x2e0] sm:$0xff]
    %v4726 = vld [vmem:[#allocation13 + $0x2e8] sm:$0xff]
    %v4727 = vld [vmem:[#allocation13 + $0x2f0] sm:$0xff]
    %v4728 = vld [vmem:[#allocation13 + $0x2f8] sm:$0xff]
    %v4729 = vld [vmem:[#allocation13 + $0x300] sm:$0xff]
    %v4730 = vld [vmem:[#allocation13 + $0x308] sm:$0xff]
    %v4731 = vld [vmem:[#allocation13 + $0x310] sm:$0xff]
    %v4732 = vld [vmem:[#allocation13 + $0x318] sm:$0xff]
    %v4733 = vld [vmem:[#allocation13 + $0x320] sm:$0xff]
    %v4734 = vld [vmem:[#allocation13 + $0x328] sm:$0xff]
    %v4735 = vld [vmem:[#allocation13 + $0x330] sm:$0xff]
    %v4736 = vld [vmem:[#allocation13 + $0x338] sm:$0xff]
    %v4737 = vld [vmem:[#allocation13 + $0x340] sm:$0xff]
    %v4738 = vld [vmem:[#allocation13 + $0x348] sm:$0xff]
    %v4739 = vld [vmem:[#allocation13 + $0x350] sm:$0xff]
    %v4740 = vld [vmem:[#allocation13 + $0x358] sm:$0xff]
    %v4741 = vld [vmem:[#allocation13 + $0x360] sm:$0xff]
    %v4742 = vld [vmem:[#allocation13 + $0x368] sm:$0xff]
    %v4743 = vld [vmem:[#allocation13 + $0x370] sm:$0xff]
    %v4744 = vld [vmem:[#allocation13 + $0x378] sm:$0xff]
    %v4745 = vld [vmem:[#allocation13 + $0x380] sm:$0xff]
    %v4746 = vld [vmem:[#allocation13 + $0x388] sm:$0xff]
    %v4747 = vld [vmem:[#allocation13 + $0x390] sm:$0xff]
    %v4748 = vld [vmem:[#allocation13 + $0x398] sm:$0xff]
    %v4749 = vld [vmem:[#allocation13 + $0x3a0] sm:$0xff]
    %v4750 = vld [vmem:[#allocation13 + $0x3a8] sm:$0xff]
    %v4751 = vld [vmem:[#allocation13 + $0x3b0] sm:$0xff]
    %v4752 = vld [vmem:[#allocation13 + $0x3b8] sm:$0xff]
    %v4753 = vld [vmem:[#allocation13 + $0x3c0] sm:$0xff]
    %v4754 = vld [vmem:[#allocation13 + $0x3c8] sm:$0xff]
    %v4755 = vld [vmem:[#allocation13 + $0x3d0] sm:$0xff]
    %v4756 = vld [vmem:[#allocation13 + $0x3d8] sm:$0xff]
    %v4757 = vld [vmem:[#allocation13 + $0x3e0] sm:$0xff]
    %v4758 = vld [vmem:[#allocation13 + $0x3e8] sm:$0xff]
    %v4759 = vld [vmem:[#allocation13 + $0x3f0] sm:$0xff]
    %v4760 = vld [vmem:[#allocation13 + $0x3f8] sm:$0xff]
    %v4889 = vunpack.c.l.b16 %v4633
    %v4890 = vunpack.c.h.b16 %v4633
    %v4891 = vunpack.c.l.b16 %v4634
    %v4892 = vunpack.c.h.b16 %v4634
    %v4893 = vunpack.c.l.b16 %v4635
    %v4894 = vunpack.c.h.b16 %v4635
    %v4895 = vunpack.c.l.b16 %v4636
    %v4896 = vunpack.c.h.b16 %v4636
    %v4897 = vunpack.c.l.b16 %v4637
    %v4898 = vunpack.c.h.b16 %v4637
    %v4899 = vunpack.c.l.b16 %v4638
    %v4900 = vunpack.c.h.b16 %v4638
    %v4901 = vunpack.c.l.b16 %v4639
    %v4902 = vunpack.c.h.b16 %v4639
    %v4903 = vunpack.c.l.b16 %v4640
    %v4904 = vunpack.c.h.b16 %v4640
    %v4905 = vunpack.c.l.b16 %v4641
    %v4906 = vunpack.c.h.b16 %v4641
    %v4907 = vunpack.c.l.b16 %v4642
    %v4908 = vunpack.c.h.b16 %v4642
    %v4909 = vunpack.c.l.b16 %v4643
    %v4910 = vunpack.c.h.b16 %v4643
    %v4911 = vunpack.c.l.b16 %v4644
    %v4912 = vunpack.c.h.b16 %v4644
    %v4913 = vunpack.c.l.b16 %v4645
    %v4914 = vunpack.c.h.b16 %v4645
    %v4915 = vunpack.c.l.b16 %v4646
    %v4916 = vunpack.c.h.b16 %v4646
    %v4917 = vunpack.c.l.b16 %v4647
    %v4918 = vunpack.c.h.b16 %v4647
    %v4919 = vunpack.c.l.b16 %v4648
    %v4920 = vunpack.c.h.b16 %v4648
    %v4921 = vunpack.c.l.b16 %v4649
    %v4922 = vunpack.c.h.b16 %v4649
    %v4923 = vunpack.c.l.b16 %v4650
    %v4924 = vunpack.c.h.b16 %v4650
    %v4925 = vunpack.c.l.b16 %v4651
    %v4926 = vunpack.c.h.b16 %v4651
    %v4927 = vunpack.c.l.b16 %v4652
    %v4928 = vunpack.c.h.b16 %v4652
    %v4929 = vunpack.c.l.b16 %v4653
    %v4930 = vunpack.c.h.b16 %v4653
    %v4931 = vunpack.c.l.b16 %v4654
    %v4932 = vunpack.c.h.b16 %v4654
    %v4933 = vunpack.c.l.b16 %v4655
    %v4934 = vunpack.c.h.b16 %v4655
    %v4935 = vunpack.c.l.b16 %v4656
    %v4936 = vunpack.c.h.b16 %v4656
    %v4937 = vunpack.c.l.b16 %v4657
    %v4938 = vunpack.c.h.b16 %v4657
    %v4939 = vunpack.c.l.b16 %v4658
    %v4940 = vunpack.c.h.b16 %v4658
    %v4941 = vunpack.c.l.b16 %v4659
    %v4942 = vunpack.c.h.b16 %v4659
    %v4943 = vunpack.c.l.b16 %v4660
    %v4944 = vunpack.c.h.b16 %v4660
    %v4945 = vunpack.c.l.b16 %v4661
    %v4946 = vunpack.c.h.b16 %v4661
    %v4947 = vunpack.c.l.b16 %v4662
    %v4948 = vunpack.c.h.b16 %v4662
    %v4949 = vunpack.c.l.b16 %v4663
    %v4950 = vunpack.c.h.b16 %v4663
    %v4951 = vunpack.c.l.b16 %v4664
    %v4952 = vunpack.c.h.b16 %v4664
    %v4953 = vunpack.c.l.b16 %v4665
    %v4954 = vunpack.c.h.b16 %v4665
    %v4955 = vunpack.c.l.b16 %v4666
    %v4956 = vunpack.c.h.b16 %v4666
    %v4957 = vunpack.c.l.b16 %v4667
    %v4958 = vunpack.c.h.b16 %v4667
    %v4959 = vunpack.c.l.b16 %v4668
    %v4960 = vunpack.c.h.b16 %v4668
    %v4961 = vunpack.c.l.b16 %v4669
    %v4962 = vunpack.c.h.b16 %v4669
    %v4963 = vunpack.c.l.b16 %v4670
    %v4964 = vunpack.c.h.b16 %v4670
    %v4965 = vunpack.c.l.b16 %v4671
    %v4966 = vunpack.c.h.b16 %v4671
    %v4967 = vunpack.c.l.b16 %v4672
    %v4968 = vunpack.c.h.b16 %v4672
    %v4969 = vunpack.c.l.b16 %v4673
    %v4970 = vunpack.c.h.b16 %v4673
    %v4971 = vunpack.c.l.b16 %v4674
    %v4972 = vunpack.c.h.b16 %v4674
    %v4973 = vunpack.c.l.b16 %v4675
    %v4974 = vunpack.c.h.b16 %v4675
    %v4975 = vunpack.c.l.b16 %v4676
    %v4976 = vunpack.c.h.b16 %v4676
    %v4977 = vunpack.c.l.b16 %v4677
    %v4978 = vunpack.c.h.b16 %v4677
    %v4979 = vunpack.c.l.b16 %v4678
    %v4980 = vunpack.c.h.b16 %v4678
    %v4981 = vunpack.c.l.b16 %v4679
    %v4982 = vunpack.c.h.b16 %v4679
    %v4983 = vunpack.c.l.b16 %v4680
    %v4984 = vunpack.c.h.b16 %v4680
    %v4985 = vunpack.c.l.b16 %v4681
    %v4986 = vunpack.c.h.b16 %v4681
    %v4987 = vunpack.c.l.b16 %v4682
    %v4988 = vunpack.c.h.b16 %v4682
    %v4989 = vunpack.c.l.b16 %v4683
    %v4990 = vunpack.c.h.b16 %v4683
    %v4991 = vunpack.c.l.b16 %v4684
    %v4992 = vunpack.c.h.b16 %v4684
    %v4993 = vunpack.c.l.b16 %v4685
    %v4994 = vunpack.c.h.b16 %v4685
    %v4995 = vunpack.c.l.b16 %v4686
    %v4996 = vunpack.c.h.b16 %v4686
    %v4997 = vunpack.c.l.b16 %v4687
    %v4998 = vunpack.c.h.b16 %v4687
    %v4999 = vunpack.c.l.b16 %v4688
    %v5000 = vunpack.c.h.b16 %v4688
    %v5001 = vunpack.c.l.b16 %v4689
    %v5002 = vunpack.c.h.b16 %v4689
    %v5003 = vunpack.c.l.b16 %v4690
    %v5004 = vunpack.c.h.b16 %v4690
    %v5005 = vunpack.c.l.b16 %v4691
    %v5006 = vunpack.c.h.b16 %v4691
    %v5007 = vunpack.c.l.b16 %v4692
    %v5008 = vunpack.c.h.b16 %v4692
    %v5009 = vunpack.c.l.b16 %v4693
    %v5010 = vunpack.c.h.b16 %v4693
    %v5011 = vunpack.c.l.b16 %v4694
    %v5012 = vunpack.c.h.b16 %v4694
    %v5013 = vunpack.c.l.b16 %v4695
    %v5014 = vunpack.c.h.b16 %v4695
    %v5015 = vunpack.c.l.b16 %v4696
    %v5016 = vunpack.c.h.b16 %v4696
    %v5017 = vunpack.c.l.b16 %v4697
    %v5018 = vunpack.c.h.b16 %v4697
    %v5019 = vunpack.c.l.b16 %v4698
    %v5020 = vunpack.c.h.b16 %v4698
    %v5021 = vunpack.c.l.b16 %v4699
    %v5022 = vunpack.c.h.b16 %v4699
    %v5023 = vunpack.c.l.b16 %v4700
    %v5024 = vunpack.c.h.b16 %v4700
    %v5025 = vunpack.c.l.b16 %v4701
    %v5026 = vunpack.c.h.b16 %v4701
    %v5027 = vunpack.c.l.b16 %v4702
    %v5028 = vunpack.c.h.b16 %v4702
    %v5029 = vunpack.c.l.b16 %v4703
    %v5030 = vunpack.c.h.b16 %v4703
    %v5031 = vunpack.c.l.b16 %v4704
    %v5032 = vunpack.c.h.b16 %v4704
    %v5033 = vunpack.c.l.b16 %v4705
    %v5034 = vunpack.c.h.b16 %v4705
    %v5035 = vunpack.c.l.b16 %v4706
    %v5036 = vunpack.c.h.b16 %v4706
    %v5037 = vunpack.c.l.b16 %v4707
    %v5038 = vunpack.c.h.b16 %v4707
    %v5039 = vunpack.c.l.b16 %v4708
    %v5040 = vunpack.c.h.b16 %v4708
    %v5041 = vunpack.c.l.b16 %v4709
    %v5042 = vunpack.c.h.b16 %v4709
    %v5043 = vunpack.c.l.b16 %v4710
    %v5044 = vunpack.c.h.b16 %v4710
    %v5045 = vunpack.c.l.b16 %v4711
    %v5046 = vunpack.c.h.b16 %v4711
    %v5047 = vunpack.c.l.b16 %v4712
    %v5048 = vunpack.c.h.b16 %v4712
    %v5049 = vunpack.c.l.b16 %v4713
    %v5050 = vunpack.c.h.b16 %v4713
    %v5051 = vunpack.c.l.b16 %v4714
    %v5052 = vunpack.c.h.b16 %v4714
    %v5053 = vunpack.c.l.b16 %v4715
    %v5054 = vunpack.c.h.b16 %v4715
    %v5055 = vunpack.c.l.b16 %v4716
    %v5056 = vunpack.c.h.b16 %v4716
    %v5057 = vunpack.c.l.b16 %v4717
    %v5058 = vunpack.c.h.b16 %v4717
    %v5059 = vunpack.c.l.b16 %v4718
    %v5060 = vunpack.c.h.b16 %v4718
    %v5061 = vunpack.c.l.b16 %v4719
    %v5062 = vunpack.c.h.b16 %v4719
    %v5063 = vunpack.c.l.b16 %v4720
    %v5064 = vunpack.c.h.b16 %v4720
    %v5065 = vunpack.c.l.b16 %v4721
    %v5066 = vunpack.c.h.b16 %v4721
    %v5067 = vunpack.c.l.b16 %v4722
    %v5068 = vunpack.c.h.b16 %v4722
    %v5069 = vunpack.c.l.b16 %v4723
    %v5070 = vunpack.c.h.b16 %v4723
    %v5071 = vunpack.c.l.b16 %v4724
    %v5072 = vunpack.c.h.b16 %v4724
    %v5073 = vunpack.c.l.b16 %v4725
    %v5074 = vunpack.c.h.b16 %v4725
    %v5075 = vunpack.c.l.b16 %v4726
    %v5076 = vunpack.c.h.b16 %v4726
    %v5077 = vunpack.c.l.b16 %v4727
    %v5078 = vunpack.c.h.b16 %v4727
    %v5079 = vunpack.c.l.b16 %v4728
    %v5080 = vunpack.c.h.b16 %v4728
    %v5081 = vunpack.c.l.b16 %v4729
    %v5082 = vunpack.c.h.b16 %v4729
    %v5083 = vunpack.c.l.b16 %v4730
    %v5084 = vunpack.c.h.b16 %v4730
    %v5085 = vunpack.c.l.b16 %v4731
    %v5086 = vunpack.c.h.b16 %v4731
    %v5087 = vunpack.c.l.b16 %v4732
    %v5088 = vunpack.c.h.b16 %v4732
    %v5089 = vunpack.c.l.b16 %v4733
    %v5090 = vunpack.c.h.b16 %v4733
    %v5091 = vunpack.c.l.b16 %v4734
    %v5092 = vunpack.c.h.b16 %v4734
    %v5093 = vunpack.c.l.b16 %v4735
    %v5094 = vunpack.c.h.b16 %v4735
    %v5095 = vunpack.c.l.b16 %v4736
    %v5096 = vunpack.c.h.b16 %v4736
    %v5097 = vunpack.c.l.b16 %v4737
    %v5098 = vunpack.c.h.b16 %v4737
    %v5099 = vunpack.c.l.b16 %v4738
    %v5100 = vunpack.c.h.b16 %v4738
    %v5101 = vunpack.c.l.b16 %v4739
    %v5102 = vunpack.c.h.b16 %v4739
    %v5103 = vunpack.c.l.b16 %v4740
    %v5104 = vunpack.c.h.b16 %v4740
    %v5105 = vunpack.c.l.b16 %v4741
    %v5106 = vunpack.c.h.b16 %v4741
    %v5107 = vunpack.c.l.b16 %v4742
    %v5108 = vunpack.c.h.b16 %v4742
    %v5109 = vunpack.c.l.b16 %v4743
    %v5110 = vunpack.c.h.b16 %v4743
    %v5111 = vunpack.c.l.b16 %v4744
    %v5112 = vunpack.c.h.b16 %v4744
    %v5113 = vunpack.c.l.b16 %v4745
    %v5114 = vunpack.c.h.b16 %v4745
    %v5115 = vunpack.c.l.b16 %v4746
    %v5116 = vunpack.c.h.b16 %v4746
    %v5117 = vunpack.c.l.b16 %v4747
    %v5118 = vunpack.c.h.b16 %v4747
    %v5119 = vunpack.c.l.b16 %v4748
    %v5120 = vunpack.c.h.b16 %v4748
    %v5121 = vunpack.c.l.b16 %v4749
    %v5122 = vunpack.c.h.b16 %v4749
    %v5123 = vunpack.c.l.b16 %v4750
    %v5124 = vunpack.c.h.b16 %v4750
    %v5125 = vunpack.c.l.b16 %v4751
    %v5126 = vunpack.c.h.b16 %v4751
    %v5127 = vunpack.c.l.b16 %v4752
    %v5128 = vunpack.c.h.b16 %v4752
    %v5129 = vunpack.c.l.b16 %v4753
    %v5130 = vunpack.c.h.b16 %v4753
    %v5131 = vunpack.c.l.b16 %v4754
    %v5132 = vunpack.c.h.b16 %v4754
    %v5133 = vunpack.c.l.b16 %v4755
    %v5134 = vunpack.c.h.b16 %v4755
    %v5135 = vunpack.c.l.b16 %v4756
    %v5136 = vunpack.c.h.b16 %v4756
    %v5137 = vunpack.c.l.b16 %v4757
    %v5138 = vunpack.c.h.b16 %v4757
    %v5139 = vunpack.c.l.b16 %v4758
    %v5140 = vunpack.c.h.b16 %v4758
    %v5141 = vunpack.c.l.b16 %v4759
    %v5142 = vunpack.c.h.b16 %v4759
    %v5143 = vunpack.c.l.b16 %v4760
    %v5144 = vunpack.c.h.b16 %v4760
    %v5145 = vpack.c.b16 %v4893, %v4889
    %v5146 = vpack.c.b16 %v4894, %v4890
    %v5147 = vpack.c.b16 %v4895, %v4891
    %v5148 = vpack.c.b16 %v4896, %v4892
    %v5149 = vpack.c.b16 %v4901, %v4897
    %v5150 = vpack.c.b16 %v4902, %v4898
    %v5151 = vpack.c.b16 %v4903, %v4899
    %v5152 = vpack.c.b16 %v4904, %v4900
    %v5153 = vpack.c.b16 %v4909, %v4905
    %v5154 = vpack.c.b16 %v4910, %v4906
    %v5155 = vpack.c.b16 %v4911, %v4907
    %v5156 = vpack.c.b16 %v4912, %v4908
    %v5157 = vpack.c.b16 %v4917, %v4913
    %v5158 = vpack.c.b16 %v4918, %v4914
    %v5159 = vpack.c.b16 %v4919, %v4915
    %v5160 = vpack.c.b16 %v4920, %v4916
    %v5161 = vpack.c.b16 %v4925, %v4921
    %v5162 = vpack.c.b16 %v4926, %v4922
    %v5163 = vpack.c.b16 %v4927, %v4923
    %v5164 = vpack.c.b16 %v4928, %v4924
    %v5165 = vpack.c.b16 %v4933, %v4929
    %v5166 = vpack.c.b16 %v4934, %v4930
    %v5167 = vpack.c.b16 %v4935, %v4931
    %v5168 = vpack.c.b16 %v4936, %v4932
    %v5169 = vpack.c.b16 %v4941, %v4937
    %v5170 = vpack.c.b16 %v4942, %v4938
    %v5171 = vpack.c.b16 %v4943, %v4939
    %v5172 = vpack.c.b16 %v4944, %v4940
    %v5173 = vpack.c.b16 %v4949, %v4945
    %v5174 = vpack.c.b16 %v4950, %v4946
    %v5175 = vpack.c.b16 %v4951, %v4947
    %v5176 = vpack.c.b16 %v4952, %v4948
    %v5177 = vpack.c.b16 %v4957, %v4953
    %v5178 = vpack.c.b16 %v4958, %v4954
    %v5179 = vpack.c.b16 %v4959, %v4955
    %v5180 = vpack.c.b16 %v4960, %v4956
    %v5181 = vpack.c.b16 %v4965, %v4961
    %v5182 = vpack.c.b16 %v4966, %v4962
    %v5183 = vpack.c.b16 %v4967, %v4963
    %v5184 = vpack.c.b16 %v4968, %v4964
    %v5185 = vpack.c.b16 %v4973, %v4969
    %v5186 = vpack.c.b16 %v4974, %v4970
    %v5187 = vpack.c.b16 %v4975, %v4971
    %v5188 = vpack.c.b16 %v4976, %v4972
    %v5189 = vpack.c.b16 %v4981, %v4977
    %v5190 = vpack.c.b16 %v4982, %v4978
    %v5191 = vpack.c.b16 %v4983, %v4979
    %v5192 = vpack.c.b16 %v4984, %v4980
    %v5193 = vpack.c.b16 %v4989, %v4985
    %v5194 = vpack.c.b16 %v4990, %v4986
    %v5195 = vpack.c.b16 %v4991, %v4987
    %v5196 = vpack.c.b16 %v4992, %v4988
    %v5197 = vpack.c.b16 %v4997, %v4993
    %v5198 = vpack.c.b16 %v4998, %v4994
    %v5199 = vpack.c.b16 %v4999, %v4995
    %v5200 = vpack.c.b16 %v5000, %v4996
    %v5201 = vpack.c.b16 %v5005, %v5001
    %v5202 = vpack.c.b16 %v5006, %v5002
    %v5203 = vpack.c.b16 %v5007, %v5003
    %v5204 = vpack.c.b16 %v5008, %v5004
    %v5205 = vpack.c.b16 %v5013, %v5009
    %v5206 = vpack.c.b16 %v5014, %v5010
    %v5207 = vpack.c.b16 %v5015, %v5011
    %v5208 = vpack.c.b16 %v5016, %v5012
    %v5209 = vpack.c.b16 %v5021, %v5017
    %v5210 = vpack.c.b16 %v5022, %v5018
    %v5211 = vpack.c.b16 %v5023, %v5019
    %v5212 = vpack.c.b16 %v5024, %v5020
    %v5213 = vpack.c.b16 %v5029, %v5025
    %v5214 = vpack.c.b16 %v5030, %v5026
    %v5215 = vpack.c.b16 %v5031, %v5027
    %v5216 = vpack.c.b16 %v5032, %v5028
    %v5217 = vpack.c.b16 %v5037, %v5033
    %v5218 = vpack.c.b16 %v5038, %v5034
    %v5219 = vpack.c.b16 %v5039, %v5035
    %v5220 = vpack.c.b16 %v5040, %v5036
    %v5221 = vpack.c.b16 %v5045, %v5041
    %v5222 = vpack.c.b16 %v5046, %v5042
    %v5223 = vpack.c.b16 %v5047, %v5043
    %v5224 = vpack.c.b16 %v5048, %v5044
    %v5225 = vpack.c.b16 %v5053, %v5049
    %v5226 = vpack.c.b16 %v5054, %v5050
    %v5227 = vpack.c.b16 %v5055, %v5051
    %v5228 = vpack.c.b16 %v5056, %v5052
    %v5229 = vpack.c.b16 %v5061, %v5057
    %v5230 = vpack.c.b16 %v5062, %v5058
    %v5231 = vpack.c.b16 %v5063, %v5059
    %v5232 = vpack.c.b16 %v5064, %v5060
    %v5233 = vpack.c.b16 %v5069, %v5065
    %v5234 = vpack.c.b16 %v5070, %v5066
    %v5235 = vpack.c.b16 %v5071, %v5067
    %v5236 = vpack.c.b16 %v5072, %v5068
    %v5237 = vpack.c.b16 %v5077, %v5073
    %v5238 = vpack.c.b16 %v5078, %v5074
    %v5239 = vpack.c.b16 %v5079, %v5075
    %v5240 = vpack.c.b16 %v5080, %v5076
    %v5241 = vpack.c.b16 %v5085, %v5081
    %v5242 = vpack.c.b16 %v5086, %v5082
    %v5243 = vpack.c.b16 %v5087, %v5083
    %v5244 = vpack.c.b16 %v5088, %v5084
    %v5245 = vpack.c.b16 %v5093, %v5089
    %v5246 = vpack.c.b16 %v5094, %v5090
    %v5247 = vpack.c.b16 %v5095, %v5091
    %v5248 = vpack.c.b16 %v5096, %v5092
    %v5249 = vpack.c.b16 %v5101, %v5097
    %v5250 = vpack.c.b16 %v5102, %v5098
    %v5251 = vpack.c.b16 %v5103, %v5099
    %v5252 = vpack.c.b16 %v5104, %v5100
    %v5253 = vpack.c.b16 %v5109, %v5105
    %v5254 = vpack.c.b16 %v5110, %v5106
    %v5255 = vpack.c.b16 %v5111, %v5107
    %v5256 = vpack.c.b16 %v5112, %v5108
    %v5257 = vpack.c.b16 %v5117, %v5113
    %v5258 = vpack.c.b16 %v5118, %v5114
    %v5259 = vpack.c.b16 %v5119, %v5115
    %v5260 = vpack.c.b16 %v5120, %v5116
    %v5261 = vpack.c.b16 %v5125, %v5121
    %v5262 = vpack.c.b16 %v5126, %v5122
    %v5263 = vpack.c.b16 %v5127, %v5123
    %v5264 = vpack.c.b16 %v5128, %v5124
    %v5265 = vpack.c.b16 %v5133, %v5129
    %v5266 = vpack.c.b16 %v5134, %v5130
    %v5267 = vpack.c.b16 %v5135, %v5131
    %v5268 = vpack.c.b16 %v5136, %v5132
    %v5269 = vpack.c.b16 %v5141, %v5137
    %v5270 = vpack.c.b16 %v5142, %v5138
    %v5271 = vpack.c.b16 %v5143, %v5139
    %v5272 = vpack.c.b16 %v5144, %v5140
    %5401 = vmatprep.subr.bf16.mxu0 %v5174
    %5402 = vmatpush1.bf16.msra.mxu0 %v5173
    %5403 = vmatprep.subr.bf16.mxu0 %v5170
    %5404 = vmatpush1.bf16.msra.mxu0 %v5169
    %5405 = vmatprep.subr.bf16.mxu0 %v5166
    %5406 = vmatpush1.bf16.msra.mxu0 %v5165
    %5407 = vmatprep.subr.bf16.mxu0 %v5162
    %5408 = vmatpush1.bf16.msra.mxu0 %v5161
    %5409 = vmatprep.subr.bf16.mxu0 %v5158
    %5410 = vmatpush1.bf16.msra.mxu0 %v5157
    %5411 = vmatprep.subr.bf16.mxu0 %v5154
    %5412 = vmatpush1.bf16.msra.mxu0 %v5153
    %5413 = vmatprep.subr.bf16.mxu0 %v5150
    %5414 = vmatpush1.bf16.msra.mxu0 %v5149
    %5415 = vmatprep.subr.bf16.mxu0 %v5146
    %5416 = vmatpush1.bf16.msra.mxu0 %v5145
    %5417 = vmatprep.subr.bf16.mxu0 %v5206
    %5418 = vmatpush2.bf16.msra.mxu0 %v5205
    %5419 = vmatprep.subr.bf16.mxu0 %v5202
    %5420 = vmatpush2.bf16.msra.mxu0 %v5201
    %5421 = vmatprep.subr.bf16.mxu0 %v5198
    %5422 = vmatpush2.bf16.msra.mxu0 %v5197
    %5423 = vmatprep.subr.bf16.mxu0 %v5194
    %5424 = vmatpush2.bf16.msra.mxu0 %v5193
    %5425 = vmatprep.subr.bf16.mxu0 %v5190
    %5426 = vmatpush2.bf16.msra.mxu0 %v5189
    %5427 = vmatprep.subr.bf16.mxu0 %v5186
    %5428 = vmatpush2.bf16.msra.mxu0 %v5185
    %5429 = vmatprep.subr.bf16.mxu0 %v5182
    %5430 = vmatpush2.bf16.msra.mxu0 %v5181
    %5431 = vmatprep.subr.bf16.mxu0 %v5178
    %5432 = vmatpush2.bf16.msra.mxu0 %v5177
    %5433 = vmatprep.mubr.bf16.mxu0 %v4630
    %5434 = vmatmul.mubr.bf16.gmra.mxu0 %v4629
    %v5435 = vpop.f32.mrf.mxu0
    %v5436 = vadd.f32 0.0, %v5435
    %v5437 = vpop.f32.mrf.mxu0
    %v5438 = vadd.f32 0.0, %v5437
    %v5439 = vpop.f32.mrf.mxu0
    %v5440 = vadd.f32 0.0, %v5439
    %v5441 = vpop.f32.mrf.mxu0
    %v5442 = vadd.f32 0.0, %v5441
    %5443 = vdwg.mxu0
    %5444 = vmatprep.subr.bf16.mxu0 %v5238
    %5445 = vmatpush1.bf16.msra.mxu0 %v5237
    %5446 = vmatprep.subr.bf16.mxu0 %v5234
    %5447 = vmatpush1.bf16.msra.mxu0 %v5233
    %5448 = vmatprep.subr.bf16.mxu0 %v5230
    %5449 = vmatpush1.bf16.msra.mxu0 %v5229
    %5450 = vmatprep.subr.bf16.mxu0 %v5226
    %5451 = vmatpush1.bf16.msra.mxu0 %v5225
    %5452 = vmatprep.subr.bf16.mxu0 %v5222
    %5453 = vmatpush1.bf16.msra.mxu0 %v5221
    %5454 = vmatprep.subr.bf16.mxu0 %v5218
    %5455 = vmatpush1.bf16.msra.mxu0 %v5217
    %5456 = vmatprep.subr.bf16.mxu0 %v5214
    %5457 = vmatpush1.bf16.msra.mxu0 %v5213
    %5458 = vmatprep.subr.bf16.mxu0 %v5210
    %5459 = vmatpush1.bf16.msra.mxu0 %v5209
    %5460 = vmatprep.subr.bf16.mxu0 %v5270
    %5461 = vmatpush2.bf16.msra.mxu0 %v5269
    %5462 = vmatprep.subr.bf16.mxu0 %v5266
    %5463 = vmatpush2.bf16.msra.mxu0 %v5265
    %5464 = vmatprep.subr.bf16.mxu0 %v5262
    %5465 = vmatpush2.bf16.msra.mxu0 %v5261
    %5466 = vmatprep.subr.bf16.mxu0 %v5258
    %5467 = vmatpush2.bf16.msra.mxu0 %v5257
    %5468 = vmatprep.subr.bf16.mxu0 %v5254
    %5469 = vmatpush2.bf16.msra.mxu0 %v5253
    %5470 = vmatprep.subr.bf16.mxu0 %v5250
    %5471 = vmatpush2.bf16.msra.mxu0 %v5249
    %5472 = vmatprep.subr.bf16.mxu0 %v5246
    %5473 = vmatpush2.bf16.msra.mxu0 %v5245
    %5474 = vmatprep.subr.bf16.mxu0 %v5242
    %5475 = vmatpush2.bf16.msra.mxu0 %v5241
    %5476 = vmatprep.mubr.bf16.mxu0 %v4632
    %5477 = vmatmul.mubr.bf16.gmra.mxu0 %v4631
    %v5478 = vpop.f32.mrf.mxu0
    %v5479 = vadd.f32 %v5436, %v5478
    %v5480 = vpop.f32.mrf.mxu0
    %v5481 = vadd.f32 %v5438, %v5480
    %v5482 = vpop.f32.mrf.mxu0
    %v5483 = vadd.f32 %v5440, %v5482
    %v5484 = vpop.f32.mrf.mxu0
    %v5485 = vadd.f32 %v5442, %v5484
    %5486 = vdwg.mxu0
    %5487 = vmatprep.subr.bf16.mxu0 %v5176
    %5488 = vmatpush1.bf16.msra.mxu0 %v5175
    %5489 = vmatprep.subr.bf16.mxu0 %v5172
    %5490 = vmatpush1.bf16.msra.mxu0 %v5171
    %5491 = vmatprep.subr.bf16.mxu0 %v5168
    %5492 = vmatpush1.bf16.msra.mxu0 %v5167
    %5493 = vmatprep.subr.bf16.mxu0 %v5164
    %5494 = vmatpush1.bf16.msra.mxu0 %v5163
    %5495 = vmatprep.subr.bf16.mxu0 %v5160
    %5496 = vmatpush1.bf16.msra.mxu0 %v5159
    %5497 = vmatprep.subr.bf16.mxu0 %v5156
    %5498 = vmatpush1.bf16.msra.mxu0 %v5155
    %5499 = vmatprep.subr.bf16.mxu0 %v5152
    %5500 = vmatpush1.bf16.msra.mxu0 %v5151
    %5501 = vmatprep.subr.bf16.mxu0 %v5148
    %5502 = vmatpush1.bf16.msra.mxu0 %v5147
    %5503 = vmatprep.subr.bf16.mxu0 %v5208
    %5504 = vmatpush2.bf16.msra.mxu0 %v5207
    %5505 = vmatprep.subr.bf16.mxu0 %v5204
    %5506 = vmatpush2.bf16.msra.mxu0 %v5203
    %5507 = vmatprep.subr.bf16.mxu0 %v5200
    %5508 = vmatpush2.bf16.msra.mxu0 %v5199
    %5509 = vmatprep.subr.bf16.mxu0 %v5196
    %5510 = vmatpush2.bf16.msra.mxu0 %v5195
    %5511 = vmatprep.subr.bf16.mxu0 %v5192
    %5512 = vmatpush2.bf16.msra.mxu0 %v5191
    %5513 = vmatprep.subr.bf16.mxu0 %v5188
    %5514 = vmatpush2.bf16.msra.mxu0 %v5187
    %5515 = vmatprep.subr.bf16.mxu0 %v5184
    %5516 = vmatpush2.bf16.msra.mxu0 %v5183
    %5517 = vmatprep.subr.bf16.mxu0 %v5180
    %5518 = vmatpush2.bf16.msra.mxu0 %v5179
    %5519 = vmatprep.mubr.bf16.mxu0 %v4630
    %5520 = vmatmul.mubr.bf16.gmra.mxu0 %v4629
    %v5521 = vpop.f32.mrf.mxu0
    %v5522 = vadd.f32 0.0, %v5521
    %v5523 = vpop.f32.mrf.mxu0
    %v5524 = vadd.f32 0.0, %v5523
    %v5525 = vpop.f32.mrf.mxu0
    %v5526 = vadd.f32 0.0, %v5525
    %v5527 = vpop.f32.mrf.mxu0
    %v5528 = vadd.f32 0.0, %v5527
    %5529 = vdwg.mxu0
    %5530 = vmatprep.subr.bf16.mxu0 %v5240
    %5531 = vmatpush1.bf16.msra.mxu0 %v5239
    %5532 = vmatprep.subr.bf16.mxu0 %v5236
    %5533 = vmatpush1.bf16.msra.mxu0 %v5235
    %5534 = vmatprep.subr.bf16.mxu0 %v5232
    %5535 = vmatpush1.bf16.msra.mxu0 %v5231
    %5536 = vmatprep.subr.bf16.mxu0 %v5228
    %5537 = vmatpush1.bf16.msra.mxu0 %v5227
    %5538 = vmatprep.subr.bf16.mxu0 %v5224
    %5539 = vmatpush1.bf16.msra.mxu0 %v5223
    %5540 = vmatprep.subr.bf16.mxu0 %v5220
    %5541 = vmatpush1.bf16.msra.mxu0 %v5219
    %5542 = vmatprep.subr.bf16.mxu0 %v5216
    %5543 = vmatpush1.bf16.msra.mxu0 %v5215
    %5544 = vmatprep.subr.bf16.mxu0 %v5212
    %5545 = vmatpush1.bf16.msra.mxu0 %v5211
    %5546 = vmatprep.subr.bf16.mxu0 %v5272
    %5547 = vmatpush2.bf16.msra.mxu0 %v5271
    %5548 = vmatprep.subr.bf16.mxu0 %v5268
    %5549 = vmatpush2.bf16.msra.mxu0 %v5267
    %5550 = vmatprep.subr.bf16.mxu0 %v5264
    %5551 = vmatpush2.bf16.msra.mxu0 %v5263
    %5552 = vmatprep.subr.bf16.mxu0 %v5260
    %5553 = vmatpush2.bf16.msra.mxu0 %v5259
    %5554 = vmatprep.subr.bf16.mxu0 %v5256
    %5555 = vmatpush2.bf16.msra.mxu0 %v5255
    %5556 = vmatprep.subr.bf16.mxu0 %v5252
    %5557 = vmatpush2.bf16.msra.mxu0 %v5251
    %5558 = vmatprep.subr.bf16.mxu0 %v5248
    %5559 = vmatpush2.bf16.msra.mxu0 %v5247
    %5560 = vmatprep.subr.bf16.mxu0 %v5244
    %5561 = vmatpush2.bf16.msra.mxu0 %v5243
    %5562 = vmatprep.mubr.bf16.mxu0 %v4632
    %5563 = vmatmul.mubr.bf16.gmra.mxu0 %v4631
    %v5564 = vpop.f32.mrf.mxu0
    %v5565 = vadd.f32 %v5522, %v5564
    %v5566 = vpop.f32.mrf.mxu0
    %v5567 = vadd.f32 %v5524, %v5566
    %v5568 = vpop.f32.mrf.mxu0
    %v5569 = vadd.f32 %v5526, %v5568
    %v5570 = vpop.f32.mrf.mxu0
    %v5571 = vadd.f32 %v5528, %v5570
    %5572 = vdwg.mxu0
    %v5573 = vadd.f32 %v408, %v5479
    %v5574 = vadd.f32 %v409, %v5481
    %v5575 = vadd.f32 %v410, %v5565
    %v5576 = vadd.f32 %v411, %v5567
    %v5577 = vadd.f32 %v412, %v5483
    %v5578 = vadd.f32 %v413, %v5485
    %v5579 = vadd.f32 %v414, %v5569
    %v5580 = vadd.f32 %v415, %v5571
    %v5581 = vld [vmem:[#allocation14] sm:$0xf]
    %v5583 = vlaneseq
    %v5584 = vshrl.u32 %v5583, 7
    %v5585 = vsub.s32 0, %v5584
    %v5586 = vrot.slane %v5581, %v5585
    %v5587 = vlaneseq
    %v5588 = vshrl.u32 %v5587, 7
    %v5589 = vsub.s32 1, %v5588
    %v5590 = vrot.slane %v5581, %v5589
    %v5591 = vlaneseq
    %v5592 = vshrl.u32 %v5591, 7
    %v5593 = vsub.s32 2, %v5592
    %v5594 = vrot.slane %v5581, %v5593
    %v5595 = vlaneseq
    %v5596 = vshrl.u32 %v5595, 7
    %v5597 = vsub.s32 3, %v5596
    %v5598 = vrot.slane %v5581, %v5597
    %v5603 = vadd.f32 %v5573, %v5586
    %v5604 = vadd.f32 %v5574, %v5590
    %v5605 = vadd.f32 %v5575, %v5594
    %v5606 = vadd.f32 %v5576, %v5598
    %v5607 = vadd.f32 %v5577, %v5586
    %v5608 = vadd.f32 %v5578, %v5590
    %v5609 = vadd.f32 %v5579, %v5594
    %v5610 = vadd.f32 %v5580, %v5598
    %v5611 = vld [vmem:[#allocation16] sm:$0xf]
    %v5612 = vld [vmem:[#allocation17] sm:$0xf]
    %v5613 = vadd.f32 %v5603, %v5604
    %v5614 = vadd.f32 %v5613, %v5605
    %v5615 = vadd.f32 %v5614, %v5606
    %5616 = vadd.xlane.f32.xlu0 %v5615
    %v5617 = vpop.xlane.xlu0 %5616
    %v5618 = vadd.f32 %v5607, %v5608
    %v5619 = vadd.f32 %v5618, %v5609
    %v5620 = vadd.f32 %v5619, %v5610
    %5621 = vadd.xlane.f32.xlu0 %v5620
    %v5622 = vpop.xlane.xlu0 %5621
    %v5623 = vmul.f32 %v5617, %v428
    %v5624 = vmul.f32 %v5622, %v428
    %v5625 = vsub.f32 %v5603, %v5623
    %v5626 = vsub.f32 %v5604, %v5623
    %v5627 = vsub.f32 %v5605, %v5623
    %v5628 = vsub.f32 %v5606, %v5623
    %v5629 = vsub.f32 %v5607, %v5624
    %v5630 = vsub.f32 %v5608, %v5624
    %v5631 = vsub.f32 %v5609, %v5624
    %v5632 = vsub.f32 %v5610, %v5624
    %v5633 = vmul.f32 %v5625, %v5625
    %v5634 = vmul.f32 %v5626, %v5626
    %v5635 = vmul.f32 %v5627, %v5627
    %v5636 = vmul.f32 %v5628, %v5628
    %v5637 = vmul.f32 %v5629, %v5629
    %v5638 = vmul.f32 %v5630, %v5630
    %v5639 = vmul.f32 %v5631, %v5631
    %v5640 = vmul.f32 %v5632, %v5632
    %v5641 = vadd.f32 %v5633, %v5634
    %v5642 = vadd.f32 %v5641, %v5635
    %v5643 = vadd.f32 %v5642, %v5636
    %5644 = vadd.xlane.f32.xlu0 %v5643
    %v5645 = vpop.xlane.xlu0 %5644
    %v5646 = vadd.f32 %v5637, %v5638
    %v5647 = vadd.f32 %v5646, %v5639
    %v5648 = vadd.f32 %v5647, %v5640
    %5649 = vadd.xlane.f32.xlu0 %v5648
    %v5650 = vpop.xlane.xlu0 %5649
    %v5651 = vmul.f32 %v5645, %v428
    %v5652 = vmul.f32 %v5650, %v428
    %v5653 = vadd.f32 %v5651, 1e-05
    %v5654 = vadd.f32 %v5652, 1e-05
    %v5655 = vrsqrt.pop %v5653
    %v5656 = vrsqrt.pop %v5654
    %v5657 = vmul.f32 %v5625, %v5655
    %v5658 = vmul.f32 %v5626, %v5655
    %v5659 = vmul.f32 %v5627, %v5655
    %v5660 = vmul.f32 %v5628, %v5655
    %v5661 = vmul.f32 %v5629, %v5656
    %v5662 = vmul.f32 %v5630, %v5656
    %v5663 = vmul.f32 %v5631, %v5656
    %v5664 = vmul.f32 %v5632, %v5656
    %v5666 = vlaneseq
    %v5667 = vshrl.u32 %v5666, 7
    %v5668 = vsub.s32 0, %v5667
    %v5669 = vrot.slane %v5611, %v5668
    %v5670 = vlaneseq
    %v5671 = vshrl.u32 %v5670, 7
    %v5672 = vsub.s32 1, %v5671
    %v5673 = vrot.slane %v5611, %v5672
    %v5674 = vlaneseq
    %v5675 = vshrl.u32 %v5674, 7
    %v5676 = vsub.s32 2, %v5675
    %v5677 = vrot.slane %v5611, %v5676
    %v5678 = vlaneseq
    %v5679 = vshrl.u32 %v5678, 7
    %v5680 = vsub.s32 3, %v5679
    %v5681 = vrot.slane %v5611, %v5680
    %v5686 = vmul.f32 %v5657, %v5669
    %v5687 = vmul.f32 %v5658, %v5673
    %v5688 = vmul.f32 %v5659, %v5677
    %v5689 = vmul.f32 %v5660, %v5681
    %v5690 = vmul.f32 %v5661, %v5669
    %v5691 = vmul.f32 %v5662, %v5673
    %v5692 = vmul.f32 %v5663, %v5677
    %v5693 = vmul.f32 %v5664, %v5681
    %v5695 = vlaneseq
    %v5696 = vshrl.u32 %v5695, 7
    %v5697 = vsub.s32 0, %v5696
    %v5698 = vrot.slane %v5612, %v5697
    %v5699 = vlaneseq
    %v5700 = vshrl.u32 %v5699, 7
    %v5701 = vsub.s32 1, %v5700
    %v5702 = vrot.slane %v5612, %v5701
    %v5703 = vlaneseq
    %v5704 = vshrl.u32 %v5703, 7
    %v5705 = vsub.s32 2, %v5704
    %v5706 = vrot.slane %v5612, %v5705
    %v5707 = vlaneseq
    %v5708 = vshrl.u32 %v5707, 7
    %v5709 = vsub.s32 3, %v5708
    %v5710 = vrot.slane %v5612, %v5709
    %v5715 = vadd.f32 %v5686, %v5698
    %v5716 = vadd.f32 %v5687, %v5702
    %v5717 = vadd.f32 %v5688, %v5706
    %v5718 = vadd.f32 %v5689, %v5710
    %v5719 = vadd.f32 %v5690, %v5698
    %v5720 = vadd.f32 %v5691, %v5702
    %v5721 = vadd.f32 %v5692, %v5706
    %v5722 = vadd.f32 %v5693, %v5710
    %v5723 = vpack.c.bf16 %v5719, %v5715
    %v5724 = vpack.c.bf16 %v5720, %v5716
    %v5725 = vpack.c.bf16 %v5721, %v5717
    %v5726 = vpack.c.bf16 %v5722, %v5718
    %v5727 = vld [vmem:[#allocation19] sm:$0xff]
    %v5728 = vld [vmem:[#allocation19 + $0x8] sm:$0xff]
    %v5729 = vld [vmem:[#allocation19 + $0x10] sm:$0xff]
    %v5730 = vld [vmem:[#allocation19 + $0x18] sm:$0xff]
    %v5731 = vld [vmem:[#allocation19 + $0x20] sm:$0xff]
    %v5732 = vld [vmem:[#allocation19 + $0x28] sm:$0xff]
    %v5733 = vld [vmem:[#allocation19 + $0x30] sm:$0xff]
    %v5734 = vld [vmem:[#allocation19 + $0x38] sm:$0xff]
    %v5735 = vld [vmem:[#allocation19 + $0x40] sm:$0xff]
    %v5736 = vld [vmem:[#allocation19 + $0x48] sm:$0xff]
    %v5737 = vld [vmem:[#allocation19 + $0x50] sm:$0xff]
    %v5738 = vld [vmem:[#allocation19 + $0x58] sm:$0xff]
    %v5739 = vld [vmem:[#allocation19 + $0x60] sm:$0xff]
    %v5740 = vld [vmem:[#allocation19 + $0x68] sm:$0xff]
    %v5741 = vld [vmem:[#allocation19 + $0x70] sm:$0xff]
    %v5742 = vld [vmem:[#allocation19 + $0x78] sm:$0xff]
    %v5743 = vld [vmem:[#allocation19 + $0x80] sm:$0xff]
    %v5744 = vld [vmem:[#allocation19 + $0x88] sm:$0xff]
    %v5745 = vld [vmem:[#allocation19 + $0x90] sm:$0xff]
    %v5746 = vld [vmem:[#allocation19 + $0x98] sm:$0xff]
    %v5747 = vld [vmem:[#allocation19 + $0xa0] sm:$0xff]
    %v5748 = vld [vmem:[#allocation19 + $0xa8] sm:$0xff]
    %v5749 = vld [vmem:[#allocation19 + $0xb0] sm:$0xff]
    %v5750 = vld [vmem:[#allocation19 + $0xb8] sm:$0xff]
    %v5751 = vld [vmem:[#allocation19 + $0xc0] sm:$0xff]
    %v5752 = vld [vmem:[#allocation19 + $0xc8] sm:$0xff]
    %v5753 = vld [vmem:[#allocation19 + $0xd0] sm:$0xff]
    %v5754 = vld [vmem:[#allocation19 + $0xd8] sm:$0xff]
    %v5755 = vld [vmem:[#allocation19 + $0xe0] sm:$0xff]
    %v5756 = vld [vmem:[#allocation19 + $0xe8] sm:$0xff]
    %v5757 = vld [vmem:[#allocation19 + $0xf0] sm:$0xff]
    %v5758 = vld [vmem:[#allocation19 + $0xf8] sm:$0xff]
    %v5759 = vld [vmem:[#allocation19 + $0x100] sm:$0xff]
    %v5760 = vld [vmem:[#allocation19 + $0x108] sm:$0xff]
    %v5761 = vld [vmem:[#allocation19 + $0x110] sm:$0xff]
    %v5762 = vld [vmem:[#allocation19 + $0x118] sm:$0xff]
    %v5763 = vld [vmem:[#allocation19 + $0x120] sm:$0xff]
    %v5764 = vld [vmem:[#allocation19 + $0x128] sm:$0xff]
    %v5765 = vld [vmem:[#allocation19 + $0x130] sm:$0xff]
    %v5766 = vld [vmem:[#allocation19 + $0x138] sm:$0xff]
    %v5767 = vld [vmem:[#allocation19 + $0x140] sm:$0xff]
    %v5768 = vld [vmem:[#allocation19 + $0x148] sm:$0xff]
    %v5769 = vld [vmem:[#allocation19 + $0x150] sm:$0xff]
    %v5770 = vld [vmem:[#allocation19 + $0x158] sm:$0xff]
    %v5771 = vld [vmem:[#allocation19 + $0x160] sm:$0xff]
    %v5772 = vld [vmem:[#allocation19 + $0x168] sm:$0xff]
    %v5773 = vld [vmem:[#allocation19 + $0x170] sm:$0xff]
    %v5774 = vld [vmem:[#allocation19 + $0x178] sm:$0xff]
    %v5775 = vld [vmem:[#allocation19 + $0x180] sm:$0xff]
    %v5776 = vld [vmem:[#allocation19 + $0x188] sm:$0xff]
    %v5777 = vld [vmem:[#allocation19 + $0x190] sm:$0xff]
    %v5778 = vld [vmem:[#allocation19 + $0x198] sm:$0xff]
    %v5779 = vld [vmem:[#allocation19 + $0x1a0] sm:$0xff]
    %v5780 = vld [vmem:[#allocation19 + $0x1a8] sm:$0xff]
    %v5781 = vld [vmem:[#allocation19 + $0x1b0] sm:$0xff]
    %v5782 = vld [vmem:[#allocation19 + $0x1b8] sm:$0xff]
    %v5783 = vld [vmem:[#allocation19 + $0x1c0] sm:$0xff]
    %v5784 = vld [vmem:[#allocation19 + $0x1c8] sm:$0xff]
    %v5785 = vld [vmem:[#allocation19 + $0x1d0] sm:$0xff]
    %v5786 = vld [vmem:[#allocation19 + $0x1d8] sm:$0xff]
    %v5787 = vld [vmem:[#allocation19 + $0x1e0] sm:$0xff]
    %v5788 = vld [vmem:[#allocation19 + $0x1e8] sm:$0xff]
    %v5789 = vld [vmem:[#allocation19 + $0x1f0] sm:$0xff]
    %v5790 = vld [vmem:[#allocation19 + $0x1f8] sm:$0xff]
    %v5791 = vld [vmem:[#allocation19 + $0x200] sm:$0xff]
    %v5792 = vld [vmem:[#allocation19 + $0x208] sm:$0xff]
    %v5793 = vld [vmem:[#allocation19 + $0x210] sm:$0xff]
    %v5794 = vld [vmem:[#allocation19 + $0x218] sm:$0xff]
    %v5795 = vld [vmem:[#allocation19 + $0x220] sm:$0xff]
    %v5796 = vld [vmem:[#allocation19 + $0x228] sm:$0xff]
    %v5797 = vld [vmem:[#allocation19 + $0x230] sm:$0xff]
    %v5798 = vld [vmem:[#allocation19 + $0x238] sm:$0xff]
    %v5799 = vld [vmem:[#allocation19 + $0x240] sm:$0xff]
    %v5800 = vld [vmem:[#allocation19 + $0x248] sm:$0xff]
    %v5801 = vld [vmem:[#allocation19 + $0x250] sm:$0xff]
    %v5802 = vld [vmem:[#allocation19 + $0x258] sm:$0xff]
    %v5803 = vld [vmem:[#allocation19 + $0x260] sm:$0xff]
    %v5804 = vld [vmem:[#allocation19 + $0x268] sm:$0xff]
    %v5805 = vld [vmem:[#allocation19 + $0x270] sm:$0xff]
    %v5806 = vld [vmem:[#allocation19 + $0x278] sm:$0xff]
    %v5807 = vld [vmem:[#allocation19 + $0x280] sm:$0xff]
    %v5808 = vld [vmem:[#allocation19 + $0x288] sm:$0xff]
    %v5809 = vld [vmem:[#allocation19 + $0x290] sm:$0xff]
    %v5810 = vld [vmem:[#allocation19 + $0x298] sm:$0xff]
    %v5811 = vld [vmem:[#allocation19 + $0x2a0] sm:$0xff]
    %v5812 = vld [vmem:[#allocation19 + $0x2a8] sm:$0xff]
    %v5813 = vld [vmem:[#allocation19 + $0x2b0] sm:$0xff]
    %v5814 = vld [vmem:[#allocation19 + $0x2b8] sm:$0xff]
    %v5815 = vld [vmem:[#allocation19 + $0x2c0] sm:$0xff]
    %v5816 = vld [vmem:[#allocation19 + $0x2c8] sm:$0xff]
    %v5817 = vld [vmem:[#allocation19 + $0x2d0] sm:$0xff]
    %v5818 = vld [vmem:[#allocation19 + $0x2d8] sm:$0xff]
    %v5819 = vld [vmem:[#allocation19 + $0x2e0] sm:$0xff]
    %v5820 = vld [vmem:[#allocation19 + $0x2e8] sm:$0xff]
    %v5821 = vld [vmem:[#allocation19 + $0x2f0] sm:$0xff]
    %v5822 = vld [vmem:[#allocation19 + $0x2f8] sm:$0xff]
    %v5823 = vld [vmem:[#allocation19 + $0x300] sm:$0xff]
    %v5824 = vld [vmem:[#allocation19 + $0x308] sm:$0xff]
    %v5825 = vld [vmem:[#allocation19 + $0x310] sm:$0xff]
    %v5826 = vld [vmem:[#allocation19 + $0x318] sm:$0xff]
    %v5827 = vld [vmem:[#allocation19 + $0x320] sm:$0xff]
    %v5828 = vld [vmem:[#allocation19 + $0x328] sm:$0xff]
    %v5829 = vld [vmem:[#allocation19 + $0x330] sm:$0xff]
    %v5830 = vld [vmem:[#allocation19 + $0x338] sm:$0xff]
    %v5831 = vld [vmem:[#allocation19 + $0x340] sm:$0xff]
    %v5832 = vld [vmem:[#allocation19 + $0x348] sm:$0xff]
    %v5833 = vld [vmem:[#allocation19 + $0x350] sm:$0xff]
    %v5834 = vld [vmem:[#allocation19 + $0x358] sm:$0xff]
    %v5835 = vld [vmem:[#allocation19 + $0x360] sm:$0xff]
    %v5836 = vld [vmem:[#allocation19 + $0x368] sm:$0xff]
    %v5837 = vld [vmem:[#allocation19 + $0x370] sm:$0xff]
    %v5838 = vld [vmem:[#allocation19 + $0x378] sm:$0xff]
    %v5839 = vld [vmem:[#allocation19 + $0x380] sm:$0xff]
    %v5840 = vld [vmem:[#allocation19 + $0x388] sm:$0xff]
    %v5841 = vld [vmem:[#allocation19 + $0x390] sm:$0xff]
    %v5842 = vld [vmem:[#allocation19 + $0x398] sm:$0xff]
    %v5843 = vld [vmem:[#allocation19 + $0x3a0] sm:$0xff]
    %v5844 = vld [vmem:[#allocation19 + $0x3a8] sm:$0xff]
    %v5845 = vld [vmem:[#allocation19 + $0x3b0] sm:$0xff]
    %v5846 = vld [vmem:[#allocation19 + $0x3b8] sm:$0xff]
    %v5847 = vld [vmem:[#allocation19 + $0x3c0] sm:$0xff]
    %v5848 = vld [vmem:[#allocation19 + $0x3c8] sm:$0xff]
    %v5849 = vld [vmem:[#allocation19 + $0x3d0] sm:$0xff]
    %v5850 = vld [vmem:[#allocation19 + $0x3d8] sm:$0xff]
    %v5851 = vld [vmem:[#allocation19 + $0x3e0] sm:$0xff]
    %v5852 = vld [vmem:[#allocation19 + $0x3e8] sm:$0xff]
    %v5853 = vld [vmem:[#allocation19 + $0x3f0] sm:$0xff]
    %v5854 = vld [vmem:[#allocation19 + $0x3f8] sm:$0xff]
    %v5855 = vld [vmem:[#allocation20] sm:$0xf]
    %v5857 = vlaneseq
    %v5858 = vshrl.u32 %v5857, 7
    %v5859 = vsub.s32 0, %v5858
    %v5860 = vrot.slane %v5855, %v5859
    %v5861 = vlaneseq
    %v5862 = vshrl.u32 %v5861, 7
    %v5863 = vsub.s32 1, %v5862
    %v5864 = vrot.slane %v5855, %v5863
    %v5865 = vlaneseq
    %v5866 = vshrl.u32 %v5865, 7
    %v5867 = vsub.s32 2, %v5866
    %v5868 = vrot.slane %v5855, %v5867
    %v5869 = vlaneseq
    %v5870 = vshrl.u32 %v5869, 7
    %v5871 = vsub.s32 3, %v5870
    %v5872 = vrot.slane %v5855, %v5871
    %v6005 = vunpack.c.l.b16 %v5727
    %v6006 = vunpack.c.h.b16 %v5727
    %v6007 = vunpack.c.l.b16 %v5728
    %v6008 = vunpack.c.h.b16 %v5728
    %v6009 = vunpack.c.l.b16 %v5729
    %v6010 = vunpack.c.h.b16 %v5729
    %v6011 = vunpack.c.l.b16 %v5730
    %v6012 = vunpack.c.h.b16 %v5730
    %v6013 = vunpack.c.l.b16 %v5731
    %v6014 = vunpack.c.h.b16 %v5731
    %v6015 = vunpack.c.l.b16 %v5732
    %v6016 = vunpack.c.h.b16 %v5732
    %v6017 = vunpack.c.l.b16 %v5733
    %v6018 = vunpack.c.h.b16 %v5733
    %v6019 = vunpack.c.l.b16 %v5734
    %v6020 = vunpack.c.h.b16 %v5734
    %v6021 = vunpack.c.l.b16 %v5735
    %v6022 = vunpack.c.h.b16 %v5735
    %v6023 = vunpack.c.l.b16 %v5736
    %v6024 = vunpack.c.h.b16 %v5736
    %v6025 = vunpack.c.l.b16 %v5737
    %v6026 = vunpack.c.h.b16 %v5737
    %v6027 = vunpack.c.l.b16 %v5738
    %v6028 = vunpack.c.h.b16 %v5738
    %v6029 = vunpack.c.l.b16 %v5739
    %v6030 = vunpack.c.h.b16 %v5739
    %v6031 = vunpack.c.l.b16 %v5740
    %v6032 = vunpack.c.h.b16 %v5740
    %v6033 = vunpack.c.l.b16 %v5741
    %v6034 = vunpack.c.h.b16 %v5741
    %v6035 = vunpack.c.l.b16 %v5742
    %v6036 = vunpack.c.h.b16 %v5742
    %v6037 = vunpack.c.l.b16 %v5743
    %v6038 = vunpack.c.h.b16 %v5743
    %v6039 = vunpack.c.l.b16 %v5744
    %v6040 = vunpack.c.h.b16 %v5744
    %v6041 = vunpack.c.l.b16 %v5745
    %v6042 = vunpack.c.h.b16 %v5745
    %v6043 = vunpack.c.l.b16 %v5746
    %v6044 = vunpack.c.h.b16 %v5746
    %v6045 = vunpack.c.l.b16 %v5747
    %v6046 = vunpack.c.h.b16 %v5747
    %v6047 = vunpack.c.l.b16 %v5748
    %v6048 = vunpack.c.h.b16 %v5748
    %v6049 = vunpack.c.l.b16 %v5749
    %v6050 = vunpack.c.h.b16 %v5749
    %v6051 = vunpack.c.l.b16 %v5750
    %v6052 = vunpack.c.h.b16 %v5750
    %v6053 = vunpack.c.l.b16 %v5751
    %v6054 = vunpack.c.h.b16 %v5751
    %v6055 = vunpack.c.l.b16 %v5752
    %v6056 = vunpack.c.h.b16 %v5752
    %v6057 = vunpack.c.l.b16 %v5753
    %v6058 = vunpack.c.h.b16 %v5753
    %v6059 = vunpack.c.l.b16 %v5754
    %v6060 = vunpack.c.h.b16 %v5754
    %v6061 = vunpack.c.l.b16 %v5755
    %v6062 = vunpack.c.h.b16 %v5755
    %v6063 = vunpack.c.l.b16 %v5756
    %v6064 = vunpack.c.h.b16 %v5756
    %v6065 = vunpack.c.l.b16 %v5757
    %v6066 = vunpack.c.h.b16 %v5757
    %v6067 = vunpack.c.l.b16 %v5758
    %v6068 = vunpack.c.h.b16 %v5758
    %v6069 = vunpack.c.l.b16 %v5759
    %v6070 = vunpack.c.h.b16 %v5759
    %v6071 = vunpack.c.l.b16 %v5760
    %v6072 = vunpack.c.h.b16 %v5760
    %v6073 = vunpack.c.l.b16 %v5761
    %v6074 = vunpack.c.h.b16 %v5761
    %v6075 = vunpack.c.l.b16 %v5762
    %v6076 = vunpack.c.h.b16 %v5762
    %v6077 = vunpack.c.l.b16 %v5763
    %v6078 = vunpack.c.h.b16 %v5763
    %v6079 = vunpack.c.l.b16 %v5764
    %v6080 = vunpack.c.h.b16 %v5764
    %v6081 = vunpack.c.l.b16 %v5765
    %v6082 = vunpack.c.h.b16 %v5765
    %v6083 = vunpack.c.l.b16 %v5766
    %v6084 = vunpack.c.h.b16 %v5766
    %v6085 = vunpack.c.l.b16 %v5767
    %v6086 = vunpack.c.h.b16 %v5767
    %v6087 = vunpack.c.l.b16 %v5768
    %v6088 = vunpack.c.h.b16 %v5768
    %v6089 = vunpack.c.l.b16 %v5769
    %v6090 = vunpack.c.h.b16 %v5769
    %v6091 = vunpack.c.l.b16 %v5770
    %v6092 = vunpack.c.h.b16 %v5770
    %v6093 = vunpack.c.l.b16 %v5771
    %v6094 = vunpack.c.h.b16 %v5771
    %v6095 = vunpack.c.l.b16 %v5772
    %v6096 = vunpack.c.h.b16 %v5772
    %v6097 = vunpack.c.l.b16 %v5773
    %v6098 = vunpack.c.h.b16 %v5773
    %v6099 = vunpack.c.l.b16 %v5774
    %v6100 = vunpack.c.h.b16 %v5774
    %v6101 = vunpack.c.l.b16 %v5775
    %v6102 = vunpack.c.h.b16 %v5775
    %v6103 = vunpack.c.l.b16 %v5776
    %v6104 = vunpack.c.h.b16 %v5776
    %v6105 = vunpack.c.l.b16 %v5777
    %v6106 = vunpack.c.h.b16 %v5777
    %v6107 = vunpack.c.l.b16 %v5778
    %v6108 = vunpack.c.h.b16 %v5778
    %v6109 = vunpack.c.l.b16 %v5779
    %v6110 = vunpack.c.h.b16 %v5779
    %v6111 = vunpack.c.l.b16 %v5780
    %v6112 = vunpack.c.h.b16 %v5780
    %v6113 = vunpack.c.l.b16 %v5781
    %v6114 = vunpack.c.h.b16 %v5781
    %v6115 = vunpack.c.l.b16 %v5782
    %v6116 = vunpack.c.h.b16 %v5782
    %v6117 = vunpack.c.l.b16 %v5783
    %v6118 = vunpack.c.h.b16 %v5783
    %v6119 = vunpack.c.l.b16 %v5784
    %v6120 = vunpack.c.h.b16 %v5784
    %v6121 = vunpack.c.l.b16 %v5785
    %v6122 = vunpack.c.h.b16 %v5785
    %v6123 = vunpack.c.l.b16 %v5786
    %v6124 = vunpack.c.h.b16 %v5786
    %v6125 = vunpack.c.l.b16 %v5787
    %v6126 = vunpack.c.h.b16 %v5787
    %v6127 = vunpack.c.l.b16 %v5788
    %v6128 = vunpack.c.h.b16 %v5788
    %v6129 = vunpack.c.l.b16 %v5789
    %v6130 = vunpack.c.h.b16 %v5789
    %v6131 = vunpack.c.l.b16 %v5790
    %v6132 = vunpack.c.h.b16 %v5790
    %v6133 = vunpack.c.l.b16 %v5791
    %v6134 = vunpack.c.h.b16 %v5791
    %v6135 = vunpack.c.l.b16 %v5792
    %v6136 = vunpack.c.h.b16 %v5792
    %v6137 = vunpack.c.l.b16 %v5793
    %v6138 = vunpack.c.h.b16 %v5793
    %v6139 = vunpack.c.l.b16 %v5794
    %v6140 = vunpack.c.h.b16 %v5794
    %v6141 = vunpack.c.l.b16 %v5795
    %v6142 = vunpack.c.h.b16 %v5795
    %v6143 = vunpack.c.l.b16 %v5796
    %v6144 = vunpack.c.h.b16 %v5796
    %v6145 = vunpack.c.l.b16 %v5797
    %v6146 = vunpack.c.h.b16 %v5797
    %v6147 = vunpack.c.l.b16 %v5798
    %v6148 = vunpack.c.h.b16 %v5798
    %v6149 = vunpack.c.l.b16 %v5799
    %v6150 = vunpack.c.h.b16 %v5799
    %v6151 = vunpack.c.l.b16 %v5800
    %v6152 = vunpack.c.h.b16 %v5800
    %v6153 = vunpack.c.l.b16 %v5801
    %v6154 = vunpack.c.h.b16 %v5801
    %v6155 = vunpack.c.l.b16 %v5802
    %v6156 = vunpack.c.h.b16 %v5802
    %v6157 = vunpack.c.l.b16 %v5803
    %v6158 = vunpack.c.h.b16 %v5803
    %v6159 = vunpack.c.l.b16 %v5804
    %v6160 = vunpack.c.h.b16 %v5804
    %v6161 = vunpack.c.l.b16 %v5805
    %v6162 = vunpack.c.h.b16 %v5805
    %v6163 = vunpack.c.l.b16 %v5806
    %v6164 = vunpack.c.h.b16 %v5806
    %v6165 = vunpack.c.l.b16 %v5807
    %v6166 = vunpack.c.h.b16 %v5807
    %v6167 = vunpack.c.l.b16 %v5808
    %v6168 = vunpack.c.h.b16 %v5808
    %v6169 = vunpack.c.l.b16 %v5809
    %v6170 = vunpack.c.h.b16 %v5809
    %v6171 = vunpack.c.l.b16 %v5810
    %v6172 = vunpack.c.h.b16 %v5810
    %v6173 = vunpack.c.l.b16 %v5811
    %v6174 = vunpack.c.h.b16 %v5811
    %v6175 = vunpack.c.l.b16 %v5812
    %v6176 = vunpack.c.h.b16 %v5812
    %v6177 = vunpack.c.l.b16 %v5813
    %v6178 = vunpack.c.h.b16 %v5813
    %v6179 = vunpack.c.l.b16 %v5814
    %v6180 = vunpack.c.h.b16 %v5814
    %v6181 = vunpack.c.l.b16 %v5815
    %v6182 = vunpack.c.h.b16 %v5815
    %v6183 = vunpack.c.l.b16 %v5816
    %v6184 = vunpack.c.h.b16 %v5816
    %v6185 = vunpack.c.l.b16 %v5817
    %v6186 = vunpack.c.h.b16 %v5817
    %v6187 = vunpack.c.l.b16 %v5818
    %v6188 = vunpack.c.h.b16 %v5818
    %v6189 = vunpack.c.l.b16 %v5819
    %v6190 = vunpack.c.h.b16 %v5819
    %v6191 = vunpack.c.l.b16 %v5820
    %v6192 = vunpack.c.h.b16 %v5820
    %v6193 = vunpack.c.l.b16 %v5821
    %v6194 = vunpack.c.h.b16 %v5821
    %v6195 = vunpack.c.l.b16 %v5822
    %v6196 = vunpack.c.h.b16 %v5822
    %v6197 = vunpack.c.l.b16 %v5823
    %v6198 = vunpack.c.h.b16 %v5823
    %v6199 = vunpack.c.l.b16 %v5824
    %v6200 = vunpack.c.h.b16 %v5824
    %v6201 = vunpack.c.l.b16 %v5825
    %v6202 = vunpack.c.h.b16 %v5825
    %v6203 = vunpack.c.l.b16 %v5826
    %v6204 = vunpack.c.h.b16 %v5826
    %v6205 = vunpack.c.l.b16 %v5827
    %v6206 = vunpack.c.h.b16 %v5827
    %v6207 = vunpack.c.l.b16 %v5828
    %v6208 = vunpack.c.h.b16 %v5828
    %v6209 = vunpack.c.l.b16 %v5829
    %v6210 = vunpack.c.h.b16 %v5829
    %v6211 = vunpack.c.l.b16 %v5830
    %v6212 = vunpack.c.h.b16 %v5830
    %v6213 = vunpack.c.l.b16 %v5831
    %v6214 = vunpack.c.h.b16 %v5831
    %v6215 = vunpack.c.l.b16 %v5832
    %v6216 = vunpack.c.h.b16 %v5832
    %v6217 = vunpack.c.l.b16 %v5833
    %v6218 = vunpack.c.h.b16 %v5833
    %v6219 = vunpack.c.l.b16 %v5834
    %v6220 = vunpack.c.h.b16 %v5834
    %v6221 = vunpack.c.l.b16 %v5835
    %v6222 = vunpack.c.h.b16 %v5835
    %v6223 = vunpack.c.l.b16 %v5836
    %v6224 = vunpack.c.h.b16 %v5836
    %v6225 = vunpack.c.l.b16 %v5837
    %v6226 = vunpack.c.h.b16 %v5837
    %v6227 = vunpack.c.l.b16 %v5838
    %v6228 = vunpack.c.h.b16 %v5838
    %v6229 = vunpack.c.l.b16 %v5839
    %v6230 = vunpack.c.h.b16 %v5839
    %v6231 = vunpack.c.l.b16 %v5840
    %v6232 = vunpack.c.h.b16 %v5840
    %v6233 = vunpack.c.l.b16 %v5841
    %v6234 = vunpack.c.h.b16 %v5841
    %v6235 = vunpack.c.l.b16 %v5842
    %v6236 = vunpack.c.h.b16 %v5842
    %v6237 = vunpack.c.l.b16 %v5843
    %v6238 = vunpack.c.h.b16 %v5843
    %v6239 = vunpack.c.l.b16 %v5844
    %v6240 = vunpack.c.h.b16 %v5844
    %v6241 = vunpack.c.l.b16 %v5845
    %v6242 = vunpack.c.h.b16 %v5845
    %v6243 = vunpack.c.l.b16 %v5846
    %v6244 = vunpack.c.h.b16 %v5846
    %v6245 = vunpack.c.l.b16 %v5847
    %v6246 = vunpack.c.h.b16 %v5847
    %v6247 = vunpack.c.l.b16 %v5848
    %v6248 = vunpack.c.h.b16 %v5848
    %v6249 = vunpack.c.l.b16 %v5849
    %v6250 = vunpack.c.h.b16 %v5849
    %v6251 = vunpack.c.l.b16 %v5850
    %v6252 = vunpack.c.h.b16 %v5850
    %v6253 = vunpack.c.l.b16 %v5851
    %v6254 = vunpack.c.h.b16 %v5851
    %v6255 = vunpack.c.l.b16 %v5852
    %v6256 = vunpack.c.h.b16 %v5852
    %v6257 = vunpack.c.l.b16 %v5853
    %v6258 = vunpack.c.h.b16 %v5853
    %v6259 = vunpack.c.l.b16 %v5854
    %v6260 = vunpack.c.h.b16 %v5854
    %v6261 = vpack.c.b16 %v6009, %v6005
    %v6262 = vpack.c.b16 %v6010, %v6006
    %v6263 = vpack.c.b16 %v6011, %v6007
    %v6264 = vpack.c.b16 %v6012, %v6008
    %v6265 = vpack.c.b16 %v6017, %v6013
    %v6266 = vpack.c.b16 %v6018, %v6014
    %v6267 = vpack.c.b16 %v6019, %v6015
    %v6268 = vpack.c.b16 %v6020, %v6016
    %v6269 = vpack.c.b16 %v6025, %v6021
    %v6270 = vpack.c.b16 %v6026, %v6022
    %v6271 = vpack.c.b16 %v6027, %v6023
    %v6272 = vpack.c.b16 %v6028, %v6024
    %v6273 = vpack.c.b16 %v6033, %v6029
    %v6274 = vpack.c.b16 %v6034, %v6030
    %v6275 = vpack.c.b16 %v6035, %v6031
    %v6276 = vpack.c.b16 %v6036, %v6032
    %v6277 = vpack.c.b16 %v6041, %v6037
    %v6278 = vpack.c.b16 %v6042, %v6038
    %v6279 = vpack.c.b16 %v6043, %v6039
    %v6280 = vpack.c.b16 %v6044, %v6040
    %v6281 = vpack.c.b16 %v6049, %v6045
    %v6282 = vpack.c.b16 %v6050, %v6046
    %v6283 = vpack.c.b16 %v6051, %v6047
    %v6284 = vpack.c.b16 %v6052, %v6048
    %v6285 = vpack.c.b16 %v6057, %v6053
    %v6286 = vpack.c.b16 %v6058, %v6054
    %v6287 = vpack.c.b16 %v6059, %v6055
    %v6288 = vpack.c.b16 %v6060, %v6056
    %v6289 = vpack.c.b16 %v6065, %v6061
    %v6290 = vpack.c.b16 %v6066, %v6062
    %v6291 = vpack.c.b16 %v6067, %v6063
    %v6292 = vpack.c.b16 %v6068, %v6064
    %v6293 = vpack.c.b16 %v6073, %v6069
    %v6294 = vpack.c.b16 %v6074, %v6070
    %v6295 = vpack.c.b16 %v6075, %v6071
    %v6296 = vpack.c.b16 %v6076, %v6072
    %v6297 = vpack.c.b16 %v6081, %v6077
    %v6298 = vpack.c.b16 %v6082, %v6078
    %v6299 = vpack.c.b16 %v6083, %v6079
    %v6300 = vpack.c.b16 %v6084, %v6080
    %v6301 = vpack.c.b16 %v6089, %v6085
    %v6302 = vpack.c.b16 %v6090, %v6086
    %v6303 = vpack.c.b16 %v6091, %v6087
    %v6304 = vpack.c.b16 %v6092, %v6088
    %v6305 = vpack.c.b16 %v6097, %v6093
    %v6306 = vpack.c.b16 %v6098, %v6094
    %v6307 = vpack.c.b16 %v6099, %v6095
    %v6308 = vpack.c.b16 %v6100, %v6096
    %v6309 = vpack.c.b16 %v6105, %v6101
    %v6310 = vpack.c.b16 %v6106, %v6102
    %v6311 = vpack.c.b16 %v6107, %v6103
    %v6312 = vpack.c.b16 %v6108, %v6104
    %v6313 = vpack.c.b16 %v6113, %v6109
    %v6314 = vpack.c.b16 %v6114, %v6110
    %v6315 = vpack.c.b16 %v6115, %v6111
    %v6316 = vpack.c.b16 %v6116, %v6112
    %v6317 = vpack.c.b16 %v6121, %v6117
    %v6318 = vpack.c.b16 %v6122, %v6118
    %v6319 = vpack.c.b16 %v6123, %v6119
    %v6320 = vpack.c.b16 %v6124, %v6120
    %v6321 = vpack.c.b16 %v6129, %v6125
    %v6322 = vpack.c.b16 %v6130, %v6126
    %v6323 = vpack.c.b16 %v6131, %v6127
    %v6324 = vpack.c.b16 %v6132, %v6128
    %v6325 = vpack.c.b16 %v6137, %v6133
    %v6326 = vpack.c.b16 %v6138, %v6134
    %v6327 = vpack.c.b16 %v6139, %v6135
    %v6328 = vpack.c.b16 %v6140, %v6136
    %v6329 = vpack.c.b16 %v6145, %v6141
    %v6330 = vpack.c.b16 %v6146, %v6142
    %v6331 = vpack.c.b16 %v6147, %v6143
    %v6332 = vpack.c.b16 %v6148, %v6144
    %v6333 = vpack.c.b16 %v6153, %v6149
    %v6334 = vpack.c.b16 %v6154, %v6150
    %v6335 = vpack.c.b16 %v6155, %v6151
    %v6336 = vpack.c.b16 %v6156, %v6152
    %v6337 = vpack.c.b16 %v6161, %v6157
    %v6338 = vpack.c.b16 %v6162, %v6158
    %v6339 = vpack.c.b16 %v6163, %v6159
    %v6340 = vpack.c.b16 %v6164, %v6160
    %v6341 = vpack.c.b16 %v6169, %v6165
    %v6342 = vpack.c.b16 %v6170, %v6166
    %v6343 = vpack.c.b16 %v6171, %v6167
    %v6344 = vpack.c.b16 %v6172, %v6168
    %v6345 = vpack.c.b16 %v6177, %v6173
    %v6346 = vpack.c.b16 %v6178, %v6174
    %v6347 = vpack.c.b16 %v6179, %v6175
    %v6348 = vpack.c.b16 %v6180, %v6176
    %v6349 = vpack.c.b16 %v6185, %v6181
    %v6350 = vpack.c.b16 %v6186, %v6182
    %v6351 = vpack.c.b16 %v6187, %v6183
    %v6352 = vpack.c.b16 %v6188, %v6184
    %v6353 = vpack.c.b16 %v6193, %v6189
    %v6354 = vpack.c.b16 %v6194, %v6190
    %v6355 = vpack.c.b16 %v6195, %v6191
    %v6356 = vpack.c.b16 %v6196, %v6192
    %v6357 = vpack.c.b16 %v6201, %v6197
    %v6358 = vpack.c.b16 %v6202, %v6198
    %v6359 = vpack.c.b16 %v6203, %v6199
    %v6360 = vpack.c.b16 %v6204, %v6200
    %v6361 = vpack.c.b16 %v6209, %v6205
    %v6362 = vpack.c.b16 %v6210, %v6206
    %v6363 = vpack.c.b16 %v6211, %v6207
    %v6364 = vpack.c.b16 %v6212, %v6208
    %v6365 = vpack.c.b16 %v6217, %v6213
    %v6366 = vpack.c.b16 %v6218, %v6214
    %v6367 = vpack.c.b16 %v6219, %v6215
    %v6368 = vpack.c.b16 %v6220, %v6216
    %v6369 = vpack.c.b16 %v6225, %v6221
    %v6370 = vpack.c.b16 %v6226, %v6222
    %v6371 = vpack.c.b16 %v6227, %v6223
    %v6372 = vpack.c.b16 %v6228, %v6224
    %v6373 = vpack.c.b16 %v6233, %v6229
    %v6374 = vpack.c.b16 %v6234, %v6230
    %v6375 = vpack.c.b16 %v6235, %v6231
    %v6376 = vpack.c.b16 %v6236, %v6232
    %v6377 = vpack.c.b16 %v6241, %v6237
    %v6378 = vpack.c.b16 %v6242, %v6238
    %v6379 = vpack.c.b16 %v6243, %v6239
    %v6380 = vpack.c.b16 %v6244, %v6240
    %v6381 = vpack.c.b16 %v6249, %v6245
    %v6382 = vpack.c.b16 %v6250, %v6246
    %v6383 = vpack.c.b16 %v6251, %v6247
    %v6384 = vpack.c.b16 %v6252, %v6248
    %v6385 = vpack.c.b16 %v6257, %v6253
    %v6386 = vpack.c.b16 %v6258, %v6254
    %v6387 = vpack.c.b16 %v6259, %v6255
    %v6388 = vpack.c.b16 %v6260, %v6256
    %6517 = vmatprep.subr.bf16.mxu0 %v6290
    %6518 = vmatpush1.bf16.msra.mxu0 %v6289
    %6519 = vmatprep.subr.bf16.mxu0 %v6286
    %6520 = vmatpush1.bf16.msra.mxu0 %v6285
    %6521 = vmatprep.subr.bf16.mxu0 %v6282
    %6522 = vmatpush1.bf16.msra.mxu0 %v6281
    %6523 = vmatprep.subr.bf16.mxu0 %v6278
    %6524 = vmatpush1.bf16.msra.mxu0 %v6277
    %6525 = vmatprep.subr.bf16.mxu0 %v6274
    %6526 = vmatpush1.bf16.msra.mxu0 %v6273
    %6527 = vmatprep.subr.bf16.mxu0 %v6270
    %6528 = vmatpush1.bf16.msra.mxu0 %v6269
    %6529 = vmatprep.subr.bf16.mxu0 %v6266
    %6530 = vmatpush1.bf16.msra.mxu0 %v6265
    %6531 = vmatprep.subr.bf16.mxu0 %v6262
    %6532 = vmatpush1.bf16.msra.mxu0 %v6261
    %6533 = vmatprep.subr.bf16.mxu0 %v6322
    %6534 = vmatpush2.bf16.msra.mxu0 %v6321
    %6535 = vmatprep.subr.bf16.mxu0 %v6318
    %6536 = vmatpush2.bf16.msra.mxu0 %v6317
    %6537 = vmatprep.subr.bf16.mxu0 %v6314
    %6538 = vmatpush2.bf16.msra.mxu0 %v6313
    %6539 = vmatprep.subr.bf16.mxu0 %v6310
    %6540 = vmatpush2.bf16.msra.mxu0 %v6309
    %6541 = vmatprep.subr.bf16.mxu0 %v6306
    %6542 = vmatpush2.bf16.msra.mxu0 %v6305
    %6543 = vmatprep.subr.bf16.mxu0 %v6302
    %6544 = vmatpush2.bf16.msra.mxu0 %v6301
    %6545 = vmatprep.subr.bf16.mxu0 %v6298
    %6546 = vmatpush2.bf16.msra.mxu0 %v6297
    %6547 = vmatprep.subr.bf16.mxu0 %v6294
    %6548 = vmatpush2.bf16.msra.mxu0 %v6293
    %6549 = vmatprep.mubr.bf16.mxu0 %v5724
    %6550 = vmatmul.mubr.bf16.gmra.mxu0 %v5723
    %v6551 = vpop.f32.mrf.mxu0
    %v6552 = vadd.f32 %v5860, %v6551
    %v6553 = vpop.f32.mrf.mxu0
    %v6554 = vadd.f32 %v5864, %v6553
    %v6555 = vpop.f32.mrf.mxu0
    %v6556 = vadd.f32 %v5860, %v6555
    %v6557 = vpop.f32.mrf.mxu0
    %v6558 = vadd.f32 %v5864, %v6557
    %6559 = vdwg.mxu0
    %6560 = vmatprep.subr.bf16.mxu0 %v6354
    %6561 = vmatpush1.bf16.msra.mxu0 %v6353
    %6562 = vmatprep.subr.bf16.mxu0 %v6350
    %6563 = vmatpush1.bf16.msra.mxu0 %v6349
    %6564 = vmatprep.subr.bf16.mxu0 %v6346
    %6565 = vmatpush1.bf16.msra.mxu0 %v6345
    %6566 = vmatprep.subr.bf16.mxu0 %v6342
    %6567 = vmatpush1.bf16.msra.mxu0 %v6341
    %6568 = vmatprep.subr.bf16.mxu0 %v6338
    %6569 = vmatpush1.bf16.msra.mxu0 %v6337
    %6570 = vmatprep.subr.bf16.mxu0 %v6334
    %6571 = vmatpush1.bf16.msra.mxu0 %v6333
    %6572 = vmatprep.subr.bf16.mxu0 %v6330
    %6573 = vmatpush1.bf16.msra.mxu0 %v6329
    %6574 = vmatprep.subr.bf16.mxu0 %v6326
    %6575 = vmatpush1.bf16.msra.mxu0 %v6325
    %6576 = vmatprep.subr.bf16.mxu0 %v6386
    %6577 = vmatpush2.bf16.msra.mxu0 %v6385
    %6578 = vmatprep.subr.bf16.mxu0 %v6382
    %6579 = vmatpush2.bf16.msra.mxu0 %v6381
    %6580 = vmatprep.subr.bf16.mxu0 %v6378
    %6581 = vmatpush2.bf16.msra.mxu0 %v6377
    %6582 = vmatprep.subr.bf16.mxu0 %v6374
    %6583 = vmatpush2.bf16.msra.mxu0 %v6373
    %6584 = vmatprep.subr.bf16.mxu0 %v6370
    %6585 = vmatpush2.bf16.msra.mxu0 %v6369
    %6586 = vmatprep.subr.bf16.mxu0 %v6366
    %6587 = vmatpush2.bf16.msra.mxu0 %v6365
    %6588 = vmatprep.subr.bf16.mxu0 %v6362
    %6589 = vmatpush2.bf16.msra.mxu0 %v6361
    %6590 = vmatprep.subr.bf16.mxu0 %v6358
    %6591 = vmatpush2.bf16.msra.mxu0 %v6357
    %6592 = vmatprep.mubr.bf16.mxu0 %v5726
    %6593 = vmatmul.mubr.bf16.gmra.mxu0 %v5725
    %v6594 = vpop.f32.mrf.mxu0
    %v6595 = vadd.f32 %v6552, %v6594
    %v6596 = vpop.f32.mrf.mxu0
    %v6597 = vadd.f32 %v6554, %v6596
    %v6598 = vpop.f32.mrf.mxu0
    %v6599 = vadd.f32 %v6556, %v6598
    %v6600 = vpop.f32.mrf.mxu0
    %v6601 = vadd.f32 %v6558, %v6600
    %6602 = vdwg.mxu0
    %6603 = vmatprep.subr.bf16.mxu0 %v6292
    %6604 = vmatpush1.bf16.msra.mxu0 %v6291
    %6605 = vmatprep.subr.bf16.mxu0 %v6288
    %6606 = vmatpush1.bf16.msra.mxu0 %v6287
    %6607 = vmatprep.subr.bf16.mxu0 %v6284
    %6608 = vmatpush1.bf16.msra.mxu0 %v6283
    %6609 = vmatprep.subr.bf16.mxu0 %v6280
    %6610 = vmatpush1.bf16.msra.mxu0 %v6279
    %6611 = vmatprep.subr.bf16.mxu0 %v6276
    %6612 = vmatpush1.bf16.msra.mxu0 %v6275
    %6613 = vmatprep.subr.bf16.mxu0 %v6272
    %6614 = vmatpush1.bf16.msra.mxu0 %v6271
    %6615 = vmatprep.subr.bf16.mxu0 %v6268
    %6616 = vmatpush1.bf16.msra.mxu0 %v6267
    %6617 = vmatprep.subr.bf16.mxu0 %v6264
    %6618 = vmatpush1.bf16.msra.mxu0 %v6263
    %6619 = vmatprep.subr.bf16.mxu0 %v6324
    %6620 = vmatpush2.bf16.msra.mxu0 %v6323
    %6621 = vmatprep.subr.bf16.mxu0 %v6320
    %6622 = vmatpush2.bf16.msra.mxu0 %v6319
    %6623 = vmatprep.subr.bf16.mxu0 %v6316
    %6624 = vmatpush2.bf16.msra.mxu0 %v6315
    %6625 = vmatprep.subr.bf16.mxu0 %v6312
    %6626 = vmatpush2.bf16.msra.mxu0 %v6311
    %6627 = vmatprep.subr.bf16.mxu0 %v6308
    %6628 = vmatpush2.bf16.msra.mxu0 %v6307
    %6629 = vmatprep.subr.bf16.mxu0 %v6304
    %6630 = vmatpush2.bf16.msra.mxu0 %v6303
    %6631 = vmatprep.subr.bf16.mxu0 %v6300
    %6632 = vmatpush2.bf16.msra.mxu0 %v6299
    %6633 = vmatprep.subr.bf16.mxu0 %v6296
    %6634 = vmatpush2.bf16.msra.mxu0 %v6295
    %6635 = vmatprep.mubr.bf16.mxu0 %v5724
    %6636 = vmatmul.mubr.bf16.gmra.mxu0 %v5723
    %v6637 = vpop.f32.mrf.mxu0
    %v6638 = vadd.f32 %v5868, %v6637
    %v6639 = vpop.f32.mrf.mxu0
    %v6640 = vadd.f32 %v5872, %v6639
    %v6641 = vpop.f32.mrf.mxu0
    %v6642 = vadd.f32 %v5868, %v6641
    %v6643 = vpop.f32.mrf.mxu0
    %v6644 = vadd.f32 %v5872, %v6643
    %6645 = vdwg.mxu0
    %6646 = vmatprep.subr.bf16.mxu0 %v6356
    %6647 = vmatpush1.bf16.msra.mxu0 %v6355
    %6648 = vmatprep.subr.bf16.mxu0 %v6352
    %6649 = vmatpush1.bf16.msra.mxu0 %v6351
    %6650 = vmatprep.subr.bf16.mxu0 %v6348
    %6651 = vmatpush1.bf16.msra.mxu0 %v6347
    %6652 = vmatprep.subr.bf16.mxu0 %v6344
    %6653 = vmatpush1.bf16.msra.mxu0 %v6343
    %6654 = vmatprep.subr.bf16.mxu0 %v6340
    %6655 = vmatpush1.bf16.msra.mxu0 %v6339
    %6656 = vmatprep.subr.bf16.mxu0 %v6336
    %6657 = vmatpush1.bf16.msra.mxu0 %v6335
    %6658 = vmatprep.subr.bf16.mxu0 %v6332
    %6659 = vmatpush1.bf16.msra.mxu0 %v6331
    %6660 = vmatprep.subr.bf16.mxu0 %v6328
    %6661 = vmatpush1.bf16.msra.mxu0 %v6327
    %6662 = vmatprep.subr.bf16.mxu0 %v6388
    %6663 = vmatpush2.bf16.msra.mxu0 %v6387
    %6664 = vmatprep.subr.bf16.mxu0 %v6384
    %6665 = vmatpush2.bf16.msra.mxu0 %v6383
    %6666 = vmatprep.subr.bf16.mxu0 %v6380
    %6667 = vmatpush2.bf16.msra.mxu0 %v6379
    %6668 = vmatprep.subr.bf16.mxu0 %v6376
    %6669 = vmatpush2.bf16.msra.mxu0 %v6375
    %6670 = vmatprep.subr.bf16.mxu0 %v6372
    %6671 = vmatpush2.bf16.msra.mxu0 %v6371
    %6672 = vmatprep.subr.bf16.mxu0 %v6368
    %6673 = vmatpush2.bf16.msra.mxu0 %v6367
    %6674 = vmatprep.subr.bf16.mxu0 %v6364
    %6675 = vmatpush2.bf16.msra.mxu0 %v6363
    %6676 = vmatprep.subr.bf16.mxu0 %v6360
    %6677 = vmatpush2.bf16.msra.mxu0 %v6359
    %6678 = vmatprep.mubr.bf16.mxu0 %v5726
    %6679 = vmatmul.mubr.bf16.gmra.mxu0 %v5725
    %v6680 = vpop.f32.mrf.mxu0
    %v6681 = vadd.f32 %v6638, %v6680
    %v6682 = vpop.f32.mrf.mxu0
    %v6683 = vadd.f32 %v6640, %v6682
    %v6684 = vpop.f32.mrf.mxu0
    %v6685 = vadd.f32 %v6642, %v6684
    %v6686 = vpop.f32.mrf.mxu0
    %v6687 = vadd.f32 %v6644, %v6686
    %6688 = vdwg.mxu0
    %v6689 = vmul.f32 %v6595, 0.5
    %v6690 = vmul.f32 %v6597, 0.5
    %v6691 = vmul.f32 %v6681, 0.5
    %v6692 = vmul.f32 %v6683, 0.5
    %v6693 = vmul.f32 %v6599, 0.5
    %v6694 = vmul.f32 %v6601, 0.5
    %v6695 = vmul.f32 %v6685, 0.5
    %v6696 = vmul.f32 %v6687, 0.5
    %v6697 = vmul.f32 %v6595, 0.044715
    %v6698 = vmul.f32 %v6597, 0.044715
    %v6699 = vmul.f32 %v6681, 0.044715
    %v6700 = vmul.f32 %v6683, 0.044715
    %v6701 = vmul.f32 %v6599, 0.044715
    %v6702 = vmul.f32 %v6601, 0.044715
    %v6703 = vmul.f32 %v6685, 0.044715
    %v6704 = vmul.f32 %v6687, 0.044715
    %v6705 = vmul.f32 %v6697, %v6595
    %v6706 = vmul.f32 %v6698, %v6597
    %v6707 = vmul.f32 %v6699, %v6681
    %v6708 = vmul.f32 %v6700, %v6683
    %v6709 = vmul.f32 %v6701, %v6599
    %v6710 = vmul.f32 %v6702, %v6601
    %v6711 = vmul.f32 %v6703, %v6685
    %v6712 = vmul.f32 %v6704, %v6687
    %v6713 = vmul.f32 %v6705, %v6595
    %v6714 = vmul.f32 %v6706, %v6597
    %v6715 = vmul.f32 %v6707, %v6681
    %v6716 = vmul.f32 %v6708, %v6683
    %v6717 = vmul.f32 %v6709, %v6599
    %v6718 = vmul.f32 %v6710, %v6601
    %v6719 = vmul.f32 %v6711, %v6685
    %v6720 = vmul.f32 %v6712, %v6687
    %v6721 = vadd.f32 %v6595, %v6713
    %v6722 = vadd.f32 %v6597, %v6714
    %v6723 = vadd.f32 %v6681, %v6715
    %v6724 = vadd.f32 %v6683, %v6716
    %v6725 = vadd.f32 %v6599, %v6717
    %v6726 = vadd.f32 %v6601, %v6718
    %v6727 = vadd.f32 %v6685, %v6719
    %v6728 = vadd.f32 %v6687, %v6720
    %v6729 = vmul.f32 %v6721, 0.7978846
    %v6730 = vmul.f32 %v6722, 0.7978846
    %v6731 = vmul.f32 %v6723, 0.7978846
    %v6732 = vmul.f32 %v6724, 0.7978846
    %v6733 = vmul.f32 %v6725, 0.7978846
    %v6734 = vmul.f32 %v6726, 0.7978846
    %v6735 = vmul.f32 %v6727, 0.7978846
    %v6736 = vmul.f32 %v6728, 0.7978846
    %v6737 = vtanh.pop %v6729
    %v6738 = vtanh.pop %v6730
    %v6739 = vtanh.pop %v6731
    %v6740 = vtanh.pop %v6732
    %v6741 = vtanh.pop %v6733
    %v6742 = vtanh.pop %v6734
    %v6743 = vtanh.pop %v6735
    %v6744 = vtanh.pop %v6736
    %v6745 = vadd.f32 %v6737, 1.0
    %v6746 = vadd.f32 %v6738, 1.0
    %v6747 = vadd.f32 %v6739, 1.0
    %v6748 = vadd.f32 %v6740, 1.0
    %v6749 = vadd.f32 %v6741, 1.0
    %v6750 = vadd.f32 %v6742, 1.0
    %v6751 = vadd.f32 %v6743, 1.0
    %v6752 = vadd.f32 %v6744, 1.0
    %v6753 = vmul.f32 %v6689, %v6745
    %v6754 = vmul.f32 %v6690, %v6746
    %v6755 = vmul.f32 %v6691, %v6747
    %v6756 = vmul.f32 %v6692, %v6748
    %v6757 = vmul.f32 %v6693, %v6749
    %v6758 = vmul.f32 %v6694, %v6750
    %v6759 = vmul.f32 %v6695, %v6751
    %v6760 = vmul.f32 %v6696, %v6752
    %v6761 = vpack.c.bf16 %v6757, %v6753
    %v6762 = vpack.c.bf16 %v6758, %v6754
    %v6763 = vpack.c.bf16 %v6759, %v6755
    %v6764 = vpack.c.bf16 %v6760, %v6756
    %v6765 = vld [vmem:[#allocation22] sm:$0xff]
    %v6766 = vld [vmem:[#allocation22 + $0x8] sm:$0xff]
    %v6767 = vld [vmem:[#allocation22 + $0x10] sm:$0xff]
    %v6768 = vld [vmem:[#allocation22 + $0x18] sm:$0xff]
    %v6769 = vld [vmem:[#allocation22 + $0x20] sm:$0xff]
    %v6770 = vld [vmem:[#allocation22 + $0x28] sm:$0xff]
    %v6771 = vld [vmem:[#allocation22 + $0x30] sm:$0xff]
    %v6772 = vld [vmem:[#allocation22 + $0x38] sm:$0xff]
    %v6773 = vld [vmem:[#allocation22 + $0x40] sm:$0xff]
    %v6774 = vld [vmem:[#allocation22 + $0x48] sm:$0xff]
    %v6775 = vld [vmem:[#allocation22 + $0x50] sm:$0xff]
    %v6776 = vld [vmem:[#allocation22 + $0x58] sm:$0xff]
    %v6777 = vld [vmem:[#allocation22 + $0x60] sm:$0xff]
    %v6778 = vld [vmem:[#allocation22 + $0x68] sm:$0xff]
    %v6779 = vld [vmem:[#allocation22 + $0x70] sm:$0xff]
    %v6780 = vld [vmem:[#allocation22 + $0x78] sm:$0xff]
    %v6781 = vld [vmem:[#allocation22 + $0x80] sm:$0xff]
    %v6782 = vld [vmem:[#allocation22 + $0x88] sm:$0xff]
    %v6783 = vld [vmem:[#allocation22 + $0x90] sm:$0xff]
    %v6784 = vld [vmem:[#allocation22 + $0x98] sm:$0xff]
    %v6785 = vld [vmem:[#allocation22 + $0xa0] sm:$0xff]
    %v6786 = vld [vmem:[#allocation22 + $0xa8] sm:$0xff]
    %v6787 = vld [vmem:[#allocation22 + $0xb0] sm:$0xff]
    %v6788 = vld [vmem:[#allocation22 + $0xb8] sm:$0xff]
    %v6789 = vld [vmem:[#allocation22 + $0xc0] sm:$0xff]
    %v6790 = vld [vmem:[#allocation22 + $0xc8] sm:$0xff]
    %v6791 = vld [vmem:[#allocation22 + $0xd0] sm:$0xff]
    %v6792 = vld [vmem:[#allocation22 + $0xd8] sm:$0xff]
    %v6793 = vld [vmem:[#allocation22 + $0xe0] sm:$0xff]
    %v6794 = vld [vmem:[#allocation22 + $0xe8] sm:$0xff]
    %v6795 = vld [vmem:[#allocation22 + $0xf0] sm:$0xff]
    %v6796 = vld [vmem:[#allocation22 + $0xf8] sm:$0xff]
    %v6797 = vld [vmem:[#allocation22 + $0x100] sm:$0xff]
    %v6798 = vld [vmem:[#allocation22 + $0x108] sm:$0xff]
    %v6799 = vld [vmem:[#allocation22 + $0x110] sm:$0xff]
    %v6800 = vld [vmem:[#allocation22 + $0x118] sm:$0xff]
    %v6801 = vld [vmem:[#allocation22 + $0x120] sm:$0xff]
    %v6802 = vld [vmem:[#allocation22 + $0x128] sm:$0xff]
    %v6803 = vld [vmem:[#allocation22 + $0x130] sm:$0xff]
    %v6804 = vld [vmem:[#allocation22 + $0x138] sm:$0xff]
    %v6805 = vld [vmem:[#allocation22 + $0x140] sm:$0xff]
    %v6806 = vld [vmem:[#allocation22 + $0x148] sm:$0xff]
    %v6807 = vld [vmem:[#allocation22 + $0x150] sm:$0xff]
    %v6808 = vld [vmem:[#allocation22 + $0x158] sm:$0xff]
    %v6809 = vld [vmem:[#allocation22 + $0x160] sm:$0xff]
    %v6810 = vld [vmem:[#allocation22 + $0x168] sm:$0xff]
    %v6811 = vld [vmem:[#allocation22 + $0x170] sm:$0xff]
    %v6812 = vld [vmem:[#allocation22 + $0x178] sm:$0xff]
    %v6813 = vld [vmem:[#allocation22 + $0x180] sm:$0xff]
    %v6814 = vld [vmem:[#allocation22 + $0x188] sm:$0xff]
    %v6815 = vld [vmem:[#allocation22 + $0x190] sm:$0xff]
    %v6816 = vld [vmem:[#allocation22 + $0x198] sm:$0xff]
    %v6817 = vld [vmem:[#allocation22 + $0x1a0] sm:$0xff]
    %v6818 = vld [vmem:[#allocation22 + $0x1a8] sm:$0xff]
    %v6819 = vld [vmem:[#allocation22 + $0x1b0] sm:$0xff]
    %v6820 = vld [vmem:[#allocation22 + $0x1b8] sm:$0xff]
    %v6821 = vld [vmem:[#allocation22 + $0x1c0] sm:$0xff]
    %v6822 = vld [vmem:[#allocation22 + $0x1c8] sm:$0xff]
    %v6823 = vld [vmem:[#allocation22 + $0x1d0] sm:$0xff]
    %v6824 = vld [vmem:[#allocation22 + $0x1d8] sm:$0xff]
    %v6825 = vld [vmem:[#allocation22 + $0x1e0] sm:$0xff]
    %v6826 = vld [vmem:[#allocation22 + $0x1e8] sm:$0xff]
    %v6827 = vld [vmem:[#allocation22 + $0x1f0] sm:$0xff]
    %v6828 = vld [vmem:[#allocation22 + $0x1f8] sm:$0xff]
    %v6829 = vld [vmem:[#allocation22 + $0x200] sm:$0xff]
    %v6830 = vld [vmem:[#allocation22 + $0x208] sm:$0xff]
    %v6831 = vld [vmem:[#allocation22 + $0x210] sm:$0xff]
    %v6832 = vld [vmem:[#allocation22 + $0x218] sm:$0xff]
    %v6833 = vld [vmem:[#allocation22 + $0x220] sm:$0xff]
    %v6834 = vld [vmem:[#allocation22 + $0x228] sm:$0xff]
    %v6835 = vld [vmem:[#allocation22 + $0x230] sm:$0xff]
    %v6836 = vld [vmem:[#allocation22 + $0x238] sm:$0xff]
    %v6837 = vld [vmem:[#allocation22 + $0x240] sm:$0xff]
    %v6838 = vld [vmem:[#allocation22 + $0x248] sm:$0xff]
    %v6839 = vld [vmem:[#allocation22 + $0x250] sm:$0xff]
    %v6840 = vld [vmem:[#allocation22 + $0x258] sm:$0xff]
    %v6841 = vld [vmem:[#allocation22 + $0x260] sm:$0xff]
    %v6842 = vld [vmem:[#allocation22 + $0x268] sm:$0xff]
    %v6843 = vld [vmem:[#allocation22 + $0x270] sm:$0xff]
    %v6844 = vld [vmem:[#allocation22 + $0x278] sm:$0xff]
    %v6845 = vld [vmem:[#allocation22 + $0x280] sm:$0xff]
    %v6846 = vld [vmem:[#allocation22 + $0x288] sm:$0xff]
    %v6847 = vld [vmem:[#allocation22 + $0x290] sm:$0xff]
    %v6848 = vld [vmem:[#allocation22 + $0x298] sm:$0xff]
    %v6849 = vld [vmem:[#allocation22 + $0x2a0] sm:$0xff]
    %v6850 = vld [vmem:[#allocation22 + $0x2a8] sm:$0xff]
    %v6851 = vld [vmem:[#allocation22 + $0x2b0] sm:$0xff]
    %v6852 = vld [vmem:[#allocation22 + $0x2b8] sm:$0xff]
    %v6853 = vld [vmem:[#allocation22 + $0x2c0] sm:$0xff]
    %v6854 = vld [vmem:[#allocation22 + $0x2c8] sm:$0xff]
    %v6855 = vld [vmem:[#allocation22 + $0x2d0] sm:$0xff]
    %v6856 = vld [vmem:[#allocation22 + $0x2d8] sm:$0xff]
    %v6857 = vld [vmem:[#allocation22 + $0x2e0] sm:$0xff]
    %v6858 = vld [vmem:[#allocation22 + $0x2e8] sm:$0xff]
    %v6859 = vld [vmem:[#allocation22 + $0x2f0] sm:$0xff]
    %v6860 = vld [vmem:[#allocation22 + $0x2f8] sm:$0xff]
    %v6861 = vld [vmem:[#allocation22 + $0x300] sm:$0xff]
    %v6862 = vld [vmem:[#allocation22 + $0x308] sm:$0xff]
    %v6863 = vld [vmem:[#allocation22 + $0x310] sm:$0xff]
    %v6864 = vld [vmem:[#allocation22 + $0x318] sm:$0xff]
    %v6865 = vld [vmem:[#allocation22 + $0x320] sm:$0xff]
    %v6866 = vld [vmem:[#allocation22 + $0x328] sm:$0xff]
    %v6867 = vld [vmem:[#allocation22 + $0x330] sm:$0xff]
    %v6868 = vld [vmem:[#allocation22 + $0x338] sm:$0xff]
    %v6869 = vld [vmem:[#allocation22 + $0x340] sm:$0xff]
    %v6870 = vld [vmem:[#allocation22 + $0x348] sm:$0xff]
    %v6871 = vld [vmem:[#allocation22 + $0x350] sm:$0xff]
    %v6872 = vld [vmem:[#allocation22 + $0x358] sm:$0xff]
    %v6873 = vld [vmem:[#allocation22 + $0x360] sm:$0xff]
    %v6874 = vld [vmem:[#allocation22 + $0x368] sm:$0xff]
    %v6875 = vld [vmem:[#allocation22 + $0x370] sm:$0xff]
    %v6876 = vld [vmem:[#allocation22 + $0x378] sm:$0xff]
    %v6877 = vld [vmem:[#allocation22 + $0x380] sm:$0xff]
    %v6878 = vld [vmem:[#allocation22 + $0x388] sm:$0xff]
    %v6879 = vld [vmem:[#allocation22 + $0x390] sm:$0xff]
    %v6880 = vld [vmem:[#allocation22 + $0x398] sm:$0xff]
    %v6881 = vld [vmem:[#allocation22 + $0x3a0] sm:$0xff]
    %v6882 = vld [vmem:[#allocation22 + $0x3a8] sm:$0xff]
    %v6883 = vld [vmem:[#allocation22 + $0x3b0] sm:$0xff]
    %v6884 = vld [vmem:[#allocation22 + $0x3b8] sm:$0xff]
    %v6885 = vld [vmem:[#allocation22 + $0x3c0] sm:$0xff]
    %v6886 = vld [vmem:[#allocation22 + $0x3c8] sm:$0xff]
    %v6887 = vld [vmem:[#allocation22 + $0x3d0] sm:$0xff]
    %v6888 = vld [vmem:[#allocation22 + $0x3d8] sm:$0xff]
    %v6889 = vld [vmem:[#allocation22 + $0x3e0] sm:$0xff]
    %v6890 = vld [vmem:[#allocation22 + $0x3e8] sm:$0xff]
    %v6891 = vld [vmem:[#allocation22 + $0x3f0] sm:$0xff]
    %v6892 = vld [vmem:[#allocation22 + $0x3f8] sm:$0xff]
    %v7021 = vunpack.c.l.b16 %v6765
    %v7022 = vunpack.c.h.b16 %v6765
    %v7023 = vunpack.c.l.b16 %v6766
    %v7024 = vunpack.c.h.b16 %v6766
    %v7025 = vunpack.c.l.b16 %v6767
    %v7026 = vunpack.c.h.b16 %v6767
    %v7027 = vunpack.c.l.b16 %v6768
    %v7028 = vunpack.c.h.b16 %v6768
    %v7029 = vunpack.c.l.b16 %v6769
    %v7030 = vunpack.c.h.b16 %v6769
    %v7031 = vunpack.c.l.b16 %v6770
    %v7032 = vunpack.c.h.b16 %v6770
    %v7033 = vunpack.c.l.b16 %v6771
    %v7034 = vunpack.c.h.b16 %v6771
    %v7035 = vunpack.c.l.b16 %v6772
    %v7036 = vunpack.c.h.b16 %v6772
    %v7037 = vunpack.c.l.b16 %v6773
    %v7038 = vunpack.c.h.b16 %v6773
    %v7039 = vunpack.c.l.b16 %v6774
    %v7040 = vunpack.c.h.b16 %v6774
    %v7041 = vunpack.c.l.b16 %v6775
    %v7042 = vunpack.c.h.b16 %v6775
    %v7043 = vunpack.c.l.b16 %v6776
    %v7044 = vunpack.c.h.b16 %v6776
    %v7045 = vunpack.c.l.b16 %v6777
    %v7046 = vunpack.c.h.b16 %v6777
    %v7047 = vunpack.c.l.b16 %v6778
    %v7048 = vunpack.c.h.b16 %v6778
    %v7049 = vunpack.c.l.b16 %v6779
    %v7050 = vunpack.c.h.b16 %v6779
    %v7051 = vunpack.c.l.b16 %v6780
    %v7052 = vunpack.c.h.b16 %v6780
    %v7053 = vunpack.c.l.b16 %v6781
    %v7054 = vunpack.c.h.b16 %v6781
    %v7055 = vunpack.c.l.b16 %v6782
    %v7056 = vunpack.c.h.b16 %v6782
    %v7057 = vunpack.c.l.b16 %v6783
    %v7058 = vunpack.c.h.b16 %v6783
    %v7059 = vunpack.c.l.b16 %v6784
    %v7060 = vunpack.c.h.b16 %v6784
    %v7061 = vunpack.c.l.b16 %v6785
    %v7062 = vunpack.c.h.b16 %v6785
    %v7063 = vunpack.c.l.b16 %v6786
    %v7064 = vunpack.c.h.b16 %v6786
    %v7065 = vunpack.c.l.b16 %v6787
    %v7066 = vunpack.c.h.b16 %v6787
    %v7067 = vunpack.c.l.b16 %v6788
    %v7068 = vunpack.c.h.b16 %v6788
    %v7069 = vunpack.c.l.b16 %v6789
    %v7070 = vunpack.c.h.b16 %v6789
    %v7071 = vunpack.c.l.b16 %v6790
    %v7072 = vunpack.c.h.b16 %v6790
    %v7073 = vunpack.c.l.b16 %v6791
    %v7074 = vunpack.c.h.b16 %v6791
    %v7075 = vunpack.c.l.b16 %v6792
    %v7076 = vunpack.c.h.b16 %v6792
    %v7077 = vunpack.c.l.b16 %v6793
    %v7078 = vunpack.c.h.b16 %v6793
    %v7079 = vunpack.c.l.b16 %v6794
    %v7080 = vunpack.c.h.b16 %v6794
    %v7081 = vunpack.c.l.b16 %v6795
    %v7082 = vunpack.c.h.b16 %v6795
    %v7083 = vunpack.c.l.b16 %v6796
    %v7084 = vunpack.c.h.b16 %v6796
    %v7085 = vunpack.c.l.b16 %v6797
    %v7086 = vunpack.c.h.b16 %v6797
    %v7087 = vunpack.c.l.b16 %v6798
    %v7088 = vunpack.c.h.b16 %v6798
    %v7089 = vunpack.c.l.b16 %v6799
    %v7090 = vunpack.c.h.b16 %v6799
    %v7091 = vunpack.c.l.b16 %v6800
    %v7092 = vunpack.c.h.b16 %v6800
    %v7093 = vunpack.c.l.b16 %v6801
    %v7094 = vunpack.c.h.b16 %v6801
    %v7095 = vunpack.c.l.b16 %v6802
    %v7096 = vunpack.c.h.b16 %v6802
    %v7097 = vunpack.c.l.b16 %v6803
    %v7098 = vunpack.c.h.b16 %v6803
    %v7099 = vunpack.c.l.b16 %v6804
    %v7100 = vunpack.c.h.b16 %v6804
    %v7101 = vunpack.c.l.b16 %v6805
    %v7102 = vunpack.c.h.b16 %v6805
    %v7103 = vunpack.c.l.b16 %v6806
    %v7104 = vunpack.c.h.b16 %v6806
    %v7105 = vunpack.c.l.b16 %v6807
    %v7106 = vunpack.c.h.b16 %v6807
    %v7107 = vunpack.c.l.b16 %v6808
    %v7108 = vunpack.c.h.b16 %v6808
    %v7109 = vunpack.c.l.b16 %v6809
    %v7110 = vunpack.c.h.b16 %v6809
    %v7111 = vunpack.c.l.b16 %v6810
    %v7112 = vunpack.c.h.b16 %v6810
    %v7113 = vunpack.c.l.b16 %v6811
    %v7114 = vunpack.c.h.b16 %v6811
    %v7115 = vunpack.c.l.b16 %v6812
    %v7116 = vunpack.c.h.b16 %v6812
    %v7117 = vunpack.c.l.b16 %v6813
    %v7118 = vunpack.c.h.b16 %v6813
    %v7119 = vunpack.c.l.b16 %v6814
    %v7120 = vunpack.c.h.b16 %v6814
    %v7121 = vunpack.c.l.b16 %v6815
    %v7122 = vunpack.c.h.b16 %v6815
    %v7123 = vunpack.c.l.b16 %v6816
    %v7124 = vunpack.c.h.b16 %v6816
    %v7125 = vunpack.c.l.b16 %v6817
    %v7126 = vunpack.c.h.b16 %v6817
    %v7127 = vunpack.c.l.b16 %v6818
    %v7128 = vunpack.c.h.b16 %v6818
    %v7129 = vunpack.c.l.b16 %v6819
    %v7130 = vunpack.c.h.b16 %v6819
    %v7131 = vunpack.c.l.b16 %v6820
    %v7132 = vunpack.c.h.b16 %v6820
    %v7133 = vunpack.c.l.b16 %v6821
    %v7134 = vunpack.c.h.b16 %v6821
    %v7135 = vunpack.c.l.b16 %v6822
    %v7136 = vunpack.c.h.b16 %v6822
    %v7137 = vunpack.c.l.b16 %v6823
    %v7138 = vunpack.c.h.b16 %v6823
    %v7139 = vunpack.c.l.b16 %v6824
    %v7140 = vunpack.c.h.b16 %v6824
    %v7141 = vunpack.c.l.b16 %v6825
    %v7142 = vunpack.c.h.b16 %v6825
    %v7143 = vunpack.c.l.b16 %v6826
    %v7144 = vunpack.c.h.b16 %v6826
    %v7145 = vunpack.c.l.b16 %v6827
    %v7146 = vunpack.c.h.b16 %v6827
    %v7147 = vunpack.c.l.b16 %v6828
    %v7148 = vunpack.c.h.b16 %v6828
    %v7149 = vunpack.c.l.b16 %v6829
    %v7150 = vunpack.c.h.b16 %v6829
    %v7151 = vunpack.c.l.b16 %v6830
    %v7152 = vunpack.c.h.b16 %v6830
    %v7153 = vunpack.c.l.b16 %v6831
    %v7154 = vunpack.c.h.b16 %v6831
    %v7155 = vunpack.c.l.b16 %v6832
    %v7156 = vunpack.c.h.b16 %v6832
    %v7157 = vunpack.c.l.b16 %v6833
    %v7158 = vunpack.c.h.b16 %v6833
    %v7159 = vunpack.c.l.b16 %v6834
    %v7160 = vunpack.c.h.b16 %v6834
    %v7161 = vunpack.c.l.b16 %v6835
    %v7162 = vunpack.c.h.b16 %v6835
    %v7163 = vunpack.c.l.b16 %v6836
    %v7164 = vunpack.c.h.b16 %v6836
    %v7165 = vunpack.c.l.b16 %v6837
    %v7166 = vunpack.c.h.b16 %v6837
    %v7167 = vunpack.c.l.b16 %v6838
    %v7168 = vunpack.c.h.b16 %v6838
    %v7169 = vunpack.c.l.b16 %v6839
    %v7170 = vunpack.c.h.b16 %v6839
    %v7171 = vunpack.c.l.b16 %v6840
    %v7172 = vunpack.c.h.b16 %v6840
    %v7173 = vunpack.c.l.b16 %v6841
    %v7174 = vunpack.c.h.b16 %v6841
    %v7175 = vunpack.c.l.b16 %v6842
    %v7176 = vunpack.c.h.b16 %v6842
    %v7177 = vunpack.c.l.b16 %v6843
    %v7178 = vunpack.c.h.b16 %v6843
    %v7179 = vunpack.c.l.b16 %v6844
    %v7180 = vunpack.c.h.b16 %v6844
    %v7181 = vunpack.c.l.b16 %v6845
    %v7182 = vunpack.c.h.b16 %v6845
    %v7183 = vunpack.c.l.b16 %v6846
    %v7184 = vunpack.c.h.b16 %v6846
    %v7185 = vunpack.c.l.b16 %v6847
    %v7186 = vunpack.c.h.b16 %v6847
    %v7187 = vunpack.c.l.b16 %v6848
    %v7188 = vunpack.c.h.b16 %v6848
    %v7189 = vunpack.c.l.b16 %v6849
    %v7190 = vunpack.c.h.b16 %v6849
    %v7191 = vunpack.c.l.b16 %v6850
    %v7192 = vunpack.c.h.b16 %v6850
    %v7193 = vunpack.c.l.b16 %v6851
    %v7194 = vunpack.c.h.b16 %v6851
    %v7195 = vunpack.c.l.b16 %v6852
    %v7196 = vunpack.c.h.b16 %v6852
    %v7197 = vunpack.c.l.b16 %v6853
    %v7198 = vunpack.c.h.b16 %v6853
    %v7199 = vunpack.c.l.b16 %v6854
    %v7200 = vunpack.c.h.b16 %v6854
    %v7201 = vunpack.c.l.b16 %v6855
    %v7202 = vunpack.c.h.b16 %v6855
    %v7203 = vunpack.c.l.b16 %v6856
    %v7204 = vunpack.c.h.b16 %v6856
    %v7205 = vunpack.c.l.b16 %v6857
    %v7206 = vunpack.c.h.b16 %v6857
    %v7207 = vunpack.c.l.b16 %v6858
    %v7208 = vunpack.c.h.b16 %v6858
    %v7209 = vunpack.c.l.b16 %v6859
    %v7210 = vunpack.c.h.b16 %v6859
    %v7211 = vunpack.c.l.b16 %v6860
    %v7212 = vunpack.c.h.b16 %v6860
    %v7213 = vunpack.c.l.b16 %v6861
    %v7214 = vunpack.c.h.b16 %v6861
    %v7215 = vunpack.c.l.b16 %v6862
    %v7216 = vunpack.c.h.b16 %v6862
    %v7217 = vunpack.c.l.b16 %v6863
    %v7218 = vunpack.c.h.b16 %v6863
    %v7219 = vunpack.c.l.b16 %v6864
    %v7220 = vunpack.c.h.b16 %v6864
    %v7221 = vunpack.c.l.b16 %v6865
    %v7222 = vunpack.c.h.b16 %v6865
    %v7223 = vunpack.c.l.b16 %v6866
    %v7224 = vunpack.c.h.b16 %v6866
    %v7225 = vunpack.c.l.b16 %v6867
    %v7226 = vunpack.c.h.b16 %v6867
    %v7227 = vunpack.c.l.b16 %v6868
    %v7228 = vunpack.c.h.b16 %v6868
    %v7229 = vunpack.c.l.b16 %v6869
    %v7230 = vunpack.c.h.b16 %v6869
    %v7231 = vunpack.c.l.b16 %v6870
    %v7232 = vunpack.c.h.b16 %v6870
    %v7233 = vunpack.c.l.b16 %v6871
    %v7234 = vunpack.c.h.b16 %v6871
    %v7235 = vunpack.c.l.b16 %v6872
    %v7236 = vunpack.c.h.b16 %v6872
    %v7237 = vunpack.c.l.b16 %v6873
    %v7238 = vunpack.c.h.b16 %v6873
    %v7239 = vunpack.c.l.b16 %v6874
    %v7240 = vunpack.c.h.b16 %v6874
    %v7241 = vunpack.c.l.b16 %v6875
    %v7242 = vunpack.c.h.b16 %v6875
    %v7243 = vunpack.c.l.b16 %v6876
    %v7244 = vunpack.c.h.b16 %v6876
    %v7245 = vunpack.c.l.b16 %v6877
    %v7246 = vunpack.c.h.b16 %v6877
    %v7247 = vunpack.c.l.b16 %v6878
    %v7248 = vunpack.c.h.b16 %v6878
    %v7249 = vunpack.c.l.b16 %v6879
    %v7250 = vunpack.c.h.b16 %v6879
    %v7251 = vunpack.c.l.b16 %v6880
    %v7252 = vunpack.c.h.b16 %v6880
    %v7253 = vunpack.c.l.b16 %v6881
    %v7254 = vunpack.c.h.b16 %v6881
    %v7255 = vunpack.c.l.b16 %v6882
    %v7256 = vunpack.c.h.b16 %v6882
    %v7257 = vunpack.c.l.b16 %v6883
    %v7258 = vunpack.c.h.b16 %v6883
    %v7259 = vunpack.c.l.b16 %v6884
    %v7260 = vunpack.c.h.b16 %v6884
    %v7261 = vunpack.c.l.b16 %v6885
    %v7262 = vunpack.c.h.b16 %v6885
    %v7263 = vunpack.c.l.b16 %v6886
    %v7264 = vunpack.c.h.b16 %v6886
    %v7265 = vunpack.c.l.b16 %v6887
    %v7266 = vunpack.c.h.b16 %v6887
    %v7267 = vunpack.c.l.b16 %v6888
    %v7268 = vunpack.c.h.b16 %v6888
    %v7269 = vunpack.c.l.b16 %v6889
    %v7270 = vunpack.c.h.b16 %v6889
    %v7271 = vunpack.c.l.b16 %v6890
    %v7272 = vunpack.c.h.b16 %v6890
    %v7273 = vunpack.c.l.b16 %v6891
    %v7274 = vunpack.c.h.b16 %v6891
    %v7275 = vunpack.c.l.b16 %v6892
    %v7276 = vunpack.c.h.b16 %v6892
    %v7277 = vpack.c.b16 %v7025, %v7021
    %v7278 = vpack.c.b16 %v7026, %v7022
    %v7279 = vpack.c.b16 %v7027, %v7023
    %v7280 = vpack.c.b16 %v7028, %v7024
    %v7281 = vpack.c.b16 %v7033, %v7029
    %v7282 = vpack.c.b16 %v7034, %v7030
    %v7283 = vpack.c.b16 %v7035, %v7031
    %v7284 = vpack.c.b16 %v7036, %v7032
    %v7285 = vpack.c.b16 %v7041, %v7037
    %v7286 = vpack.c.b16 %v7042, %v7038
    %v7287 = vpack.c.b16 %v7043, %v7039
    %v7288 = vpack.c.b16 %v7044, %v7040
    %v7289 = vpack.c.b16 %v7049, %v7045
    %v7290 = vpack.c.b16 %v7050, %v7046
    %v7291 = vpack.c.b16 %v7051, %v7047
    %v7292 = vpack.c.b16 %v7052, %v7048
    %v7293 = vpack.c.b16 %v7057, %v7053
    %v7294 = vpack.c.b16 %v7058, %v7054
    %v7295 = vpack.c.b16 %v7059, %v7055
    %v7296 = vpack.c.b16 %v7060, %v7056
    %v7297 = vpack.c.b16 %v7065, %v7061
    %v7298 = vpack.c.b16 %v7066, %v7062
    %v7299 = vpack.c.b16 %v7067, %v7063
    %v7300 = vpack.c.b16 %v7068, %v7064
    %v7301 = vpack.c.b16 %v7073, %v7069
    %v7302 = vpack.c.b16 %v7074, %v7070
    %v7303 = vpack.c.b16 %v7075, %v7071
    %v7304 = vpack.c.b16 %v7076, %v7072
    %v7305 = vpack.c.b16 %v7081, %v7077
    %v7306 = vpack.c.b16 %v7082, %v7078
    %v7307 = vpack.c.b16 %v7083, %v7079
    %v7308 = vpack.c.b16 %v7084, %v7080
    %v7309 = vpack.c.b16 %v7089, %v7085
    %v7310 = vpack.c.b16 %v7090, %v7086
    %v7311 = vpack.c.b16 %v7091, %v7087
    %v7312 = vpack.c.b16 %v7092, %v7088
    %v7313 = vpack.c.b16 %v7097, %v7093
    %v7314 = vpack.c.b16 %v7098, %v7094
    %v7315 = vpack.c.b16 %v7099, %v7095
    %v7316 = vpack.c.b16 %v7100, %v7096
    %v7317 = vpack.c.b16 %v7105, %v7101
    %v7318 = vpack.c.b16 %v7106, %v7102
    %v7319 = vpack.c.b16 %v7107, %v7103
    %v7320 = vpack.c.b16 %v7108, %v7104
    %v7321 = vpack.c.b16 %v7113, %v7109
    %v7322 = vpack.c.b16 %v7114, %v7110
    %v7323 = vpack.c.b16 %v7115, %v7111
    %v7324 = vpack.c.b16 %v7116, %v7112
    %v7325 = vpack.c.b16 %v7121, %v7117
    %v7326 = vpack.c.b16 %v7122, %v7118
    %v7327 = vpack.c.b16 %v7123, %v7119
    %v7328 = vpack.c.b16 %v7124, %v7120
    %v7329 = vpack.c.b16 %v7129, %v7125
    %v7330 = vpack.c.b16 %v7130, %v7126
    %v7331 = vpack.c.b16 %v7131, %v7127
    %v7332 = vpack.c.b16 %v7132, %v7128
    %v7333 = vpack.c.b16 %v7137, %v7133
    %v7334 = vpack.c.b16 %v7138, %v7134
    %v7335 = vpack.c.b16 %v7139, %v7135
    %v7336 = vpack.c.b16 %v7140, %v7136
    %v7337 = vpack.c.b16 %v7145, %v7141
    %v7338 = vpack.c.b16 %v7146, %v7142
    %v7339 = vpack.c.b16 %v7147, %v7143
    %v7340 = vpack.c.b16 %v7148, %v7144
    %v7341 = vpack.c.b16 %v7153, %v7149
    %v7342 = vpack.c.b16 %v7154, %v7150
    %v7343 = vpack.c.b16 %v7155, %v7151
    %v7344 = vpack.c.b16 %v7156, %v7152
    %v7345 = vpack.c.b16 %v7161, %v7157
    %v7346 = vpack.c.b16 %v7162, %v7158
    %v7347 = vpack.c.b16 %v7163, %v7159
    %v7348 = vpack.c.b16 %v7164, %v7160
    %v7349 = vpack.c.b16 %v7169, %v7165
    %v7350 = vpack.c.b16 %v7170, %v7166
    %v7351 = vpack.c.b16 %v7171, %v7167
    %v7352 = vpack.c.b16 %v7172, %v7168
    %v7353 = vpack.c.b16 %v7177, %v7173
    %v7354 = vpack.c.b16 %v7178, %v7174
    %v7355 = vpack.c.b16 %v7179, %v7175
    %v7356 = vpack.c.b16 %v7180, %v7176
    %v7357 = vpack.c.b16 %v7185, %v7181
    %v7358 = vpack.c.b16 %v7186, %v7182
    %v7359 = vpack.c.b16 %v7187, %v7183
    %v7360 = vpack.c.b16 %v7188, %v7184
    %v7361 = vpack.c.b16 %v7193, %v7189
    %v7362 = vpack.c.b16 %v7194, %v7190
    %v7363 = vpack.c.b16 %v7195, %v7191
    %v7364 = vpack.c.b16 %v7196, %v7192
    %v7365 = vpack.c.b16 %v7201, %v7197
    %v7366 = vpack.c.b16 %v7202, %v7198
    %v7367 = vpack.c.b16 %v7203, %v7199
    %v7368 = vpack.c.b16 %v7204, %v7200
    %v7369 = vpack.c.b16 %v7209, %v7205
    %v7370 = vpack.c.b16 %v7210, %v7206
    %v7371 = vpack.c.b16 %v7211, %v7207
    %v7372 = vpack.c.b16 %v7212, %v7208
    %v7373 = vpack.c.b16 %v7217, %v7213
    %v7374 = vpack.c.b16 %v7218, %v7214
    %v7375 = vpack.c.b16 %v7219, %v7215
    %v7376 = vpack.c.b16 %v7220, %v7216
    %v7377 = vpack.c.b16 %v7225, %v7221
    %v7378 = vpack.c.b16 %v7226, %v7222
    %v7379 = vpack.c.b16 %v7227, %v7223
    %v7380 = vpack.c.b16 %v7228, %v7224
    %v7381 = vpack.c.b16 %v7233, %v7229
    %v7382 = vpack.c.b16 %v7234, %v7230
    %v7383 = vpack.c.b16 %v7235, %v7231
    %v7384 = vpack.c.b16 %v7236, %v7232
    %v7385 = vpack.c.b16 %v7241, %v7237
    %v7386 = vpack.c.b16 %v7242, %v7238
    %v7387 = vpack.c.b16 %v7243, %v7239
    %v7388 = vpack.c.b16 %v7244, %v7240
    %v7389 = vpack.c.b16 %v7249, %v7245
    %v7390 = vpack.c.b16 %v7250, %v7246
    %v7391 = vpack.c.b16 %v7251, %v7247
    %v7392 = vpack.c.b16 %v7252, %v7248
    %v7393 = vpack.c.b16 %v7257, %v7253
    %v7394 = vpack.c.b16 %v7258, %v7254
    %v7395 = vpack.c.b16 %v7259, %v7255
    %v7396 = vpack.c.b16 %v7260, %v7256
    %v7397 = vpack.c.b16 %v7265, %v7261
    %v7398 = vpack.c.b16 %v7266, %v7262
    %v7399 = vpack.c.b16 %v7267, %v7263
    %v7400 = vpack.c.b16 %v7268, %v7264
    %v7401 = vpack.c.b16 %v7273, %v7269
    %v7402 = vpack.c.b16 %v7274, %v7270
    %v7403 = vpack.c.b16 %v7275, %v7271
    %v7404 = vpack.c.b16 %v7276, %v7272
    %7533 = vmatprep.subr.bf16.mxu0 %v7306
    %7534 = vmatpush1.bf16.msra.mxu0 %v7305
    %7535 = vmatprep.subr.bf16.mxu0 %v7302
    %7536 = vmatpush1.bf16.msra.mxu0 %v7301
    %7537 = vmatprep.subr.bf16.mxu0 %v7298
    %7538 = vmatpush1.bf16.msra.mxu0 %v7297
    %7539 = vmatprep.subr.bf16.mxu0 %v7294
    %7540 = vmatpush1.bf16.msra.mxu0 %v7293
    %7541 = vmatprep.subr.bf16.mxu0 %v7290
    %7542 = vmatpush1.bf16.msra.mxu0 %v7289
    %7543 = vmatprep.subr.bf16.mxu0 %v7286
    %7544 = vmatpush1.bf16.msra.mxu0 %v7285
    %7545 = vmatprep.subr.bf16.mxu0 %v7282
    %7546 = vmatpush1.bf16.msra.mxu0 %v7281
    %7547 = vmatprep.subr.bf16.mxu0 %v7278
    %7548 = vmatpush1.bf16.msra.mxu0 %v7277
    %7549 = vmatprep.subr.bf16.mxu0 %v7338
    %7550 = vmatpush2.bf16.msra.mxu0 %v7337
    %7551 = vmatprep.subr.bf16.mxu0 %v7334
    %7552 = vmatpush2.bf16.msra.mxu0 %v7333
    %7553 = vmatprep.subr.bf16.mxu0 %v7330
    %7554 = vmatpush2.bf16.msra.mxu0 %v7329
    %7555 = vmatprep.subr.bf16.mxu0 %v7326
    %7556 = vmatpush2.bf16.msra.mxu0 %v7325
    %7557 = vmatprep.subr.bf16.mxu0 %v7322
    %7558 = vmatpush2.bf16.msra.mxu0 %v7321
    %7559 = vmatprep.subr.bf16.mxu0 %v7318
    %7560 = vmatpush2.bf16.msra.mxu0 %v7317
    %7561 = vmatprep.subr.bf16.mxu0 %v7314
    %7562 = vmatpush2.bf16.msra.mxu0 %v7313
    %7563 = vmatprep.subr.bf16.mxu0 %v7310
    %7564 = vmatpush2.bf16.msra.mxu0 %v7309
    %7565 = vmatprep.mubr.bf16.mxu0 %v6762
    %7566 = vmatmul.mubr.bf16.gmra.mxu0 %v6761
    %v7567 = vpop.f32.mrf.mxu0
    %v7568 = vadd.f32 0.0, %v7567
    %v7569 = vpop.f32.mrf.mxu0
    %v7570 = vadd.f32 0.0, %v7569
    %v7571 = vpop.f32.mrf.mxu0
    %v7572 = vadd.f32 0.0, %v7571
    %v7573 = vpop.f32.mrf.mxu0
    %v7574 = vadd.f32 0.0, %v7573
    %7575 = vdwg.mxu0
    %7576 = vmatprep.subr.bf16.mxu0 %v7370
    %7577 = vmatpush1.bf16.msra.mxu0 %v7369
    %7578 = vmatprep.subr.bf16.mxu0 %v7366
    %7579 = vmatpush1.bf16.msra.mxu0 %v7365
    %7580 = vmatprep.subr.bf16.mxu0 %v7362
    %7581 = vmatpush1.bf16.msra.mxu0 %v7361
    %7582 = vmatprep.subr.bf16.mxu0 %v7358
    %7583 = vmatpush1.bf16.msra.mxu0 %v7357
    %7584 = vmatprep.subr.bf16.mxu0 %v7354
    %7585 = vmatpush1.bf16.msra.mxu0 %v7353
    %7586 = vmatprep.subr.bf16.mxu0 %v7350
    %7587 = vmatpush1.bf16.msra.mxu0 %v7349
    %7588 = vmatprep.subr.bf16.mxu0 %v7346
    %7589 = vmatpush1.bf16.msra.mxu0 %v7345
    %7590 = vmatprep.subr.bf16.mxu0 %v7342
    %7591 = vmatpush1.bf16.msra.mxu0 %v7341
    %7592 = vmatprep.subr.bf16.mxu0 %v7402
    %7593 = vmatpush2.bf16.msra.mxu0 %v7401
    %7594 = vmatprep.subr.bf16.mxu0 %v7398
    %7595 = vmatpush2.bf16.msra.mxu0 %v7397
    %7596 = vmatprep.subr.bf16.mxu0 %v7394
    %7597 = vmatpush2.bf16.msra.mxu0 %v7393
    %7598 = vmatprep.subr.bf16.mxu0 %v7390
    %7599 = vmatpush2.bf16.msra.mxu0 %v7389
    %7600 = vmatprep.subr.bf16.mxu0 %v7386
    %7601 = vmatpush2.bf16.msra.mxu0 %v7385
    %7602 = vmatprep.subr.bf16.mxu0 %v7382
    %7603 = vmatpush2.bf16.msra.mxu0 %v7381
    %7604 = vmatprep.subr.bf16.mxu0 %v7378
    %7605 = vmatpush2.bf16.msra.mxu0 %v7377
    %7606 = vmatprep.subr.bf16.mxu0 %v7374
    %7607 = vmatpush2.bf16.msra.mxu0 %v7373
    %7608 = vmatprep.mubr.bf16.mxu0 %v6764
    %7609 = vmatmul.mubr.bf16.gmra.mxu0 %v6763
    %v7610 = vpop.f32.mrf.mxu0
    %v7611 = vadd.f32 %v7568, %v7610
    %v7612 = vpop.f32.mrf.mxu0
    %v7613 = vadd.f32 %v7570, %v7612
    %v7614 = vpop.f32.mrf.mxu0
    %v7615 = vadd.f32 %v7572, %v7614
    %v7616 = vpop.f32.mrf.mxu0
    %v7617 = vadd.f32 %v7574, %v7616
    %7618 = vdwg.mxu0
    %7619 = vmatprep.subr.bf16.mxu0 %v7308
    %7620 = vmatpush1.bf16.msra.mxu0 %v7307
    %7621 = vmatprep.subr.bf16.mxu0 %v7304
    %7622 = vmatpush1.bf16.msra.mxu0 %v7303
    %7623 = vmatprep.subr.bf16.mxu0 %v7300
    %7624 = vmatpush1.bf16.msra.mxu0 %v7299
    %7625 = vmatprep.subr.bf16.mxu0 %v7296
    %7626 = vmatpush1.bf16.msra.mxu0 %v7295
    %7627 = vmatprep.subr.bf16.mxu0 %v7292
    %7628 = vmatpush1.bf16.msra.mxu0 %v7291
    %7629 = vmatprep.subr.bf16.mxu0 %v7288
    %7630 = vmatpush1.bf16.msra.mxu0 %v7287
    %7631 = vmatprep.subr.bf16.mxu0 %v7284
    %7632 = vmatpush1.bf16.msra.mxu0 %v7283
    %7633 = vmatprep.subr.bf16.mxu0 %v7280
    %7634 = vmatpush1.bf16.msra.mxu0 %v7279
    %7635 = vmatprep.subr.bf16.mxu0 %v7340
    %7636 = vmatpush2.bf16.msra.mxu0 %v7339
    %7637 = vmatprep.subr.bf16.mxu0 %v7336
    %7638 = vmatpush2.bf16.msra.mxu0 %v7335
    %7639 = vmatprep.subr.bf16.mxu0 %v7332
    %7640 = vmatpush2.bf16.msra.mxu0 %v7331
    %7641 = vmatprep.subr.bf16.mxu0 %v7328
    %7642 = vmatpush2.bf16.msra.mxu0 %v7327
    %7643 = vmatprep.subr.bf16.mxu0 %v7324
    %7644 = vmatpush2.bf16.msra.mxu0 %v7323
    %7645 = vmatprep.subr.bf16.mxu0 %v7320
    %7646 = vmatpush2.bf16.msra.mxu0 %v7319
    %7647 = vmatprep.subr.bf16.mxu0 %v7316
    %7648 = vmatpush2.bf16.msra.mxu0 %v7315
    %7649 = vmatprep.subr.bf16.mxu0 %v7312
    %7650 = vmatpush2.bf16.msra.mxu0 %v7311
    %7651 = vmatprep.mubr.bf16.mxu0 %v6762
    %7652 = vmatmul.mubr.bf16.gmra.mxu0 %v6761
    %v7653 = vpop.f32.mrf.mxu0
    %v7654 = vadd.f32 0.0, %v7653
    %v7655 = vpop.f32.mrf.mxu0
    %v7656 = vadd.f32 0.0, %v7655
    %v7657 = vpop.f32.mrf.mxu0
    %v7658 = vadd.f32 0.0, %v7657
    %v7659 = vpop.f32.mrf.mxu0
    %v7660 = vadd.f32 0.0, %v7659
    %7661 = vdwg.mxu0
    %7662 = vmatprep.subr.bf16.mxu0 %v7372
    %7663 = vmatpush1.bf16.msra.mxu0 %v7371
    %7664 = vmatprep.subr.bf16.mxu0 %v7368
    %7665 = vmatpush1.bf16.msra.mxu0 %v7367
    %7666 = vmatprep.subr.bf16.mxu0 %v7364
    %7667 = vmatpush1.bf16.msra.mxu0 %v7363
    %7668 = vmatprep.subr.bf16.mxu0 %v7360
    %7669 = vmatpush1.bf16.msra.mxu0 %v7359
    %7670 = vmatprep.subr.bf16.mxu0 %v7356
    %7671 = vmatpush1.bf16.msra.mxu0 %v7355
    %7672 = vmatprep.subr.bf16.mxu0 %v7352
    %7673 = vmatpush1.bf16.msra.mxu0 %v7351
    %7674 = vmatprep.subr.bf16.mxu0 %v7348
    %7675 = vmatpush1.bf16.msra.mxu0 %v7347
    %7676 = vmatprep.subr.bf16.mxu0 %v7344
    %7677 = vmatpush1.bf16.msra.mxu0 %v7343
    %7678 = vmatprep.subr.bf16.mxu0 %v7404
    %7679 = vmatpush2.bf16.msra.mxu0 %v7403
    %7680 = vmatprep.subr.bf16.mxu0 %v7400
    %7681 = vmatpush2.bf16.msra.mxu0 %v7399
    %7682 = vmatprep.subr.bf16.mxu0 %v7396
    %7683 = vmatpush2.bf16.msra.mxu0 %v7395
    %7684 = vmatprep.subr.bf16.mxu0 %v7392
    %7685 = vmatpush2.bf16.msra.mxu0 %v7391
    %7686 = vmatprep.subr.bf16.mxu0 %v7388
    %7687 = vmatpush2.bf16.msra.mxu0 %v7387
    %7688 = vmatprep.subr.bf16.mxu0 %v7384
    %7689 = vmatpush2.bf16.msra.mxu0 %v7383
    %7690 = vmatprep.subr.bf16.mxu0 %v7380
    %7691 = vmatpush2.bf16.msra.mxu0 %v7379
    %7692 = vmatprep.subr.bf16.mxu0 %v7376
    %7693 = vmatpush2.bf16.msra.mxu0 %v7375
    %7694 = vmatprep.mubr.bf16.mxu0 %v6764
    %7695 = vmatmul.mubr.bf16.gmra.mxu0 %v6763
    %v7696 = vpop.f32.mrf.mxu0
    %v7697 = vadd.f32 %v7654, %v7696
    %v7698 = vpop.f32.mrf.mxu0
    %v7699 = vadd.f32 %v7656, %v7698
    %v7700 = vpop.f32.mrf.mxu0
    %v7701 = vadd.f32 %v7658, %v7700
    %v7702 = vpop.f32.mrf.mxu0
    %v7703 = vadd.f32 %v7660, %v7702
    %7704 = vdwg.mxu0
    %v7705 = vadd.f32 %v5603, %v7611
    %v7706 = vadd.f32 %v5604, %v7613
    %v7707 = vadd.f32 %v5605, %v7697
    %v7708 = vadd.f32 %v5606, %v7699
    %v7709 = vadd.f32 %v5607, %v7615
    %v7710 = vadd.f32 %v5608, %v7617
    %v7711 = vadd.f32 %v5609, %v7701
    %v7712 = vadd.f32 %v5610, %v7703
    %v7713 = vld [vmem:[#allocation23] sm:$0xf]
    %v7715 = vlaneseq
    %v7716 = vshrl.u32 %v7715, 7
    %v7717 = vsub.s32 0, %v7716
    %v7718 = vrot.slane %v7713, %v7717
    %v7719 = vlaneseq
    %v7720 = vshrl.u32 %v7719, 7
    %v7721 = vsub.s32 1, %v7720
    %v7722 = vrot.slane %v7713, %v7721
    %v7723 = vlaneseq
    %v7724 = vshrl.u32 %v7723, 7
    %v7725 = vsub.s32 2, %v7724
    %v7726 = vrot.slane %v7713, %v7725
    %v7727 = vlaneseq
    %v7728 = vshrl.u32 %v7727, 7
    %v7729 = vsub.s32 3, %v7728
    %v7730 = vrot.slane %v7713, %v7729
    %v7735 = vadd.f32 %v7705, %v7718
    %v7736 = vadd.f32 %v7706, %v7722
    %v7737 = vadd.f32 %v7707, %v7726
    %v7738 = vadd.f32 %v7708, %v7730
    %v7739 = vadd.f32 %v7709, %v7718
    %v7740 = vadd.f32 %v7710, %v7722
    %v7741 = vadd.f32 %v7711, %v7726
    %v7742 = vadd.f32 %v7712, %v7730
    %v7743 = vld [vmem:[#allocation25] sm:$0xf]
    %v7744 = vld [vmem:[#allocation26] sm:$0xf]
    %v7745 = vadd.f32 %v7735, %v7736
    %v7746 = vadd.f32 %v7745, %v7737
    %v7747 = vadd.f32 %v7746, %v7738
    %7748 = vadd.xlane.f32.xlu0 %v7747
    %v7749 = vpop.xlane.xlu0 %7748
    %v7750 = vadd.f32 %v7739, %v7740
    %v7751 = vadd.f32 %v7750, %v7741
    %v7752 = vadd.f32 %v7751, %v7742
    %7753 = vadd.xlane.f32.xlu0 %v7752
    %v7754 = vpop.xlane.xlu0 %7753
    %v7755 = vmul.f32 %v7749, %v428
    %v7756 = vmul.f32 %v7754, %v428
    %v7757 = vsub.f32 %v7735, %v7755
    %v7758 = vsub.f32 %v7736, %v7755
    %v7759 = vsub.f32 %v7737, %v7755
    %v7760 = vsub.f32 %v7738, %v7755
    %v7761 = vsub.f32 %v7739, %v7756
    %v7762 = vsub.f32 %v7740, %v7756
    %v7763 = vsub.f32 %v7741, %v7756
    %v7764 = vsub.f32 %v7742, %v7756
    %v7765 = vmul.f32 %v7757, %v7757
    %v7766 = vmul.f32 %v7758, %v7758
    %v7767 = vmul.f32 %v7759, %v7759
    %v7768 = vmul.f32 %v7760, %v7760
    %v7769 = vmul.f32 %v7761, %v7761
    %v7770 = vmul.f32 %v7762, %v7762
    %v7771 = vmul.f32 %v7763, %v7763
    %v7772 = vmul.f32 %v7764, %v7764
    %v7773 = vadd.f32 %v7765, %v7766
    %v7774 = vadd.f32 %v7773, %v7767
    %v7775 = vadd.f32 %v7774, %v7768
    %7776 = vadd.xlane.f32.xlu0 %v7775
    %v7777 = vpop.xlane.xlu0 %7776
    %v7778 = vadd.f32 %v7769, %v7770
    %v7779 = vadd.f32 %v7778, %v7771
    %v7780 = vadd.f32 %v7779, %v7772
    %7781 = vadd.xlane.f32.xlu0 %v7780
    %v7782 = vpop.xlane.xlu0 %7781
    %v7783 = vmul.f32 %v7777, %v428
    %v7784 = vmul.f32 %v7782, %v428
    %v7785 = vadd.f32 %v7783, 1e-05
    %v7786 = vadd.f32 %v7784, 1e-05
    %v7787 = vrsqrt.pop %v7785
    %v7788 = vrsqrt.pop %v7786
    %v7789 = vmul.f32 %v7757, %v7787
    %v7790 = vmul.f32 %v7758, %v7787
    %v7791 = vmul.f32 %v7759, %v7787
    %v7792 = vmul.f32 %v7760, %v7787
    %v7793 = vmul.f32 %v7761, %v7788
    %v7794 = vmul.f32 %v7762, %v7788
    %v7795 = vmul.f32 %v7763, %v7788
    %v7796 = vmul.f32 %v7764, %v7788
    %v7798 = vlaneseq
    %v7799 = vshrl.u32 %v7798, 7
    %v7800 = vsub.s32 0, %v7799
    %v7801 = vrot.slane %v7743, %v7800
    %v7802 = vlaneseq
    %v7803 = vshrl.u32 %v7802, 7
    %v7804 = vsub.s32 1, %v7803
    %v7805 = vrot.slane %v7743, %v7804
    %v7806 = vlaneseq
    %v7807 = vshrl.u32 %v7806, 7
    %v7808 = vsub.s32 2, %v7807
    %v7809 = vrot.slane %v7743, %v7808
    %v7810 = vlaneseq
    %v7811 = vshrl.u32 %v7810, 7
    %v7812 = vsub.s32 3, %v7811
    %v7813 = vrot.slane %v7743, %v7812
    %v7818 = vmul.f32 %v7789, %v7801
    %v7819 = vmul.f32 %v7790, %v7805
    %v7820 = vmul.f32 %v7791, %v7809
    %v7821 = vmul.f32 %v7792, %v7813
    %v7822 = vmul.f32 %v7793, %v7801
    %v7823 = vmul.f32 %v7794, %v7805
    %v7824 = vmul.f32 %v7795, %v7809
    %v7825 = vmul.f32 %v7796, %v7813
    %v7827 = vlaneseq
    %v7828 = vshrl.u32 %v7827, 7
    %v7829 = vsub.s32 0, %v7828
    %v7830 = vrot.slane %v7744, %v7829
    %v7831 = vlaneseq
    %v7832 = vshrl.u32 %v7831, 7
    %v7833 = vsub.s32 1, %v7832
    %v7834 = vrot.slane %v7744, %v7833
    %v7835 = vlaneseq
    %v7836 = vshrl.u32 %v7835, 7
    %v7837 = vsub.s32 2, %v7836
    %v7838 = vrot.slane %v7744, %v7837
    %v7839 = vlaneseq
    %v7840 = vshrl.u32 %v7839, 7
    %v7841 = vsub.s32 3, %v7840
    %v7842 = vrot.slane %v7744, %v7841
    %v7847 = vadd.f32 %v7818, %v7830
    %v7848 = vadd.f32 %v7819, %v7834
    %v7849 = vadd.f32 %v7820, %v7838
    %v7850 = vadd.f32 %v7821, %v7842
    %v7851 = vadd.f32 %v7822, %v7830
    %v7852 = vadd.f32 %v7823, %v7834
    %v7853 = vadd.f32 %v7824, %v7838
    %v7854 = vadd.f32 %v7825, %v7842
    %v7859 = vrot.slane %v7847, 1
    %v7860 = vrot.slane %v7848, 1
    %v7861 = vrot.slane %v7849, 1
    %v7862 = vrot.slane %v7850, 1
    %vm7867 = vcmask 1040384
    %v7868 = vsel %vm7867, %v7859, %v7851
    %v7869 = vsel %vm7867, %v7860, %v7852
    %v7870 = vsel %vm7867, %v7861, %v7853
    %v7871 = vsel %vm7867, %v7862, %v7854
    %v7872 = vpack.c.bf16 %v7868, %v7868
    %v7873 = vpack.c.bf16 %v7869, %v7869
    %v7874 = vpack.c.bf16 %v7870, %v7870
    %v7875 = vpack.c.bf16 %v7871, %v7871
    %v7876 = vld [vmem:[%s41] sm:$0xf]
    %v7877 = vld [vmem:[%s41 + $0x4] sm:$0xf]
    %v7878 = vld [vmem:[%s41 + $0x8] sm:$0xf]
    %v7879 = vld [vmem:[%s41 + $0xc] sm:$0xf]
    %v7880 = vld [vmem:[%s41 + $0x10] sm:$0xf]
    %v7881 = vld [vmem:[%s41 + $0x14] sm:$0xf]
    %v7882 = vld [vmem:[%s41 + $0x18] sm:$0xf]
    %v7883 = vld [vmem:[%s41 + $0x1c] sm:$0xf]
    %v7884 = vld [vmem:[%s41 + $0x20] sm:$0xf]
    %v7885 = vld [vmem:[%s41 + $0x24] sm:$0xf]
    %v7886 = vld [vmem:[%s41 + $0x28] sm:$0xf]
    %v7887 = vld [vmem:[%s41 + $0x2c] sm:$0xf]
    %v7888 = vld [vmem:[%s41 + $0x30] sm:$0xf]
    %v7889 = vld [vmem:[%s41 + $0x34] sm:$0xf]
    %v7890 = vld [vmem:[%s41 + $0x38] sm:$0xf]
    %v7891 = vld [vmem:[%s41 + $0x3c] sm:$0xf]
    %v7892 = vld [vmem:[%s41 + $0x40] sm:$0xf]
    %v7893 = vld [vmem:[%s41 + $0x44] sm:$0xf]
    %v7894 = vld [vmem:[%s41 + $0x48] sm:$0xf]
    %v7895 = vld [vmem:[%s41 + $0x4c] sm:$0xf]
    %v7896 = vld [vmem:[%s41 + $0x50] sm:$0xf]
    %v7897 = vld [vmem:[%s41 + $0x54] sm:$0xf]
    %v7898 = vld [vmem:[%s41 + $0x58] sm:$0xf]
    %v7899 = vld [vmem:[%s41 + $0x5c] sm:$0xf]
    %v7900 = vld [vmem:[%s41 + $0x60] sm:$0xf]
    %v7901 = vld [vmem:[%s41 + $0x64] sm:$0xf]
    %v7902 = vld [vmem:[%s41 + $0x68] sm:$0xf]
    %v7903 = vld [vmem:[%s41 + $0x6c] sm:$0xf]
    %v7904 = vld [vmem:[%s41 + $0x70] sm:$0xf]
    %v7905 = vld [vmem:[%s41 + $0x74] sm:$0xf]
    %v7906 = vld [vmem:[%s41 + $0x78] sm:$0xf]
    %v7907 = vld [vmem:[%s41 + $0x7c] sm:$0xf]
    %v7908 = vld [vmem:[%s41 + $0x80] sm:$0xf]
    %v7909 = vld [vmem:[%s41 + $0x84] sm:$0xf]
    %v7910 = vld [vmem:[%s41 + $0x88] sm:$0xf]
    %v7911 = vld [vmem:[%s41 + $0x8c] sm:$0xf]
    %v7912 = vld [vmem:[%s41 + $0x90] sm:$0xf]
    %v7913 = vld [vmem:[%s41 + $0x94] sm:$0xf]
    %v7914 = vld [vmem:[%s41 + $0x98] sm:$0xf]
    %v7915 = vld [vmem:[%s41 + $0x9c] sm:$0xf]
    %v7916 = vld [vmem:[%s41 + $0xa0] sm:$0xf]
    %v7917 = vld [vmem:[%s41 + $0xa4] sm:$0xf]
    %v7918 = vld [vmem:[%s41 + $0xa8] sm:$0xf]
    %v7919 = vld [vmem:[%s41 + $0xac] sm:$0xf]
    %v7920 = vld [vmem:[%s41 + $0xb0] sm:$0xf]
    %v7921 = vld [vmem:[%s41 + $0xb4] sm:$0xf]
    %v7922 = vld [vmem:[%s41 + $0xb8] sm:$0xf]
    %v7923 = vld [vmem:[%s41 + $0xbc] sm:$0xf]
    %v7924 = vld [vmem:[%s41 + $0xc0] sm:$0xf]
    %v7925 = vld [vmem:[%s41 + $0xc4] sm:$0xf]
    %v7926 = vld [vmem:[%s41 + $0xc8] sm:$0xf]
    %v7927 = vld [vmem:[%s41 + $0xcc] sm:$0xf]
    %v7928 = vld [vmem:[%s41 + $0xd0] sm:$0xf]
    %v7929 = vld [vmem:[%s41 + $0xd4] sm:$0xf]
    %v7930 = vld [vmem:[%s41 + $0xd8] sm:$0xf]
    %v7931 = vld [vmem:[%s41 + $0xdc] sm:$0xf]
    %v7932 = vld [vmem:[%s41 + $0xe0] sm:$0xf]
    %v7933 = vld [vmem:[%s41 + $0xe4] sm:$0xf]
    %v7934 = vld [vmem:[%s41 + $0xe8] sm:$0xf]
    %v7935 = vld [vmem:[%s41 + $0xec] sm:$0xf]
    %v7936 = vld [vmem:[%s41 + $0xf0] sm:$0xf]
    %v7937 = vld [vmem:[%s41 + $0xf4] sm:$0xf]
    %v7938 = vld [vmem:[%s41 + $0xf8] sm:$0xf]
    %v7939 = vld [vmem:[%s41 + $0xfc] sm:$0xf]
    %v7940 = vld [vmem:[#allocation28] sm:$0x1]
    %v7942 = vlaneseq
    %v7943 = vshrl.u32 %v7942, 7
    %v7944 = vsub.s32 0, %v7943
    %v7945 = vrot.slane %v7940, %v7944
    %v8011 = vunpack.c.l.b16 %v7876
    %v8012 = vunpack.c.l.b16 %v7877
    %v8013 = vunpack.c.l.b16 %v7878
    %v8014 = vunpack.c.l.b16 %v7879
    %v8015 = vunpack.c.l.b16 %v7880
    %v8016 = vunpack.c.l.b16 %v7881
    %v8017 = vunpack.c.l.b16 %v7882
    %v8018 = vunpack.c.l.b16 %v7883
    %v8019 = vunpack.c.l.b16 %v7884
    %v8020 = vunpack.c.l.b16 %v7885
    %v8021 = vunpack.c.l.b16 %v7886
    %v8022 = vunpack.c.l.b16 %v7887
    %v8023 = vunpack.c.l.b16 %v7888
    %v8024 = vunpack.c.l.b16 %v7889
    %v8025 = vunpack.c.l.b16 %v7890
    %v8026 = vunpack.c.l.b16 %v7891
    %v8027 = vunpack.c.l.b16 %v7892
    %v8028 = vunpack.c.l.b16 %v7893
    %v8029 = vunpack.c.l.b16 %v7894
    %v8030 = vunpack.c.l.b16 %v7895
    %v8031 = vunpack.c.l.b16 %v7896
    %v8032 = vunpack.c.l.b16 %v7897
    %v8033 = vunpack.c.l.b16 %v7898
    %v8034 = vunpack.c.l.b16 %v7899
    %v8035 = vunpack.c.l.b16 %v7900
    %v8036 = vunpack.c.l.b16 %v7901
    %v8037 = vunpack.c.l.b16 %v7902
    %v8038 = vunpack.c.l.b16 %v7903
    %v8039 = vunpack.c.l.b16 %v7904
    %v8040 = vunpack.c.l.b16 %v7905
    %v8041 = vunpack.c.l.b16 %v7906
    %v8042 = vunpack.c.l.b16 %v7907
    %v8043 = vunpack.c.l.b16 %v7908
    %v8044 = vunpack.c.l.b16 %v7909
    %v8045 = vunpack.c.l.b16 %v7910
    %v8046 = vunpack.c.l.b16 %v7911
    %v8047 = vunpack.c.l.b16 %v7912
    %v8048 = vunpack.c.l.b16 %v7913
    %v8049 = vunpack.c.l.b16 %v7914
    %v8050 = vunpack.c.l.b16 %v7915
    %v8051 = vunpack.c.l.b16 %v7916
    %v8052 = vunpack.c.l.b16 %v7917
    %v8053 = vunpack.c.l.b16 %v7918
    %v8054 = vunpack.c.l.b16 %v7919
    %v8055 = vunpack.c.l.b16 %v7920
    %v8056 = vunpack.c.l.b16 %v7921
    %v8057 = vunpack.c.l.b16 %v7922
    %v8058 = vunpack.c.l.b16 %v7923
    %v8059 = vunpack.c.l.b16 %v7924
    %v8060 = vunpack.c.l.b16 %v7925
    %v8061 = vunpack.c.l.b16 %v7926
    %v8062 = vunpack.c.l.b16 %v7927
    %v8063 = vunpack.c.l.b16 %v7928
    %v8064 = vunpack.c.l.b16 %v7929
    %v8065 = vunpack.c.l.b16 %v7930
    %v8066 = vunpack.c.l.b16 %v7931
    %v8067 = vunpack.c.l.b16 %v7932
    %v8068 = vunpack.c.l.b16 %v7933
    %v8069 = vunpack.c.l.b16 %v7934
    %v8070 = vunpack.c.l.b16 %v7935
    %v8071 = vunpack.c.l.b16 %v7936
    %v8072 = vunpack.c.l.b16 %v7937
    %v8073 = vunpack.c.l.b16 %v7938
    %v8074 = vunpack.c.l.b16 %v7939
    %v8075 = vpack.c.b16 %v8012, %v8011
    %v8076 = vpack.c.b16 %v8014, %v8013
    %v8077 = vpack.c.b16 %v8016, %v8015
    %v8078 = vpack.c.b16 %v8018, %v8017
    %v8079 = vpack.c.b16 %v8020, %v8019
    %v8080 = vpack.c.b16 %v8022, %v8021
    %v8081 = vpack.c.b16 %v8024, %v8023
    %v8082 = vpack.c.b16 %v8026, %v8025
    %v8083 = vpack.c.b16 %v8028, %v8027
    %v8084 = vpack.c.b16 %v8030, %v8029
    %v8085 = vpack.c.b16 %v8032, %v8031
    %v8086 = vpack.c.b16 %v8034, %v8033
    %v8087 = vpack.c.b16 %v8036, %v8035
    %v8088 = vpack.c.b16 %v8038, %v8037
    %v8089 = vpack.c.b16 %v8040, %v8039
    %v8090 = vpack.c.b16 %v8042, %v8041
    %v8091 = vpack.c.b16 %v8044, %v8043
    %v8092 = vpack.c.b16 %v8046, %v8045
    %v8093 = vpack.c.b16 %v8048, %v8047
    %v8094 = vpack.c.b16 %v8050, %v8049
    %v8095 = vpack.c.b16 %v8052, %v8051
    %v8096 = vpack.c.b16 %v8054, %v8053
    %v8097 = vpack.c.b16 %v8056, %v8055
    %v8098 = vpack.c.b16 %v8058, %v8057
    %v8099 = vpack.c.b16 %v8060, %v8059
    %v8100 = vpack.c.b16 %v8062, %v8061
    %v8101 = vpack.c.b16 %v8064, %v8063
    %v8102 = vpack.c.b16 %v8066, %v8065
    %v8103 = vpack.c.b16 %v8068, %v8067
    %v8104 = vpack.c.b16 %v8070, %v8069
    %v8105 = vpack.c.b16 %v8072, %v8071
    %v8106 = vpack.c.b16 %v8074, %v8073
    %8139 = vmatprep.subr.bf16.mxu0 0
    %8140 = vmatpush1.bf16.msra.mxu0 %v8082
    %8141 = vmatprep.subr.bf16.mxu0 0
    %8142 = vmatpush1.bf16.msra.mxu0 %v8081
    %8143 = vmatprep.subr.bf16.mxu0 0
    %8144 = vmatpush1.bf16.msra.mxu0 %v8080
    %8145 = vmatprep.subr.bf16.mxu0 0
    %8146 = vmatpush1.bf16.msra.mxu0 %v8079
    %8147 = vmatprep.subr.bf16.mxu0 0
    %8148 = vmatpush1.bf16.msra.mxu0 %v8078
    %8149 = vmatprep.subr.bf16.mxu0 0
    %8150 = vmatpush1.bf16.msra.mxu0 %v8077
    %8151 = vmatprep.subr.bf16.mxu0 0
    %8152 = vmatpush1.bf16.msra.mxu0 %v8076
    %8153 = vmatprep.subr.bf16.mxu0 0
    %8154 = vmatpush1.bf16.msra.mxu0 %v8075
    %8155 = vmatprep.subr.bf16.mxu0 0
    %8156 = vmatpush2.bf16.msra.mxu0 %v8090
    %8157 = vmatprep.subr.bf16.mxu0 0
    %8158 = vmatpush2.bf16.msra.mxu0 %v8089
    %8159 = vmatprep.subr.bf16.mxu0 0
    %8160 = vmatpush2.bf16.msra.mxu0 %v8088
    %8161 = vmatprep.subr.bf16.mxu0 0
    %8162 = vmatpush2.bf16.msra.mxu0 %v8087
    %8163 = vmatprep.subr.bf16.mxu0 0
    %8164 = vmatpush2.bf16.msra.mxu0 %v8086
    %8165 = vmatprep.subr.bf16.mxu0 0
    %8166 = vmatpush2.bf16.msra.mxu0 %v8085
    %8167 = vmatprep.subr.bf16.mxu0 0
    %8168 = vmatpush2.bf16.msra.mxu0 %v8084
    %8169 = vmatprep.subr.bf16.mxu0 0
    %8170 = vmatpush2.bf16.msra.mxu0 %v8083
    %8171 = vmatprep.mubr.bf16.mxu0 %v7873
    %8172 = vmatmul.mubr.bf16.gmra.mxu0 %v7872
    %v8173 = vpop.f32.mrf.mxu0
    %v8174 = vadd.f32 %v7945, %v8173
    %v8175 = vpop.f32.mrf.mxu0
    %v8176 = vpop.f32.mrf.mxu0
    %v8177 = vpop.f32.mrf.mxu0
    %8178 = vdwg.mxu0
    %8179 = vmatprep.subr.bf16.mxu0 0
    %8180 = vmatpush1.bf16.msra.mxu0 %v8098
    %8181 = vmatprep.subr.bf16.mxu0 0
    %8182 = vmatpush1.bf16.msra.mxu0 %v8097
    %8183 = vmatprep.subr.bf16.mxu0 0
    %8184 = vmatpush1.bf16.msra.mxu0 %v8096
    %8185 = vmatprep.subr.bf16.mxu0 0
    %8186 = vmatpush1.bf16.msra.mxu0 %v8095
    %8187 = vmatprep.subr.bf16.mxu0 0
    %8188 = vmatpush1.bf16.msra.mxu0 %v8094
    %8189 = vmatprep.subr.bf16.mxu0 0
    %8190 = vmatpush1.bf16.msra.mxu0 %v8093
    %8191 = vmatprep.subr.bf16.mxu0 0
    %8192 = vmatpush1.bf16.msra.mxu0 %v8092
    %8193 = vmatprep.subr.bf16.mxu0 0
    %8194 = vmatpush1.bf16.msra.mxu0 %v8091
    %8195 = vmatprep.subr.bf16.mxu0 0
    %8196 = vmatpush2.bf16.msra.mxu0 %v8106
    %8197 = vmatprep.subr.bf16.mxu0 0
    %8198 = vmatpush2.bf16.msra.mxu0 %v8105
    %8199 = vmatprep.subr.bf16.mxu0 0
    %8200 = vmatpush2.bf16.msra.mxu0 %v8104
    %8201 = vmatprep.subr.bf16.mxu0 0
    %8202 = vmatpush2.bf16.msra.mxu0 %v8103
    %8203 = vmatprep.subr.bf16.mxu0 0
    %8204 = vmatpush2.bf16.msra.mxu0 %v8102
    %8205 = vmatprep.subr.bf16.mxu0 0
    %8206 = vmatpush2.bf16.msra.mxu0 %v8101
    %8207 = vmatprep.subr.bf16.mxu0 0
    %8208 = vmatpush2.bf16.msra.mxu0 %v8100
    %8209 = vmatprep.subr.bf16.mxu0 0
    %8210 = vmatpush2.bf16.msra.mxu0 %v8099
    %8211 = vmatprep.mubr.bf16.mxu0 %v7875
    %8212 = vmatmul.mubr.bf16.gmra.mxu0 %v7874
    %v8213 = vpop.f32.mrf.mxu0
    %v8214 = vadd.f32 %v8174, %v8213
    %v8215 = vpop.f32.mrf.mxu0
    %v8216 = vpop.f32.mrf.mxu0
    %v8217 = vpop.f32.mrf.mxu0
    %8218 = vdwg.mxu0
    %v8219 = vld [vmem:[#allocation5] sm:$0x3]
    %v8220 = vpack.c.bf16 %v8219, %v8219
    %v8221 = vld [vmem:[%s45] sm:$0xf]
    %v8222 = vld [vmem:[%s45 + $0x4] sm:$0xf]
    %v8223 = vld [vmem:[%s45 + $0x8] sm:$0xf]
    %v8224 = vld [vmem:[%s45 + $0xc] sm:$0xf]
    %v8225 = vld [vmem:[%s45 + $0x10] sm:$0xf]
    %v8226 = vld [vmem:[%s45 + $0x14] sm:$0xf]
    %v8227 = vld [vmem:[%s45 + $0x18] sm:$0xf]
    %v8228 = vld [vmem:[%s45 + $0x1c] sm:$0xf]
    %v8229 = vld [vmem:[#allocation29] sm:$0x1]
    %v8231 = vlaneseq
    %v8232 = vshrl.u32 %v8231, 7
    %v8233 = vsub.s32 0, %v8232
    %v8234 = vrot.slane %v8229, %v8233
    %v8244 = vunpack.c.l.b16 %v8221
    %v8245 = vunpack.c.l.b16 %v8222
    %v8246 = vunpack.c.l.b16 %v8223
    %v8247 = vunpack.c.l.b16 %v8224
    %v8248 = vunpack.c.l.b16 %v8225
    %v8249 = vunpack.c.l.b16 %v8226
    %v8250 = vunpack.c.l.b16 %v8227
    %v8251 = vunpack.c.l.b16 %v8228
    %v8252 = vpack.c.b16 %v8245, %v8244
    %v8253 = vpack.c.b16 %v8247, %v8246
    %v8254 = vpack.c.b16 %v8249, %v8248
    %v8255 = vpack.c.b16 %v8251, %v8250
    %v8261 = vsel %vm3626, %v8220, 0
    %8263 = vmatprep.subr.bf16.mxu0 0
    %8264 = vmatpush1.bf16.msra.mxu0 0
    %8265 = vmatprep.subr.bf16.mxu0 0
    %8266 = vmatpush1.bf16.msra.mxu0 0
    %8267 = vmatprep.subr.bf16.mxu0 0
    %8268 = vmatpush1.bf16.msra.mxu0 0
    %8269 = vmatprep.subr.bf16.mxu0 0
    %8270 = vmatpush1.bf16.msra.mxu0 0
    %8271 = vmatprep.subr.bf16.mxu0 0
    %8272 = vmatpush1.bf16.msra.mxu0 %v8255
    %8273 = vmatprep.subr.bf16.mxu0 0
    %8274 = vmatpush1.bf16.msra.mxu0 %v8254
    %8275 = vmatprep.subr.bf16.mxu0 0
    %8276 = vmatpush1.bf16.msra.mxu0 %v8253
    %8277 = vmatprep.subr.bf16.mxu0 0
    %8278 = vmatpush1.bf16.msra.mxu0 %v8252
    %8279 = vmatprep.subr.bf16.mxu0 0
    %8280 = vmatpush2.bf16.msra.mxu0 0
    %8281 = vmatprep.subr.bf16.mxu0 0
    %8282 = vmatpush2.bf16.msra.mxu0 0
    %8283 = vmatprep.subr.bf16.mxu0 0
    %8284 = vmatpush2.bf16.msra.mxu0 0
    %8285 = vmatprep.subr.bf16.mxu0 0
    %8286 = vmatpush2.bf16.msra.mxu0 0
    %8287 = vmatprep.subr.bf16.mxu0 0
    %8288 = vmatpush2.bf16.msra.mxu0 0
    %8289 = vmatprep.subr.bf16.mxu0 0
    %8290 = vmatpush2.bf16.msra.mxu0 0
    %8291 = vmatprep.subr.bf16.mxu0 0
    %8292 = vmatpush2.bf16.msra.mxu0 0
    %8293 = vmatprep.subr.bf16.mxu0 0
    %8294 = vmatpush2.bf16.msra.mxu0 0
    %8295 = vmatprep.mubr.bf16.mxu0 0
    %8296 = vmatmul.mubr.bf16.gmra.mxu0 %v8261
    %v8297 = vpop.f32.mrf.mxu0
    %v8298 = vadd.f32 %v8234, %v8297
    %v8299 = vpop.f32.mrf.mxu0
    %v8300 = vpop.f32.mrf.mxu0
    %v8301 = vpop.f32.mrf.mxu0
    %8302 = vdwg.mxu0
    %v8303 = vmul.f32 %v8214, %v8298
    %v8304 = vpack.c.bf16 %v8214, %v8214
    %v8305 = vld [vmem:[#allocation31] sm:$0xf]
    %v8306 = vld [vmem:[#allocation31 + $0x4] sm:$0xf]
    %v8307 = vld [vmem:[#allocation31 + $0x8] sm:$0xf]
    %v8308 = vld [vmem:[#allocation31 + $0xc] sm:$0xf]
    %v8309 = vpack.c.bf16 %v8298, %v8298
    %v8310 = vld [vmem:[#allocation32] sm:$0xf]
    %v8311 = vld [vmem:[#allocation32 + $0x4] sm:$0xf]
    %v8312 = vld [vmem:[#allocation32 + $0x8] sm:$0xf]
    %v8313 = vld [vmem:[#allocation32 + $0xc] sm:$0xf]
    %v8318 = vunpack.c.l.b16 %v8310
    %v8319 = vunpack.c.l.b16 %v8311
    %v8320 = vunpack.c.l.b16 %v8312
    %v8321 = vunpack.c.l.b16 %v8313
    %v8322 = vpack.c.b16 %v8319, %v8318
    %v8323 = vpack.c.b16 %v8321, %v8320
    %vm8326 = vcmask 261120
    %v8328 = vsel %vm8326, %v8309, 0
    %8330 = vmatprep.subr.bf16.mxu0 0
    %8331 = vmatpush1.bf16.msra.mxu0 0
    %8332 = vmatprep.subr.bf16.mxu0 0
    %8333 = vmatpush1.bf16.msra.mxu0 0
    %8334 = vmatprep.subr.bf16.mxu0 0
    %8335 = vmatpush1.bf16.msra.mxu0 0
    %8336 = vmatprep.subr.bf16.mxu0 0
    %8337 = vmatpush1.bf16.msra.mxu0 0
    %8338 = vmatprep.subr.bf16.mxu0 0
    %8339 = vmatpush1.bf16.msra.mxu0 0
    %8340 = vmatprep.subr.bf16.mxu0 0
    %8341 = vmatpush1.bf16.msra.mxu0 0
    %8342 = vmatprep.subr.bf16.mxu0 0
    %8343 = vmatpush1.bf16.msra.mxu0 %v8323
    %8344 = vmatprep.subr.bf16.mxu0 0
    %8345 = vmatpush1.bf16.msra.mxu0 %v8322
    %8346 = vmatprep.subr.bf16.mxu0 0
    %8347 = vmatpush2.bf16.msra.mxu0 0
    %8348 = vmatprep.subr.bf16.mxu0 0
    %8349 = vmatpush2.bf16.msra.mxu0 0
    %8350 = vmatprep.subr.bf16.mxu0 0
    %8351 = vmatpush2.bf16.msra.mxu0 0
    %8352 = vmatprep.subr.bf16.mxu0 0
    %8353 = vmatpush2.bf16.msra.mxu0 0
    %8354 = vmatprep.subr.bf16.mxu0 0
    %8355 = vmatpush2.bf16.msra.mxu0 0
    %8356 = vmatprep.subr.bf16.mxu0 0
    %8357 = vmatpush2.bf16.msra.mxu0 0
    %8358 = vmatprep.subr.bf16.mxu0 0
    %8359 = vmatpush2.bf16.msra.mxu0 0
    %8360 = vmatprep.subr.bf16.mxu0 0
    %8361 = vmatpush2.bf16.msra.mxu0 0
    %8362 = vmatprep.mubr.bf16.mxu0 0
    %8363 = vmatmul.mubr.bf16.gmra.mxu0 %v8328
    %v8364 = vpop.f32.mrf.mxu0
    %v8365 = vadd.f32 0.0, %v8364
    %v8366 = vpop.f32.mrf.mxu0
    %v8367 = vpop.f32.mrf.mxu0
    %v8368 = vpop.f32.mrf.mxu0
    %8369 = vdwg.mxu0
    %v8374 = vunpack.c.l.b16 %v8305
    %v8375 = vunpack.c.l.b16 %v8306
    %v8376 = vunpack.c.l.b16 %v8307
    %v8377 = vunpack.c.l.b16 %v8308
    %v8378 = vpack.c.b16 %v8375, %v8374
    %v8379 = vpack.c.b16 %v8377, %v8376
    %v8383 = vsel %vm8326, %v8304, 0
    %8385 = vmatprep.subr.bf16.mxu0 0
    %8386 = vmatpush1.bf16.msra.mxu0 0
    %8387 = vmatprep.subr.bf16.mxu0 0
    %8388 = vmatpush1.bf16.msra.mxu0 0
    %8389 = vmatprep.subr.bf16.mxu0 0
    %8390 = vmatpush1.bf16.msra.mxu0 0
    %8391 = vmatprep.subr.bf16.mxu0 0
    %8392 = vmatpush1.bf16.msra.mxu0 0
    %8393 = vmatprep.subr.bf16.mxu0 0
    %8394 = vmatpush1.bf16.msra.mxu0 0
    %8395 = vmatprep.subr.bf16.mxu0 0
    %8396 = vmatpush1.bf16.msra.mxu0 0
    %8397 = vmatprep.subr.bf16.mxu0 0
    %8398 = vmatpush1.bf16.msra.mxu0 %v8379
    %8399 = vmatprep.subr.bf16.mxu0 0
    %8400 = vmatpush1.bf16.msra.mxu0 %v8378
    %8401 = vmatprep.subr.bf16.mxu0 0
    %8402 = vmatpush2.bf16.msra.mxu0 0
    %8403 = vmatprep.subr.bf16.mxu0 0
    %8404 = vmatpush2.bf16.msra.mxu0 0
    %8405 = vmatprep.subr.bf16.mxu0 0
    %8406 = vmatpush2.bf16.msra.mxu0 0
    %8407 = vmatprep.subr.bf16.mxu0 0
    %8408 = vmatpush2.bf16.msra.mxu0 0
    %8409 = vmatprep.subr.bf16.mxu0 0
    %8410 = vmatpush2.bf16.msra.mxu0 0
    %8411 = vmatprep.subr.bf16.mxu0 0
    %8412 = vmatpush2.bf16.msra.mxu0 0
    %8413 = vmatprep.subr.bf16.mxu0 0
    %8414 = vmatpush2.bf16.msra.mxu0 0
    %8415 = vmatprep.subr.bf16.mxu0 0
    %8416 = vmatpush2.bf16.msra.mxu0 0
    %8417 = vmatprep.mubr.bf16.mxu0 0
    %8418 = vmatmul.mubr.bf16.gmra.mxu0 %v8383
    %v8419 = vpop.f32.mrf.mxu0
    %v8420 = vadd.f32 %v8365, %v8419
    %v8421 = vpop.f32.mrf.mxu0
    %v8422 = vpop.f32.mrf.mxu0
    %v8423 = vpop.f32.mrf.mxu0
    %8424 = vdwg.mxu0
    %v8425 = vld [vmem:[#allocation34] sm:$0x1]
    %v8427 = vlaneseq
    %v8428 = vshrl.u32 %v8427, 7
    %v8429 = vsub.s32 0, %v8428
    %v8430 = vrot.slane %v8425, %v8429
    %v8432 = vadd.f32 %v8420, %v8430
    %v8433 = vmul.f32 %v8432, 0.999995
    %v8434 = vmax.f32 %v8433, 0.0
    %v8435 = vld [vmem:[#allocation35] sm:$0x1]
    %v8437 = vlaneseq
    %v8438 = vshrl.u32 %v8437, 7
    %v8439 = vsub.s32 0, %v8438
    %v8440 = vrot.slane %v8435, %v8439
    %v8442 = vmul.f32 %v8434, %v8440
    %v8443 = vld [vmem:[#allocation37] sm:$0x1]
    %v8445 = vlaneseq
    %v8446 = vshrl.u32 %v8445, 7
    %v8447 = vsub.s32 0, %v8446
    %v8448 = vrot.slane %v8443, %v8447
    %v8450 = vmul.f32 %v8303, %v8448
    %v8451 = vadd.f32 %v8442, %v8450
    %vm8452 = vcmask 254976
    %v8453 = vsel %vm8452, %v8451, 0.0
    %8454 = vadd.xlane.f32.xlu0 %v8453
    %v8455 = vpop.xlane.xlu0 %8454
    %v8456 = vld [vmem:[#allocation2] sm:$0x1]
    %v8458 = vlaneseq
    %v8459 = vshrl.u32 %v8458, 7
    %v8460 = vsub.s32 0, %v8459
    %v8461 = vrot.slane %v8456, %v8460
    %v8463 = vadd.f32 %v8455, %v8461
    %v8464 = vsub.f32 0.0, %v8463
    %v8465 = vmul.f32 %v8464, 1.442695
    %v8466 = vpow.pop %v8465
    %v8467 = vadd.f32 %v8466, 1.0
    %v8468 = vrcp.pop %v8467
    %v8469 = vmul.f32 1.0, %v8468
    %vm8470 = vcmask 1024
    %8471 = vst.msk [vmem:[%s61] sm:$0x3] %vm8470, %v8469
    // Predicated region
    $region214: #{recommender_forward.1} parent=1 // pred_check
      _
    $region215: #{recommender_forward.1} parent=1 // pred_check_branch
      %8473 = sbr.rel (0) target = $region217
    $region216: #{recommender_forward.1} parent=1 // pred_region
      _
    $region217: #{recommender_forward.1} parent=1 // pred_fallthru
      _
    // Predicated region
    $region218: #{recommender_forward.1} parent=1 // pred_check
      _
    $region219: #{recommender_forward.1} parent=1 // pred_check_branch
      %8475 = sbr.rel (0) target = $region221
    $region220: #{recommender_forward.1} parent=1 // pred_region
      _
    $region221: #{recommender_forward.1} parent=1 // pred_fallthru
      _
    %8476 = vsyncpa [#allocation4], 1
    %8477 = vsyncpa [#allocation6], 1
    %8478 = vsyncpa [#allocation9], 1
    %8479 = vsyncpa [#allocation12], 1
    %8480 = vsyncpa [#allocation15], 1
    %8481 = vsyncpa [#allocation18], 1
    %8482 = vsyncpa [#allocation21], 1
    %8483 = vsyncpa [#allocation24], 1
    %8484 = vsyncpa [#allocation27], 1
    %8485 = vsyncpa [#allocation30], 1
    %8486 = vsyncpa [#allocation33], 1
    %8487 = vsyncpa [#allocation36], 1

</llo_original>
